<compile_context>
chip_gen: v7x
topology: tpu7x:2x2x1
jax: 0.10.0
libtpu: 0.0.40
codegen_flags: <defaults>
</compile_context>

<pallas_src>
import functools
import math

import numpy as np
import jax
import jax.numpy as jnp
from jax.experimental import pallas as pl

# ----------------------------------------------------------------------------
# Config (consistent with the module's constructor)
# ----------------------------------------------------------------------------
IMAGE_SIZE = 16
NOISE_EMBED_DIMS = 32
PATCH_SIZE = 2
EMBED_DIM = 64
DROPOUT = 0.0                      # eval semantics -> dropout is identity
N_LAYERS = 2
TEXT_EMB_SIZE = 768
MLP_MULT = 4
N_CHANNELS = 4
N_HEADS = max(1, EMBED_DIM // 64)  # reference repo uses embed_dim // 64 heads
HW_PATCH = IMAGE_SIZE // PATCH_SIZE              # 8
SEQ_LEN = HW_PATCH * HW_PATCH                    # 64
PATCH_DIM = N_CHANNELS * PATCH_SIZE * PATCH_SIZE  # 16
HIDDEN = MLP_MULT * EMBED_DIM                    # 256
LN_EPS = 1e-5
_ATTN_SCALE = 1.0 / math.sqrt(EMBED_DIM // N_HEADS)
_INV_SQRT2 = 0.7071067811865476

# TODO(synk): multi-head path not needed here (n_heads = embed_dim // 64 = 1).
assert N_HEADS == 1


# ----------------------------------------------------------------------------
# Shared math helpers (used both inside the Pallas kernel and by the reference)
# ----------------------------------------------------------------------------
def _gelu(x):
    # torch.nn.GELU() default: exact erf-based GELU.
    return 0.5 * x * (1.0 + jax.lax.erf(x * _INV_SQRT2))


def _ln(x, g, b):
    mu = jnp.mean(x, axis=-1, keepdims=True)
    var = jnp.mean(jnp.square(x - mu), axis=-1, keepdims=True)
    return (x - mu) * jax.lax.rsqrt(var + LN_EPS) * g + b


def _mm(x, w):
    # bf16 MXU operands, f32 accumulation (x is f32, w already bf16).
    return jnp.dot(x.astype(jnp.bfloat16), w, preferred_element_type=jnp.float32)


def _attend(q, k, v):
    # Single-head attention on 2-D f32 tiles: q (Sq, D); k, v (Sk, D).
    s = jax.lax.dot_general(
        q.astype(jnp.bfloat16), k.astype(jnp.bfloat16),
        (((1,), (1,)), ((), ())), preferred_element_type=jnp.float32) * _ATTN_SCALE
    s = s - jnp.max(s, axis=-1, keepdims=True)
    p = jnp.exp(s)
    p = p / jnp.sum(p, axis=-1, keepdims=True)
    return jnp.dot(p.astype(jnp.bfloat16), v.astype(jnp.bfloat16),
                   preferred_element_type=jnp.float32)


# ----------------------------------------------------------------------------
# Fused transformer-block kernel (whole DenoiserTransBlock minus out_proj)
# ----------------------------------------------------------------------------
def _denoiser_block_kernel(*refs):
    (patches_ref, cond_ref, pos_ref, shift_ref,
     pc_w, pc_b, pln1_g, pln1_b, pl_w, pl_b, pln2_g, pln2_b,
     n1_g, n1_b, wq, wk, wv,
     n2_g, n2_b, cq, ck, cv,
     n3_g, n3_b, c1w, c1b, dww, dwb, c2w, c2b,
     out_ref) = refs

    f32 = jnp.float32
    BS = patches_ref.shape[0]
    B = BS // SEQ_LEN
    S = SEQ_LEN
    NC = cond_ref.shape[0] // B          # number of cond tokens (always 2 here)
    assert NC == 2

    # ---- patchify_and_embed: per-patch Linear -> LN -> Linear -> LN, + pos ----
    t = _mm(patches_ref[...].astype(f32), pc_w[...]) + pc_b[...]
    t = _ln(t, pln1_g[...], pln1_b[...])
    t = _mm(t, pl_w[...]) + pl_b[...]
    t = _ln(t, pln2_g[...], pln2_b[...])
    t = t + pos_ref[...]

    cond = cond_ref[...].astype(f32)     # (B*2, E), already layer-normed outside

    for l in range(N_LAYERS):
        # ---------------- self attention (pre-LN, residual) -------------------
        h = _ln(t, n1_g[l:l + 1, :], n1_b[l:l + 1, :])
        q = _mm(h, wq[l])
        k = _mm(h, wk[l])
        v = _mm(h, wv[l])
        o_parts = [
            _attend(q[b * S:(b + 1) * S, :],
                    k[b * S:(b + 1) * S, :],
                    v[b * S:(b + 1) * S, :])
            for b in range(B)
        ]
        o = jnp.concatenate(o_parts, axis=0) if B > 1 else o_parts[0]
        t = t + o

        # -------- cross attention against the 2 cond tokens (rank-1 form) -----
        h = _ln(t, n2_g[l:l + 1, :], n2_b[l:l + 1, :])
        q = _mm(h, cq[l])                 # (BS, E)
        kk = _mm(cond, ck[l])             # (B*2, E)
        vv = _mm(cond, cv[l])             # (B*2, E)
        o_parts = []
        for b in range(B):
            qb = q[b * S:(b + 1) * S, :]
            kb = kk[b * NC:(b + 1) * NC, :]
            vb = vv[b * NC:(b + 1) * NC, :]
            s0 = jnp.sum(qb * kb[0:1, :], axis=-1, keepdims=True) * _ATTN_SCALE
            s1 = jnp.sum(qb * kb[1:2, :], axis=-1, keepdims=True) * _ATTN_SCALE
            m = jnp.maximum(s0, s1)
            e0 = jnp.exp(s0 - m)
            e1 = jnp.exp(s1 - m)
            o_parts.append((e0 * vb[0:1, :] + e1 * vb[1:2, :]) / (e0 + e1))
        o = jnp.concatenate(o_parts, axis=0) if B > 1 else o_parts[0]
        t = t + o

        # -------- MLPSepConv: 1x1 conv -> depthwise 3x3 -> GELU -> 1x1 conv ----
        h = _ln(t, n3_g[l:l + 1, :], n3_b[l:l + 1, :])
        y = _mm(h, c1w[l]) + c1b[l:l + 1, :]          # (BS, HIDDEN) f32
        acc = jnp.zeros((BS, HIDDEN), f32)
        for tap in range(9):
            # Gather the (dy,dx)-shifted rows with a 0/1 selection matmul on the
            # MXU (out-of-image rows are all-zero) -> no sublane slicing/shifts.
            sel = shift_ref[tap * BS:(tap + 1) * BS, :]
            gathered = jnp.dot(sel, y, preferred_element_type=f32)
            acc = acc + gathered * dww[l * 9 + tap:l * 9 + tap + 1, :]
        acc = _gelu(acc + dwb[l:l + 1, :])
        t = t + _mm(acc, c2w[l]) + c2b[l:l + 1, :]

    out_ref[...] = t.astype(out_ref.dtype)


# ----------------------------------------------------------------------------
# Weight packing for the fused kernel
# ----------------------------------------------------------------------------
def _prep_weights(params):
    bf = jnp.bfloat16
    blocks = params["blocks"]
    E = EMBED_DIM

    def stack(fn):
        return jnp.stack([fn(blk) for blk in blocks], axis=0)

    return dict(
        pc_w=params["patch_conv_w"].astype(bf),
        pc_b=params["patch_conv_b"].reshape(1, -1),
        pln1_g=params["patch_ln1_g"].reshape(1, -1),
        pln1_b=params["patch_ln1_b"].reshape(1, -1),
        pl_w=params["patch_lin_w"].astype(bf),
        pl_b=params["patch_lin_b"].reshape(1, -1),
        pln2_g=params["patch_ln2_g"].reshape(1, -1),
        pln2_b=params["patch_ln2_b"].reshape(1, -1),
        n1_g=stack(lambda b: b["n1_g"]), n1_b=stack(lambda b: b["n1_b"]),
        wq=stack(lambda b: b["qkv_w"][:, :E]).astype(bf),
        wk=stack(lambda b: b["qkv_w"][:, E:2 * E]).astype(bf),
        wv=stack(lambda b: b["qkv_w"][:, 2 * E:]).astype(bf),
        n2_g=stack(lambda b: b["n2_g"]), n2_b=stack(lambda b: b["n2_b"]),
        cq=stack(lambda b: b["q_w"]).astype(bf),
        ck=stack(lambda b: b["kv_w"][:, :E]).astype(bf),
        cv=stack(lambda b: b["kv_w"][:, E:]).astype(bf),
        n3_g=stack(lambda b: b["n3_g"]), n3_b=stack(lambda b: b["n3_b"]),
        c1w=stack(lambda b: b["c1_w"]).astype(bf),
        c1b=stack(lambda b: b["c1_b"]),
        dww=stack(lambda b: b["dw_w"].reshape(9, HIDDEN)).reshape(N_LAYERS * 9, HIDDEN),
        dwb=stack(lambda b: b["dw_b"]),
        c2w=stack(lambda b: b["c2_w"]).astype(bf),
        c2b=stack(lambda b: b["c2_b"]),
    )


_ARG_ORDER = ("pc_w", "pc_b", "pln1_g", "pln1_b", "pl_w", "pl_b", "pln2_g", "pln2_b",
              "n1_g", "n1_b", "wq", "wk", "wv",
              "n2_g", "n2_b", "cq", "ck", "cv",
              "n3_g", "n3_b", "c1w", "c1b", "dww", "dwb", "c2w", "c2b")


@functools.lru_cache(maxsize=None)
def _shift_matrices(B):
    """9 block-diagonal 0/1 matrices mapping flattened (b,h,w) rows to their
    (h+dy, w+dx) source rows (all-zero row where the 3x3 tap leaves the image)."""
    S, HW = SEQ_LEN, HW_PATCH
    BS = B * S
    T = np.zeros((9, BS, BS), np.float32)
    for tap in range(9):
        dy, dx = tap // 3 - 1, tap % 3 - 1
        for b in range(B):
            for h in range(HW):
                for w in range(HW):
                    hs, ws = h + dy, w + dx
                    if 0 <= hs < HW and 0 <= ws < HW:
                        T[tap, b * S + h * HW + w, b * S + hs * HW + ws] = 1.0
    return jnp.asarray(T.reshape(9 * BS, BS))


# ----------------------------------------------------------------------------
# Glue (patch extraction / reassembly) in plain JAX
# ----------------------------------------------------------------------------
def extract_patches(x, p):
    # NCHW -> (B, (h w), (c p1 p2)); same flatten order as Conv2d(stride=p)+Rearrange.
    B, C, H, W = x.shape
    hp, wp = H // p, W // p
    x = x.reshape(B, C, hp, p, wp, p)
    x = x.transpose(0, 2, 4, 1, 3, 5)          # B, hp, wp, C, p, p
    return x.reshape(B, hp * wp, C * p * p)


def patches_to_image(x, p, hp, wp, C):
    # 'b (h w) (c p1 p2) -> b c (h p1) (w p2)'
    B = x.shape[0]
    x = x.reshape(B, hp, wp, C, p, p)
    x = x.transpose(0, 3, 1, 4, 2, 5)          # B, C, hp, p, wp, p
    return x.reshape(B, C, hp * p, wp * p)


# ----------------------------------------------------------------------------
# Model forward (Pallas path)
# ----------------------------------------------------------------------------
def _make_cond(params, noise_level, label):
    # Tiny scalar-path ops (2-4 rows) are left to plain JAX/XLA per perf review.
    B = noise_level.shape[0]
    ang = params["angular_speeds"]
    emb = jnp.concatenate([jnp.sin(ang * noise_level),
                           jnp.cos(ang * noise_level)], axis=-1)     # (B, nd)
    h = _gelu(emb @ params["ff_w1"] + params["ff_b1"])
    noise_emb = h @ params["ff_w2"] + params["ff_b2"]                # (B, E)
    label_emb = label @ params["label_w"] + params["label_b"]        # (B, E)
    cond = jnp.stack([noise_emb, label_emb], axis=1)                 # (B, 2, E)
    cond = _ln(cond, params["norm_g"], params["norm_b"])
    return cond.reshape(B * 2, EMBED_DIM)


def denoiser_trans_block(params, x, cond_flat):
    B = x.shape[0]
    assert cond_flat.shape[0] == 2 * B
    patches = extract_patches(x, PATCH_SIZE).reshape(B * SEQ_LEN, PATCH_DIM)
    pos = jnp.tile(params["pos_embed"], (B, 1))                      # (B*S, E)
    prep = _prep_weights(params)
    shifts = _shift_matrices(B)

    # Single fused kernel: no grid, every operand fully resident in VMEM.
    t = pl.pallas_call(
        _denoiser_block_kernel,
        out_shape=jax.ShapeDtypeStruct((B * SEQ_LEN, EMBED_DIM), jnp.float32),
    )(patches, cond_flat, pos, shifts, *(prep[k] for k in _ARG_ORDER))

    # out_proj (E -> patch_dim=16 is lane-sparse; leave it to XLA) + un-patchify.
    o = t @ params["out_w"] + params["out_b"]
    return patches_to_image(o.reshape(B, SEQ_LEN, PATCH_DIM),
                            PATCH_SIZE, HW_PATCH, HW_PATCH, N_CHANNELS)


def denoiser_forward(params, x, noise_level, label):
    cond = _make_cond(params, noise_level, label)
    return denoiser_trans_block(params, x, cond)


# ----------------------------------------------------------------------------
# Pure-JAX reference (same math / same bf16 operand policy) for validation
# ----------------------------------------------------------------------------
def _trans_block_ref(params, patches, cond_flat, B):
    f32 = jnp.float32
    prep = _prep_weights(params)
    S, E, NC = SEQ_LEN, EMBED_DIM, cond_flat.shape[0] // B

    def attn_bf16(q, k, v):
        s = jnp.einsum("bqd,bkd->bqk", q.astype(jnp.bfloat16), k.astype(jnp.bfloat16),
                       preferred_element_type=f32) * _ATTN_SCALE
        s = s - jnp.max(s, axis=-1, keepdims=True)
        p = jnp.exp(s)
        p = p / jnp.sum(p, axis=-1, keepdims=True)
        return jnp.einsum("bqk,bkd->bqd", p.astype(jnp.bfloat16),
                          v.astype(jnp.bfloat16), preferred_element_type=f32)

    def attn_f32(q, k, v):
        s = jnp.einsum("bqd,bkd->bqk", q, k, preferred_element_type=f32) * _ATTN_SCALE
        s = s - jnp.max(s, axis=-1, keepdims=True)
        p = jnp.exp(s)
        p = p / jnp.sum(p, axis=-1, keepdims=True)
        return jnp.einsum("bqk,bkd->bqd", p, v, preferred_element_type=f32)

    t = _mm(patches, prep["pc_w"]) + prep["pc_b"]
    t = _ln(t, prep["pln1_g"], prep["pln1_b"])
    t = _mm(t, prep["pl_w"]) + prep["pl_b"]
    t = _ln(t, prep["pln2_g"], prep["pln2_b"])
    t = t + jnp.tile(params["pos_embed"], (B, 1))

    cond = cond_flat
    wdw = prep["dww"].reshape(N_LAYERS, 3, 3, HIDDEN)
    for l in range(N_LAYERS):
        h = _ln(t, prep["n1_g"][l:l + 1], prep["n1_b"][l:l + 1])
        q, k, v = _mm(h, prep["wq"][l]), _mm(h, prep["wk"][l]), _mm(h, prep["wv"][l])
        o = attn_bf16(q.reshape(B, S, E), k.reshape(B, S, E), v.reshape(B, S, E))
        t = t + o.reshape(B * S, E)

        h = _ln(t, prep["n2_g"][l:l + 1], prep["n2_b"][l:l + 1])
        q = _mm(h, prep["cq"][l])
        kk, vv = _mm(cond, prep["ck"][l]), _mm(cond, prep["cv"][l])
        o = attn_f32(q.reshape(B, S, E), kk.reshape(B, NC, E), vv.reshape(B, NC, E))
        t = t + o.reshape(B * S, E)

        h = _ln(t, prep["n3_g"][l:l + 1], prep["n3_b"][l:l + 1])
        y = _mm(h, prep["c1w"][l]) + prep["c1b"][l:l + 1]
        yr = y.reshape(B, HW_PATCH, HW_PATCH, HIDDEN)
        yp = jnp.pad(yr, ((0, 0), (1, 1), (1, 1), (0, 0)))
        acc = jnp.zeros_like(yr)
        for dy in range(3):
            for dx in range(3):
                acc = acc + yp[:, dy:dy + HW_PATCH, dx:dx + HW_PATCH, :] * wdw[l, dy, dx]
        acc = _gelu(acc + prep["dwb"][l])
        t = t + _mm(acc.reshape(B * S, HIDDEN), prep["c2w"][l]) + prep["c2b"][l:l + 1]
    return t


def denoiser_forward_ref(params, x, noise_level, label):
    B = x.shape[0]
    cond = _make_cond(params, noise_level, label)
    patches = extract_patches(x, PATCH_SIZE).reshape(B * SEQ_LEN, PATCH_DIM)
    t = _trans_block_ref(params, patches, cond, B)
    o = t @ params["out_w"] + params["out_b"]
    return patches_to_image(o.reshape(B, SEQ_LEN, PATCH_DIM),
                            PATCH_SIZE, HW_PATCH, HW_PATCH, N_CHANNELS)


# ----------------------------------------------------------------------------
# Deterministic synthetic parameters (shapes follow the module __init__)
# ----------------------------------------------------------------------------
def init_params(key):
    it = iter(jax.random.split(key, 128))

    def W(*shape, scale=0.02):
        return (scale * jax.random.normal(next(it), shape)).astype(jnp.float32)

    def Z(*shape):
        return jnp.zeros(shape, jnp.float32)

    def O(*shape):
        return jnp.ones(shape, jnp.float32)

    half = NOISE_EMBED_DIMS // 2
    params = {
        "angular_speeds": (2.0 * jnp.pi *
                           jnp.exp(jnp.linspace(jnp.log(1.0), jnp.log(1000.0), half))
                           ).astype(jnp.float32),
        "ff_w1": W(NOISE_EMBED_DIMS, EMBED_DIM), "ff_b1": Z(EMBED_DIM),
        "ff_w2": W(EMBED_DIM, EMBED_DIM), "ff_b2": Z(EMBED_DIM),
        "label_w": W(TEXT_EMB_SIZE, EMBED_DIM), "label_b": Z(EMBED_DIM),
        "norm_g": O(EMBED_DIM), "norm_b": Z(EMBED_DIM),
        "patch_conv_w": W(PATCH_DIM, PATCH_DIM), "patch_conv_b": Z(PATCH_DIM),
        "patch_ln1_g": O(PATCH_DIM), "patch_ln1_b": Z(PATCH_DIM),
        "patch_lin_w": W(PATCH_DIM, EMBED_DIM), "patch_lin_b": Z(EMBED_DIM),
        "patch_ln2_g": O(EMBED_DIM), "patch_ln2_b": Z(EMBED_DIM),
        "pos_embed": W(SEQ_LEN, EMBED_DIM),
        "out_w": W(EMBED_DIM, PATCH_DIM), "out_b": Z(PATCH_DIM),
        "blocks": [],
    }
    for _ in range(N_LAYERS):
        params["blocks"].append({
            "n1_g": O(EMBED_DIM), "n1_b": Z(EMBED_DIM),
            "n2_g": O(EMBED_DIM), "n2_b": Z(EMBED_DIM),
            "n3_g": O(EMBED_DIM), "n3_b": Z(EMBED_DIM),
            "qkv_w": W(EMBED_DIM, 3 * EMBED_DIM),          # bias=False
            "q_w": W(EMBED_DIM, EMBED_DIM),                # bias=False
            "kv_w": W(EMBED_DIM, 2 * EMBED_DIM),           # bias=False
            "c1_w": W(EMBED_DIM, HIDDEN), "c1_b": Z(HIDDEN),
            "dw_w": W(3, 3, HIDDEN), "dw_b": Z(HIDDEN),
            "c2_w": W(HIDDEN, EMBED_DIM), "c2_b": Z(EMBED_DIM),
        })
    return params


# ----------------------------------------------------------------------------
if __name__ == "__main__":
    key = jax.random.PRNGKey(0)
    kp, kx, kn, kl = jax.random.split(key, 4)
    params = init_params(kp)

    x = jax.random.normal(kx, (2, N_CHANNELS, IMAGE_SIZE, IMAGE_SIZE), jnp.float32)
    noise_level = jax.random.uniform(kn, (2, 1), jnp.float32)
    label = jax.random.normal(kl, (2, TEXT_EMB_SIZE), jnp.float32)

    fwd = jax.jit(denoiser_forward)
    out = jax.block_until_ready(fwd(params, x, noise_level, label))
    assert out.shape == x.shape, out.shape
    assert bool(jnp.all(jnp.isfinite(out)))

    # Validate the fused Pallas path against a pure-JAX reference of the same math.
    ref = jax.block_until_ready(jax.jit(denoiser_forward_ref)(params, x, noise_level, label))
    max_err = float(jnp.max(jnp.abs(out - ref)))
    assert max_err < 5e-3, f"kernel/reference mismatch: max|diff|={max_err}"

    print("KERNEL_OK")
</pallas_src>

<mosaic_0001>
module attributes {stable_mosaic.version = 11 : i64} {
  func.func @_denoiser_block_kernel(%arg0: memref<128x16xf32, #tpu.memory_space<vmem>>, %arg1: memref<4x64xf32, #tpu.memory_space<vmem>>, %arg2: memref<128x64xf32, #tpu.memory_space<vmem>>, %arg3: memref<1152x128xf32, #tpu.memory_space<vmem>>, %arg4: memref<16x16xbf16, #tpu.memory_space<vmem>>, %arg5: memref<1x16xf32, #tpu.memory_space<vmem>>, %arg6: memref<1x16xf32, #tpu.memory_space<vmem>>, %arg7: memref<1x16xf32, #tpu.memory_space<vmem>>, %arg8: memref<16x64xbf16, #tpu.memory_space<vmem>>, %arg9: memref<1x64xf32, #tpu.memory_space<vmem>>, %arg10: memref<1x64xf32, #tpu.memory_space<vmem>>, %arg11: memref<1x64xf32, #tpu.memory_space<vmem>>, %arg12: memref<2x64xf32, #tpu.memory_space<vmem>>, %arg13: memref<2x64xf32, #tpu.memory_space<vmem>>, %arg14: memref<2x64x64xbf16, #tpu.memory_space<vmem>>, %arg15: memref<2x64x64xbf16, #tpu.memory_space<vmem>>, %arg16: memref<2x64x64xbf16, #tpu.memory_space<vmem>>, %arg17: memref<2x64xf32, #tpu.memory_space<vmem>>, %arg18: memref<2x64xf32, #tpu.memory_space<vmem>>, %arg19: memref<2x64x64xbf16, #tpu.memory_space<vmem>>, %arg20: memref<2x64x64xbf16, #tpu.memory_space<vmem>>, %arg21: memref<2x64x64xbf16, #tpu.memory_space<vmem>>, %arg22: memref<2x64xf32, #tpu.memory_space<vmem>>, %arg23: memref<2x64xf32, #tpu.memory_space<vmem>>, %arg24: memref<2x64x256xbf16, #tpu.memory_space<vmem>>, %arg25: memref<2x256xf32, #tpu.memory_space<vmem>>, %arg26: memref<18x256xf32, #tpu.memory_space<vmem>>, %arg27: memref<2x256xf32, #tpu.memory_space<vmem>>, %arg28: memref<2x256x64xbf16, #tpu.memory_space<vmem>>, %arg29: memref<2x64xf32, #tpu.memory_space<vmem>>, %arg30: memref<128x64xf32, #tpu.memory_space<vmem>>) attributes {dimension_semantics = [], scalar_prefetch = 0 : i64, scratch_operands = 0 : i64, tpu.core_type = #tpu.core_type<tc>} {
    %c0 = arith.constant 0 : index
    %c0_0 = arith.constant 0 : index
    %0 = vector.load %arg0[%c0, %c0_0] : memref<128x16xf32, #tpu.memory_space<vmem>>, vector<128x16xf32>
    %c0_1 = arith.constant 0 : index
    %c0_2 = arith.constant 0 : index
    %1 = vector.load %arg4[%c0_1, %c0_2] : memref<16x16xbf16, #tpu.memory_space<vmem>>, vector<16x16xbf16>
    %2 = arith.truncf %0 : vector<128x16xf32> to vector<128x16xbf16>
    %cst = arith.constant dense<0.000000e+00> : vector<128x16xf32>
    %3 = tpu.matmul %2, %1, %cst {dimension_numbers = #tpu.dot_dimension_numbers<[1], [0], [0], [1], [0, 0, 1, 1], [], []>} : vector<128x16xbf16>, vector<16x16xbf16>, vector<128x16xf32> -> vector<128x16xf32>
    %c0_3 = arith.constant 0 : index
    %c0_4 = arith.constant 0 : index
    %4 = vector.load %arg5[%c0_3, %c0_4] : memref<1x16xf32, #tpu.memory_space<vmem>>, vector<1x16xf32>
    %5 = vector.broadcast %4 : vector<1x16xf32> to vector<128x16xf32>
    %6 = arith.addf %3, %5 : vector<128x16xf32>
    %c0_5 = arith.constant 0 : index
    %c0_6 = arith.constant 0 : index
    %7 = vector.load %arg6[%c0_5, %c0_6] : memref<1x16xf32, #tpu.memory_space<vmem>>, vector<1x16xf32>
    %c0_7 = arith.constant 0 : index
    %c0_8 = arith.constant 0 : index
    %8 = vector.load %arg7[%c0_7, %c0_8] : memref<1x16xf32, #tpu.memory_space<vmem>>, vector<1x16xf32>
    %cst_9 = arith.constant dense<0.000000e+00> : vector<128xf32>
    %9 = vector.multi_reduction <add>, %6, %cst_9 [1] : vector<128x16xf32> to vector<128xf32>
    %10 = vector.shape_cast %9 : vector<128xf32> to vector<128x1xf32>
    %cst_10 = arith.constant 1.600000e+01 : f32
    %11 = vector.broadcast %cst_10 : f32 to vector<128x1xf32>
    %12 = arith.divf %10, %11 : vector<128x1xf32>
    %13 = vector.broadcast %12 : vector<128x1xf32> to vector<128x16xf32>
    %14 = arith.subf %6, %13 : vector<128x16xf32>
    %15 = arith.mulf %14, %14 : vector<128x16xf32>
    %cst_11 = arith.constant dense<0.000000e+00> : vector<128xf32>
    %16 = vector.multi_reduction <add>, %15, %cst_11 [1] : vector<128x16xf32> to vector<128xf32>
    %17 = vector.shape_cast %16 : vector<128xf32> to vector<128x1xf32>
    %cst_12 = arith.constant 1.600000e+01 : f32
    %18 = vector.broadcast %cst_12 : f32 to vector<128x1xf32>
    %19 = arith.divf %17, %18 : vector<128x1xf32>
    %20 = vector.broadcast %12 : vector<128x1xf32> to vector<128x16xf32>
    %21 = arith.subf %6, %20 : vector<128x16xf32>
    %cst_13 = arith.constant 9.99999974E-6 : f32
    %22 = vector.broadcast %cst_13 : f32 to vector<128x1xf32>
    %23 = arith.addf %19, %22 : vector<128x1xf32>
    %24 = math.rsqrt %23 : vector<128x1xf32>
    %25 = vector.broadcast %24 : vector<128x1xf32> to vector<128x16xf32>
    %26 = arith.mulf %21, %25 : vector<128x16xf32>
    %27 = vector.broadcast %7 : vector<1x16xf32> to vector<128x16xf32>
    %28 = arith.mulf %26, %27 : vector<128x16xf32>
    %29 = vector.broadcast %8 : vector<1x16xf32> to vector<128x16xf32>
    %30 = arith.addf %28, %29 : vector<128x16xf32>
    %c0_14 = arith.constant 0 : index
    %c0_15 = arith.constant 0 : index
    %31 = vector.load %arg8[%c0_14, %c0_15] : memref<16x64xbf16, #tpu.memory_space<vmem>>, vector<16x64xbf16>
    %32 = arith.truncf %30 : vector<128x16xf32> to vector<128x16xbf16>
    %cst_16 = arith.constant dense<0.000000e+00> : vector<128x64xf32>
    %33 = tpu.matmul %32, %31, %cst_16 {dimension_numbers = #tpu.dot_dimension_numbers<[1], [0], [0], [1], [0, 0, 1, 1], [], []>} : vector<128x16xbf16>, vector<16x64xbf16>, vector<128x64xf32> -> vector<128x64xf32>
    %c0_17 = arith.constant 0 : index
    %c0_18 = arith.constant 0 : index
    %34 = vector.load %arg9[%c0_17, %c0_18] : memref<1x64xf32, #tpu.memory_space<vmem>>, vector<1x64xf32>
    %35 = vector.broadcast %34 : vector<1x64xf32> to vector<128x64xf32>
    %36 = arith.addf %33, %35 : vector<128x64xf32>
    %c0_19 = arith.constant 0 : index
    %c0_20 = arith.constant 0 : index
    %37 = vector.load %arg10[%c0_19, %c0_20] : memref<1x64xf32, #tpu.memory_space<vmem>>, vector<1x64xf32>
    %c0_21 = arith.constant 0 : index
    %c0_22 = arith.constant 0 : index
    %38 = vector.load %arg11[%c0_21, %c0_22] : memref<1x64xf32, #tpu.memory_space<vmem>>, vector<1x64xf32>
    %cst_23 = arith.constant dense<0.000000e+00> : vector<128xf32>
    %39 = vector.multi_reduction <add>, %36, %cst_23 [1] : vector<128x64xf32> to vector<128xf32>
    %40 = vector.shape_cast %39 : vector<128xf32> to vector<128x1xf32>
    %cst_24 = arith.constant 6.400000e+01 : f32
    %41 = vector.broadcast %cst_24 : f32 to vector<128x1xf32>
    %42 = arith.divf %40, %41 : vector<128x1xf32>
    %43 = vector.broadcast %42 : vector<128x1xf32> to vector<128x64xf32>
    %44 = arith.subf %36, %43 : vector<128x64xf32>
    %45 = arith.mulf %44, %44 : vector<128x64xf32>
    %cst_25 = arith.constant dense<0.000000e+00> : vector<128xf32>
    %46 = vector.multi_reduction <add>, %45, %cst_25 [1] : vector<128x64xf32> to vector<128xf32>
    %47 = vector.shape_cast %46 : vector<128xf32> to vector<128x1xf32>
    %cst_26 = arith.constant 6.400000e+01 : f32
    %48 = vector.broadcast %cst_26 : f32 to vector<128x1xf32>
    %49 = arith.divf %47, %48 : vector<128x1xf32>
    %50 = vector.broadcast %42 : vector<128x1xf32> to vector<128x64xf32>
    %51 = arith.subf %36, %50 : vector<128x64xf32>
    %cst_27 = arith.constant 9.99999974E-6 : f32
    %52 = vector.broadcast %cst_27 : f32 to vector<128x1xf32>
    %53 = arith.addf %49, %52 : vector<128x1xf32>
    %54 = math.rsqrt %53 : vector<128x1xf32>
    %55 = vector.broadcast %54 : vector<128x1xf32> to vector<128x64xf32>
    %56 = arith.mulf %51, %55 : vector<128x64xf32>
    %57 = vector.broadcast %37 : vector<1x64xf32> to vector<128x64xf32>
    %58 = arith.mulf %56, %57 : vector<128x64xf32>
    %59 = vector.broadcast %38 : vector<1x64xf32> to vector<128x64xf32>
    %60 = arith.addf %58, %59 : vector<128x64xf32>
    %c0_28 = arith.constant 0 : index
    %c0_29 = arith.constant 0 : index
    %61 = vector.load %arg2[%c0_28, %c0_29] : memref<128x64xf32, #tpu.memory_space<vmem>>, vector<128x64xf32>
    %62 = arith.addf %60, %61 : vector<128x64xf32>
    %c0_30 = arith.constant 0 : index
    %c0_31 = arith.constant 0 : index
    %63 = vector.load %arg1[%c0_30, %c0_31] : memref<4x64xf32, #tpu.memory_space<vmem>>, vector<4x64xf32>
    %c0_32 = arith.constant 0 : index
    %c0_33 = arith.constant 0 : index
    %64 = vector.load %arg12[%c0_32, %c0_33] : memref<2x64xf32, #tpu.memory_space<vmem>>, vector<1x64xf32>
    %c0_34 = arith.constant 0 : index
    %c0_35 = arith.constant 0 : index
    %65 = vector.load %arg13[%c0_34, %c0_35] : memref<2x64xf32, #tpu.memory_space<vmem>>, vector<1x64xf32>
    %cst_36 = arith.constant dense<0.000000e+00> : vector<128xf32>
    %66 = vector.multi_reduction <add>, %62, %cst_36 [1] : vector<128x64xf32> to vector<128xf32>
    %67 = vector.shape_cast %66 : vector<128xf32> to vector<128x1xf32>
    %cst_37 = arith.constant 6.400000e+01 : f32
    %68 = vector.broadcast %cst_37 : f32 to vector<128x1xf32>
    %69 = arith.divf %67, %68 : vector<128x1xf32>
    %70 = vector.broadcast %69 : vector<128x1xf32> to vector<128x64xf32>
    %71 = arith.subf %62, %70 : vector<128x64xf32>
    %72 = arith.mulf %71, %71 : vector<128x64xf32>
    %cst_38 = arith.constant dense<0.000000e+00> : vector<128xf32>
    %73 = vector.multi_reduction <add>, %72, %cst_38 [1] : vector<128x64xf32> to vector<128xf32>
    %74 = vector.shape_cast %73 : vector<128xf32> to vector<128x1xf32>
    %cst_39 = arith.constant 6.400000e+01 : f32
    %75 = vector.broadcast %cst_39 : f32 to vector<128x1xf32>
    %76 = arith.divf %74, %75 : vector<128x1xf32>
    %77 = vector.broadcast %69 : vector<128x1xf32> to vector<128x64xf32>
    %78 = arith.subf %62, %77 : vector<128x64xf32>
    %cst_40 = arith.constant 9.99999974E-6 : f32
    %79 = vector.broadcast %cst_40 : f32 to vector<128x1xf32>
    %80 = arith.addf %76, %79 : vector<128x1xf32>
    %81 = math.rsqrt %80 : vector<128x1xf32>
    %82 = vector.broadcast %81 : vector<128x1xf32> to vector<128x64xf32>
    %83 = arith.mulf %78, %82 : vector<128x64xf32>
    %84 = vector.broadcast %64 : vector<1x64xf32> to vector<128x64xf32>
    %85 = arith.mulf %83, %84 : vector<128x64xf32>
    %86 = vector.broadcast %65 : vector<1x64xf32> to vector<128x64xf32>
    %87 = arith.addf %85, %86 : vector<128x64xf32>
    %c0_41 = arith.constant 0 : index
    %c0_42 = arith.constant 0 : index
    %c0_43 = arith.constant 0 : index
    %88 = vector.load %arg14[%c0_41, %c0_42, %c0_43] : memref<2x64x64xbf16, #tpu.memory_space<vmem>>, vector<1x64x64xbf16>
    %89 = vector.shape_cast %88 : vector<1x64x64xbf16> to vector<64x64xbf16>
    %90 = arith.truncf %87 : vector<128x64xf32> to vector<128x64xbf16>
    %cst_44 = arith.constant dense<0.000000e+00> : vector<128x64xf32>
    %91 = tpu.matmul %90, %89, %cst_44 {dimension_numbers = #tpu.dot_dimension_numbers<[1], [0], [0], [1], [0, 0, 1, 1], [], []>} : vector<128x64xbf16>, vector<64x64xbf16>, vector<128x64xf32> -> vector<128x64xf32>
    %c0_45 = arith.constant 0 : index
    %c0_46 = arith.constant 0 : index
    %c0_47 = arith.constant 0 : index
    %92 = vector.load %arg15[%c0_45, %c0_46, %c0_47] : memref<2x64x64xbf16, #tpu.memory_space<vmem>>, vector<1x64x64xbf16>
    %93 = vector.shape_cast %92 : vector<1x64x64xbf16> to vector<64x64xbf16>
    %94 = arith.truncf %87 : vector<128x64xf32> to vector<128x64xbf16>
    %cst_48 = arith.constant dense<0.000000e+00> : vector<128x64xf32>
    %95 = tpu.matmul %94, %93, %cst_48 {dimension_numbers = #tpu.dot_dimension_numbers<[1], [0], [0], [1], [0, 0, 1, 1], [], []>} : vector<128x64xbf16>, vector<64x64xbf16>, vector<128x64xf32> -> vector<128x64xf32>
    %c0_49 = arith.constant 0 : index
    %c0_50 = arith.constant 0 : index
    %c0_51 = arith.constant 0 : index
    %96 = vector.load %arg16[%c0_49, %c0_50, %c0_51] : memref<2x64x64xbf16, #tpu.memory_space<vmem>>, vector<1x64x64xbf16>
    %97 = vector.shape_cast %96 : vector<1x64x64xbf16> to vector<64x64xbf16>
    %98 = arith.truncf %87 : vector<128x64xf32> to vector<128x64xbf16>
    %cst_52 = arith.constant dense<0.000000e+00> : vector<128x64xf32>
    %99 = tpu.matmul %98, %97, %cst_52 {dimension_numbers = #tpu.dot_dimension_numbers<[1], [0], [0], [1], [0, 0, 1, 1], [], []>} : vector<128x64xbf16>, vector<64x64xbf16>, vector<128x64xf32> -> vector<128x64xf32>
    %100 = vector.extract_strided_slice %91 {offsets = [0, 0], sizes = [64, 64], strides = [1, 1]} : vector<128x64xf32> to vector<64x64xf32>
    %101 = vector.extract_strided_slice %95 {offsets = [0, 0], sizes = [64, 64], strides = [1, 1]} : vector<128x64xf32> to vector<64x64xf32>
    %102 = vector.extract_strided_slice %99 {offsets = [0, 0], sizes = [64, 64], strides = [1, 1]} : vector<128x64xf32> to vector<64x64xf32>
    %103 = arith.truncf %100 : vector<64x64xf32> to vector<64x64xbf16>
    %104 = arith.truncf %101 : vector<64x64xf32> to vector<64x64xbf16>
    %cst_53 = arith.constant dense<0.000000e+00> : vector<64x64xf32>
    %105 = tpu.matmul %103, %104, %cst_53 {dimension_numbers = #tpu.dot_dimension_numbers<[1], [1], [0], [0], [0, 0, 1, 0], [], []>} : vector<64x64xbf16>, vector<64x64xbf16>, vector<64x64xf32> -> vector<64x64xf32>
    %cst_54 = arith.constant 1.250000e-01 : f32
    %106 = vector.broadcast %cst_54 : f32 to vector<64x64xf32>
    %107 = arith.mulf %105, %106 : vector<64x64xf32>
    %cst_55 = arith.constant dense<0xFF800000> : vector<64xf32>
    %108 = vector.multi_reduction <maximumf>, %107, %cst_55 [1] : vector<64x64xf32> to vector<64xf32>
    %109 = vector.shape_cast %108 : vector<64xf32> to vector<64x1xf32>
    %110 = vector.broadcast %109 : vector<64x1xf32> to vector<64x64xf32>
    %111 = arith.subf %107, %110 : vector<64x64xf32>
    %112 = math.exp %111 : vector<64x64xf32>
    %cst_56 = arith.constant dense<0.000000e+00> : vector<64xf32>
    %113 = vector.multi_reduction <add>, %112, %cst_56 [1] : vector<64x64xf32> to vector<64xf32>
    %114 = vector.shape_cast %113 : vector<64xf32> to vector<64x1xf32>
    %115 = vector.broadcast %114 : vector<64x1xf32> to vector<64x64xf32>
    %116 = arith.divf %112, %115 : vector<64x64xf32>
    %117 = arith.truncf %116 : vector<64x64xf32> to vector<64x64xbf16>
    %118 = arith.truncf %102 : vector<64x64xf32> to vector<64x64xbf16>
    %cst_57 = arith.constant dense<0.000000e+00> : vector<64x64xf32>
    %119 = tpu.matmul %117, %118, %cst_57 {dimension_numbers = #tpu.dot_dimension_numbers<[1], [0], [0], [1], [0, 0, 1, 1], [], []>} : vector<64x64xbf16>, vector<64x64xbf16>, vector<64x64xf32> -> vector<64x64xf32>
    %120 = vector.extract_strided_slice %91 {offsets = [64, 0], sizes = [64, 64], strides = [1, 1]} : vector<128x64xf32> to vector<64x64xf32>
    %121 = vector.extract_strided_slice %95 {offsets = [64, 0], sizes = [64, 64], strides = [1, 1]} : vector<128x64xf32> to vector<64x64xf32>
    %122 = vector.extract_strided_slice %99 {offsets = [64, 0], sizes = [64, 64], strides = [1, 1]} : vector<128x64xf32> to vector<64x64xf32>
    %123 = arith.truncf %120 : vector<64x64xf32> to vector<64x64xbf16>
    %124 = arith.truncf %121 : vector<64x64xf32> to vector<64x64xbf16>
    %cst_58 = arith.constant dense<0.000000e+00> : vector<64x64xf32>
    %125 = tpu.matmul %123, %124, %cst_58 {dimension_numbers = #tpu.dot_dimension_numbers<[1], [1], [0], [0], [0, 0, 1, 0], [], []>} : vector<64x64xbf16>, vector<64x64xbf16>, vector<64x64xf32> -> vector<64x64xf32>
    %cst_59 = arith.constant 1.250000e-01 : f32
    %126 = vector.broadcast %cst_59 : f32 to vector<64x64xf32>
    %127 = arith.mulf %125, %126 : vector<64x64xf32>
    %cst_60 = arith.constant dense<0xFF800000> : vector<64xf32>
    %128 = vector.multi_reduction <maximumf>, %127, %cst_60 [1] : vector<64x64xf32> to vector<64xf32>
    %129 = vector.shape_cast %128 : vector<64xf32> to vector<64x1xf32>
    %130 = vector.broadcast %129 : vector<64x1xf32> to vector<64x64xf32>
    %131 = arith.subf %127, %130 : vector<64x64xf32>
    %132 = math.exp %131 : vector<64x64xf32>
    %cst_61 = arith.constant dense<0.000000e+00> : vector<64xf32>
    %133 = vector.multi_reduction <add>, %132, %cst_61 [1] : vector<64x64xf32> to vector<64xf32>
    %134 = vector.shape_cast %133 : vector<64xf32> to vector<64x1xf32>
    %135 = vector.broadcast %134 : vector<64x1xf32> to vector<64x64xf32>
    %136 = arith.divf %132, %135 : vector<64x64xf32>
    %137 = arith.truncf %136 : vector<64x64xf32> to vector<64x64xbf16>
    %138 = arith.truncf %122 : vector<64x64xf32> to vector<64x64xbf16>
    %cst_62 = arith.constant dense<0.000000e+00> : vector<64x64xf32>
    %139 = tpu.matmul %137, %138, %cst_62 {dimension_numbers = #tpu.dot_dimension_numbers<[1], [0], [0], [1], [0, 0, 1, 1], [], []>} : vector<64x64xbf16>, vector<64x64xbf16>, vector<64x64xf32> -> vector<64x64xf32>
    %140 = tpu.concatenate %119, %139 in 0 : vector<64x64xf32>, vector<64x64xf32> -> vector<128x64xf32>
    %141 = arith.addf %62, %140 : vector<128x64xf32>
    %c0_63 = arith.constant 0 : index
    %c0_64 = arith.constant 0 : index
    %142 = vector.load %arg17[%c0_63, %c0_64] : memref<2x64xf32, #tpu.memory_space<vmem>>, vector<1x64xf32>
    %c0_65 = arith.constant 0 : index
    %c0_66 = arith.constant 0 : index
    %143 = vector.load %arg18[%c0_65, %c0_66] : memref<2x64xf32, #tpu.memory_space<vmem>>, vector<1x64xf32>
    %cst_67 = arith.constant dense<0.000000e+00> : vector<128xf32>
    %144 = vector.multi_reduction <add>, %141, %cst_67 [1] : vector<128x64xf32> to vector<128xf32>
    %145 = vector.shape_cast %144 : vector<128xf32> to vector<128x1xf32>
    %cst_68 = arith.constant 6.400000e+01 : f32
    %146 = vector.broadcast %cst_68 : f32 to vector<128x1xf32>
    %147 = arith.divf %145, %146 : vector<128x1xf32>
    %148 = vector.broadcast %147 : vector<128x1xf32> to vector<128x64xf32>
    %149 = arith.subf %141, %148 : vector<128x64xf32>
    %150 = arith.mulf %149, %149 : vector<128x64xf32>
    %cst_69 = arith.constant dense<0.000000e+00> : vector<128xf32>
    %151 = vector.multi_reduction <add>, %150, %cst_69 [1] : vector<128x64xf32> to vector<128xf32>
    %152 = vector.shape_cast %151 : vector<128xf32> to vector<128x1xf32>
    %cst_70 = arith.constant 6.400000e+01 : f32
    %153 = vector.broadcast %cst_70 : f32 to vector<128x1xf32>
    %154 = arith.divf %152, %153 : vector<128x1xf32>
    %155 = vector.broadcast %147 : vector<128x1xf32> to vector<128x64xf32>
    %156 = arith.subf %141, %155 : vector<128x64xf32>
    %cst_71 = arith.constant 9.99999974E-6 : f32
    %157 = vector.broadcast %cst_71 : f32 to vector<128x1xf32>
    %158 = arith.addf %154, %157 : vector<128x1xf32>
    %159 = math.rsqrt %158 : vector<128x1xf32>
    %160 = vector.broadcast %159 : vector<128x1xf32> to vector<128x64xf32>
    %161 = arith.mulf %156, %160 : vector<128x64xf32>
    %162 = vector.broadcast %142 : vector<1x64xf32> to vector<128x64xf32>
    %163 = arith.mulf %161, %162 : vector<128x64xf32>
    %164 = vector.broadcast %143 : vector<1x64xf32> to vector<128x64xf32>
    %165 = arith.addf %163, %164 : vector<128x64xf32>
    %c0_72 = arith.constant 0 : index
    %c0_73 = arith.constant 0 : index
    %c0_74 = arith.constant 0 : index
    %166 = vector.load %arg19[%c0_72, %c0_73, %c0_74] : memref<2x64x64xbf16, #tpu.memory_space<vmem>>, vector<1x64x64xbf16>
    %167 = vector.shape_cast %166 : vector<1x64x64xbf16> to vector<64x64xbf16>
    %168 = arith.truncf %165 : vector<128x64xf32> to vector<128x64xbf16>
    %cst_75 = arith.constant dense<0.000000e+00> : vector<128x64xf32>
    %169 = tpu.matmul %168, %167, %cst_75 {dimension_numbers = #tpu.dot_dimension_numbers<[1], [0], [0], [1], [0, 0, 1, 1], [], []>} : vector<128x64xbf16>, vector<64x64xbf16>, vector<128x64xf32> -> vector<128x64xf32>
    %c0_76 = arith.constant 0 : index
    %c0_77 = arith.constant 0 : index
    %c0_78 = arith.constant 0 : index
    %170 = vector.load %arg20[%c0_76, %c0_77, %c0_78] : memref<2x64x64xbf16, #tpu.memory_space<vmem>>, vector<1x64x64xbf16>
    %171 = vector.shape_cast %170 : vector<1x64x64xbf16> to vector<64x64xbf16>
    %172 = arith.truncf %63 : vector<4x64xf32> to vector<4x64xbf16>
    %cst_79 = arith.constant dense<0.000000e+00> : vector<4x64xf32>
    %173 = tpu.matmul %172, %171, %cst_79 {dimension_numbers = #tpu.dot_dimension_numbers<[1], [0], [0], [1], [0, 0, 1, 1], [], []>} : vector<4x64xbf16>, vector<64x64xbf16>, vector<4x64xf32> -> vector<4x64xf32>
    %c0_80 = arith.constant 0 : index
    %c0_81 = arith.constant 0 : index
    %c0_82 = arith.constant 0 : index
    %174 = vector.load %arg21[%c0_80, %c0_81, %c0_82] : memref<2x64x64xbf16, #tpu.memory_space<vmem>>, vector<1x64x64xbf16>
    %175 = vector.shape_cast %174 : vector<1x64x64xbf16> to vector<64x64xbf16>
    %176 = arith.truncf %63 : vector<4x64xf32> to vector<4x64xbf16>
    %cst_83 = arith.constant dense<0.000000e+00> : vector<4x64xf32>
    %177 = tpu.matmul %176, %175, %cst_83 {dimension_numbers = #tpu.dot_dimension_numbers<[1], [0], [0], [1], [0, 0, 1, 1], [], []>} : vector<4x64xbf16>, vector<64x64xbf16>, vector<4x64xf32> -> vector<4x64xf32>
    %178 = vector.extract_strided_slice %169 {offsets = [0, 0], sizes = [64, 64], strides = [1, 1]} : vector<128x64xf32> to vector<64x64xf32>
    %179 = vector.extract_strided_slice %173 {offsets = [0, 0], sizes = [2, 64], strides = [1, 1]} : vector<4x64xf32> to vector<2x64xf32>
    %180 = vector.extract_strided_slice %177 {offsets = [0, 0], sizes = [2, 64], strides = [1, 1]} : vector<4x64xf32> to vector<2x64xf32>
    %181 = vector.extract_strided_slice %179 {offsets = [0, 0], sizes = [1, 64], strides = [1, 1]} : vector<2x64xf32> to vector<1x64xf32>
    %182 = vector.broadcast %181 : vector<1x64xf32> to vector<64x64xf32>
    %183 = arith.mulf %178, %182 : vector<64x64xf32>
    %cst_84 = arith.constant dense<0.000000e+00> : vector<64xf32>
    %184 = vector.multi_reduction <add>, %183, %cst_84 [1] : vector<64x64xf32> to vector<64xf32>
    %185 = vector.shape_cast %184 : vector<64xf32> to vector<64x1xf32>
    %cst_85 = arith.constant 1.250000e-01 : f32
    %186 = vector.broadcast %cst_85 : f32 to vector<64x1xf32>
    %187 = arith.mulf %185, %186 : vector<64x1xf32>
    %188 = vector.extract_strided_slice %179 {offsets = [1, 0], sizes = [1, 64], strides = [1, 1]} : vector<2x64xf32> to vector<1x64xf32>
    %189 = vector.broadcast %188 : vector<1x64xf32> to vector<64x64xf32>
    %190 = arith.mulf %178, %189 : vector<64x64xf32>
    %cst_86 = arith.constant dense<0.000000e+00> : vector<64xf32>
    %191 = vector.multi_reduction <add>, %190, %cst_86 [1] : vector<64x64xf32> to vector<64xf32>
    %192 = vector.shape_cast %191 : vector<64xf32> to vector<64x1xf32>
    %cst_87 = arith.constant 1.250000e-01 : f32
    %193 = vector.broadcast %cst_87 : f32 to vector<64x1xf32>
    %194 = arith.mulf %192, %193 : vector<64x1xf32>
    %195 = arith.maximumf %187, %194 : vector<64x1xf32>
    %196 = arith.subf %187, %195 : vector<64x1xf32>
    %197 = math.exp %196 : vector<64x1xf32>
    %198 = arith.subf %194, %195 : vector<64x1xf32>
    %199 = math.exp %198 : vector<64x1xf32>
    %200 = vector.extract_strided_slice %180 {offsets = [0, 0], sizes = [1, 64], strides = [1, 1]} : vector<2x64xf32> to vector<1x64xf32>
    %201 = vector.broadcast %197 : vector<64x1xf32> to vector<64x64xf32>
    %202 = vector.broadcast %200 : vector<1x64xf32> to vector<64x64xf32>
    %203 = arith.mulf %201, %202 : vector<64x64xf32>
    %204 = vector.extract_strided_slice %180 {offsets = [1, 0], sizes = [1, 64], strides = [1, 1]} : vector<2x64xf32> to vector<1x64xf32>
    %205 = vector.broadcast %199 : vector<64x1xf32> to vector<64x64xf32>
    %206 = vector.broadcast %204 : vector<1x64xf32> to vector<64x64xf32>
    %207 = arith.mulf %205, %206 : vector<64x64xf32>
    %208 = arith.addf %203, %207 : vector<64x64xf32>
    %209 = arith.addf %197, %199 : vector<64x1xf32>
    %210 = vector.broadcast %209 : vector<64x1xf32> to vector<64x64xf32>
    %211 = arith.divf %208, %210 : vector<64x64xf32>
    %212 = vector.extract_strided_slice %169 {offsets = [64, 0], sizes = [64, 64], strides = [1, 1]} : vector<128x64xf32> to vector<64x64xf32>
    %213 = vector.extract_strided_slice %173 {offsets = [2, 0], sizes = [2, 64], strides = [1, 1]} : vector<4x64xf32> to vector<2x64xf32>
    %214 = vector.extract_strided_slice %177 {offsets = [2, 0], sizes = [2, 64], strides = [1, 1]} : vector<4x64xf32> to vector<2x64xf32>
    %215 = vector.extract_strided_slice %213 {offsets = [0, 0], sizes = [1, 64], strides = [1, 1]} : vector<2x64xf32> to vector<1x64xf32>
    %216 = vector.broadcast %215 : vector<1x64xf32> to vector<64x64xf32>
    %217 = arith.mulf %212, %216 : vector<64x64xf32>
    %cst_88 = arith.constant dense<0.000000e+00> : vector<64xf32>
    %218 = vector.multi_reduction <add>, %217, %cst_88 [1] : vector<64x64xf32> to vector<64xf32>
    %219 = vector.shape_cast %218 : vector<64xf32> to vector<64x1xf32>
    %cst_89 = arith.constant 1.250000e-01 : f32
    %220 = vector.broadcast %cst_89 : f32 to vector<64x1xf32>
    %221 = arith.mulf %219, %220 : vector<64x1xf32>
    %222 = vector.extract_strided_slice %213 {offsets = [1, 0], sizes = [1, 64], strides = [1, 1]} : vector<2x64xf32> to vector<1x64xf32>
    %223 = vector.broadcast %222 : vector<1x64xf32> to vector<64x64xf32>
    %224 = arith.mulf %212, %223 : vector<64x64xf32>
    %cst_90 = arith.constant dense<0.000000e+00> : vector<64xf32>
    %225 = vector.multi_reduction <add>, %224, %cst_90 [1] : vector<64x64xf32> to vector<64xf32>
    %226 = vector.shape_cast %225 : vector<64xf32> to vector<64x1xf32>
    %cst_91 = arith.constant 1.250000e-01 : f32
    %227 = vector.broadcast %cst_91 : f32 to vector<64x1xf32>
    %228 = arith.mulf %226, %227 : vector<64x1xf32>
    %229 = arith.maximumf %221, %228 : vector<64x1xf32>
    %230 = arith.subf %221, %229 : vector<64x1xf32>
    %231 = math.exp %230 : vector<64x1xf32>
    %232 = arith.subf %228, %229 : vector<64x1xf32>
    %233 = math.exp %232 : vector<64x1xf32>
    %234 = vector.extract_strided_slice %214 {offsets = [0, 0], sizes = [1, 64], strides = [1, 1]} : vector<2x64xf32> to vector<1x64xf32>
    %235 = vector.broadcast %231 : vector<64x1xf32> to vector<64x64xf32>
    %236 = vector.broadcast %234 : vector<1x64xf32> to vector<64x64xf32>
    %237 = arith.mulf %235, %236 : vector<64x64xf32>
    %238 = vector.extract_strided_slice %214 {offsets = [1, 0], sizes = [1, 64], strides = [1, 1]} : vector<2x64xf32> to vector<1x64xf32>
    %239 = vector.broadcast %233 : vector<64x1xf32> to vector<64x64xf32>
    %240 = vector.broadcast %238 : vector<1x64xf32> to vector<64x64xf32>
    %241 = arith.mulf %239, %240 : vector<64x64xf32>
    %242 = arith.addf %237, %241 : vector<64x64xf32>
    %243 = arith.addf %231, %233 : vector<64x1xf32>
    %244 = vector.broadcast %243 : vector<64x1xf32> to vector<64x64xf32>
    %245 = arith.divf %242, %244 : vector<64x64xf32>
    %246 = tpu.concatenate %211, %245 in 0 : vector<64x64xf32>, vector<64x64xf32> -> vector<128x64xf32>
    %247 = arith.addf %141, %246 : vector<128x64xf32>
    %c0_92 = arith.constant 0 : index
    %c0_93 = arith.constant 0 : index
    %248 = vector.load %arg22[%c0_92, %c0_93] : memref<2x64xf32, #tpu.memory_space<vmem>>, vector<1x64xf32>
    %c0_94 = arith.constant 0 : index
    %c0_95 = arith.constant 0 : index
    %249 = vector.load %arg23[%c0_94, %c0_95] : memref<2x64xf32, #tpu.memory_space<vmem>>, vector<1x64xf32>
    %cst_96 = arith.constant dense<0.000000e+00> : vector<128xf32>
    %250 = vector.multi_reduction <add>, %247, %cst_96 [1] : vector<128x64xf32> to vector<128xf32>
    %251 = vector.shape_cast %250 : vector<128xf32> to vector<128x1xf32>
    %cst_97 = arith.constant 6.400000e+01 : f32
    %252 = vector.broadcast %cst_97 : f32 to vector<128x1xf32>
    %253 = arith.divf %251, %252 : vector<128x1xf32>
    %254 = vector.broadcast %253 : vector<128x1xf32> to vector<128x64xf32>
    %255 = arith.subf %247, %254 : vector<128x64xf32>
    %256 = arith.mulf %255, %255 : vector<128x64xf32>
    %cst_98 = arith.constant dense<0.000000e+00> : vector<128xf32>
    %257 = vector.multi_reduction <add>, %256, %cst_98 [1] : vector<128x64xf32> to vector<128xf32>
    %258 = vector.shape_cast %257 : vector<128xf32> to vector<128x1xf32>
    %cst_99 = arith.constant 6.400000e+01 : f32
    %259 = vector.broadcast %cst_99 : f32 to vector<128x1xf32>
    %260 = arith.divf %258, %259 : vector<128x1xf32>
    %261 = vector.broadcast %253 : vector<128x1xf32> to vector<128x64xf32>
    %262 = arith.subf %247, %261 : vector<128x64xf32>
    %cst_100 = arith.constant 9.99999974E-6 : f32
    %263 = vector.broadcast %cst_100 : f32 to vector<128x1xf32>
    %264 = arith.addf %260, %263 : vector<128x1xf32>
    %265 = math.rsqrt %264 : vector<128x1xf32>
    %266 = vector.broadcast %265 : vector<128x1xf32> to vector<128x64xf32>
    %267 = arith.mulf %262, %266 : vector<128x64xf32>
    %268 = vector.broadcast %248 : vector<1x64xf32> to vector<128x64xf32>
    %269 = arith.mulf %267, %268 : vector<128x64xf32>
    %270 = vector.broadcast %249 : vector<1x64xf32> to vector<128x64xf32>
    %271 = arith.addf %269, %270 : vector<128x64xf32>
    %c0_101 = arith.constant 0 : index
    %c0_102 = arith.constant 0 : index
    %c0_103 = arith.constant 0 : index
    %272 = vector.load %arg24[%c0_101, %c0_102, %c0_103] : memref<2x64x256xbf16, #tpu.memory_space<vmem>>, vector<1x64x256xbf16>
    %273 = vector.shape_cast %272 : vector<1x64x256xbf16> to vector<64x256xbf16>
    %274 = arith.truncf %271 : vector<128x64xf32> to vector<128x64xbf16>
    %cst_104 = arith.constant dense<0.000000e+00> : vector<128x256xf32>
    %275 = tpu.matmul %274, %273, %cst_104 {dimension_numbers = #tpu.dot_dimension_numbers<[1], [0], [0], [1], [0, 0, 1, 1], [], []>} : vector<128x64xbf16>, vector<64x256xbf16>, vector<128x256xf32> -> vector<128x256xf32>
    %c0_105 = arith.constant 0 : index
    %c0_106 = arith.constant 0 : index
    %276 = vector.load %arg25[%c0_105, %c0_106] : memref<2x256xf32, #tpu.memory_space<vmem>>, vector<1x256xf32>
    %277 = vector.broadcast %276 : vector<1x256xf32> to vector<128x256xf32>
    %278 = arith.addf %275, %277 : vector<128x256xf32>
    %cst_107 = arith.constant 0.000000e+00 : f32
    %279 = vector.broadcast %cst_107 : f32 to vector<128x256xf32>
    %c0_108 = arith.constant 0 : index
    %c0_109 = arith.constant 0 : index
    %280 = vector.load %arg3[%c0_108, %c0_109] : memref<1152x128xf32, #tpu.memory_space<vmem>>, vector<128x128xf32>
    %cst_110 = arith.constant dense<0.000000e+00> : vector<128x256xf32>
    %281 = tpu.matmul %280, %278, %cst_110 {dimension_numbers = #tpu.dot_dimension_numbers<[1], [0], [0], [1], [0, 0, 1, 1], [], []>} : vector<128x128xf32>, vector<128x256xf32>, vector<128x256xf32> -> vector<128x256xf32>
    %c0_111 = arith.constant 0 : index
    %c0_112 = arith.constant 0 : index
    %282 = vector.load %arg26[%c0_111, %c0_112] : memref<18x256xf32, #tpu.memory_space<vmem>>, vector<1x256xf32>
    %283 = vector.broadcast %282 : vector<1x256xf32> to vector<128x256xf32>
    %284 = arith.mulf %281, %283 : vector<128x256xf32>
    %285 = arith.addf %279, %284 : vector<128x256xf32>
    %c128 = arith.constant 128 : index
    %c0_113 = arith.constant 0 : index
    %286 = vector.load %arg3[%c128, %c0_113] : memref<1152x128xf32, #tpu.memory_space<vmem>>, vector<128x128xf32>
    %cst_114 = arith.constant dense<0.000000e+00> : vector<128x256xf32>
    %287 = tpu.matmul %286, %278, %cst_114 {dimension_numbers = #tpu.dot_dimension_numbers<[1], [0], [0], [1], [0, 0, 1, 1], [], []>} : vector<128x128xf32>, vector<128x256xf32>, vector<128x256xf32> -> vector<128x256xf32>
    %c1 = arith.constant 1 : index
    %c0_115 = arith.constant 0 : index
    %288 = vector.load %arg26[%c1, %c0_115] : memref<18x256xf32, #tpu.memory_space<vmem>>, vector<1x256xf32>
    %289 = vector.broadcast %288 : vector<1x256xf32> to vector<128x256xf32>
    %290 = arith.mulf %287, %289 : vector<128x256xf32>
    %291 = arith.addf %285, %290 : vector<128x256xf32>
    %c256 = arith.constant 256 : index
    %c0_116 = arith.constant 0 : index
    %292 = vector.load %arg3[%c256, %c0_116] : memref<1152x128xf32, #tpu.memory_space<vmem>>, vector<128x128xf32>
    %cst_117 = arith.constant dense<0.000000e+00> : vector<128x256xf32>
    %293 = tpu.matmul %292, %278, %cst_117 {dimension_numbers = #tpu.dot_dimension_numbers<[1], [0], [0], [1], [0, 0, 1, 1], [], []>} : vector<128x128xf32>, vector<128x256xf32>, vector<128x256xf32> -> vector<128x256xf32>
    %c2 = arith.constant 2 : index
    %c0_118 = arith.constant 0 : index
    %294 = vector.load %arg26[%c2, %c0_118] : memref<18x256xf32, #tpu.memory_space<vmem>>, vector<1x256xf32>
    %295 = vector.broadcast %294 : vector<1x256xf32> to vector<128x256xf32>
    %296 = arith.mulf %293, %295 : vector<128x256xf32>
    %297 = arith.addf %291, %296 : vector<128x256xf32>
    %c384 = arith.constant 384 : index
    %c0_119 = arith.constant 0 : index
    %298 = vector.load %arg3[%c384, %c0_119] : memref<1152x128xf32, #tpu.memory_space<vmem>>, vector<128x128xf32>
    %cst_120 = arith.constant dense<0.000000e+00> : vector<128x256xf32>
    %299 = tpu.matmul %298, %278, %cst_120 {dimension_numbers = #tpu.dot_dimension_numbers<[1], [0], [0], [1], [0, 0, 1, 1], [], []>} : vector<128x128xf32>, vector<128x256xf32>, vector<128x256xf32> -> vector<128x256xf32>
    %c3 = arith.constant 3 : index
    %c0_121 = arith.constant 0 : index
    %300 = vector.load %arg26[%c3, %c0_121] : memref<18x256xf32, #tpu.memory_space<vmem>>, vector<1x256xf32>
    %301 = vector.broadcast %300 : vector<1x256xf32> to vector<128x256xf32>
    %302 = arith.mulf %299, %301 : vector<128x256xf32>
    %303 = arith.addf %297, %302 : vector<128x256xf32>
    %c512 = arith.constant 512 : index
    %c0_122 = arith.constant 0 : index
    %304 = vector.load %arg3[%c512, %c0_122] : memref<1152x128xf32, #tpu.memory_space<vmem>>, vector<128x128xf32>
    %cst_123 = arith.constant dense<0.000000e+00> : vector<128x256xf32>
    %305 = tpu.matmul %304, %278, %cst_123 {dimension_numbers = #tpu.dot_dimension_numbers<[1], [0], [0], [1], [0, 0, 1, 1], [], []>} : vector<128x128xf32>, vector<128x256xf32>, vector<128x256xf32> -> vector<128x256xf32>
    %c4 = arith.constant 4 : index
    %c0_124 = arith.constant 0 : index
    %306 = vector.load %arg26[%c4, %c0_124] : memref<18x256xf32, #tpu.memory_space<vmem>>, vector<1x256xf32>
    %307 = vector.broadcast %306 : vector<1x256xf32> to vector<128x256xf32>
    %308 = arith.mulf %305, %307 : vector<128x256xf32>
    %309 = arith.addf %303, %308 : vector<128x256xf32>
    %c640 = arith.constant 640 : index
    %c0_125 = arith.constant 0 : index
    %310 = vector.load %arg3[%c640, %c0_125] : memref<1152x128xf32, #tpu.memory_space<vmem>>, vector<128x128xf32>
    %cst_126 = arith.constant dense<0.000000e+00> : vector<128x256xf32>
    %311 = tpu.matmul %310, %278, %cst_126 {dimension_numbers = #tpu.dot_dimension_numbers<[1], [0], [0], [1], [0, 0, 1, 1], [], []>} : vector<128x128xf32>, vector<128x256xf32>, vector<128x256xf32> -> vector<128x256xf32>
    %c5 = arith.constant 5 : index
    %c0_127 = arith.constant 0 : index
    %312 = vector.load %arg26[%c5, %c0_127] : memref<18x256xf32, #tpu.memory_space<vmem>>, vector<1x256xf32>
    %313 = vector.broadcast %312 : vector<1x256xf32> to vector<128x256xf32>
    %314 = arith.mulf %311, %313 : vector<128x256xf32>
    %315 = arith.addf %309, %314 : vector<128x256xf32>
    %c768 = arith.constant 768 : index
    %c0_128 = arith.constant 0 : index
    %316 = vector.load %arg3[%c768, %c0_128] : memref<1152x128xf32, #tpu.memory_space<vmem>>, vector<128x128xf32>
    %cst_129 = arith.constant dense<0.000000e+00> : vector<128x256xf32>
    %317 = tpu.matmul %316, %278, %cst_129 {dimension_numbers = #tpu.dot_dimension_numbers<[1], [0], [0], [1], [0, 0, 1, 1], [], []>} : vector<128x128xf32>, vector<128x256xf32>, vector<128x256xf32> -> vector<128x256xf32>
    %c6 = arith.constant 6 : index
    %c0_130 = arith.constant 0 : index
    %318 = vector.load %arg26[%c6, %c0_130] : memref<18x256xf32, #tpu.memory_space<vmem>>, vector<1x256xf32>
    %319 = vector.broadcast %318 : vector<1x256xf32> to vector<128x256xf32>
    %320 = arith.mulf %317, %319 : vector<128x256xf32>
    %321 = arith.addf %315, %320 : vector<128x256xf32>
    %c896 = arith.constant 896 : index
    %c0_131 = arith.constant 0 : index
    %322 = vector.load %arg3[%c896, %c0_131] : memref<1152x128xf32, #tpu.memory_space<vmem>>, vector<128x128xf32>
    %cst_132 = arith.constant dense<0.000000e+00> : vector<128x256xf32>
    %323 = tpu.matmul %322, %278, %cst_132 {dimension_numbers = #tpu.dot_dimension_numbers<[1], [0], [0], [1], [0, 0, 1, 1], [], []>} : vector<128x128xf32>, vector<128x256xf32>, vector<128x256xf32> -> vector<128x256xf32>
    %c7 = arith.constant 7 : index
    %c0_133 = arith.constant 0 : index
    %324 = vector.load %arg26[%c7, %c0_133] : memref<18x256xf32, #tpu.memory_space<vmem>>, vector<1x256xf32>
    %325 = vector.broadcast %324 : vector<1x256xf32> to vector<128x256xf32>
    %326 = arith.mulf %323, %325 : vector<128x256xf32>
    %327 = arith.addf %321, %326 : vector<128x256xf32>
    %c1024 = arith.constant 1024 : index
    %c0_134 = arith.constant 0 : index
    %328 = vector.load %arg3[%c1024, %c0_134] : memref<1152x128xf32, #tpu.memory_space<vmem>>, vector<128x128xf32>
    %cst_135 = arith.constant dense<0.000000e+00> : vector<128x256xf32>
    %329 = tpu.matmul %328, %278, %cst_135 {dimension_numbers = #tpu.dot_dimension_numbers<[1], [0], [0], [1], [0, 0, 1, 1], [], []>} : vector<128x128xf32>, vector<128x256xf32>, vector<128x256xf32> -> vector<128x256xf32>
    %c8 = arith.constant 8 : index
    %c0_136 = arith.constant 0 : index
    %330 = vector.load %arg26[%c8, %c0_136] : memref<18x256xf32, #tpu.memory_space<vmem>>, vector<1x256xf32>
    %331 = vector.broadcast %330 : vector<1x256xf32> to vector<128x256xf32>
    %332 = arith.mulf %329, %331 : vector<128x256xf32>
    %333 = arith.addf %327, %332 : vector<128x256xf32>
    %c0_137 = arith.constant 0 : index
    %c0_138 = arith.constant 0 : index
    %334 = vector.load %arg27[%c0_137, %c0_138] : memref<2x256xf32, #tpu.memory_space<vmem>>, vector<1x256xf32>
    %335 = vector.broadcast %334 : vector<1x256xf32> to vector<128x256xf32>
    %336 = arith.addf %333, %335 : vector<128x256xf32>
    %cst_139 = arith.constant 5.000000e-01 : f32
    %337 = vector.broadcast %cst_139 : f32 to vector<128x256xf32>
    %338 = arith.mulf %337, %336 : vector<128x256xf32>
    %cst_140 = arith.constant 0.707106769 : f32
    %339 = vector.broadcast %cst_140 : f32 to vector<128x256xf32>
    %340 = arith.mulf %336, %339 : vector<128x256xf32>
    %341 = math.erf %340 : vector<128x256xf32>
    %cst_141 = arith.constant 1.000000e+00 : f32
    %342 = vector.broadcast %cst_141 : f32 to vector<128x256xf32>
    %343 = arith.addf %342, %341 : vector<128x256xf32>
    %344 = arith.mulf %338, %343 : vector<128x256xf32>
    %c0_142 = arith.constant 0 : index
    %c0_143 = arith.constant 0 : index
    %c0_144 = arith.constant 0 : index
    %345 = vector.load %arg28[%c0_142, %c0_143, %c0_144] : memref<2x256x64xbf16, #tpu.memory_space<vmem>>, vector<1x256x64xbf16>
    %346 = vector.shape_cast %345 : vector<1x256x64xbf16> to vector<256x64xbf16>
    %347 = arith.truncf %344 : vector<128x256xf32> to vector<128x256xbf16>
    %cst_145 = arith.constant dense<0.000000e+00> : vector<128x64xf32>
    %348 = tpu.matmul %347, %346, %cst_145 {dimension_numbers = #tpu.dot_dimension_numbers<[1], [0], [0], [1], [0, 0, 1, 1], [], []>} : vector<128x256xbf16>, vector<256x64xbf16>, vector<128x64xf32> -> vector<128x64xf32>
    %349 = arith.addf %247, %348 : vector<128x64xf32>
    %c0_146 = arith.constant 0 : index
    %c0_147 = arith.constant 0 : index
    %350 = vector.load %arg29[%c0_146, %c0_147] : memref<2x64xf32, #tpu.memory_space<vmem>>, vector<1x64xf32>
    %351 = vector.broadcast %350 : vector<1x64xf32> to vector<128x64xf32>
    %352 = arith.addf %349, %351 : vector<128x64xf32>
    %c1_148 = arith.constant 1 : index
    %c0_149 = arith.constant 0 : index
    %353 = vector.load %arg12[%c1_148, %c0_149] : memref<2x64xf32, #tpu.memory_space<vmem>>, vector<1x64xf32>
    %c1_150 = arith.constant 1 : index
    %c0_151 = arith.constant 0 : index
    %354 = vector.load %arg13[%c1_150, %c0_151] : memref<2x64xf32, #tpu.memory_space<vmem>>, vector<1x64xf32>
    %cst_152 = arith.constant dense<0.000000e+00> : vector<128xf32>
    %355 = vector.multi_reduction <add>, %352, %cst_152 [1] : vector<128x64xf32> to vector<128xf32>
    %356 = vector.shape_cast %355 : vector<128xf32> to vector<128x1xf32>
    %cst_153 = arith.constant 6.400000e+01 : f32
    %357 = vector.broadcast %cst_153 : f32 to vector<128x1xf32>
    %358 = arith.divf %356, %357 : vector<128x1xf32>
    %359 = vector.broadcast %358 : vector<128x1xf32> to vector<128x64xf32>
    %360 = arith.subf %352, %359 : vector<128x64xf32>
    %361 = arith.mulf %360, %360 : vector<128x64xf32>
    %cst_154 = arith.constant dense<0.000000e+00> : vector<128xf32>
    %362 = vector.multi_reduction <add>, %361, %cst_154 [1] : vector<128x64xf32> to vector<128xf32>
    %363 = vector.shape_cast %362 : vector<128xf32> to vector<128x1xf32>
    %cst_155 = arith.constant 6.400000e+01 : f32
    %364 = vector.broadcast %cst_155 : f32 to vector<128x1xf32>
    %365 = arith.divf %363, %364 : vector<128x1xf32>
    %366 = vector.broadcast %358 : vector<128x1xf32> to vector<128x64xf32>
    %367 = arith.subf %352, %366 : vector<128x64xf32>
    %cst_156 = arith.constant 9.99999974E-6 : f32
    %368 = vector.broadcast %cst_156 : f32 to vector<128x1xf32>
    %369 = arith.addf %365, %368 : vector<128x1xf32>
    %370 = math.rsqrt %369 : vector<128x1xf32>
    %371 = vector.broadcast %370 : vector<128x1xf32> to vector<128x64xf32>
    %372 = arith.mulf %367, %371 : vector<128x64xf32>
    %373 = vector.broadcast %353 : vector<1x64xf32> to vector<128x64xf32>
    %374 = arith.mulf %372, %373 : vector<128x64xf32>
    %375 = vector.broadcast %354 : vector<1x64xf32> to vector<128x64xf32>
    %376 = arith.addf %374, %375 : vector<128x64xf32>
    %c1_157 = arith.constant 1 : index
    %c0_158 = arith.constant 0 : index
    %c0_159 = arith.constant 0 : index
    %377 = vector.load %arg14[%c1_157, %c0_158, %c0_159] : memref<2x64x64xbf16, #tpu.memory_space<vmem>>, vector<1x64x64xbf16>
    %378 = vector.shape_cast %377 : vector<1x64x64xbf16> to vector<64x64xbf16>
    %379 = arith.truncf %376 : vector<128x64xf32> to vector<128x64xbf16>
    %cst_160 = arith.constant dense<0.000000e+00> : vector<128x64xf32>
    %380 = tpu.matmul %379, %378, %cst_160 {dimension_numbers = #tpu.dot_dimension_numbers<[1], [0], [0], [1], [0, 0, 1, 1], [], []>} : vector<128x64xbf16>, vector<64x64xbf16>, vector<128x64xf32> -> vector<128x64xf32>
    %c1_161 = arith.constant 1 : index
    %c0_162 = arith.constant 0 : index
    %c0_163 = arith.constant 0 : index
    %381 = vector.load %arg15[%c1_161, %c0_162, %c0_163] : memref<2x64x64xbf16, #tpu.memory_space<vmem>>, vector<1x64x64xbf16>
    %382 = vector.shape_cast %381 : vector<1x64x64xbf16> to vector<64x64xbf16>
    %383 = arith.truncf %376 : vector<128x64xf32> to vector<128x64xbf16>
    %cst_164 = arith.constant dense<0.000000e+00> : vector<128x64xf32>
    %384 = tpu.matmul %383, %382, %cst_164 {dimension_numbers = #tpu.dot_dimension_numbers<[1], [0], [0], [1], [0, 0, 1, 1], [], []>} : vector<128x64xbf16>, vector<64x64xbf16>, vector<128x64xf32> -> vector<128x64xf32>
    %c1_165 = arith.constant 1 : index
    %c0_166 = arith.constant 0 : index
    %c0_167 = arith.constant 0 : index
    %385 = vector.load %arg16[%c1_165, %c0_166, %c0_167] : memref<2x64x64xbf16, #tpu.memory_space<vmem>>, vector<1x64x64xbf16>
    %386 = vector.shape_cast %385 : vector<1x64x64xbf16> to vector<64x64xbf16>
    %387 = arith.truncf %376 : vector<128x64xf32> to vector<128x64xbf16>
    %cst_168 = arith.constant dense<0.000000e+00> : vector<128x64xf32>
    %388 = tpu.matmul %387, %386, %cst_168 {dimension_numbers = #tpu.dot_dimension_numbers<[1], [0], [0], [1], [0, 0, 1, 1], [], []>} : vector<128x64xbf16>, vector<64x64xbf16>, vector<128x64xf32> -> vector<128x64xf32>
    %389 = vector.extract_strided_slice %380 {offsets = [0, 0], sizes = [64, 64], strides = [1, 1]} : vector<128x64xf32> to vector<64x64xf32>
    %390 = vector.extract_strided_slice %384 {offsets = [0, 0], sizes = [64, 64], strides = [1, 1]} : vector<128x64xf32> to vector<64x64xf32>
    %391 = vector.extract_strided_slice %388 {offsets = [0, 0], sizes = [64, 64], strides = [1, 1]} : vector<128x64xf32> to vector<64x64xf32>
    %392 = arith.truncf %389 : vector<64x64xf32> to vector<64x64xbf16>
    %393 = arith.truncf %390 : vector<64x64xf32> to vector<64x64xbf16>
    %cst_169 = arith.constant dense<0.000000e+00> : vector<64x64xf32>
    %394 = tpu.matmul %392, %393, %cst_169 {dimension_numbers = #tpu.dot_dimension_numbers<[1], [1], [0], [0], [0, 0, 1, 0], [], []>} : vector<64x64xbf16>, vector<64x64xbf16>, vector<64x64xf32> -> vector<64x64xf32>
    %cst_170 = arith.constant 1.250000e-01 : f32
    %395 = vector.broadcast %cst_170 : f32 to vector<64x64xf32>
    %396 = arith.mulf %394, %395 : vector<64x64xf32>
    %cst_171 = arith.constant dense<0xFF800000> : vector<64xf32>
    %397 = vector.multi_reduction <maximumf>, %396, %cst_171 [1] : vector<64x64xf32> to vector<64xf32>
    %398 = vector.shape_cast %397 : vector<64xf32> to vector<64x1xf32>
    %399 = vector.broadcast %398 : vector<64x1xf32> to vector<64x64xf32>
    %400 = arith.subf %396, %399 : vector<64x64xf32>
    %401 = math.exp %400 : vector<64x64xf32>
    %cst_172 = arith.constant dense<0.000000e+00> : vector<64xf32>
    %402 = vector.multi_reduction <add>, %401, %cst_172 [1] : vector<64x64xf32> to vector<64xf32>
    %403 = vector.shape_cast %402 : vector<64xf32> to vector<64x1xf32>
    %404 = vector.broadcast %403 : vector<64x1xf32> to vector<64x64xf32>
    %405 = arith.divf %401, %404 : vector<64x64xf32>
    %406 = arith.truncf %405 : vector<64x64xf32> to vector<64x64xbf16>
    %407 = arith.truncf %391 : vector<64x64xf32> to vector<64x64xbf16>
    %cst_173 = arith.constant dense<0.000000e+00> : vector<64x64xf32>
    %408 = tpu.matmul %406, %407, %cst_173 {dimension_numbers = #tpu.dot_dimension_numbers<[1], [0], [0], [1], [0, 0, 1, 1], [], []>} : vector<64x64xbf16>, vector<64x64xbf16>, vector<64x64xf32> -> vector<64x64xf32>
    %409 = vector.extract_strided_slice %380 {offsets = [64, 0], sizes = [64, 64], strides = [1, 1]} : vector<128x64xf32> to vector<64x64xf32>
    %410 = vector.extract_strided_slice %384 {offsets = [64, 0], sizes = [64, 64], strides = [1, 1]} : vector<128x64xf32> to vector<64x64xf32>
    %411 = vector.extract_strided_slice %388 {offsets = [64, 0], sizes = [64, 64], strides = [1, 1]} : vector<128x64xf32> to vector<64x64xf32>
    %412 = arith.truncf %409 : vector<64x64xf32> to vector<64x64xbf16>
    %413 = arith.truncf %410 : vector<64x64xf32> to vector<64x64xbf16>
    %cst_174 = arith.constant dense<0.000000e+00> : vector<64x64xf32>
    %414 = tpu.matmul %412, %413, %cst_174 {dimension_numbers = #tpu.dot_dimension_numbers<[1], [1], [0], [0], [0, 0, 1, 0], [], []>} : vector<64x64xbf16>, vector<64x64xbf16>, vector<64x64xf32> -> vector<64x64xf32>
    %cst_175 = arith.constant 1.250000e-01 : f32
    %415 = vector.broadcast %cst_175 : f32 to vector<64x64xf32>
    %416 = arith.mulf %414, %415 : vector<64x64xf32>
    %cst_176 = arith.constant dense<0xFF800000> : vector<64xf32>
    %417 = vector.multi_reduction <maximumf>, %416, %cst_176 [1] : vector<64x64xf32> to vector<64xf32>
    %418 = vector.shape_cast %417 : vector<64xf32> to vector<64x1xf32>
    %419 = vector.broadcast %418 : vector<64x1xf32> to vector<64x64xf32>
    %420 = arith.subf %416, %419 : vector<64x64xf32>
    %421 = math.exp %420 : vector<64x64xf32>
    %cst_177 = arith.constant dense<0.000000e+00> : vector<64xf32>
    %422 = vector.multi_reduction <add>, %421, %cst_177 [1] : vector<64x64xf32> to vector<64xf32>
    %423 = vector.shape_cast %422 : vector<64xf32> to vector<64x1xf32>
    %424 = vector.broadcast %423 : vector<64x1xf32> to vector<64x64xf32>
    %425 = arith.divf %421, %424 : vector<64x64xf32>
    %426 = arith.truncf %425 : vector<64x64xf32> to vector<64x64xbf16>
    %427 = arith.truncf %411 : vector<64x64xf32> to vector<64x64xbf16>
    %cst_178 = arith.constant dense<0.000000e+00> : vector<64x64xf32>
    %428 = tpu.matmul %426, %427, %cst_178 {dimension_numbers = #tpu.dot_dimension_numbers<[1], [0], [0], [1], [0, 0, 1, 1], [], []>} : vector<64x64xbf16>, vector<64x64xbf16>, vector<64x64xf32> -> vector<64x64xf32>
    %429 = tpu.concatenate %408, %428 in 0 : vector<64x64xf32>, vector<64x64xf32> -> vector<128x64xf32>
    %430 = arith.addf %352, %429 : vector<128x64xf32>
    %c1_179 = arith.constant 1 : index
    %c0_180 = arith.constant 0 : index
    %431 = vector.load %arg17[%c1_179, %c0_180] : memref<2x64xf32, #tpu.memory_space<vmem>>, vector<1x64xf32>
    %c1_181 = arith.constant 1 : index
    %c0_182 = arith.constant 0 : index
    %432 = vector.load %arg18[%c1_181, %c0_182] : memref<2x64xf32, #tpu.memory_space<vmem>>, vector<1x64xf32>
    %cst_183 = arith.constant dense<0.000000e+00> : vector<128xf32>
    %433 = vector.multi_reduction <add>, %430, %cst_183 [1] : vector<128x64xf32> to vector<128xf32>
    %434 = vector.shape_cast %433 : vector<128xf32> to vector<128x1xf32>
    %cst_184 = arith.constant 6.400000e+01 : f32
    %435 = vector.broadcast %cst_184 : f32 to vector<128x1xf32>
    %436 = arith.divf %434, %435 : vector<128x1xf32>
    %437 = vector.broadcast %436 : vector<128x1xf32> to vector<128x64xf32>
    %438 = arith.subf %430, %437 : vector<128x64xf32>
    %439 = arith.mulf %438, %438 : vector<128x64xf32>
    %cst_185 = arith.constant dense<0.000000e+00> : vector<128xf32>
    %440 = vector.multi_reduction <add>, %439, %cst_185 [1] : vector<128x64xf32> to vector<128xf32>
    %441 = vector.shape_cast %440 : vector<128xf32> to vector<128x1xf32>
    %cst_186 = arith.constant 6.400000e+01 : f32
    %442 = vector.broadcast %cst_186 : f32 to vector<128x1xf32>
    %443 = arith.divf %441, %442 : vector<128x1xf32>
    %444 = vector.broadcast %436 : vector<128x1xf32> to vector<128x64xf32>
    %445 = arith.subf %430, %444 : vector<128x64xf32>
    %cst_187 = arith.constant 9.99999974E-6 : f32
    %446 = vector.broadcast %cst_187 : f32 to vector<128x1xf32>
    %447 = arith.addf %443, %446 : vector<128x1xf32>
    %448 = math.rsqrt %447 : vector<128x1xf32>
    %449 = vector.broadcast %448 : vector<128x1xf32> to vector<128x64xf32>
    %450 = arith.mulf %445, %449 : vector<128x64xf32>
    %451 = vector.broadcast %431 : vector<1x64xf32> to vector<128x64xf32>
    %452 = arith.mulf %450, %451 : vector<128x64xf32>
    %453 = vector.broadcast %432 : vector<1x64xf32> to vector<128x64xf32>
    %454 = arith.addf %452, %453 : vector<128x64xf32>
    %c1_188 = arith.constant 1 : index
    %c0_189 = arith.constant 0 : index
    %c0_190 = arith.constant 0 : index
    %455 = vector.load %arg19[%c1_188, %c0_189, %c0_190] : memref<2x64x64xbf16, #tpu.memory_space<vmem>>, vector<1x64x64xbf16>
    %456 = vector.shape_cast %455 : vector<1x64x64xbf16> to vector<64x64xbf16>
    %457 = arith.truncf %454 : vector<128x64xf32> to vector<128x64xbf16>
    %cst_191 = arith.constant dense<0.000000e+00> : vector<128x64xf32>
    %458 = tpu.matmul %457, %456, %cst_191 {dimension_numbers = #tpu.dot_dimension_numbers<[1], [0], [0], [1], [0, 0, 1, 1], [], []>} : vector<128x64xbf16>, vector<64x64xbf16>, vector<128x64xf32> -> vector<128x64xf32>
    %c1_192 = arith.constant 1 : index
    %c0_193 = arith.constant 0 : index
    %c0_194 = arith.constant 0 : index
    %459 = vector.load %arg20[%c1_192, %c0_193, %c0_194] : memref<2x64x64xbf16, #tpu.memory_space<vmem>>, vector<1x64x64xbf16>
    %460 = vector.shape_cast %459 : vector<1x64x64xbf16> to vector<64x64xbf16>
    %461 = arith.truncf %63 : vector<4x64xf32> to vector<4x64xbf16>
    %cst_195 = arith.constant dense<0.000000e+00> : vector<4x64xf32>
    %462 = tpu.matmul %461, %460, %cst_195 {dimension_numbers = #tpu.dot_dimension_numbers<[1], [0], [0], [1], [0, 0, 1, 1], [], []>} : vector<4x64xbf16>, vector<64x64xbf16>, vector<4x64xf32> -> vector<4x64xf32>
    %c1_196 = arith.constant 1 : index
    %c0_197 = arith.constant 0 : index
    %c0_198 = arith.constant 0 : index
    %463 = vector.load %arg21[%c1_196, %c0_197, %c0_198] : memref<2x64x64xbf16, #tpu.memory_space<vmem>>, vector<1x64x64xbf16>
    %464 = vector.shape_cast %463 : vector<1x64x64xbf16> to vector<64x64xbf16>
    %465 = arith.truncf %63 : vector<4x64xf32> to vector<4x64xbf16>
    %cst_199 = arith.constant dense<0.000000e+00> : vector<4x64xf32>
    %466 = tpu.matmul %465, %464, %cst_199 {dimension_numbers = #tpu.dot_dimension_numbers<[1], [0], [0], [1], [0, 0, 1, 1], [], []>} : vector<4x64xbf16>, vector<64x64xbf16>, vector<4x64xf32> -> vector<4x64xf32>
    %467 = vector.extract_strided_slice %458 {offsets = [0, 0], sizes = [64, 64], strides = [1, 1]} : vector<128x64xf32> to vector<64x64xf32>
    %468 = vector.extract_strided_slice %462 {offsets = [0, 0], sizes = [2, 64], strides = [1, 1]} : vector<4x64xf32> to vector<2x64xf32>
    %469 = vector.extract_strided_slice %466 {offsets = [0, 0], sizes = [2, 64], strides = [1, 1]} : vector<4x64xf32> to vector<2x64xf32>
    %470 = vector.extract_strided_slice %468 {offsets = [0, 0], sizes = [1, 64], strides = [1, 1]} : vector<2x64xf32> to vector<1x64xf32>
    %471 = vector.broadcast %470 : vector<1x64xf32> to vector<64x64xf32>
    %472 = arith.mulf %467, %471 : vector<64x64xf32>
    %cst_200 = arith.constant dense<0.000000e+00> : vector<64xf32>
    %473 = vector.multi_reduction <add>, %472, %cst_200 [1] : vector<64x64xf32> to vector<64xf32>
    %474 = vector.shape_cast %473 : vector<64xf32> to vector<64x1xf32>
    %cst_201 = arith.constant 1.250000e-01 : f32
    %475 = vector.broadcast %cst_201 : f32 to vector<64x1xf32>
    %476 = arith.mulf %474, %475 : vector<64x1xf32>
    %477 = vector.extract_strided_slice %468 {offsets = [1, 0], sizes = [1, 64], strides = [1, 1]} : vector<2x64xf32> to vector<1x64xf32>
    %478 = vector.broadcast %477 : vector<1x64xf32> to vector<64x64xf32>
    %479 = arith.mulf %467, %478 : vector<64x64xf32>
    %cst_202 = arith.constant dense<0.000000e+00> : vector<64xf32>
    %480 = vector.multi_reduction <add>, %479, %cst_202 [1] : vector<64x64xf32> to vector<64xf32>
    %481 = vector.shape_cast %480 : vector<64xf32> to vector<64x1xf32>
    %cst_203 = arith.constant 1.250000e-01 : f32
    %482 = vector.broadcast %cst_203 : f32 to vector<64x1xf32>
    %483 = arith.mulf %481, %482 : vector<64x1xf32>
    %484 = arith.maximumf %476, %483 : vector<64x1xf32>
    %485 = arith.subf %476, %484 : vector<64x1xf32>
    %486 = math.exp %485 : vector<64x1xf32>
    %487 = arith.subf %483, %484 : vector<64x1xf32>
    %488 = math.exp %487 : vector<64x1xf32>
    %489 = vector.extract_strided_slice %469 {offsets = [0, 0], sizes = [1, 64], strides = [1, 1]} : vector<2x64xf32> to vector<1x64xf32>
    %490 = vector.broadcast %486 : vector<64x1xf32> to vector<64x64xf32>
    %491 = vector.broadcast %489 : vector<1x64xf32> to vector<64x64xf32>
    %492 = arith.mulf %490, %491 : vector<64x64xf32>
    %493 = vector.extract_strided_slice %469 {offsets = [1, 0], sizes = [1, 64], strides = [1, 1]} : vector<2x64xf32> to vector<1x64xf32>
    %494 = vector.broadcast %488 : vector<64x1xf32> to vector<64x64xf32>
    %495 = vector.broadcast %493 : vector<1x64xf32> to vector<64x64xf32>
    %496 = arith.mulf %494, %495 : vector<64x64xf32>
    %497 = arith.addf %492, %496 : vector<64x64xf32>
    %498 = arith.addf %486, %488 : vector<64x1xf32>
    %499 = vector.broadcast %498 : vector<64x1xf32> to vector<64x64xf32>
    %500 = arith.divf %497, %499 : vector<64x64xf32>
    %501 = vector.extract_strided_slice %458 {offsets = [64, 0], sizes = [64, 64], strides = [1, 1]} : vector<128x64xf32> to vector<64x64xf32>
    %502 = vector.extract_strided_slice %462 {offsets = [2, 0], sizes = [2, 64], strides = [1, 1]} : vector<4x64xf32> to vector<2x64xf32>
    %503 = vector.extract_strided_slice %466 {offsets = [2, 0], sizes = [2, 64], strides = [1, 1]} : vector<4x64xf32> to vector<2x64xf32>
    %504 = vector.extract_strided_slice %502 {offsets = [0, 0], sizes = [1, 64], strides = [1, 1]} : vector<2x64xf32> to vector<1x64xf32>
    %505 = vector.broadcast %504 : vector<1x64xf32> to vector<64x64xf32>
    %506 = arith.mulf %501, %505 : vector<64x64xf32>
    %cst_204 = arith.constant dense<0.000000e+00> : vector<64xf32>
    %507 = vector.multi_reduction <add>, %506, %cst_204 [1] : vector<64x64xf32> to vector<64xf32>
    %508 = vector.shape_cast %507 : vector<64xf32> to vector<64x1xf32>
    %cst_205 = arith.constant 1.250000e-01 : f32
    %509 = vector.broadcast %cst_205 : f32 to vector<64x1xf32>
    %510 = arith.mulf %508, %509 : vector<64x1xf32>
    %511 = vector.extract_strided_slice %502 {offsets = [1, 0], sizes = [1, 64], strides = [1, 1]} : vector<2x64xf32> to vector<1x64xf32>
    %512 = vector.broadcast %511 : vector<1x64xf32> to vector<64x64xf32>
    %513 = arith.mulf %501, %512 : vector<64x64xf32>
    %cst_206 = arith.constant dense<0.000000e+00> : vector<64xf32>
    %514 = vector.multi_reduction <add>, %513, %cst_206 [1] : vector<64x64xf32> to vector<64xf32>
    %515 = vector.shape_cast %514 : vector<64xf32> to vector<64x1xf32>
    %cst_207 = arith.constant 1.250000e-01 : f32
    %516 = vector.broadcast %cst_207 : f32 to vector<64x1xf32>
    %517 = arith.mulf %515, %516 : vector<64x1xf32>
    %518 = arith.maximumf %510, %517 : vector<64x1xf32>
    %519 = arith.subf %510, %518 : vector<64x1xf32>
    %520 = math.exp %519 : vector<64x1xf32>
    %521 = arith.subf %517, %518 : vector<64x1xf32>
    %522 = math.exp %521 : vector<64x1xf32>
    %523 = vector.extract_strided_slice %503 {offsets = [0, 0], sizes = [1, 64], strides = [1, 1]} : vector<2x64xf32> to vector<1x64xf32>
    %524 = vector.broadcast %520 : vector<64x1xf32> to vector<64x64xf32>
    %525 = vector.broadcast %523 : vector<1x64xf32> to vector<64x64xf32>
    %526 = arith.mulf %524, %525 : vector<64x64xf32>
    %527 = vector.extract_strided_slice %503 {offsets = [1, 0], sizes = [1, 64], strides = [1, 1]} : vector<2x64xf32> to vector<1x64xf32>
    %528 = vector.broadcast %522 : vector<64x1xf32> to vector<64x64xf32>
    %529 = vector.broadcast %527 : vector<1x64xf32> to vector<64x64xf32>
    %530 = arith.mulf %528, %529 : vector<64x64xf32>
    %531 = arith.addf %526, %530 : vector<64x64xf32>
    %532 = arith.addf %520, %522 : vector<64x1xf32>
    %533 = vector.broadcast %532 : vector<64x1xf32> to vector<64x64xf32>
    %534 = arith.divf %531, %533 : vector<64x64xf32>
    %535 = tpu.concatenate %500, %534 in 0 : vector<64x64xf32>, vector<64x64xf32> -> vector<128x64xf32>
    %536 = arith.addf %430, %535 : vector<128x64xf32>
    %c1_208 = arith.constant 1 : index
    %c0_209 = arith.constant 0 : index
    %537 = vector.load %arg22[%c1_208, %c0_209] : memref<2x64xf32, #tpu.memory_space<vmem>>, vector<1x64xf32>
    %c1_210 = arith.constant 1 : index
    %c0_211 = arith.constant 0 : index
    %538 = vector.load %arg23[%c1_210, %c0_211] : memref<2x64xf32, #tpu.memory_space<vmem>>, vector<1x64xf32>
    %cst_212 = arith.constant dense<0.000000e+00> : vector<128xf32>
    %539 = vector.multi_reduction <add>, %536, %cst_212 [1] : vector<128x64xf32> to vector<128xf32>
    %540 = vector.shape_cast %539 : vector<128xf32> to vector<128x1xf32>
    %cst_213 = arith.constant 6.400000e+01 : f32
    %541 = vector.broadcast %cst_213 : f32 to vector<128x1xf32>
    %542 = arith.divf %540, %541 : vector<128x1xf32>
    %543 = vector.broadcast %542 : vector<128x1xf32> to vector<128x64xf32>
    %544 = arith.subf %536, %543 : vector<128x64xf32>
    %545 = arith.mulf %544, %544 : vector<128x64xf32>
    %cst_214 = arith.constant dense<0.000000e+00> : vector<128xf32>
    %546 = vector.multi_reduction <add>, %545, %cst_214 [1] : vector<128x64xf32> to vector<128xf32>
    %547 = vector.shape_cast %546 : vector<128xf32> to vector<128x1xf32>
    %cst_215 = arith.constant 6.400000e+01 : f32
    %548 = vector.broadcast %cst_215 : f32 to vector<128x1xf32>
    %549 = arith.divf %547, %548 : vector<128x1xf32>
    %550 = vector.broadcast %542 : vector<128x1xf32> to vector<128x64xf32>
    %551 = arith.subf %536, %550 : vector<128x64xf32>
    %cst_216 = arith.constant 9.99999974E-6 : f32
    %552 = vector.broadcast %cst_216 : f32 to vector<128x1xf32>
    %553 = arith.addf %549, %552 : vector<128x1xf32>
    %554 = math.rsqrt %553 : vector<128x1xf32>
    %555 = vector.broadcast %554 : vector<128x1xf32> to vector<128x64xf32>
    %556 = arith.mulf %551, %555 : vector<128x64xf32>
    %557 = vector.broadcast %537 : vector<1x64xf32> to vector<128x64xf32>
    %558 = arith.mulf %556, %557 : vector<128x64xf32>
    %559 = vector.broadcast %538 : vector<1x64xf32> to vector<128x64xf32>
    %560 = arith.addf %558, %559 : vector<128x64xf32>
    %c1_217 = arith.constant 1 : index
    %c0_218 = arith.constant 0 : index
    %c0_219 = arith.constant 0 : index
    %561 = vector.load %arg24[%c1_217, %c0_218, %c0_219] : memref<2x64x256xbf16, #tpu.memory_space<vmem>>, vector<1x64x256xbf16>
    %562 = vector.shape_cast %561 : vector<1x64x256xbf16> to vector<64x256xbf16>
    %563 = arith.truncf %560 : vector<128x64xf32> to vector<128x64xbf16>
    %cst_220 = arith.constant dense<0.000000e+00> : vector<128x256xf32>
    %564 = tpu.matmul %563, %562, %cst_220 {dimension_numbers = #tpu.dot_dimension_numbers<[1], [0], [0], [1], [0, 0, 1, 1], [], []>} : vector<128x64xbf16>, vector<64x256xbf16>, vector<128x256xf32> -> vector<128x256xf32>
    %c1_221 = arith.constant 1 : index
    %c0_222 = arith.constant 0 : index
    %565 = vector.load %arg25[%c1_221, %c0_222] : memref<2x256xf32, #tpu.memory_space<vmem>>, vector<1x256xf32>
    %566 = vector.broadcast %565 : vector<1x256xf32> to vector<128x256xf32>
    %567 = arith.addf %564, %566 : vector<128x256xf32>
    %cst_223 = arith.constant 0.000000e+00 : f32
    %568 = vector.broadcast %cst_223 : f32 to vector<128x256xf32>
    %c0_224 = arith.constant 0 : index
    %c0_225 = arith.constant 0 : index
    %569 = vector.load %arg3[%c0_224, %c0_225] : memref<1152x128xf32, #tpu.memory_space<vmem>>, vector<128x128xf32>
    %cst_226 = arith.constant dense<0.000000e+00> : vector<128x256xf32>
    %570 = tpu.matmul %569, %567, %cst_226 {dimension_numbers = #tpu.dot_dimension_numbers<[1], [0], [0], [1], [0, 0, 1, 1], [], []>} : vector<128x128xf32>, vector<128x256xf32>, vector<128x256xf32> -> vector<128x256xf32>
    %c9 = arith.constant 9 : index
    %c0_227 = arith.constant 0 : index
    %571 = vector.load %arg26[%c9, %c0_227] : memref<18x256xf32, #tpu.memory_space<vmem>>, vector<1x256xf32>
    %572 = vector.broadcast %571 : vector<1x256xf32> to vector<128x256xf32>
    %573 = arith.mulf %570, %572 : vector<128x256xf32>
    %574 = arith.addf %568, %573 : vector<128x256xf32>
    %c128_228 = arith.constant 128 : index
    %c0_229 = arith.constant 0 : index
    %575 = vector.load %arg3[%c128_228, %c0_229] : memref<1152x128xf32, #tpu.memory_space<vmem>>, vector<128x128xf32>
    %cst_230 = arith.constant dense<0.000000e+00> : vector<128x256xf32>
    %576 = tpu.matmul %575, %567, %cst_230 {dimension_numbers = #tpu.dot_dimension_numbers<[1], [0], [0], [1], [0, 0, 1, 1], [], []>} : vector<128x128xf32>, vector<128x256xf32>, vector<128x256xf32> -> vector<128x256xf32>
    %c10 = arith.constant 10 : index
    %c0_231 = arith.constant 0 : index
    %577 = vector.load %arg26[%c10, %c0_231] : memref<18x256xf32, #tpu.memory_space<vmem>>, vector<1x256xf32>
    %578 = vector.broadcast %577 : vector<1x256xf32> to vector<128x256xf32>
    %579 = arith.mulf %576, %578 : vector<128x256xf32>
    %580 = arith.addf %574, %579 : vector<128x256xf32>
    %c256_232 = arith.constant 256 : index
    %c0_233 = arith.constant 0 : index
    %581 = vector.load %arg3[%c256_232, %c0_233] : memref<1152x128xf32, #tpu.memory_space<vmem>>, vector<128x128xf32>
    %cst_234 = arith.constant dense<0.000000e+00> : vector<128x256xf32>
    %582 = tpu.matmul %581, %567, %cst_234 {dimension_numbers = #tpu.dot_dimension_numbers<[1], [0], [0], [1], [0, 0, 1, 1], [], []>} : vector<128x128xf32>, vector<128x256xf32>, vector<128x256xf32> -> vector<128x256xf32>
    %c11 = arith.constant 11 : index
    %c0_235 = arith.constant 0 : index
    %583 = vector.load %arg26[%c11, %c0_235] : memref<18x256xf32, #tpu.memory_space<vmem>>, vector<1x256xf32>
    %584 = vector.broadcast %583 : vector<1x256xf32> to vector<128x256xf32>
    %585 = arith.mulf %582, %584 : vector<128x256xf32>
    %586 = arith.addf %580, %585 : vector<128x256xf32>
    %c384_236 = arith.constant 384 : index
    %c0_237 = arith.constant 0 : index
    %587 = vector.load %arg3[%c384_236, %c0_237] : memref<1152x128xf32, #tpu.memory_space<vmem>>, vector<128x128xf32>
    %cst_238 = arith.constant dense<0.000000e+00> : vector<128x256xf32>
    %588 = tpu.matmul %587, %567, %cst_238 {dimension_numbers = #tpu.dot_dimension_numbers<[1], [0], [0], [1], [0, 0, 1, 1], [], []>} : vector<128x128xf32>, vector<128x256xf32>, vector<128x256xf32> -> vector<128x256xf32>
    %c12 = arith.constant 12 : index
    %c0_239 = arith.constant 0 : index
    %589 = vector.load %arg26[%c12, %c0_239] : memref<18x256xf32, #tpu.memory_space<vmem>>, vector<1x256xf32>
    %590 = vector.broadcast %589 : vector<1x256xf32> to vector<128x256xf32>
    %591 = arith.mulf %588, %590 : vector<128x256xf32>
    %592 = arith.addf %586, %591 : vector<128x256xf32>
    %c512_240 = arith.constant 512 : index
    %c0_241 = arith.constant 0 : index
    %593 = vector.load %arg3[%c512_240, %c0_241] : memref<1152x128xf32, #tpu.memory_space<vmem>>, vector<128x128xf32>
    %cst_242 = arith.constant dense<0.000000e+00> : vector<128x256xf32>
    %594 = tpu.matmul %593, %567, %cst_242 {dimension_numbers = #tpu.dot_dimension_numbers<[1], [0], [0], [1], [0, 0, 1, 1], [], []>} : vector<128x128xf32>, vector<128x256xf32>, vector<128x256xf32> -> vector<128x256xf32>
    %c13 = arith.constant 13 : index
    %c0_243 = arith.constant 0 : index
    %595 = vector.load %arg26[%c13, %c0_243] : memref<18x256xf32, #tpu.memory_space<vmem>>, vector<1x256xf32>
    %596 = vector.broadcast %595 : vector<1x256xf32> to vector<128x256xf32>
    %597 = arith.mulf %594, %596 : vector<128x256xf32>
    %598 = arith.addf %592, %597 : vector<128x256xf32>
    %c640_244 = arith.constant 640 : index
    %c0_245 = arith.constant 0 : index
    %599 = vector.load %arg3[%c640_244, %c0_245] : memref<1152x128xf32, #tpu.memory_space<vmem>>, vector<128x128xf32>
    %cst_246 = arith.constant dense<0.000000e+00> : vector<128x256xf32>
    %600 = tpu.matmul %599, %567, %cst_246 {dimension_numbers = #tpu.dot_dimension_numbers<[1], [0], [0], [1], [0, 0, 1, 1], [], []>} : vector<128x128xf32>, vector<128x256xf32>, vector<128x256xf32> -> vector<128x256xf32>
    %c14 = arith.constant 14 : index
    %c0_247 = arith.constant 0 : index
    %601 = vector.load %arg26[%c14, %c0_247] : memref<18x256xf32, #tpu.memory_space<vmem>>, vector<1x256xf32>
    %602 = vector.broadcast %601 : vector<1x256xf32> to vector<128x256xf32>
    %603 = arith.mulf %600, %602 : vector<128x256xf32>
    %604 = arith.addf %598, %603 : vector<128x256xf32>
    %c768_248 = arith.constant 768 : index
    %c0_249 = arith.constant 0 : index
    %605 = vector.load %arg3[%c768_248, %c0_249] : memref<1152x128xf32, #tpu.memory_space<vmem>>, vector<128x128xf32>
    %cst_250 = arith.constant dense<0.000000e+00> : vector<128x256xf32>
    %606 = tpu.matmul %605, %567, %cst_250 {dimension_numbers = #tpu.dot_dimension_numbers<[1], [0], [0], [1], [0, 0, 1, 1], [], []>} : vector<128x128xf32>, vector<128x256xf32>, vector<128x256xf32> -> vector<128x256xf32>
    %c15 = arith.constant 15 : index
    %c0_251 = arith.constant 0 : index
    %607 = vector.load %arg26[%c15, %c0_251] : memref<18x256xf32, #tpu.memory_space<vmem>>, vector<1x256xf32>
    %608 = vector.broadcast %607 : vector<1x256xf32> to vector<128x256xf32>
    %609 = arith.mulf %606, %608 : vector<128x256xf32>
    %610 = arith.addf %604, %609 : vector<128x256xf32>
    %c896_252 = arith.constant 896 : index
    %c0_253 = arith.constant 0 : index
    %611 = vector.load %arg3[%c896_252, %c0_253] : memref<1152x128xf32, #tpu.memory_space<vmem>>, vector<128x128xf32>
    %cst_254 = arith.constant dense<0.000000e+00> : vector<128x256xf32>
    %612 = tpu.matmul %611, %567, %cst_254 {dimension_numbers = #tpu.dot_dimension_numbers<[1], [0], [0], [1], [0, 0, 1, 1], [], []>} : vector<128x128xf32>, vector<128x256xf32>, vector<128x256xf32> -> vector<128x256xf32>
    %c16 = arith.constant 16 : index
    %c0_255 = arith.constant 0 : index
    %613 = vector.load %arg26[%c16, %c0_255] : memref<18x256xf32, #tpu.memory_space<vmem>>, vector<1x256xf32>
    %614 = vector.broadcast %613 : vector<1x256xf32> to vector<128x256xf32>
    %615 = arith.mulf %612, %614 : vector<128x256xf32>
    %616 = arith.addf %610, %615 : vector<128x256xf32>
    %c1024_256 = arith.constant 1024 : index
    %c0_257 = arith.constant 0 : index
    %617 = vector.load %arg3[%c1024_256, %c0_257] : memref<1152x128xf32, #tpu.memory_space<vmem>>, vector<128x128xf32>
    %cst_258 = arith.constant dense<0.000000e+00> : vector<128x256xf32>
    %618 = tpu.matmul %617, %567, %cst_258 {dimension_numbers = #tpu.dot_dimension_numbers<[1], [0], [0], [1], [0, 0, 1, 1], [], []>} : vector<128x128xf32>, vector<128x256xf32>, vector<128x256xf32> -> vector<128x256xf32>
    %c17 = arith.constant 17 : index
    %c0_259 = arith.constant 0 : index
    %619 = vector.load %arg26[%c17, %c0_259] : memref<18x256xf32, #tpu.memory_space<vmem>>, vector<1x256xf32>
    %620 = vector.broadcast %619 : vector<1x256xf32> to vector<128x256xf32>
    %621 = arith.mulf %618, %620 : vector<128x256xf32>
    %622 = arith.addf %616, %621 : vector<128x256xf32>
    %c1_260 = arith.constant 1 : index
    %c0_261 = arith.constant 0 : index
    %623 = vector.load %arg27[%c1_260, %c0_261] : memref<2x256xf32, #tpu.memory_space<vmem>>, vector<1x256xf32>
    %624 = vector.broadcast %623 : vector<1x256xf32> to vector<128x256xf32>
    %625 = arith.addf %622, %624 : vector<128x256xf32>
    %cst_262 = arith.constant 5.000000e-01 : f32
    %626 = vector.broadcast %cst_262 : f32 to vector<128x256xf32>
    %627 = arith.mulf %626, %625 : vector<128x256xf32>
    %cst_263 = arith.constant 0.707106769 : f32
    %628 = vector.broadcast %cst_263 : f32 to vector<128x256xf32>
    %629 = arith.mulf %625, %628 : vector<128x256xf32>
    %630 = math.erf %629 : vector<128x256xf32>
    %cst_264 = arith.constant 1.000000e+00 : f32
    %631 = vector.broadcast %cst_264 : f32 to vector<128x256xf32>
    %632 = arith.addf %631, %630 : vector<128x256xf32>
    %633 = arith.mulf %627, %632 : vector<128x256xf32>
    %c1_265 = arith.constant 1 : index
    %c0_266 = arith.constant 0 : index
    %c0_267 = arith.constant 0 : index
    %634 = vector.load %arg28[%c1_265, %c0_266, %c0_267] : memref<2x256x64xbf16, #tpu.memory_space<vmem>>, vector<1x256x64xbf16>
    %635 = vector.shape_cast %634 : vector<1x256x64xbf16> to vector<256x64xbf16>
    %636 = arith.truncf %633 : vector<128x256xf32> to vector<128x256xbf16>
    %cst_268 = arith.constant dense<0.000000e+00> : vector<128x64xf32>
    %637 = tpu.matmul %636, %635, %cst_268 {dimension_numbers = #tpu.dot_dimension_numbers<[1], [0], [0], [1], [0, 0, 1, 1], [], []>} : vector<128x256xbf16>, vector<256x64xbf16>, vector<128x64xf32> -> vector<128x64xf32>
    %638 = arith.addf %536, %637 : vector<128x64xf32>
    %c1_269 = arith.constant 1 : index
    %c0_270 = arith.constant 0 : index
    %639 = vector.load %arg29[%c1_269, %c0_270] : memref<2x64xf32, #tpu.memory_space<vmem>>, vector<1x64xf32>
    %640 = vector.broadcast %639 : vector<1x64xf32> to vector<128x64xf32>
    %641 = arith.addf %638, %640 : vector<128x64xf32>
    %c0_271 = arith.constant 0 : index
    %c0_272 = arith.constant 0 : index
    %642 = vector.load %arg30[%c0_271, %c0_272] : memref<128x64xf32, #tpu.memory_space<vmem>>, vector<128x64xf32>
    tpu.vector_store %arg30[%c0_271, %c0_272], %641 {strides = array<i32>} : memref<128x64xf32, #tpu.memory_space<vmem>>, vector<128x64xf32>,
    return
  }
}

</mosaic_0001>

<llo_original>
// kernel: denoiser_forward.1
$region0: #{denoiser_forward.1}
  #allocation0 [shape = 'u32[]', space=smem, size = 0x4, offset = 0x4, fixed_abs, tag = 'smem constant byte address 0x4 - core index']
  #allocation1 [shape = 'u32[144,128]{1,0:T(1,128)}', space=vmem, size = 0x12000, scoped, tag = 'internal scratch']
  %s0 = inlined_call_operand.smem [shape: u32[31], index: -1, kind: input, shape index: {}]
  %s1 = sld [smem:[%s0]]
  %s2 = scalar_lea.smem %s0, 1
  %s3 = sld [smem:[%s2]]
  %s4 = scalar_lea.smem %s0, 2
  %s5 = sld [smem:[%s4]]
  %s6 = scalar_lea.smem %s0, 3
  %s7 = sld [smem:[%s6]]
  %s8 = scalar_lea.smem %s0, 4
  %s9 = sld [smem:[%s8]]
  %s10 = scalar_lea.smem %s0, 5
  %s11 = sld [smem:[%s10]]
  %s12 = scalar_lea.smem %s0, 6
  %s13 = sld [smem:[%s12]]
  %s14 = scalar_lea.smem %s0, 7
  %s15 = sld [smem:[%s14]]
  %s16 = scalar_lea.smem %s0, 8
  %s17 = sld [smem:[%s16]]
  %s18 = scalar_lea.smem %s0, 9
  %s19 = sld [smem:[%s18]]
  %s20 = scalar_lea.smem %s0, 10
  %s21 = sld [smem:[%s20]]
  %s22 = scalar_lea.smem %s0, 11
  %s23 = sld [smem:[%s22]]
  %s24 = scalar_lea.smem %s0, 12
  %s25 = sld [smem:[%s24]]
  %s26 = scalar_lea.smem %s0, 13
  %s27 = sld [smem:[%s26]]
  %s28 = scalar_lea.smem %s0, 14
  %s29 = sld [smem:[%s28]]
  %s30 = scalar_lea.smem %s0, 15
  %s31 = sld [smem:[%s30]]
  %s32 = scalar_lea.smem %s0, 16
  %s33 = sld [smem:[%s32]]
  %s34 = scalar_lea.smem %s0, 17
  %s35 = sld [smem:[%s34]]
  %s36 = scalar_lea.smem %s0, 18
  %s37 = sld [smem:[%s36]]
  %s38 = scalar_lea.smem %s0, 19
  %s39 = sld [smem:[%s38]]
  %s40 = scalar_lea.smem %s0, 20
  %s41 = sld [smem:[%s40]]
  %s42 = scalar_lea.smem %s0, 21
  %s43 = sld [smem:[%s42]]
  %s44 = scalar_lea.smem %s0, 22
  %s45 = sld [smem:[%s44]]
  %s46 = scalar_lea.smem %s0, 23
  %s47 = sld [smem:[%s46]]
  %s48 = scalar_lea.smem %s0, 24
  %s49 = sld [smem:[%s48]]
  %s50 = scalar_lea.smem %s0, 25
  %s51 = sld [smem:[%s50]]
  %s52 = scalar_lea.smem %s0, 26
  %s53 = sld [smem:[%s52]]
  %s54 = scalar_lea.smem %s0, 27
  %s55 = sld [smem:[%s54]]
  %s56 = scalar_lea.smem %s0, 28
  %s57 = sld [smem:[%s56]]
  %s58 = scalar_lea.smem %s0, 29
  %s59 = sld [smem:[%s58]]
  %s60 = scalar_lea.smem %s0, 30
  %s61 = sld [smem:[%s60]]
  %s62 = sld [smem:[#allocation0]]
  $region130: #{denoiser_forward.1} parent=0
    _
  %s64 = ssub.s32 1, %s62
  %s65 = scalar_select 0, %s64, %s62
  // Predicated region
  $region2: #{denoiser_forward.1} parent=0 // pred_check
    _
  $region3: #{denoiser_forward.1} parent=0 // pred_check_branch
    %67 = sbr.rel (0) target = $region5
  $region4: #{denoiser_forward.1} parent=0 // pred_region
    _
  $region5: #{denoiser_forward.1} parent=0 // pred_fallthru
    _
  // Predicated region
  $region6: #{denoiser_forward.1} parent=0 // pred_check
    _
  $region7: #{denoiser_forward.1} parent=0 // pred_check_branch
    %69 = sbr.rel (0) target = $region9
  $region8: #{denoiser_forward.1} parent=0 // pred_region
    _
  $region9: #{denoiser_forward.1} parent=0 // pred_fallthru
    _
  // Predicated region
  $region10: #{denoiser_forward.1} parent=0 // pred_check
    _
  $region11: #{denoiser_forward.1} parent=0 // pred_check_branch
    %71 = sbr.rel (0) target = $region13
  $region12: #{denoiser_forward.1} parent=0 // pred_region
    _
  $region13: #{denoiser_forward.1} parent=0 // pred_fallthru
    _
  // Predicated region
  $region14: #{denoiser_forward.1} parent=0 // pred_check
    _
  $region15: #{denoiser_forward.1} parent=0 // pred_check_branch
    %73 = sbr.rel (0) target = $region17
  $region16: #{denoiser_forward.1} parent=0 // pred_region
    _
  $region17: #{denoiser_forward.1} parent=0 // pred_fallthru
    _
  // Predicated region
  $region18: #{denoiser_forward.1} parent=0 // pred_check
    _
  $region19: #{denoiser_forward.1} parent=0 // pred_check_branch
    %75 = sbr.rel (0) target = $region21
  $region20: #{denoiser_forward.1} parent=0 // pred_region
    _
  $region21: #{denoiser_forward.1} parent=0 // pred_fallthru
    _
  // Predicated region
  $region22: #{denoiser_forward.1} parent=0 // pred_check
    _
  $region23: #{denoiser_forward.1} parent=0 // pred_check_branch
    %77 = sbr.rel (0) target = $region25
  $region24: #{denoiser_forward.1} parent=0 // pred_region
    _
  $region25: #{denoiser_forward.1} parent=0 // pred_fallthru
    _
  // Predicated region
  $region26: #{denoiser_forward.1} parent=0 // pred_check
    _
  $region27: #{denoiser_forward.1} parent=0 // pred_check_branch
    %79 = sbr.rel (0) target = $region29
  $region28: #{denoiser_forward.1} parent=0 // pred_region
    _
  $region29: #{denoiser_forward.1} parent=0 // pred_fallthru
    _
  // Predicated region
  $region30: #{denoiser_forward.1} parent=0 // pred_check
    _
  $region31: #{denoiser_forward.1} parent=0 // pred_check_branch
    %81 = sbr.rel (0) target = $region33
  $region32: #{denoiser_forward.1} parent=0 // pred_region
    _
  $region33: #{denoiser_forward.1} parent=0 // pred_fallthru
    _
  // Predicated region
  $region34: #{denoiser_forward.1} parent=0 // pred_check
    _
  $region35: #{denoiser_forward.1} parent=0 // pred_check_branch
    %83 = sbr.rel (0) target = $region37
  $region36: #{denoiser_forward.1} parent=0 // pred_region
    _
  $region37: #{denoiser_forward.1} parent=0 // pred_fallthru
    _
  // Predicated region
  $region38: #{denoiser_forward.1} parent=0 // pred_check
    _
  $region39: #{denoiser_forward.1} parent=0 // pred_check_branch
    %85 = sbr.rel (0) target = $region41
  $region40: #{denoiser_forward.1} parent=0 // pred_region
    _
  $region41: #{denoiser_forward.1} parent=0 // pred_fallthru
    _
  // Predicated region
  $region42: #{denoiser_forward.1} parent=0 // pred_check
    _
  $region43: #{denoiser_forward.1} parent=0 // pred_check_branch
    %87 = sbr.rel (0) target = $region45
  $region44: #{denoiser_forward.1} parent=0 // pred_region
    _
  $region45: #{denoiser_forward.1} parent=0 // pred_fallthru
    _
  // Predicated region
  $region46: #{denoiser_forward.1} parent=0 // pred_check
    _
  $region47: #{denoiser_forward.1} parent=0 // pred_check_branch
    %89 = sbr.rel (0) target = $region49
  $region48: #{denoiser_forward.1} parent=0 // pred_region
    _
  $region49: #{denoiser_forward.1} parent=0 // pred_fallthru
    _
  // Predicated region
  $region50: #{denoiser_forward.1} parent=0 // pred_check
    _
  $region51: #{denoiser_forward.1} parent=0 // pred_check_branch
    %91 = sbr.rel (0) target = $region53
  $region52: #{denoiser_forward.1} parent=0 // pred_region
    _
  $region53: #{denoiser_forward.1} parent=0 // pred_fallthru
    _
  // Predicated region
  $region54: #{denoiser_forward.1} parent=0 // pred_check
    _
  $region55: #{denoiser_forward.1} parent=0 // pred_check_branch
    %93 = sbr.rel (0) target = $region57
  $region56: #{denoiser_forward.1} parent=0 // pred_region
    _
  $region57: #{denoiser_forward.1} parent=0 // pred_fallthru
    _
  // Predicated region
  $region58: #{denoiser_forward.1} parent=0 // pred_check
    _
  $region59: #{denoiser_forward.1} parent=0 // pred_check_branch
    %95 = sbr.rel (0) target = $region61
  $region60: #{denoiser_forward.1} parent=0 // pred_region
    _
  $region61: #{denoiser_forward.1} parent=0 // pred_fallthru
    _
  // Predicated region
  $region62: #{denoiser_forward.1} parent=0 // pred_check
    _
  $region63: #{denoiser_forward.1} parent=0 // pred_check_branch
    %97 = sbr.rel (0) target = $region65
  $region64: #{denoiser_forward.1} parent=0 // pred_region
    _
  $region65: #{denoiser_forward.1} parent=0 // pred_fallthru
    _
  // Predicated region
  $region66: #{denoiser_forward.1} parent=0 // pred_check
    _
  $region67: #{denoiser_forward.1} parent=0 // pred_check_branch
    %99 = sbr.rel (0) target = $region69
  $region68: #{denoiser_forward.1} parent=0 // pred_region
    _
  $region69: #{denoiser_forward.1} parent=0 // pred_fallthru
    _
  // Predicated region
  $region70: #{denoiser_forward.1} parent=0 // pred_check
    _
  $region71: #{denoiser_forward.1} parent=0 // pred_check_branch
    %101 = sbr.rel (0) target = $region73
  $region72: #{denoiser_forward.1} parent=0 // pred_region
    _
  $region73: #{denoiser_forward.1} parent=0 // pred_fallthru
    _
  // Predicated region
  $region74: #{denoiser_forward.1} parent=0 // pred_check
    _
  $region75: #{denoiser_forward.1} parent=0 // pred_check_branch
    %103 = sbr.rel (0) target = $region77
  $region76: #{denoiser_forward.1} parent=0 // pred_region
    _
  $region77: #{denoiser_forward.1} parent=0 // pred_fallthru
    _
  // Predicated region
  $region78: #{denoiser_forward.1} parent=0 // pred_check
    _
  $region79: #{denoiser_forward.1} parent=0 // pred_check_branch
    %105 = sbr.rel (0) target = $region81
  $region80: #{denoiser_forward.1} parent=0 // pred_region
    _
  $region81: #{denoiser_forward.1} parent=0 // pred_fallthru
    _
  // Predicated region
  $region82: #{denoiser_forward.1} parent=0 // pred_check
    _
  $region83: #{denoiser_forward.1} parent=0 // pred_check_branch
    %107 = sbr.rel (0) target = $region85
  $region84: #{denoiser_forward.1} parent=0 // pred_region
    _
  $region85: #{denoiser_forward.1} parent=0 // pred_fallthru
    _
  // Predicated region
  $region86: #{denoiser_forward.1} parent=0 // pred_check
    _
  $region87: #{denoiser_forward.1} parent=0 // pred_check_branch
    %109 = sbr.rel (0) target = $region89
  $region88: #{denoiser_forward.1} parent=0 // pred_region
    _
  $region89: #{denoiser_forward.1} parent=0 // pred_fallthru
    _
  // Predicated region
  $region90: #{denoiser_forward.1} parent=0 // pred_check
    _
  $region91: #{denoiser_forward.1} parent=0 // pred_check_branch
    %111 = sbr.rel (0) target = $region93
  $region92: #{denoiser_forward.1} parent=0 // pred_region
    _
  $region93: #{denoiser_forward.1} parent=0 // pred_fallthru
    _
  // Predicated region
  $region94: #{denoiser_forward.1} parent=0 // pred_check
    _
  $region95: #{denoiser_forward.1} parent=0 // pred_check_branch
    %113 = sbr.rel (0) target = $region97
  $region96: #{denoiser_forward.1} parent=0 // pred_region
    _
  $region97: #{denoiser_forward.1} parent=0 // pred_fallthru
    _
  // Predicated region
  $region98: #{denoiser_forward.1} parent=0 // pred_check
    _
  $region99: #{denoiser_forward.1} parent=0 // pred_check_branch
    %115 = sbr.rel (0) target = $region101
  $region100: #{denoiser_forward.1} parent=0 // pred_region
    _
  $region101: #{denoiser_forward.1} parent=0 // pred_fallthru
    _
  // Predicated region
  $region102: #{denoiser_forward.1} parent=0 // pred_check
    _
  $region103: #{denoiser_forward.1} parent=0 // pred_check_branch
    %117 = sbr.rel (0) target = $region105
  $region104: #{denoiser_forward.1} parent=0 // pred_region
    _
  $region105: #{denoiser_forward.1} parent=0 // pred_fallthru
    _
  // Predicated region
  $region106: #{denoiser_forward.1} parent=0 // pred_check
    _
  $region107: #{denoiser_forward.1} parent=0 // pred_check_branch
    %119 = sbr.rel (0) target = $region109
  $region108: #{denoiser_forward.1} parent=0 // pred_region
    _
  $region109: #{denoiser_forward.1} parent=0 // pred_fallthru
    _
  // Predicated region
  $region110: #{denoiser_forward.1} parent=0 // pred_check
    _
  $region111: #{denoiser_forward.1} parent=0 // pred_check_branch
    %121 = sbr.rel (0) target = $region113
  $region112: #{denoiser_forward.1} parent=0 // pred_region
    _
  $region113: #{denoiser_forward.1} parent=0 // pred_fallthru
    _
  // Predicated region
  $region114: #{denoiser_forward.1} parent=0 // pred_check
    _
  $region115: #{denoiser_forward.1} parent=0 // pred_check_branch
    %123 = sbr.rel (0) target = $region117
  $region116: #{denoiser_forward.1} parent=0 // pred_region
    _
  $region117: #{denoiser_forward.1} parent=0 // pred_fallthru
    _
  // Predicated region
  $region118: #{denoiser_forward.1} parent=0 // pred_check
    _
  $region119: #{denoiser_forward.1} parent=0 // pred_check_branch
    %125 = sbr.rel (0) target = $region121
  $region120: #{denoiser_forward.1} parent=0 // pred_region
    _
  $region121: #{denoiser_forward.1} parent=0 // pred_fallthru
    _
  %v127 = vld [vmem:[%s1] sm:$0xff]
  %v128 = vld [vmem:[%s1 + $0x8] sm:$0xff]
  %v129 = vld [vmem:[%s1 + $0x10] sm:$0xff]
  %v130 = vld [vmem:[%s1 + $0x18] sm:$0xff]
  %v131 = vld [vmem:[%s1 + $0x20] sm:$0xff]
  %v132 = vld [vmem:[%s1 + $0x28] sm:$0xff]
  %v133 = vld [vmem:[%s1 + $0x30] sm:$0xff]
  %v134 = vld [vmem:[%s1 + $0x38] sm:$0xff]
  %v135 = vld [vmem:[%s1 + $0x40] sm:$0xff]
  %v136 = vld [vmem:[%s1 + $0x48] sm:$0xff]
  %v137 = vld [vmem:[%s1 + $0x50] sm:$0xff]
  %v138 = vld [vmem:[%s1 + $0x58] sm:$0xff]
  %v139 = vld [vmem:[%s1 + $0x60] sm:$0xff]
  %v140 = vld [vmem:[%s1 + $0x68] sm:$0xff]
  %v141 = vld [vmem:[%s1 + $0x70] sm:$0xff]
  %v142 = vld [vmem:[%s1 + $0x78] sm:$0xff]
  %v143 = vld [vmem:[%s9] sm:$0xf]
  %v144 = vld [vmem:[%s9 + $0x4] sm:$0xf]
  %v145 = vpack.c.bf16 %v128, %v127
  %v146 = vpack.c.bf16 %v130, %v129
  %v147 = vpack.c.bf16 %v132, %v131
  %v148 = vpack.c.bf16 %v134, %v133
  %v149 = vpack.c.bf16 %v136, %v135
  %v150 = vpack.c.bf16 %v138, %v137
  %v151 = vpack.c.bf16 %v140, %v139
  %v152 = vpack.c.bf16 %v142, %v141
  %v153 = vld [vmem:[%s11] sm:$0x1]
  %v155 = vlaneseq
  %v156 = vshrl.u32 %v155, 7
  %v157 = vsub.s32 0, %v156
  %v158 = vrot.slane %v153, %v157
  %v162 = vunpack.c.l.b16 %v143
  %v163 = vunpack.c.l.b16 %v144
  %v164 = vpack.c.b16 %v163, %v162
  %vm166 = vcmask 130048
  %v168 = vsel %vm166, %v145, 0
  %v171 = vsel %vm166, %v146, 0
  %v174 = vsel %vm166, %v147, 0
  %v177 = vsel %vm166, %v148, 0
  %v180 = vsel %vm166, %v149, 0
  %v183 = vsel %vm166, %v150, 0
  %v186 = vsel %vm166, %v151, 0
  %v189 = vsel %vm166, %v152, 0
  %191 = vmatprep.subr.bf16.mxu0 0
  %192 = vmatpush1.bf16.msra.mxu0 %v164
  %193 = vmatprep.subr.bf16.mxu0 0
  %194 = vmatpush1.bf16.msra.mxu0 0
  %195 = vmatprep.subr.bf16.mxu0 0
  %196 = vmatpush1.bf16.msra.mxu0 0
  %197 = vmatprep.subr.bf16.mxu0 0
  %198 = vmatpush1.bf16.msra.mxu0 0
  %199 = vmatprep.subr.bf16.mxu0 0
  %200 = vmatpush1.bf16.msra.mxu0 0
  %201 = vmatprep.subr.bf16.mxu0 0
  %202 = vmatpush1.bf16.msra.mxu0 0
  %203 = vmatprep.subr.bf16.mxu0 0
  %204 = vmatpush1.bf16.msra.mxu0 0
  %205 = vmatprep.subr.bf16.mxu0 0
  %206 = vmatpush1.bf16.msra.mxu0 0
  %207 = vmatprep.subr.bf16.mxu0 0
  %208 = vmatpush1.bf16.msra.mxu0 0
  %209 = vmatprep.subr.bf16.mxu0 0
  %210 = vmatpush1.bf16.msra.mxu0 0
  %211 = vmatprep.subr.bf16.mxu0 0
  %212 = vmatpush1.bf16.msra.mxu0 0
  %213 = vmatprep.subr.bf16.mxu0 0
  %214 = vmatpush1.bf16.msra.mxu0 0
  %215 = vmatprep.subr.bf16.mxu0 0
  %216 = vmatpush1.bf16.msra.mxu0 0
  %217 = vmatprep.subr.bf16.mxu0 0
  %218 = vmatpush1.bf16.msra.mxu0 0
  %219 = vmatprep.subr.bf16.mxu0 0
  %220 = vmatpush1.bf16.msra.mxu0 0
  %221 = vmatprep.subr.bf16.mxu0 0
  %222 = vmatpush1.bf16.msra.mxu0 0
  %223 = vmatprep.mubr.bf16.mxu0 0
  %224 = vmatmul.mubr.bf16.gmra.mrb[0].mxu0 %v168
  %v225 = vpop.f32.mrb[0].mxu0
  %v226 = vadd.f32 %v158, %v225
  %v227 = vpop.f32.mrb[0].mxu0
  %v228 = vpop.f32.mrb[0].mxu0
  %v229 = vadd.f32 %v158, %v228
  %v230 = vpop.f32.mrb[0].mxu0
  %231 = vmatprep.mubr.bf16.mxu0 0
  %232 = vmatmul.mubr.bf16.gmra.mrb[0].mxu0 %v171
  %v233 = vpop.f32.mrb[0].mxu0
  %v234 = vadd.f32 %v158, %v233
  %v235 = vpop.f32.mrb[0].mxu0
  %v236 = vpop.f32.mrb[0].mxu0
  %v237 = vadd.f32 %v158, %v236
  %v238 = vpop.f32.mrb[0].mxu0
  %239 = vmatprep.mubr.bf16.mxu0 0
  %240 = vmatmul.mubr.bf16.gmra.mrb[0].mxu0 %v174
  %v241 = vpop.f32.mrb[0].mxu0
  %v242 = vadd.f32 %v158, %v241
  %v243 = vpop.f32.mrb[0].mxu0
  %v244 = vpop.f32.mrb[0].mxu0
  %v245 = vadd.f32 %v158, %v244
  %v246 = vpop.f32.mrb[0].mxu0
  %247 = vmatprep.mubr.bf16.mxu0 0
  %248 = vmatmul.mubr.bf16.gmra.mrb[0].mxu0 %v177
  %v249 = vpop.f32.mrb[0].mxu0
  %v250 = vadd.f32 %v158, %v249
  %v251 = vpop.f32.mrb[0].mxu0
  %v252 = vpop.f32.mrb[0].mxu0
  %v253 = vadd.f32 %v158, %v252
  %v254 = vpop.f32.mrb[0].mxu0
  %255 = vmatprep.mubr.bf16.mxu0 0
  %256 = vmatmul.mubr.bf16.gmra.mrb[0].mxu0 %v180
  %v257 = vpop.f32.mrb[0].mxu0
  %v258 = vadd.f32 %v158, %v257
  %v259 = vpop.f32.mrb[0].mxu0
  %v260 = vpop.f32.mrb[0].mxu0
  %v261 = vadd.f32 %v158, %v260
  %v262 = vpop.f32.mrb[0].mxu0
  %263 = vmatprep.mubr.bf16.mxu0 0
  %264 = vmatmul.mubr.bf16.gmra.mrb[0].mxu0 %v183
  %v265 = vpop.f32.mrb[0].mxu0
  %v266 = vadd.f32 %v158, %v265
  %v267 = vpop.f32.mrb[0].mxu0
  %v268 = vpop.f32.mrb[0].mxu0
  %v269 = vadd.f32 %v158, %v268
  %v270 = vpop.f32.mrb[0].mxu0
  %271 = vmatprep.mubr.bf16.mxu0 0
  %272 = vmatmul.mubr.bf16.gmra.mrb[0].mxu0 %v186
  %v273 = vpop.f32.mrb[0].mxu0
  %v274 = vadd.f32 %v158, %v273
  %v275 = vpop.f32.mrb[0].mxu0
  %v276 = vpop.f32.mrb[0].mxu0
  %v277 = vadd.f32 %v158, %v276
  %v278 = vpop.f32.mrb[0].mxu0
  %279 = vmatprep.mubr.bf16.mxu0 0
  %280 = vmatmul.mubr.bf16.gmra.mrb[0].mxu0 %v189
  %v281 = vpop.f32.mrb[0].mxu0
  %v282 = vadd.f32 %v158, %v281
  %v283 = vpop.f32.mrb[0].mxu0
  %v284 = vpop.f32.mrb[0].mxu0
  %v285 = vadd.f32 %v158, %v284
  %v286 = vpop.f32.mrb[0].mxu0
  %287 = vdwg.mxu0
  %v288 = vld [vmem:[%s13] sm:$0x1]
  %v289 = vld [vmem:[%s15] sm:$0x1]
  %v290 = vsel %vm166, %v226, 0.0
  %291 = vadd.xlane.f32.xlu0 %v290
  %v292 = vpop.xlane.xlu0 %291
  %v293 = vsel %vm166, %v229, 0.0
  %294 = vadd.xlane.f32.xlu0 %v293
  %v295 = vpop.xlane.xlu0 %294
  %v296 = vsel %vm166, %v234, 0.0
  %297 = vadd.xlane.f32.xlu0 %v296
  %v298 = vpop.xlane.xlu0 %297
  %v299 = vsel %vm166, %v237, 0.0
  %300 = vadd.xlane.f32.xlu0 %v299
  %v301 = vpop.xlane.xlu0 %300
  %v302 = vsel %vm166, %v242, 0.0
  %303 = vadd.xlane.f32.xlu0 %v302
  %v304 = vpop.xlane.xlu0 %303
  %v305 = vsel %vm166, %v245, 0.0
  %306 = vadd.xlane.f32.xlu0 %v305
  %v307 = vpop.xlane.xlu0 %306
  %v308 = vsel %vm166, %v250, 0.0
  %309 = vadd.xlane.f32.xlu0 %v308
  %v310 = vpop.xlane.xlu0 %309
  %v311 = vsel %vm166, %v253, 0.0
  %312 = vadd.xlane.f32.xlu0 %v311
  %v313 = vpop.xlane.xlu0 %312
  %v314 = vsel %vm166, %v258, 0.0
  %315 = vadd.xlane.f32.xlu0 %v314
  %v316 = vpop.xlane.xlu0 %315
  %v317 = vsel %vm166, %v261, 0.0
  %318 = vadd.xlane.f32.xlu0 %v317
  %v319 = vpop.xlane.xlu0 %318
  %v320 = vsel %vm166, %v266, 0.0
  %321 = vadd.xlane.f32.xlu0 %v320
  %v322 = vpop.xlane.xlu0 %321
  %v323 = vsel %vm166, %v269, 0.0
  %324 = vadd.xlane.f32.xlu0 %v323
  %v325 = vpop.xlane.xlu0 %324
  %v326 = vsel %vm166, %v274, 0.0
  %327 = vadd.xlane.f32.xlu0 %v326
  %v328 = vpop.xlane.xlu0 %327
  %v329 = vsel %vm166, %v277, 0.0
  %330 = vadd.xlane.f32.xlu0 %v329
  %v331 = vpop.xlane.xlu0 %330
  %v332 = vsel %vm166, %v282, 0.0
  %333 = vadd.xlane.f32.xlu0 %v332
  %v334 = vpop.xlane.xlu0 %333
  %v335 = vsel %vm166, %v285, 0.0
  %336 = vadd.xlane.f32.xlu0 %v335
  %v337 = vpop.xlane.xlu0 %336
  %v338 = vrcp.pop 16.0
  %v339 = vmul.f32 %v292, %v338
  %v340 = vmul.f32 %v295, %v338
  %v341 = vmul.f32 %v298, %v338
  %v342 = vmul.f32 %v301, %v338
  %v343 = vmul.f32 %v304, %v338
  %v344 = vmul.f32 %v307, %v338
  %v345 = vmul.f32 %v310, %v338
  %v346 = vmul.f32 %v313, %v338
  %v347 = vmul.f32 %v316, %v338
  %v348 = vmul.f32 %v319, %v338
  %v349 = vmul.f32 %v322, %v338
  %v350 = vmul.f32 %v325, %v338
  %v351 = vmul.f32 %v328, %v338
  %v352 = vmul.f32 %v331, %v338
  %v353 = vmul.f32 %v334, %v338
  %v354 = vmul.f32 %v337, %v338
  %v355 = vsub.f32 %v226, %v339
  %v356 = vsub.f32 %v229, %v340
  %v357 = vsub.f32 %v234, %v341
  %v358 = vsub.f32 %v237, %v342
  %v359 = vsub.f32 %v242, %v343
  %v360 = vsub.f32 %v245, %v344
  %v361 = vsub.f32 %v250, %v345
  %v362 = vsub.f32 %v253, %v346
  %v363 = vsub.f32 %v258, %v347
  %v364 = vsub.f32 %v261, %v348
  %v365 = vsub.f32 %v266, %v349
  %v366 = vsub.f32 %v269, %v350
  %v367 = vsub.f32 %v274, %v351
  %v368 = vsub.f32 %v277, %v352
  %v369 = vsub.f32 %v282, %v353
  %v370 = vsub.f32 %v285, %v354
  %v371 = vmul.f32 %v355, %v355
  %v372 = vmul.f32 %v356, %v356
  %v373 = vmul.f32 %v357, %v357
  %v374 = vmul.f32 %v358, %v358
  %v375 = vmul.f32 %v359, %v359
  %v376 = vmul.f32 %v360, %v360
  %v377 = vmul.f32 %v361, %v361
  %v378 = vmul.f32 %v362, %v362
  %v379 = vmul.f32 %v363, %v363
  %v380 = vmul.f32 %v364, %v364
  %v381 = vmul.f32 %v365, %v365
  %v382 = vmul.f32 %v366, %v366
  %v383 = vmul.f32 %v367, %v367
  %v384 = vmul.f32 %v368, %v368
  %v385 = vmul.f32 %v369, %v369
  %v386 = vmul.f32 %v370, %v370
  %v387 = vsel %vm166, %v371, 0.0
  %388 = vadd.xlane.f32.xlu0 %v387
  %v389 = vpop.xlane.xlu0 %388
  %v390 = vsel %vm166, %v372, 0.0
  %391 = vadd.xlane.f32.xlu0 %v390
  %v392 = vpop.xlane.xlu0 %391
  %v393 = vsel %vm166, %v373, 0.0
  %394 = vadd.xlane.f32.xlu0 %v393
  %v395 = vpop.xlane.xlu0 %394
  %v396 = vsel %vm166, %v374, 0.0
  %397 = vadd.xlane.f32.xlu0 %v396
  %v398 = vpop.xlane.xlu0 %397
  %v399 = vsel %vm166, %v375, 0.0
  %400 = vadd.xlane.f32.xlu0 %v399
  %v401 = vpop.xlane.xlu0 %400
  %v402 = vsel %vm166, %v376, 0.0
  %403 = vadd.xlane.f32.xlu0 %v402
  %v404 = vpop.xlane.xlu0 %403
  %v405 = vsel %vm166, %v377, 0.0
  %406 = vadd.xlane.f32.xlu0 %v405
  %v407 = vpop.xlane.xlu0 %406
  %v408 = vsel %vm166, %v378, 0.0
  %409 = vadd.xlane.f32.xlu0 %v408
  %v410 = vpop.xlane.xlu0 %409
  %v411 = vsel %vm166, %v379, 0.0
  %412 = vadd.xlane.f32.xlu0 %v411
  %v413 = vpop.xlane.xlu0 %412
  %v414 = vsel %vm166, %v380, 0.0
  %415 = vadd.xlane.f32.xlu0 %v414
  %v416 = vpop.xlane.xlu0 %415
  %v417 = vsel %vm166, %v381, 0.0
  %418 = vadd.xlane.f32.xlu0 %v417
  %v419 = vpop.xlane.xlu0 %418
  %v420 = vsel %vm166, %v382, 0.0
  %421 = vadd.xlane.f32.xlu0 %v420
  %v422 = vpop.xlane.xlu0 %421
  %v423 = vsel %vm166, %v383, 0.0
  %424 = vadd.xlane.f32.xlu0 %v423
  %v425 = vpop.xlane.xlu0 %424
  %v426 = vsel %vm166, %v384, 0.0
  %427 = vadd.xlane.f32.xlu0 %v426
  %v428 = vpop.xlane.xlu0 %427
  %v429 = vsel %vm166, %v385, 0.0
  %430 = vadd.xlane.f32.xlu0 %v429
  %v431 = vpop.xlane.xlu0 %430
  %v432 = vsel %vm166, %v386, 0.0
  %433 = vadd.xlane.f32.xlu0 %v432
  %v434 = vpop.xlane.xlu0 %433
  %v435 = vmul.f32 %v389, %v338
  %v436 = vmul.f32 %v392, %v338
  %v437 = vmul.f32 %v395, %v338
  %v438 = vmul.f32 %v398, %v338
  %v439 = vmul.f32 %v401, %v338
  %v440 = vmul.f32 %v404, %v338
  %v441 = vmul.f32 %v407, %v338
  %v442 = vmul.f32 %v410, %v338
  %v443 = vmul.f32 %v413, %v338
  %v444 = vmul.f32 %v416, %v338
  %v445 = vmul.f32 %v419, %v338
  %v446 = vmul.f32 %v422, %v338
  %v447 = vmul.f32 %v425, %v338
  %v448 = vmul.f32 %v428, %v338
  %v449 = vmul.f32 %v431, %v338
  %v450 = vmul.f32 %v434, %v338
  %v451 = vadd.f32 %v435, 1e-05
  %v452 = vadd.f32 %v436, 1e-05
  %v453 = vadd.f32 %v437, 1e-05
  %v454 = vadd.f32 %v438, 1e-05
  %v455 = vadd.f32 %v439, 1e-05
  %v456 = vadd.f32 %v440, 1e-05
  %v457 = vadd.f32 %v441, 1e-05
  %v458 = vadd.f32 %v442, 1e-05
  %v459 = vadd.f32 %v443, 1e-05
  %v460 = vadd.f32 %v444, 1e-05
  %v461 = vadd.f32 %v445, 1e-05
  %v462 = vadd.f32 %v446, 1e-05
  %v463 = vadd.f32 %v447, 1e-05
  %v464 = vadd.f32 %v448, 1e-05
  %v465 = vadd.f32 %v449, 1e-05
  %v466 = vadd.f32 %v450, 1e-05
  %v467 = vrsqrt.pop %v451
  %v468 = vrsqrt.pop %v452
  %v469 = vrsqrt.pop %v453
  %v470 = vrsqrt.pop %v454
  %v471 = vrsqrt.pop %v455
  %v472 = vrsqrt.pop %v456
  %v473 = vrsqrt.pop %v457
  %v474 = vrsqrt.pop %v458
  %v475 = vrsqrt.pop %v459
  %v476 = vrsqrt.pop %v460
  %v477 = vrsqrt.pop %v461
  %v478 = vrsqrt.pop %v462
  %v479 = vrsqrt.pop %v463
  %v480 = vrsqrt.pop %v464
  %v481 = vrsqrt.pop %v465
  %v482 = vrsqrt.pop %v466
  %v483 = vmul.f32 %v355, %v467
  %v484 = vmul.f32 %v356, %v468
  %v485 = vmul.f32 %v357, %v469
  %v486 = vmul.f32 %v358, %v470
  %v487 = vmul.f32 %v359, %v471
  %v488 = vmul.f32 %v360, %v472
  %v489 = vmul.f32 %v361, %v473
  %v490 = vmul.f32 %v362, %v474
  %v491 = vmul.f32 %v363, %v475
  %v492 = vmul.f32 %v364, %v476
  %v493 = vmul.f32 %v365, %v477
  %v494 = vmul.f32 %v366, %v478
  %v495 = vmul.f32 %v367, %v479
  %v496 = vmul.f32 %v368, %v480
  %v497 = vmul.f32 %v369, %v481
  %v498 = vmul.f32 %v370, %v482
  %v500 = vlaneseq
  %v501 = vshrl.u32 %v500, 7
  %v502 = vsub.s32 0, %v501
  %v503 = vrot.slane %v288, %v502
  %v505 = vmul.f32 %v483, %v503
  %v506 = vmul.f32 %v484, %v503
  %v507 = vmul.f32 %v485, %v503
  %v508 = vmul.f32 %v486, %v503
  %v509 = vmul.f32 %v487, %v503
  %v510 = vmul.f32 %v488, %v503
  %v511 = vmul.f32 %v489, %v503
  %v512 = vmul.f32 %v490, %v503
  %v513 = vmul.f32 %v491, %v503
  %v514 = vmul.f32 %v492, %v503
  %v515 = vmul.f32 %v493, %v503
  %v516 = vmul.f32 %v494, %v503
  %v517 = vmul.f32 %v495, %v503
  %v518 = vmul.f32 %v496, %v503
  %v519 = vmul.f32 %v497, %v503
  %v520 = vmul.f32 %v498, %v503
  %v522 = vlaneseq
  %v523 = vshrl.u32 %v522, 7
  %v524 = vsub.s32 0, %v523
  %v525 = vrot.slane %v289, %v524
  %v527 = vadd.f32 %v505, %v525
  %v528 = vadd.f32 %v506, %v525
  %v529 = vadd.f32 %v507, %v525
  %v530 = vadd.f32 %v508, %v525
  %v531 = vadd.f32 %v509, %v525
  %v532 = vadd.f32 %v510, %v525
  %v533 = vadd.f32 %v511, %v525
  %v534 = vadd.f32 %v512, %v525
  %v535 = vadd.f32 %v513, %v525
  %v536 = vadd.f32 %v514, %v525
  %v537 = vadd.f32 %v515, %v525
  %v538 = vadd.f32 %v516, %v525
  %v539 = vadd.f32 %v517, %v525
  %v540 = vadd.f32 %v518, %v525
  %v541 = vadd.f32 %v519, %v525
  %v542 = vadd.f32 %v520, %v525
  %v543 = vld [vmem:[%s17] sm:$0xf]
  %v544 = vld [vmem:[%s17 + $0x4] sm:$0xf]
  %v545 = vpack.c.bf16 %v528, %v527
  %v546 = vpack.c.bf16 %v530, %v529
  %v547 = vpack.c.bf16 %v532, %v531
  %v548 = vpack.c.bf16 %v534, %v533
  %v549 = vpack.c.bf16 %v536, %v535
  %v550 = vpack.c.bf16 %v538, %v537
  %v551 = vpack.c.bf16 %v540, %v539
  %v552 = vpack.c.bf16 %v542, %v541
  %v553 = vld [vmem:[%s19] sm:$0x1]
  %v555 = vlaneseq
  %v556 = vshrl.u32 %v555, 7
  %v557 = vsub.s32 0, %v556
  %v558 = vrot.slane %v553, %v557
  %v562 = vunpack.c.l.b16 %v543
  %v563 = vunpack.c.l.b16 %v544
  %v564 = vpack.c.b16 %v563, %v562
  %v567 = vsel %vm166, %v545, 0
  %v570 = vsel %vm166, %v546, 0
  %v573 = vsel %vm166, %v547, 0
  %v576 = vsel %vm166, %v548, 0
  %v579 = vsel %vm166, %v549, 0
  %v582 = vsel %vm166, %v550, 0
  %v585 = vsel %vm166, %v551, 0
  %v588 = vsel %vm166, %v552, 0
  %590 = vmatprep.subr.bf16.mxu0 0
  %591 = vmatpush1.bf16.msra.mxu0 %v564
  %592 = vmatprep.subr.bf16.mxu0 0
  %593 = vmatpush1.bf16.msra.mxu0 0
  %594 = vmatprep.subr.bf16.mxu0 0
  %595 = vmatpush1.bf16.msra.mxu0 0
  %596 = vmatprep.subr.bf16.mxu0 0
  %597 = vmatpush1.bf16.msra.mxu0 0
  %598 = vmatprep.subr.bf16.mxu0 0
  %599 = vmatpush1.bf16.msra.mxu0 0
  %600 = vmatprep.subr.bf16.mxu0 0
  %601 = vmatpush1.bf16.msra.mxu0 0
  %602 = vmatprep.subr.bf16.mxu0 0
  %603 = vmatpush1.bf16.msra.mxu0 0
  %604 = vmatprep.subr.bf16.mxu0 0
  %605 = vmatpush1.bf16.msra.mxu0 0
  %606 = vmatprep.subr.bf16.mxu0 0
  %607 = vmatpush1.bf16.msra.mxu0 0
  %608 = vmatprep.subr.bf16.mxu0 0
  %609 = vmatpush1.bf16.msra.mxu0 0
  %610 = vmatprep.subr.bf16.mxu0 0
  %611 = vmatpush1.bf16.msra.mxu0 0
  %612 = vmatprep.subr.bf16.mxu0 0
  %613 = vmatpush1.bf16.msra.mxu0 0
  %614 = vmatprep.subr.bf16.mxu0 0
  %615 = vmatpush1.bf16.msra.mxu0 0
  %616 = vmatprep.subr.bf16.mxu0 0
  %617 = vmatpush1.bf16.msra.mxu0 0
  %618 = vmatprep.subr.bf16.mxu0 0
  %619 = vmatpush1.bf16.msra.mxu0 0
  %620 = vmatprep.subr.bf16.mxu0 0
  %621 = vmatpush1.bf16.msra.mxu0 0
  %622 = vmatprep.mubr.bf16.mxu0 0
  %623 = vmatmul.mubr.bf16.gmra.mrb[0].mxu0 %v567
  %v624 = vpop.f32.mrb[0].mxu0
  %v625 = vadd.f32 %v558, %v624
  %v626 = vpop.f32.mrb[0].mxu0
  %v627 = vpop.f32.mrb[0].mxu0
  %v628 = vadd.f32 %v558, %v627
  %v629 = vpop.f32.mrb[0].mxu0
  %630 = vmatprep.mubr.bf16.mxu0 0
  %631 = vmatmul.mubr.bf16.gmra.mrb[0].mxu0 %v570
  %v632 = vpop.f32.mrb[0].mxu0
  %v633 = vadd.f32 %v558, %v632
  %v634 = vpop.f32.mrb[0].mxu0
  %v635 = vpop.f32.mrb[0].mxu0
  %v636 = vadd.f32 %v558, %v635
  %v637 = vpop.f32.mrb[0].mxu0
  %638 = vmatprep.mubr.bf16.mxu0 0
  %639 = vmatmul.mubr.bf16.gmra.mrb[0].mxu0 %v573
  %v640 = vpop.f32.mrb[0].mxu0
  %v641 = vadd.f32 %v558, %v640
  %v642 = vpop.f32.mrb[0].mxu0
  %v643 = vpop.f32.mrb[0].mxu0
  %v644 = vadd.f32 %v558, %v643
  %v645 = vpop.f32.mrb[0].mxu0
  %646 = vmatprep.mubr.bf16.mxu0 0
  %647 = vmatmul.mubr.bf16.gmra.mrb[0].mxu0 %v576
  %v648 = vpop.f32.mrb[0].mxu0
  %v649 = vadd.f32 %v558, %v648
  %v650 = vpop.f32.mrb[0].mxu0
  %v651 = vpop.f32.mrb[0].mxu0
  %v652 = vadd.f32 %v558, %v651
  %v653 = vpop.f32.mrb[0].mxu0
  %654 = vmatprep.mubr.bf16.mxu0 0
  %655 = vmatmul.mubr.bf16.gmra.mrb[0].mxu0 %v579
  %v656 = vpop.f32.mrb[0].mxu0
  %v657 = vadd.f32 %v558, %v656
  %v658 = vpop.f32.mrb[0].mxu0
  %v659 = vpop.f32.mrb[0].mxu0
  %v660 = vadd.f32 %v558, %v659
  %v661 = vpop.f32.mrb[0].mxu0
  %662 = vmatprep.mubr.bf16.mxu0 0
  %663 = vmatmul.mubr.bf16.gmra.mrb[0].mxu0 %v582
  %v664 = vpop.f32.mrb[0].mxu0
  %v665 = vadd.f32 %v558, %v664
  %v666 = vpop.f32.mrb[0].mxu0
  %v667 = vpop.f32.mrb[0].mxu0
  %v668 = vadd.f32 %v558, %v667
  %v669 = vpop.f32.mrb[0].mxu0
  %670 = vmatprep.mubr.bf16.mxu0 0
  %671 = vmatmul.mubr.bf16.gmra.mrb[0].mxu0 %v585
  %v672 = vpop.f32.mrb[0].mxu0
  %v673 = vadd.f32 %v558, %v672
  %v674 = vpop.f32.mrb[0].mxu0
  %v675 = vpop.f32.mrb[0].mxu0
  %v676 = vadd.f32 %v558, %v675
  %v677 = vpop.f32.mrb[0].mxu0
  %678 = vmatprep.mubr.bf16.mxu0 0
  %679 = vmatmul.mubr.bf16.gmra.mrb[0].mxu0 %v588
  %v680 = vpop.f32.mrb[0].mxu0
  %v681 = vadd.f32 %v558, %v680
  %v682 = vpop.f32.mrb[0].mxu0
  %v683 = vpop.f32.mrb[0].mxu0
  %v684 = vadd.f32 %v558, %v683
  %v685 = vpop.f32.mrb[0].mxu0
  %686 = vdwg.mxu0
  %v687 = vld [vmem:[%s21] sm:$0x1]
  %v688 = vld [vmem:[%s23] sm:$0x1]
  %vm689 = vcmask 523264
  %v690 = vsel %vm689, %v625, 0.0
  %691 = vadd.xlane.f32.xlu0 %v690
  %v692 = vpop.xlane.xlu0 %691
  %v693 = vsel %vm689, %v628, 0.0
  %694 = vadd.xlane.f32.xlu0 %v693
  %v695 = vpop.xlane.xlu0 %694
  %v696 = vsel %vm689, %v633, 0.0
  %697 = vadd.xlane.f32.xlu0 %v696
  %v698 = vpop.xlane.xlu0 %697
  %v699 = vsel %vm689, %v636, 0.0
  %700 = vadd.xlane.f32.xlu0 %v699
  %v701 = vpop.xlane.xlu0 %700
  %v702 = vsel %vm689, %v641, 0.0
  %703 = vadd.xlane.f32.xlu0 %v702
  %v704 = vpop.xlane.xlu0 %703
  %v705 = vsel %vm689, %v644, 0.0
  %706 = vadd.xlane.f32.xlu0 %v705
  %v707 = vpop.xlane.xlu0 %706
  %v708 = vsel %vm689, %v649, 0.0
  %709 = vadd.xlane.f32.xlu0 %v708
  %v710 = vpop.xlane.xlu0 %709
  %v711 = vsel %vm689, %v652, 0.0
  %712 = vadd.xlane.f32.xlu0 %v711
  %v713 = vpop.xlane.xlu0 %712
  %v714 = vsel %vm689, %v657, 0.0
  %715 = vadd.xlane.f32.xlu0 %v714
  %v716 = vpop.xlane.xlu0 %715
  %v717 = vsel %vm689, %v660, 0.0
  %718 = vadd.xlane.f32.xlu0 %v717
  %v719 = vpop.xlane.xlu0 %718
  %v720 = vsel %vm689, %v665, 0.0
  %721 = vadd.xlane.f32.xlu0 %v720
  %v722 = vpop.xlane.xlu0 %721
  %v723 = vsel %vm689, %v668, 0.0
  %724 = vadd.xlane.f32.xlu0 %v723
  %v725 = vpop.xlane.xlu0 %724
  %v726 = vsel %vm689, %v673, 0.0
  %727 = vadd.xlane.f32.xlu0 %v726
  %v728 = vpop.xlane.xlu0 %727
  %v729 = vsel %vm689, %v676, 0.0
  %730 = vadd.xlane.f32.xlu0 %v729
  %v731 = vpop.xlane.xlu0 %730
  %v732 = vsel %vm689, %v681, 0.0
  %733 = vadd.xlane.f32.xlu0 %v732
  %v734 = vpop.xlane.xlu0 %733
  %v735 = vsel %vm689, %v684, 0.0
  %736 = vadd.xlane.f32.xlu0 %v735
  %v737 = vpop.xlane.xlu0 %736
  %v738 = vrcp.pop 64.0
  %v739 = vmul.f32 %v692, %v738
  %v740 = vmul.f32 %v695, %v738
  %v741 = vmul.f32 %v698, %v738
  %v742 = vmul.f32 %v701, %v738
  %v743 = vmul.f32 %v704, %v738
  %v744 = vmul.f32 %v707, %v738
  %v745 = vmul.f32 %v710, %v738
  %v746 = vmul.f32 %v713, %v738
  %v747 = vmul.f32 %v716, %v738
  %v748 = vmul.f32 %v719, %v738
  %v749 = vmul.f32 %v722, %v738
  %v750 = vmul.f32 %v725, %v738
  %v751 = vmul.f32 %v728, %v738
  %v752 = vmul.f32 %v731, %v738
  %v753 = vmul.f32 %v734, %v738
  %v754 = vmul.f32 %v737, %v738
  %v755 = vsub.f32 %v625, %v739
  %v756 = vsub.f32 %v628, %v740
  %v757 = vsub.f32 %v633, %v741
  %v758 = vsub.f32 %v636, %v742
  %v759 = vsub.f32 %v641, %v743
  %v760 = vsub.f32 %v644, %v744
  %v761 = vsub.f32 %v649, %v745
  %v762 = vsub.f32 %v652, %v746
  %v763 = vsub.f32 %v657, %v747
  %v764 = vsub.f32 %v660, %v748
  %v765 = vsub.f32 %v665, %v749
  %v766 = vsub.f32 %v668, %v750
  %v767 = vsub.f32 %v673, %v751
  %v768 = vsub.f32 %v676, %v752
  %v769 = vsub.f32 %v681, %v753
  %v770 = vsub.f32 %v684, %v754
  %v771 = vmul.f32 %v755, %v755
  %v772 = vmul.f32 %v756, %v756
  %v773 = vmul.f32 %v757, %v757
  %v774 = vmul.f32 %v758, %v758
  %v775 = vmul.f32 %v759, %v759
  %v776 = vmul.f32 %v760, %v760
  %v777 = vmul.f32 %v761, %v761
  %v778 = vmul.f32 %v762, %v762
  %v779 = vmul.f32 %v763, %v763
  %v780 = vmul.f32 %v764, %v764
  %v781 = vmul.f32 %v765, %v765
  %v782 = vmul.f32 %v766, %v766
  %v783 = vmul.f32 %v767, %v767
  %v784 = vmul.f32 %v768, %v768
  %v785 = vmul.f32 %v769, %v769
  %v786 = vmul.f32 %v770, %v770
  %v787 = vsel %vm689, %v771, 0.0
  %788 = vadd.xlane.f32.xlu0 %v787
  %v789 = vpop.xlane.xlu0 %788
  %v790 = vsel %vm689, %v772, 0.0
  %791 = vadd.xlane.f32.xlu0 %v790
  %v792 = vpop.xlane.xlu0 %791
  %v793 = vsel %vm689, %v773, 0.0
  %794 = vadd.xlane.f32.xlu0 %v793
  %v795 = vpop.xlane.xlu0 %794
  %v796 = vsel %vm689, %v774, 0.0
  %797 = vadd.xlane.f32.xlu0 %v796
  %v798 = vpop.xlane.xlu0 %797
  %v799 = vsel %vm689, %v775, 0.0
  %800 = vadd.xlane.f32.xlu0 %v799
  %v801 = vpop.xlane.xlu0 %800
  %v802 = vsel %vm689, %v776, 0.0
  %803 = vadd.xlane.f32.xlu0 %v802
  %v804 = vpop.xlane.xlu0 %803
  %v805 = vsel %vm689, %v777, 0.0
  %806 = vadd.xlane.f32.xlu0 %v805
  %v807 = vpop.xlane.xlu0 %806
  %v808 = vsel %vm689, %v778, 0.0
  %809 = vadd.xlane.f32.xlu0 %v808
  %v810 = vpop.xlane.xlu0 %809
  %v811 = vsel %vm689, %v779, 0.0
  %812 = vadd.xlane.f32.xlu0 %v811
  %v813 = vpop.xlane.xlu0 %812
  %v814 = vsel %vm689, %v780, 0.0
  %815 = vadd.xlane.f32.xlu0 %v814
  %v816 = vpop.xlane.xlu0 %815
  %v817 = vsel %vm689, %v781, 0.0
  %818 = vadd.xlane.f32.xlu0 %v817
  %v819 = vpop.xlane.xlu0 %818
  %v820 = vsel %vm689, %v782, 0.0
  %821 = vadd.xlane.f32.xlu0 %v820
  %v822 = vpop.xlane.xlu0 %821
  %v823 = vsel %vm689, %v783, 0.0
  %824 = vadd.xlane.f32.xlu0 %v823
  %v825 = vpop.xlane.xlu0 %824
  %v826 = vsel %vm689, %v784, 0.0
  %827 = vadd.xlane.f32.xlu0 %v826
  %v828 = vpop.xlane.xlu0 %827
  %v829 = vsel %vm689, %v785, 0.0
  %830 = vadd.xlane.f32.xlu0 %v829
  %v831 = vpop.xlane.xlu0 %830
  %v832 = vsel %vm689, %v786, 0.0
  %833 = vadd.xlane.f32.xlu0 %v832
  %v834 = vpop.xlane.xlu0 %833
  %v835 = vmul.f32 %v789, %v738
  %v836 = vmul.f32 %v792, %v738
  %v837 = vmul.f32 %v795, %v738
  %v838 = vmul.f32 %v798, %v738
  %v839 = vmul.f32 %v801, %v738
  %v840 = vmul.f32 %v804, %v738
  %v841 = vmul.f32 %v807, %v738
  %v842 = vmul.f32 %v810, %v738
  %v843 = vmul.f32 %v813, %v738
  %v844 = vmul.f32 %v816, %v738
  %v845 = vmul.f32 %v819, %v738
  %v846 = vmul.f32 %v822, %v738
  %v847 = vmul.f32 %v825, %v738
  %v848 = vmul.f32 %v828, %v738
  %v849 = vmul.f32 %v831, %v738
  %v850 = vmul.f32 %v834, %v738
  %v851 = vadd.f32 %v835, 1e-05
  %v852 = vadd.f32 %v836, 1e-05
  %v853 = vadd.f32 %v837, 1e-05
  %v854 = vadd.f32 %v838, 1e-05
  %v855 = vadd.f32 %v839, 1e-05
  %v856 = vadd.f32 %v840, 1e-05
  %v857 = vadd.f32 %v841, 1e-05
  %v858 = vadd.f32 %v842, 1e-05
  %v859 = vadd.f32 %v843, 1e-05
  %v860 = vadd.f32 %v844, 1e-05
  %v861 = vadd.f32 %v845, 1e-05
  %v862 = vadd.f32 %v846, 1e-05
  %v863 = vadd.f32 %v847, 1e-05
  %v864 = vadd.f32 %v848, 1e-05
  %v865 = vadd.f32 %v849, 1e-05
  %v866 = vadd.f32 %v850, 1e-05
  %v867 = vrsqrt.pop %v851
  %v868 = vrsqrt.pop %v852
  %v869 = vrsqrt.pop %v853
  %v870 = vrsqrt.pop %v854
  %v871 = vrsqrt.pop %v855
  %v872 = vrsqrt.pop %v856
  %v873 = vrsqrt.pop %v857
  %v874 = vrsqrt.pop %v858
  %v875 = vrsqrt.pop %v859
  %v876 = vrsqrt.pop %v860
  %v877 = vrsqrt.pop %v861
  %v878 = vrsqrt.pop %v862
  %v879 = vrsqrt.pop %v863
  %v880 = vrsqrt.pop %v864
  %v881 = vrsqrt.pop %v865
  %v882 = vrsqrt.pop %v866
  %v883 = vmul.f32 %v755, %v867
  %v884 = vmul.f32 %v756, %v868
  %v885 = vmul.f32 %v757, %v869
  %v886 = vmul.f32 %v758, %v870
  %v887 = vmul.f32 %v759, %v871
  %v888 = vmul.f32 %v760, %v872
  %v889 = vmul.f32 %v761, %v873
  %v890 = vmul.f32 %v762, %v874
  %v891 = vmul.f32 %v763, %v875
  %v892 = vmul.f32 %v764, %v876
  %v893 = vmul.f32 %v765, %v877
  %v894 = vmul.f32 %v766, %v878
  %v895 = vmul.f32 %v767, %v879
  %v896 = vmul.f32 %v768, %v880
  %v897 = vmul.f32 %v769, %v881
  %v898 = vmul.f32 %v770, %v882
  %v900 = vlaneseq
  %v901 = vshrl.u32 %v900, 7
  %v902 = vsub.s32 0, %v901
  %v903 = vrot.slane %v687, %v902
  %v905 = vmul.f32 %v883, %v903
  %v906 = vmul.f32 %v884, %v903
  %v907 = vmul.f32 %v885, %v903
  %v908 = vmul.f32 %v886, %v903
  %v909 = vmul.f32 %v887, %v903
  %v910 = vmul.f32 %v888, %v903
  %v911 = vmul.f32 %v889, %v903
  %v912 = vmul.f32 %v890, %v903
  %v913 = vmul.f32 %v891, %v903
  %v914 = vmul.f32 %v892, %v903
  %v915 = vmul.f32 %v893, %v903
  %v916 = vmul.f32 %v894, %v903
  %v917 = vmul.f32 %v895, %v903
  %v918 = vmul.f32 %v896, %v903
  %v919 = vmul.f32 %v897, %v903
  %v920 = vmul.f32 %v898, %v903
  %v922 = vlaneseq
  %v923 = vshrl.u32 %v922, 7
  %v924 = vsub.s32 0, %v923
  %v925 = vrot.slane %v688, %v924
  %v927 = vadd.f32 %v905, %v925
  %v928 = vadd.f32 %v906, %v925
  %v929 = vadd.f32 %v907, %v925
  %v930 = vadd.f32 %v908, %v925
  %v931 = vadd.f32 %v909, %v925
  %v932 = vadd.f32 %v910, %v925
  %v933 = vadd.f32 %v911, %v925
  %v934 = vadd.f32 %v912, %v925
  %v935 = vadd.f32 %v913, %v925
  %v936 = vadd.f32 %v914, %v925
  %v937 = vadd.f32 %v915, %v925
  %v938 = vadd.f32 %v916, %v925
  %v939 = vadd.f32 %v917, %v925
  %v940 = vadd.f32 %v918, %v925
  %v941 = vadd.f32 %v919, %v925
  %v942 = vadd.f32 %v920, %v925
  %v943 = vld [vmem:[%s5] sm:$0xff]
  %v944 = vld [vmem:[%s5 + $0x8] sm:$0xff]
  %v945 = vld [vmem:[%s5 + $0x10] sm:$0xff]
  %v946 = vld [vmem:[%s5 + $0x18] sm:$0xff]
  %v947 = vld [vmem:[%s5 + $0x20] sm:$0xff]
  %v948 = vld [vmem:[%s5 + $0x28] sm:$0xff]
  %v949 = vld [vmem:[%s5 + $0x30] sm:$0xff]
  %v950 = vld [vmem:[%s5 + $0x38] sm:$0xff]
  %v951 = vld [vmem:[%s5 + $0x40] sm:$0xff]
  %v952 = vld [vmem:[%s5 + $0x48] sm:$0xff]
  %v953 = vld [vmem:[%s5 + $0x50] sm:$0xff]
  %v954 = vld [vmem:[%s5 + $0x58] sm:$0xff]
  %v955 = vld [vmem:[%s5 + $0x60] sm:$0xff]
  %v956 = vld [vmem:[%s5 + $0x68] sm:$0xff]
  %v957 = vld [vmem:[%s5 + $0x70] sm:$0xff]
  %v958 = vld [vmem:[%s5 + $0x78] sm:$0xff]
  %v959 = vadd.f32 %v927, %v943
  %v960 = vadd.f32 %v928, %v944
  %v961 = vadd.f32 %v929, %v945
  %v962 = vadd.f32 %v930, %v946
  %v963 = vadd.f32 %v931, %v947
  %v964 = vadd.f32 %v932, %v948
  %v965 = vadd.f32 %v933, %v949
  %v966 = vadd.f32 %v934, %v950
  %v967 = vadd.f32 %v935, %v951
  %v968 = vadd.f32 %v936, %v952
  %v969 = vadd.f32 %v937, %v953
  %v970 = vadd.f32 %v938, %v954
  %v971 = vadd.f32 %v939, %v955
  %v972 = vadd.f32 %v940, %v956
  %v973 = vadd.f32 %v941, %v957
  %v974 = vadd.f32 %v942, %v958
  %v975 = vld [vmem:[%s3] sm:$0xf]
  %v976 = vld [vmem:[%s25] sm:$0x1]
  %v977 = vld [vmem:[%s27] sm:$0x1]
  %v978 = vsel %vm689, %v959, 0.0
  %979 = vadd.xlane.f32.xlu0 %v978
  %v980 = vpop.xlane.xlu0 %979
  %v981 = vsel %vm689, %v960, 0.0
  %982 = vadd.xlane.f32.xlu0 %v981
  %v983 = vpop.xlane.xlu0 %982
  %v984 = vsel %vm689, %v961, 0.0
  %985 = vadd.xlane.f32.xlu0 %v984
  %v986 = vpop.xlane.xlu0 %985
  %v987 = vsel %vm689, %v962, 0.0
  %988 = vadd.xlane.f32.xlu0 %v987
  %v989 = vpop.xlane.xlu0 %988
  %v990 = vsel %vm689, %v963, 0.0
  %991 = vadd.xlane.f32.xlu0 %v990
  %v992 = vpop.xlane.xlu0 %991
  %v993 = vsel %vm689, %v964, 0.0
  %994 = vadd.xlane.f32.xlu0 %v993
  %v995 = vpop.xlane.xlu0 %994
  %v996 = vsel %vm689, %v965, 0.0
  %997 = vadd.xlane.f32.xlu0 %v996
  %v998 = vpop.xlane.xlu0 %997
  %v999 = vsel %vm689, %v966, 0.0
  %1000 = vadd.xlane.f32.xlu0 %v999
  %v1001 = vpop.xlane.xlu0 %1000
  %v1002 = vsel %vm689, %v967, 0.0
  %1003 = vadd.xlane.f32.xlu0 %v1002
  %v1004 = vpop.xlane.xlu0 %1003
  %v1005 = vsel %vm689, %v968, 0.0
  %1006 = vadd.xlane.f32.xlu0 %v1005
  %v1007 = vpop.xlane.xlu0 %1006
  %v1008 = vsel %vm689, %v969, 0.0
  %1009 = vadd.xlane.f32.xlu0 %v1008
  %v1010 = vpop.xlane.xlu0 %1009
  %v1011 = vsel %vm689, %v970, 0.0
  %1012 = vadd.xlane.f32.xlu0 %v1011
  %v1013 = vpop.xlane.xlu0 %1012
  %v1014 = vsel %vm689, %v971, 0.0
  %1015 = vadd.xlane.f32.xlu0 %v1014
  %v1016 = vpop.xlane.xlu0 %1015
  %v1017 = vsel %vm689, %v972, 0.0
  %1018 = vadd.xlane.f32.xlu0 %v1017
  %v1019 = vpop.xlane.xlu0 %1018
  %v1020 = vsel %vm689, %v973, 0.0
  %1021 = vadd.xlane.f32.xlu0 %v1020
  %v1022 = vpop.xlane.xlu0 %1021
  %v1023 = vsel %vm689, %v974, 0.0
  %1024 = vadd.xlane.f32.xlu0 %v1023
  %v1025 = vpop.xlane.xlu0 %1024
  %v1026 = vmul.f32 %v980, %v738
  %v1027 = vmul.f32 %v983, %v738
  %v1028 = vmul.f32 %v986, %v738
  %v1029 = vmul.f32 %v989, %v738
  %v1030 = vmul.f32 %v992, %v738
  %v1031 = vmul.f32 %v995, %v738
  %v1032 = vmul.f32 %v998, %v738
  %v1033 = vmul.f32 %v1001, %v738
  %v1034 = vmul.f32 %v1004, %v738
  %v1035 = vmul.f32 %v1007, %v738
  %v1036 = vmul.f32 %v1010, %v738
  %v1037 = vmul.f32 %v1013, %v738
  %v1038 = vmul.f32 %v1016, %v738
  %v1039 = vmul.f32 %v1019, %v738
  %v1040 = vmul.f32 %v1022, %v738
  %v1041 = vmul.f32 %v1025, %v738
  %v1042 = vsub.f32 %v959, %v1026
  %v1043 = vsub.f32 %v960, %v1027
  %v1044 = vsub.f32 %v961, %v1028
  %v1045 = vsub.f32 %v962, %v1029
  %v1046 = vsub.f32 %v963, %v1030
  %v1047 = vsub.f32 %v964, %v1031
  %v1048 = vsub.f32 %v965, %v1032
  %v1049 = vsub.f32 %v966, %v1033
  %v1050 = vsub.f32 %v967, %v1034
  %v1051 = vsub.f32 %v968, %v1035
  %v1052 = vsub.f32 %v969, %v1036
  %v1053 = vsub.f32 %v970, %v1037
  %v1054 = vsub.f32 %v971, %v1038
  %v1055 = vsub.f32 %v972, %v1039
  %v1056 = vsub.f32 %v973, %v1040
  %v1057 = vsub.f32 %v974, %v1041
  %v1058 = vmul.f32 %v1042, %v1042
  %v1059 = vmul.f32 %v1043, %v1043
  %v1060 = vmul.f32 %v1044, %v1044
  %v1061 = vmul.f32 %v1045, %v1045
  %v1062 = vmul.f32 %v1046, %v1046
  %v1063 = vmul.f32 %v1047, %v1047
  %v1064 = vmul.f32 %v1048, %v1048
  %v1065 = vmul.f32 %v1049, %v1049
  %v1066 = vmul.f32 %v1050, %v1050
  %v1067 = vmul.f32 %v1051, %v1051
  %v1068 = vmul.f32 %v1052, %v1052
  %v1069 = vmul.f32 %v1053, %v1053
  %v1070 = vmul.f32 %v1054, %v1054
  %v1071 = vmul.f32 %v1055, %v1055
  %v1072 = vmul.f32 %v1056, %v1056
  %v1073 = vmul.f32 %v1057, %v1057
  %v1074 = vsel %vm689, %v1058, 0.0
  %1075 = vadd.xlane.f32.xlu0 %v1074
  %v1076 = vpop.xlane.xlu0 %1075
  %v1077 = vsel %vm689, %v1059, 0.0
  %1078 = vadd.xlane.f32.xlu0 %v1077
  %v1079 = vpop.xlane.xlu0 %1078
  %v1080 = vsel %vm689, %v1060, 0.0
  %1081 = vadd.xlane.f32.xlu0 %v1080
  %v1082 = vpop.xlane.xlu0 %1081
  %v1083 = vsel %vm689, %v1061, 0.0
  %1084 = vadd.xlane.f32.xlu0 %v1083
  %v1085 = vpop.xlane.xlu0 %1084
  %v1086 = vsel %vm689, %v1062, 0.0
  %1087 = vadd.xlane.f32.xlu0 %v1086
  %v1088 = vpop.xlane.xlu0 %1087
  %v1089 = vsel %vm689, %v1063, 0.0
  %1090 = vadd.xlane.f32.xlu0 %v1089
  %v1091 = vpop.xlane.xlu0 %1090
  %v1092 = vsel %vm689, %v1064, 0.0
  %1093 = vadd.xlane.f32.xlu0 %v1092
  %v1094 = vpop.xlane.xlu0 %1093
  %v1095 = vsel %vm689, %v1065, 0.0
  %1096 = vadd.xlane.f32.xlu0 %v1095
  %v1097 = vpop.xlane.xlu0 %1096
  %v1098 = vsel %vm689, %v1066, 0.0
  %1099 = vadd.xlane.f32.xlu0 %v1098
  %v1100 = vpop.xlane.xlu0 %1099
  %v1101 = vsel %vm689, %v1067, 0.0
  %1102 = vadd.xlane.f32.xlu0 %v1101
  %v1103 = vpop.xlane.xlu0 %1102
  %v1104 = vsel %vm689, %v1068, 0.0
  %1105 = vadd.xlane.f32.xlu0 %v1104
  %v1106 = vpop.xlane.xlu0 %1105
  %v1107 = vsel %vm689, %v1069, 0.0
  %1108 = vadd.xlane.f32.xlu0 %v1107
  %v1109 = vpop.xlane.xlu0 %1108
  %v1110 = vsel %vm689, %v1070, 0.0
  %1111 = vadd.xlane.f32.xlu0 %v1110
  %v1112 = vpop.xlane.xlu0 %1111
  %v1113 = vsel %vm689, %v1071, 0.0
  %1114 = vadd.xlane.f32.xlu0 %v1113
  %v1115 = vpop.xlane.xlu0 %1114
  %v1116 = vsel %vm689, %v1072, 0.0
  %1117 = vadd.xlane.f32.xlu0 %v1116
  %v1118 = vpop.xlane.xlu0 %1117
  %v1119 = vsel %vm689, %v1073, 0.0
  %1120 = vadd.xlane.f32.xlu0 %v1119
  %v1121 = vpop.xlane.xlu0 %1120
  %v1122 = vmul.f32 %v1076, %v738
  %v1123 = vmul.f32 %v1079, %v738
  %v1124 = vmul.f32 %v1082, %v738
  %v1125 = vmul.f32 %v1085, %v738
  %v1126 = vmul.f32 %v1088, %v738
  %v1127 = vmul.f32 %v1091, %v738
  %v1128 = vmul.f32 %v1094, %v738
  %v1129 = vmul.f32 %v1097, %v738
  %v1130 = vmul.f32 %v1100, %v738
  %v1131 = vmul.f32 %v1103, %v738
  %v1132 = vmul.f32 %v1106, %v738
  %v1133 = vmul.f32 %v1109, %v738
  %v1134 = vmul.f32 %v1112, %v738
  %v1135 = vmul.f32 %v1115, %v738
  %v1136 = vmul.f32 %v1118, %v738
  %v1137 = vmul.f32 %v1121, %v738
  %v1138 = vadd.f32 %v1122, 1e-05
  %v1139 = vadd.f32 %v1123, 1e-05
  %v1140 = vadd.f32 %v1124, 1e-05
  %v1141 = vadd.f32 %v1125, 1e-05
  %v1142 = vadd.f32 %v1126, 1e-05
  %v1143 = vadd.f32 %v1127, 1e-05
  %v1144 = vadd.f32 %v1128, 1e-05
  %v1145 = vadd.f32 %v1129, 1e-05
  %v1146 = vadd.f32 %v1130, 1e-05
  %v1147 = vadd.f32 %v1131, 1e-05
  %v1148 = vadd.f32 %v1132, 1e-05
  %v1149 = vadd.f32 %v1133, 1e-05
  %v1150 = vadd.f32 %v1134, 1e-05
  %v1151 = vadd.f32 %v1135, 1e-05
  %v1152 = vadd.f32 %v1136, 1e-05
  %v1153 = vadd.f32 %v1137, 1e-05
  %v1154 = vrsqrt.pop %v1138
  %v1155 = vrsqrt.pop %v1139
  %v1156 = vrsqrt.pop %v1140
  %v1157 = vrsqrt.pop %v1141
  %v1158 = vrsqrt.pop %v1142
  %v1159 = vrsqrt.pop %v1143
  %v1160 = vrsqrt.pop %v1144
  %v1161 = vrsqrt.pop %v1145
  %v1162 = vrsqrt.pop %v1146
  %v1163 = vrsqrt.pop %v1147
  %v1164 = vrsqrt.pop %v1148
  %v1165 = vrsqrt.pop %v1149
  %v1166 = vrsqrt.pop %v1150
  %v1167 = vrsqrt.pop %v1151
  %v1168 = vrsqrt.pop %v1152
  %v1169 = vrsqrt.pop %v1153
  %v1170 = vmul.f32 %v1042, %v1154
  %v1171 = vmul.f32 %v1043, %v1155
  %v1172 = vmul.f32 %v1044, %v1156
  %v1173 = vmul.f32 %v1045, %v1157
  %v1174 = vmul.f32 %v1046, %v1158
  %v1175 = vmul.f32 %v1047, %v1159
  %v1176 = vmul.f32 %v1048, %v1160
  %v1177 = vmul.f32 %v1049, %v1161
  %v1178 = vmul.f32 %v1050, %v1162
  %v1179 = vmul.f32 %v1051, %v1163
  %v1180 = vmul.f32 %v1052, %v1164
  %v1181 = vmul.f32 %v1053, %v1165
  %v1182 = vmul.f32 %v1054, %v1166
  %v1183 = vmul.f32 %v1055, %v1167
  %v1184 = vmul.f32 %v1056, %v1168
  %v1185 = vmul.f32 %v1057, %v1169
  %v1186 = vlaneseq
  %v1187 = vshrl.u32 %v1186, 7
  %v1188 = vsub.s32 0, %v1187
  %v1189 = vrot.slane %v976, %v1188
  %v1190 = vmul.f32 %v1170, %v1189
  %v1191 = vmul.f32 %v1171, %v1189
  %v1192 = vmul.f32 %v1172, %v1189
  %v1193 = vmul.f32 %v1173, %v1189
  %v1194 = vmul.f32 %v1174, %v1189
  %v1195 = vmul.f32 %v1175, %v1189
  %v1196 = vmul.f32 %v1176, %v1189
  %v1197 = vmul.f32 %v1177, %v1189
  %v1198 = vmul.f32 %v1178, %v1189
  %v1199 = vmul.f32 %v1179, %v1189
  %v1200 = vmul.f32 %v1180, %v1189
  %v1201 = vmul.f32 %v1181, %v1189
  %v1202 = vmul.f32 %v1182, %v1189
  %v1203 = vmul.f32 %v1183, %v1189
  %v1204 = vmul.f32 %v1184, %v1189
  %v1205 = vmul.f32 %v1185, %v1189
  %v1206 = vlaneseq
  %v1207 = vshrl.u32 %v1206, 7
  %v1208 = vsub.s32 0, %v1207
  %v1209 = vrot.slane %v977, %v1208
  %v1210 = vadd.f32 %v1190, %v1209
  %v1211 = vadd.f32 %v1191, %v1209
  %v1212 = vadd.f32 %v1192, %v1209
  %v1213 = vadd.f32 %v1193, %v1209
  %v1214 = vadd.f32 %v1194, %v1209
  %v1215 = vadd.f32 %v1195, %v1209
  %v1216 = vadd.f32 %v1196, %v1209
  %v1217 = vadd.f32 %v1197, %v1209
  %v1218 = vadd.f32 %v1198, %v1209
  %v1219 = vadd.f32 %v1199, %v1209
  %v1220 = vadd.f32 %v1200, %v1209
  %v1221 = vadd.f32 %v1201, %v1209
  %v1222 = vadd.f32 %v1202, %v1209
  %v1223 = vadd.f32 %v1203, %v1209
  %v1224 = vadd.f32 %v1204, %v1209
  %v1225 = vadd.f32 %v1205, %v1209
  %v1226 = vld [vmem:[%s29] sm:$0xf]
  %v1227 = vld [vmem:[%s29 + $0x4] sm:$0xf]
  %v1228 = vld [vmem:[%s29 + $0x8] sm:$0xf]
  %v1229 = vld [vmem:[%s29 + $0xc] sm:$0xf]
  %v1230 = vld [vmem:[%s29 + $0x10] sm:$0xf]
  %v1231 = vld [vmem:[%s29 + $0x14] sm:$0xf]
  %v1232 = vld [vmem:[%s29 + $0x18] sm:$0xf]
  %v1233 = vld [vmem:[%s29 + $0x1c] sm:$0xf]
  %v1234 = vpack.c.bf16 %v1211, %v1210
  %v1235 = vpack.c.bf16 %v1213, %v1212
  %v1236 = vpack.c.bf16 %v1215, %v1214
  %v1237 = vpack.c.bf16 %v1217, %v1216
  %v1238 = vpack.c.bf16 %v1219, %v1218
  %v1239 = vpack.c.bf16 %v1221, %v1220
  %v1240 = vpack.c.bf16 %v1223, %v1222
  %v1241 = vpack.c.bf16 %v1225, %v1224
  %v1250 = vunpack.c.l.b16 %v1226
  %v1251 = vunpack.c.l.b16 %v1227
  %v1252 = vunpack.c.l.b16 %v1228
  %v1253 = vunpack.c.l.b16 %v1229
  %v1254 = vunpack.c.l.b16 %v1230
  %v1255 = vunpack.c.l.b16 %v1231
  %v1256 = vunpack.c.l.b16 %v1232
  %v1257 = vunpack.c.l.b16 %v1233
  %v1258 = vpack.c.b16 %v1251, %v1250
  %v1259 = vpack.c.b16 %v1253, %v1252
  %v1260 = vpack.c.b16 %v1255, %v1254
  %v1261 = vpack.c.b16 %v1257, %v1256
  %v1267 = vsel %vm689, %v1234, 0
  %v1270 = vsel %vm689, %v1235, 0
  %v1273 = vsel %vm689, %v1236, 0
  %v1276 = vsel %vm689, %v1237, 0
  %v1279 = vsel %vm689, %v1238, 0
  %v1282 = vsel %vm689, %v1239, 0
  %v1285 = vsel %vm689, %v1240, 0
  %v1288 = vsel %vm689, %v1241, 0
  %1290 = vmatprep.subr.bf16.mxu0 0
  %1291 = vmatpush1.bf16.msra.mxu0 %v1258
  %1292 = vmatprep.subr.bf16.mxu0 0
  %1293 = vmatpush1.bf16.msra.mxu0 %v1259
  %1294 = vmatprep.subr.bf16.mxu0 0
  %1295 = vmatpush1.bf16.msra.mxu0 %v1260
  %1296 = vmatprep.subr.bf16.mxu0 0
  %1297 = vmatpush1.bf16.msra.mxu0 %v1261
  %1298 = vmatprep.subr.bf16.mxu0 0
  %1299 = vmatpush1.bf16.msra.mxu0 0
  %1300 = vmatprep.subr.bf16.mxu0 0
  %1301 = vmatpush1.bf16.msra.mxu0 0
  %1302 = vmatprep.subr.bf16.mxu0 0
  %1303 = vmatpush1.bf16.msra.mxu0 0
  %1304 = vmatprep.subr.bf16.mxu0 0
  %1305 = vmatpush1.bf16.msra.mxu0 0
  %1306 = vmatprep.subr.bf16.mxu0 0
  %1307 = vmatpush1.bf16.msra.mxu0 0
  %1308 = vmatprep.subr.bf16.mxu0 0
  %1309 = vmatpush1.bf16.msra.mxu0 0
  %1310 = vmatprep.subr.bf16.mxu0 0
  %1311 = vmatpush1.bf16.msra.mxu0 0
  %1312 = vmatprep.subr.bf16.mxu0 0
  %1313 = vmatpush1.bf16.msra.mxu0 0
  %1314 = vmatprep.subr.bf16.mxu0 0
  %1315 = vmatpush1.bf16.msra.mxu0 0
  %1316 = vmatprep.subr.bf16.mxu0 0
  %1317 = vmatpush1.bf16.msra.mxu0 0
  %1318 = vmatprep.subr.bf16.mxu0 0
  %1319 = vmatpush1.bf16.msra.mxu0 0
  %1320 = vmatprep.subr.bf16.mxu0 0
  %1321 = vmatpush1.bf16.msra.mxu0 0
  %1322 = vmatprep.mubr.bf16.mxu0 0
  %1323 = vmatmul.mubr.bf16.gmra.mrb[0].mxu0 %v1267
  %v1324 = vpop.f32.mrb[0].mxu0
  %v1325 = vadd.f32 0.0, %v1324
  %v1326 = vpop.f32.mrb[0].mxu0
  %v1327 = vpop.f32.mrb[0].mxu0
  %v1328 = vadd.f32 0.0, %v1327
  %v1329 = vpop.f32.mrb[0].mxu0
  %1330 = vmatprep.mubr.bf16.mxu0 0
  %1331 = vmatmul.mubr.bf16.gmra.mrb[0].mxu0 %v1270
  %v1332 = vpop.f32.mrb[0].mxu0
  %v1333 = vadd.f32 0.0, %v1332
  %v1334 = vpop.f32.mrb[0].mxu0
  %v1335 = vpop.f32.mrb[0].mxu0
  %v1336 = vadd.f32 0.0, %v1335
  %v1337 = vpop.f32.mrb[0].mxu0
  %1338 = vmatprep.mubr.bf16.mxu0 0
  %1339 = vmatmul.mubr.bf16.gmra.mrb[0].mxu0 %v1273
  %v1340 = vpop.f32.mrb[0].mxu0
  %v1341 = vadd.f32 0.0, %v1340
  %v1342 = vpop.f32.mrb[0].mxu0
  %v1343 = vpop.f32.mrb[0].mxu0
  %v1344 = vadd.f32 0.0, %v1343
  %v1345 = vpop.f32.mrb[0].mxu0
  %1346 = vmatprep.mubr.bf16.mxu0 0
  %1347 = vmatmul.mubr.bf16.gmra.mrb[0].mxu0 %v1276
  %v1348 = vpop.f32.mrb[0].mxu0
  %v1349 = vadd.f32 0.0, %v1348
  %v1350 = vpop.f32.mrb[0].mxu0
  %v1351 = vpop.f32.mrb[0].mxu0
  %v1352 = vadd.f32 0.0, %v1351
  %v1353 = vpop.f32.mrb[0].mxu0
  %1354 = vmatprep.mubr.bf16.mxu0 0
  %1355 = vmatmul.mubr.bf16.gmra.mrb[0].mxu0 %v1279
  %v1356 = vpop.f32.mrb[0].mxu0
  %v1357 = vadd.f32 0.0, %v1356
  %v1358 = vpop.f32.mrb[0].mxu0
  %v1359 = vpop.f32.mrb[0].mxu0
  %v1360 = vadd.f32 0.0, %v1359
  %v1361 = vpop.f32.mrb[0].mxu0
  %1362 = vmatprep.mubr.bf16.mxu0 0
  %1363 = vmatmul.mubr.bf16.gmra.mrb[0].mxu0 %v1282
  %v1364 = vpop.f32.mrb[0].mxu0
  %v1365 = vadd.f32 0.0, %v1364
  %v1366 = vpop.f32.mrb[0].mxu0
  %v1367 = vpop.f32.mrb[0].mxu0
  %v1368 = vadd.f32 0.0, %v1367
  %v1369 = vpop.f32.mrb[0].mxu0
  %1370 = vmatprep.mubr.bf16.mxu0 0
  %1371 = vmatmul.mubr.bf16.gmra.mrb[0].mxu0 %v1285
  %v1372 = vpop.f32.mrb[0].mxu0
  %v1373 = vadd.f32 0.0, %v1372
  %v1374 = vpop.f32.mrb[0].mxu0
  %v1375 = vpop.f32.mrb[0].mxu0
  %v1376 = vadd.f32 0.0, %v1375
  %v1377 = vpop.f32.mrb[0].mxu0
  %1378 = vmatprep.mubr.bf16.mxu0 0
  %1379 = vmatmul.mubr.bf16.gmra.mrb[0].mxu0 %v1288
  %v1380 = vpop.f32.mrb[0].mxu0
  %v1381 = vadd.f32 0.0, %v1380
  %v1382 = vpop.f32.mrb[0].mxu0
  %v1383 = vpop.f32.mrb[0].mxu0
  %v1384 = vadd.f32 0.0, %v1383
  %v1385 = vpop.f32.mrb[0].mxu0
  %1386 = vdwg.mxu0
  %v1387 = vld [vmem:[%s31] sm:$0xf]
  %v1388 = vld [vmem:[%s31 + $0x4] sm:$0xf]
  %v1389 = vld [vmem:[%s31 + $0x8] sm:$0xf]
  %v1390 = vld [vmem:[%s31 + $0xc] sm:$0xf]
  %v1391 = vld [vmem:[%s31 + $0x10] sm:$0xf]
  %v1392 = vld [vmem:[%s31 + $0x14] sm:$0xf]
  %v1393 = vld [vmem:[%s31 + $0x18] sm:$0xf]
  %v1394 = vld [vmem:[%s31 + $0x1c] sm:$0xf]
  %v1403 = vunpack.c.l.b16 %v1387
  %v1404 = vunpack.c.l.b16 %v1388
  %v1405 = vunpack.c.l.b16 %v1389
  %v1406 = vunpack.c.l.b16 %v1390
  %v1407 = vunpack.c.l.b16 %v1391
  %v1408 = vunpack.c.l.b16 %v1392
  %v1409 = vunpack.c.l.b16 %v1393
  %v1410 = vunpack.c.l.b16 %v1394
  %v1411 = vpack.c.b16 %v1404, %v1403
  %v1412 = vpack.c.b16 %v1406, %v1405
  %v1413 = vpack.c.b16 %v1408, %v1407
  %v1414 = vpack.c.b16 %v1410, %v1409
  %1419 = vmatprep.subr.bf16.mxu0 0
  %1420 = vmatpush1.bf16.msra.mxu0 %v1411
  %1421 = vmatprep.subr.bf16.mxu0 0
  %1422 = vmatpush1.bf16.msra.mxu0 %v1412
  %1423 = vmatprep.subr.bf16.mxu0 0
  %1424 = vmatpush1.bf16.msra.mxu0 %v1413
  %1425 = vmatprep.subr.bf16.mxu0 0
  %1426 = vmatpush1.bf16.msra.mxu0 %v1414
  %1427 = vmatprep.subr.bf16.mxu0 0
  %1428 = vmatpush1.bf16.msra.mxu0 0
  %1429 = vmatprep.subr.bf16.mxu0 0
  %1430 = vmatpush1.bf16.msra.mxu0 0
  %1431 = vmatprep.subr.bf16.mxu0 0
  %1432 = vmatpush1.bf16.msra.mxu0 0
  %1433 = vmatprep.subr.bf16.mxu0 0
  %1434 = vmatpush1.bf16.msra.mxu0 0
  %1435 = vmatprep.subr.bf16.mxu0 0
  %1436 = vmatpush1.bf16.msra.mxu0 0
  %1437 = vmatprep.subr.bf16.mxu0 0
  %1438 = vmatpush1.bf16.msra.mxu0 0
  %1439 = vmatprep.subr.bf16.mxu0 0
  %1440 = vmatpush1.bf16.msra.mxu0 0
  %1441 = vmatprep.subr.bf16.mxu0 0
  %1442 = vmatpush1.bf16.msra.mxu0 0
  %1443 = vmatprep.subr.bf16.mxu0 0
  %1444 = vmatpush1.bf16.msra.mxu0 0
  %1445 = vmatprep.subr.bf16.mxu0 0
  %1446 = vmatpush1.bf16.msra.mxu0 0
  %1447 = vmatprep.subr.bf16.mxu0 0
  %1448 = vmatpush1.bf16.msra.mxu0 0
  %1449 = vmatprep.subr.bf16.mxu0 0
  %1450 = vmatpush1.bf16.msra.mxu0 0
  %1451 = vmatprep.mubr.bf16.mxu0 0
  %1452 = vmatmul.mubr.bf16.gmra.mrb[0].mxu0 %v1267
  %v1453 = vpop.f32.mrb[0].mxu0
  %v1454 = vadd.f32 0.0, %v1453
  %v1455 = vpop.f32.mrb[0].mxu0
  %v1456 = vpop.f32.mrb[0].mxu0
  %v1457 = vadd.f32 0.0, %v1456
  %v1458 = vpop.f32.mrb[0].mxu0
  %1459 = vmatprep.mubr.bf16.mxu0 0
  %1460 = vmatmul.mubr.bf16.gmra.mrb[0].mxu0 %v1270
  %v1461 = vpop.f32.mrb[0].mxu0
  %v1462 = vadd.f32 0.0, %v1461
  %v1463 = vpop.f32.mrb[0].mxu0
  %v1464 = vpop.f32.mrb[0].mxu0
  %v1465 = vadd.f32 0.0, %v1464
  %v1466 = vpop.f32.mrb[0].mxu0
  %1467 = vmatprep.mubr.bf16.mxu0 0
  %1468 = vmatmul.mubr.bf16.gmra.mrb[0].mxu0 %v1273
  %v1469 = vpop.f32.mrb[0].mxu0
  %v1470 = vadd.f32 0.0, %v1469
  %v1471 = vpop.f32.mrb[0].mxu0
  %v1472 = vpop.f32.mrb[0].mxu0
  %v1473 = vadd.f32 0.0, %v1472
  %v1474 = vpop.f32.mrb[0].mxu0
  %1475 = vmatprep.mubr.bf16.mxu0 0
  %1476 = vmatmul.mubr.bf16.gmra.mrb[0].mxu0 %v1276
  %v1477 = vpop.f32.mrb[0].mxu0
  %v1478 = vadd.f32 0.0, %v1477
  %v1479 = vpop.f32.mrb[0].mxu0
  %v1480 = vpop.f32.mrb[0].mxu0
  %v1481 = vadd.f32 0.0, %v1480
  %v1482 = vpop.f32.mrb[0].mxu0
  %1483 = vmatprep.mubr.bf16.mxu0 0
  %1484 = vmatmul.mubr.bf16.gmra.mrb[0].mxu0 %v1279
  %v1485 = vpop.f32.mrb[0].mxu0
  %v1486 = vadd.f32 0.0, %v1485
  %v1487 = vpop.f32.mrb[0].mxu0
  %v1488 = vpop.f32.mrb[0].mxu0
  %v1489 = vadd.f32 0.0, %v1488
  %v1490 = vpop.f32.mrb[0].mxu0
  %1491 = vmatprep.mubr.bf16.mxu0 0
  %1492 = vmatmul.mubr.bf16.gmra.mrb[0].mxu0 %v1282
  %v1493 = vpop.f32.mrb[0].mxu0
  %v1494 = vadd.f32 0.0, %v1493
  %v1495 = vpop.f32.mrb[0].mxu0
  %v1496 = vpop.f32.mrb[0].mxu0
  %v1497 = vadd.f32 0.0, %v1496
  %v1498 = vpop.f32.mrb[0].mxu0
  %1499 = vmatprep.mubr.bf16.mxu0 0
  %1500 = vmatmul.mubr.bf16.gmra.mrb[0].mxu0 %v1285
  %v1501 = vpop.f32.mrb[0].mxu0
  %v1502 = vadd.f32 0.0, %v1501
  %v1503 = vpop.f32.mrb[0].mxu0
  %v1504 = vpop.f32.mrb[0].mxu0
  %v1505 = vadd.f32 0.0, %v1504
  %v1506 = vpop.f32.mrb[0].mxu0
  %1507 = vmatprep.mubr.bf16.mxu0 0
  %1508 = vmatmul.mubr.bf16.gmra.mrb[0].mxu0 %v1288
  %v1509 = vpop.f32.mrb[0].mxu0
  %v1510 = vadd.f32 0.0, %v1509
  %v1511 = vpop.f32.mrb[0].mxu0
  %v1512 = vpop.f32.mrb[0].mxu0
  %v1513 = vadd.f32 0.0, %v1512
  %v1514 = vpop.f32.mrb[0].mxu0
  %1515 = vdwg.mxu0
  %v1516 = vld [vmem:[%s33] sm:$0xf]
  %v1517 = vld [vmem:[%s33 + $0x4] sm:$0xf]
  %v1518 = vld [vmem:[%s33 + $0x8] sm:$0xf]
  %v1519 = vld [vmem:[%s33 + $0xc] sm:$0xf]
  %v1520 = vld [vmem:[%s33 + $0x10] sm:$0xf]
  %v1521 = vld [vmem:[%s33 + $0x14] sm:$0xf]
  %v1522 = vld [vmem:[%s33 + $0x18] sm:$0xf]
  %v1523 = vld [vmem:[%s33 + $0x1c] sm:$0xf]
  %v1532 = vunpack.c.l.b16 %v1516
  %v1533 = vunpack.c.l.b16 %v1517
  %v1534 = vunpack.c.l.b16 %v1518
  %v1535 = vunpack.c.l.b16 %v1519
  %v1536 = vunpack.c.l.b16 %v1520
  %v1537 = vunpack.c.l.b16 %v1521
  %v1538 = vunpack.c.l.b16 %v1522
  %v1539 = vunpack.c.l.b16 %v1523
  %v1540 = vpack.c.b16 %v1533, %v1532
  %v1541 = vpack.c.b16 %v1535, %v1534
  %v1542 = vpack.c.b16 %v1537, %v1536
  %v1543 = vpack.c.b16 %v1539, %v1538
  %1548 = vmatprep.subr.bf16.mxu0 0
  %1549 = vmatpush1.bf16.msra.mxu0 %v1540
  %1550 = vmatprep.subr.bf16.mxu0 0
  %1551 = vmatpush1.bf16.msra.mxu0 %v1541
  %1552 = vmatprep.subr.bf16.mxu0 0
  %1553 = vmatpush1.bf16.msra.mxu0 %v1542
  %1554 = vmatprep.subr.bf16.mxu0 0
  %1555 = vmatpush1.bf16.msra.mxu0 %v1543
  %1556 = vmatprep.subr.bf16.mxu0 0
  %1557 = vmatpush1.bf16.msra.mxu0 0
  %1558 = vmatprep.subr.bf16.mxu0 0
  %1559 = vmatpush1.bf16.msra.mxu0 0
  %1560 = vmatprep.subr.bf16.mxu0 0
  %1561 = vmatpush1.bf16.msra.mxu0 0
  %1562 = vmatprep.subr.bf16.mxu0 0
  %1563 = vmatpush1.bf16.msra.mxu0 0
  %1564 = vmatprep.subr.bf16.mxu0 0
  %1565 = vmatpush1.bf16.msra.mxu0 0
  %1566 = vmatprep.subr.bf16.mxu0 0
  %1567 = vmatpush1.bf16.msra.mxu0 0
  %1568 = vmatprep.subr.bf16.mxu0 0
  %1569 = vmatpush1.bf16.msra.mxu0 0
  %1570 = vmatprep.subr.bf16.mxu0 0
  %1571 = vmatpush1.bf16.msra.mxu0 0
  %1572 = vmatprep.subr.bf16.mxu0 0
  %1573 = vmatpush1.bf16.msra.mxu0 0
  %1574 = vmatprep.subr.bf16.mxu0 0
  %1575 = vmatpush1.bf16.msra.mxu0 0
  %1576 = vmatprep.subr.bf16.mxu0 0
  %1577 = vmatpush1.bf16.msra.mxu0 0
  %1578 = vmatprep.subr.bf16.mxu0 0
  %1579 = vmatpush1.bf16.msra.mxu0 0
  %1580 = vmatprep.mubr.bf16.mxu0 0
  %1581 = vmatmul.mubr.bf16.gmra.mrb[0].mxu0 %v1267
  %v1582 = vpop.f32.mrb[0].mxu0
  %v1583 = vadd.f32 0.0, %v1582
  %v1584 = vpop.f32.mrb[0].mxu0
  %v1585 = vpop.f32.mrb[0].mxu0
  %v1586 = vadd.f32 0.0, %v1585
  %v1587 = vpop.f32.mrb[0].mxu0
  %1588 = vmatprep.mubr.bf16.mxu0 0
  %1589 = vmatmul.mubr.bf16.gmra.mrb[0].mxu0 %v1270
  %v1590 = vpop.f32.mrb[0].mxu0
  %v1591 = vadd.f32 0.0, %v1590
  %v1592 = vpop.f32.mrb[0].mxu0
  %v1593 = vpop.f32.mrb[0].mxu0
  %v1594 = vadd.f32 0.0, %v1593
  %v1595 = vpop.f32.mrb[0].mxu0
  %1596 = vmatprep.mubr.bf16.mxu0 0
  %1597 = vmatmul.mubr.bf16.gmra.mrb[0].mxu0 %v1273
  %v1598 = vpop.f32.mrb[0].mxu0
  %v1599 = vadd.f32 0.0, %v1598
  %v1600 = vpop.f32.mrb[0].mxu0
  %v1601 = vpop.f32.mrb[0].mxu0
  %v1602 = vadd.f32 0.0, %v1601
  %v1603 = vpop.f32.mrb[0].mxu0
  %1604 = vmatprep.mubr.bf16.mxu0 0
  %1605 = vmatmul.mubr.bf16.gmra.mrb[0].mxu0 %v1276
  %v1606 = vpop.f32.mrb[0].mxu0
  %v1607 = vadd.f32 0.0, %v1606
  %v1608 = vpop.f32.mrb[0].mxu0
  %v1609 = vpop.f32.mrb[0].mxu0
  %v1610 = vadd.f32 0.0, %v1609
  %v1611 = vpop.f32.mrb[0].mxu0
  %1612 = vmatprep.mubr.bf16.mxu0 0
  %1613 = vmatmul.mubr.bf16.gmra.mrb[0].mxu0 %v1279
  %v1614 = vpop.f32.mrb[0].mxu0
  %v1615 = vadd.f32 0.0, %v1614
  %v1616 = vpop.f32.mrb[0].mxu0
  %v1617 = vpop.f32.mrb[0].mxu0
  %v1618 = vadd.f32 0.0, %v1617
  %v1619 = vpop.f32.mrb[0].mxu0
  %1620 = vmatprep.mubr.bf16.mxu0 0
  %1621 = vmatmul.mubr.bf16.gmra.mrb[0].mxu0 %v1282
  %v1622 = vpop.f32.mrb[0].mxu0
  %v1623 = vadd.f32 0.0, %v1622
  %v1624 = vpop.f32.mrb[0].mxu0
  %v1625 = vpop.f32.mrb[0].mxu0
  %v1626 = vadd.f32 0.0, %v1625
  %v1627 = vpop.f32.mrb[0].mxu0
  %1628 = vmatprep.mubr.bf16.mxu0 0
  %1629 = vmatmul.mubr.bf16.gmra.mrb[0].mxu0 %v1285
  %v1630 = vpop.f32.mrb[0].mxu0
  %v1631 = vadd.f32 0.0, %v1630
  %v1632 = vpop.f32.mrb[0].mxu0
  %v1633 = vpop.f32.mrb[0].mxu0
  %v1634 = vadd.f32 0.0, %v1633
  %v1635 = vpop.f32.mrb[0].mxu0
  %1636 = vmatprep.mubr.bf16.mxu0 0
  %1637 = vmatmul.mubr.bf16.gmra.mrb[0].mxu0 %v1288
  %v1638 = vpop.f32.mrb[0].mxu0
  %v1639 = vadd.f32 0.0, %v1638
  %v1640 = vpop.f32.mrb[0].mxu0
  %v1641 = vpop.f32.mrb[0].mxu0
  %v1642 = vadd.f32 0.0, %v1641
  %v1643 = vpop.f32.mrb[0].mxu0
  %1644 = vdwg.mxu0
  %v1645 = vpack.c.bf16 %v1328, %v1325
  %v1646 = vpack.c.bf16 %v1336, %v1333
  %v1647 = vpack.c.bf16 %v1344, %v1341
  %v1648 = vpack.c.bf16 %v1352, %v1349
  %v1649 = vpack.c.bf16 %v1457, %v1454
  %v1650 = vpack.c.bf16 %v1465, %v1462
  %v1651 = vpack.c.bf16 %v1473, %v1470
  %v1652 = vpack.c.bf16 %v1481, %v1478
  %v1654 = vsel %vm689, %v1645, 0
  %v1657 = vsel %vm689, %v1646, 0
  %v1660 = vsel %vm689, %v1647, 0
  %v1663 = vsel %vm689, %v1648, 0
  %v1666 = vsel %vm689, %v1649, 0
  %v1669 = vsel %vm689, %v1650, 0
  %v1672 = vsel %vm689, %v1651, 0
  %v1675 = vsel %vm689, %v1652, 0
  %1677 = vmatprep.subr.bf16.mxu0 0
  %1678 = vmatpush1.bf16.xpose.msra.mxu0 %v1666
  %1679 = vmatprep.subr.bf16.mxu0 0
  %1680 = vmatpush1.bf16.xpose.msra.mxu0 %v1669
  %1681 = vmatprep.subr.bf16.mxu0 0
  %1682 = vmatpush1.bf16.xpose.msra.mxu0 %v1672
  %1683 = vmatprep.subr.bf16.mxu0 0
  %1684 = vmatpush1.bf16.xpose.msra.mxu0 %v1675
  %1685 = vmatprep.subr.bf16.mxu0 0
  %1686 = vmatpush1.bf16.xpose.msra.mxu0 0
  %1687 = vmatprep.subr.bf16.mxu0 0
  %1688 = vmatpush1.bf16.xpose.msra.mxu0 0
  %1689 = vmatprep.subr.bf16.mxu0 0
  %1690 = vmatpush1.bf16.xpose.msra.mxu0 0
  %1691 = vmatprep.subr.bf16.mxu0 0
  %1692 = vmatpush1.bf16.xpose.msra.mxu0 0
  %1693 = vmatprep.subr.bf16.mxu0 0
  %1694 = vmatpush1.bf16.xpose.msra.mxu0 0
  %1695 = vmatprep.subr.bf16.mxu0 0
  %1696 = vmatpush1.bf16.xpose.msra.mxu0 0
  %1697 = vmatprep.subr.bf16.mxu0 0
  %1698 = vmatpush1.bf16.xpose.msra.mxu0 0
  %1699 = vmatprep.subr.bf16.mxu0 0
  %1700 = vmatpush1.bf16.xpose.msra.mxu0 0
  %1701 = vmatprep.subr.bf16.mxu0 0
  %1702 = vmatpush1.bf16.xpose.msra.mxu0 0
  %1703 = vmatprep.subr.bf16.mxu0 0
  %1704 = vmatpush1.bf16.xpose.msra.mxu0 0
  %1705 = vmatprep.subr.bf16.mxu0 0
  %1706 = vmatpush1.bf16.xpose.msra.mxu0 0
  %1707 = vmatprep.subr.bf16.mxu0 0
  %1708 = vmatpush1.bf16.xpose.msra.mxu0 0
  %1709 = vmatprep.mubr.bf16.mxu0 0
  %1710 = vmatmul.mubr.bf16.gmra.mrb[0].mxu0 %v1654
  %v1711 = vpop.f32.mrb[0].mxu0
  %v1712 = vadd.f32 0.0, %v1711
  %v1713 = vpop.f32.mrb[0].mxu0
  %v1714 = vpop.f32.mrb[0].mxu0
  %v1715 = vadd.f32 0.0, %v1714
  %v1716 = vpop.f32.mrb[0].mxu0
  %1717 = vmatprep.mubr.bf16.mxu0 0
  %1718 = vmatmul.mubr.bf16.gmra.mrb[0].mxu0 %v1657
  %v1719 = vpop.f32.mrb[0].mxu0
  %v1720 = vadd.f32 0.0, %v1719
  %v1721 = vpop.f32.mrb[0].mxu0
  %v1722 = vpop.f32.mrb[0].mxu0
  %v1723 = vadd.f32 0.0, %v1722
  %v1724 = vpop.f32.mrb[0].mxu0
  %1725 = vmatprep.mubr.bf16.mxu0 0
  %1726 = vmatmul.mubr.bf16.gmra.mrb[0].mxu0 %v1660
  %v1727 = vpop.f32.mrb[0].mxu0
  %v1728 = vadd.f32 0.0, %v1727
  %v1729 = vpop.f32.mrb[0].mxu0
  %v1730 = vpop.f32.mrb[0].mxu0
  %v1731 = vadd.f32 0.0, %v1730
  %v1732 = vpop.f32.mrb[0].mxu0
  %1733 = vmatprep.mubr.bf16.mxu0 0
  %1734 = vmatmul.mubr.bf16.gmra.mrb[0].mxu0 %v1663
  %v1735 = vpop.f32.mrb[0].mxu0
  %v1736 = vadd.f32 0.0, %v1735
  %v1737 = vpop.f32.mrb[0].mxu0
  %v1738 = vpop.f32.mrb[0].mxu0
  %v1739 = vadd.f32 0.0, %v1738
  %v1740 = vpop.f32.mrb[0].mxu0
  %1741 = vdwg.mxu0
  %v1742 = vmul.f32 %v1712, 0.125
  %v1743 = vmul.f32 %v1715, 0.125
  %v1744 = vmul.f32 %v1720, 0.125
  %v1745 = vmul.f32 %v1723, 0.125
  %v1746 = vmul.f32 %v1728, 0.125
  %v1747 = vmul.f32 %v1731, 0.125
  %v1748 = vmul.f32 %v1736, 0.125
  %v1749 = vmul.f32 %v1739, 0.125
  %v1750 = vsel %vm689, %v1742, -inf
  %1751 = vmax.xlane.f32.xlu0 %v1750
  %v1752 = vpop.xlane.xlu0 %1751
  %v1753 = vsel %vm689, %v1743, -inf
  %1754 = vmax.xlane.f32.xlu0 %v1753
  %v1755 = vpop.xlane.xlu0 %1754
  %v1756 = vsel %vm689, %v1744, -inf
  %1757 = vmax.xlane.f32.xlu0 %v1756
  %v1758 = vpop.xlane.xlu0 %1757
  %v1759 = vsel %vm689, %v1745, -inf
  %1760 = vmax.xlane.f32.xlu0 %v1759
  %v1761 = vpop.xlane.xlu0 %1760
  %v1762 = vsel %vm689, %v1746, -inf
  %1763 = vmax.xlane.f32.xlu0 %v1762
  %v1764 = vpop.xlane.xlu0 %1763
  %v1765 = vsel %vm689, %v1747, -inf
  %1766 = vmax.xlane.f32.xlu0 %v1765
  %v1767 = vpop.xlane.xlu0 %1766
  %v1768 = vsel %vm689, %v1748, -inf
  %1769 = vmax.xlane.f32.xlu0 %v1768
  %v1770 = vpop.xlane.xlu0 %1769
  %v1771 = vsel %vm689, %v1749, -inf
  %1772 = vmax.xlane.f32.xlu0 %v1771
  %v1773 = vpop.xlane.xlu0 %1772
  %v1774 = vsub.f32 %v1742, %v1752
  %v1775 = vsub.f32 %v1743, %v1755
  %v1776 = vsub.f32 %v1744, %v1758
  %v1777 = vsub.f32 %v1745, %v1761
  %v1778 = vsub.f32 %v1746, %v1764
  %v1779 = vsub.f32 %v1747, %v1767
  %v1780 = vsub.f32 %v1748, %v1770
  %v1781 = vsub.f32 %v1749, %v1773
  %v1782 = vmul.f32 %v1774, 1.442695
  %v1783 = vpow.pop %v1782
  %v1784 = vmul.f32 %v1775, 1.442695
  %v1785 = vpow.pop %v1784
  %v1786 = vmul.f32 %v1776, 1.442695
  %v1787 = vpow.pop %v1786
  %v1788 = vmul.f32 %v1777, 1.442695
  %v1789 = vpow.pop %v1788
  %v1790 = vmul.f32 %v1778, 1.442695
  %v1791 = vpow.pop %v1790
  %v1792 = vmul.f32 %v1779, 1.442695
  %v1793 = vpow.pop %v1792
  %v1794 = vmul.f32 %v1780, 1.442695
  %v1795 = vpow.pop %v1794
  %v1796 = vmul.f32 %v1781, 1.442695
  %v1797 = vpow.pop %v1796
  %v1798 = vsel %vm689, %v1783, 0.0
  %1799 = vadd.xlane.f32.xlu0 %v1798
  %v1800 = vpop.xlane.xlu0 %1799
  %v1801 = vsel %vm689, %v1785, 0.0
  %1802 = vadd.xlane.f32.xlu0 %v1801
  %v1803 = vpop.xlane.xlu0 %1802
  %v1804 = vsel %vm689, %v1787, 0.0
  %1805 = vadd.xlane.f32.xlu0 %v1804
  %v1806 = vpop.xlane.xlu0 %1805
  %v1807 = vsel %vm689, %v1789, 0.0
  %1808 = vadd.xlane.f32.xlu0 %v1807
  %v1809 = vpop.xlane.xlu0 %1808
  %v1810 = vsel %vm689, %v1791, 0.0
  %1811 = vadd.xlane.f32.xlu0 %v1810
  %v1812 = vpop.xlane.xlu0 %1811
  %v1813 = vsel %vm689, %v1793, 0.0
  %1814 = vadd.xlane.f32.xlu0 %v1813
  %v1815 = vpop.xlane.xlu0 %1814
  %v1816 = vsel %vm689, %v1795, 0.0
  %1817 = vadd.xlane.f32.xlu0 %v1816
  %v1818 = vpop.xlane.xlu0 %1817
  %v1819 = vsel %vm689, %v1797, 0.0
  %1820 = vadd.xlane.f32.xlu0 %v1819
  %v1821 = vpop.xlane.xlu0 %1820
  %v1822 = vrcp.pop %v1800
  %v1823 = vmul.f32 %v1783, %v1822
  %v1824 = vrcp.pop %v1803
  %v1825 = vmul.f32 %v1785, %v1824
  %v1826 = vrcp.pop %v1806
  %v1827 = vmul.f32 %v1787, %v1826
  %v1828 = vrcp.pop %v1809
  %v1829 = vmul.f32 %v1789, %v1828
  %v1830 = vrcp.pop %v1812
  %v1831 = vmul.f32 %v1791, %v1830
  %v1832 = vrcp.pop %v1815
  %v1833 = vmul.f32 %v1793, %v1832
  %v1834 = vrcp.pop %v1818
  %v1835 = vmul.f32 %v1795, %v1834
  %v1836 = vrcp.pop %v1821
  %v1837 = vmul.f32 %v1797, %v1836
  %v1838 = vpack.c.bf16 %v1825, %v1823
  %v1839 = vpack.c.bf16 %v1829, %v1827
  %v1840 = vpack.c.bf16 %v1833, %v1831
  %v1841 = vpack.c.bf16 %v1837, %v1835
  %v1842 = vpack.c.bf16 %v1586, %v1583
  %v1843 = vpack.c.bf16 %v1594, %v1591
  %v1844 = vpack.c.bf16 %v1602, %v1599
  %v1845 = vpack.c.bf16 %v1610, %v1607
  %v1847 = vsel %vm689, %v1838, 0
  %v1850 = vsel %vm689, %v1839, 0
  %v1853 = vsel %vm689, %v1840, 0
  %v1856 = vsel %vm689, %v1841, 0
  %1858 = vmatprep.subr.bf16.mxu0 0
  %1859 = vmatpush1.bf16.msra.mxu0 %v1842
  %1860 = vmatprep.subr.bf16.mxu0 0
  %1861 = vmatpush1.bf16.msra.mxu0 %v1843
  %1862 = vmatprep.subr.bf16.mxu0 0
  %1863 = vmatpush1.bf16.msra.mxu0 %v1844
  %1864 = vmatprep.subr.bf16.mxu0 0
  %1865 = vmatpush1.bf16.msra.mxu0 %v1845
  %1866 = vmatprep.subr.bf16.mxu0 0
  %1867 = vmatpush1.bf16.msra.mxu0 0
  %1868 = vmatprep.subr.bf16.mxu0 0
  %1869 = vmatpush1.bf16.msra.mxu0 0
  %1870 = vmatprep.subr.bf16.mxu0 0
  %1871 = vmatpush1.bf16.msra.mxu0 0
  %1872 = vmatprep.subr.bf16.mxu0 0
  %1873 = vmatpush1.bf16.msra.mxu0 0
  %1874 = vmatprep.subr.bf16.mxu0 0
  %1875 = vmatpush1.bf16.msra.mxu0 0
  %1876 = vmatprep.subr.bf16.mxu0 0
  %1877 = vmatpush1.bf16.msra.mxu0 0
  %1878 = vmatprep.subr.bf16.mxu0 0
  %1879 = vmatpush1.bf16.msra.mxu0 0
  %1880 = vmatprep.subr.bf16.mxu0 0
  %1881 = vmatpush1.bf16.msra.mxu0 0
  %1882 = vmatprep.subr.bf16.mxu0 0
  %1883 = vmatpush1.bf16.msra.mxu0 0
  %1884 = vmatprep.subr.bf16.mxu0 0
  %1885 = vmatpush1.bf16.msra.mxu0 0
  %1886 = vmatprep.subr.bf16.mxu0 0
  %1887 = vmatpush1.bf16.msra.mxu0 0
  %1888 = vmatprep.subr.bf16.mxu0 0
  %1889 = vmatpush1.bf16.msra.mxu0 0
  %1890 = vmatprep.mubr.bf16.mxu0 0
  %1891 = vmatmul.mubr.bf16.gmra.mrb[0].mxu0 %v1847
  %v1892 = vpop.f32.mrb[0].mxu0
  %v1893 = vadd.f32 0.0, %v1892
  %v1894 = vpop.f32.mrb[0].mxu0
  %v1895 = vpop.f32.mrb[0].mxu0
  %v1896 = vadd.f32 0.0, %v1895
  %v1897 = vpop.f32.mrb[0].mxu0
  %1898 = vmatprep.mubr.bf16.mxu0 0
  %1899 = vmatmul.mubr.bf16.gmra.mrb[0].mxu0 %v1850
  %v1900 = vpop.f32.mrb[0].mxu0
  %v1901 = vadd.f32 0.0, %v1900
  %v1902 = vpop.f32.mrb[0].mxu0
  %v1903 = vpop.f32.mrb[0].mxu0
  %v1904 = vadd.f32 0.0, %v1903
  %v1905 = vpop.f32.mrb[0].mxu0
  %1906 = vmatprep.mubr.bf16.mxu0 0
  %1907 = vmatmul.mubr.bf16.gmra.mrb[0].mxu0 %v1853
  %v1908 = vpop.f32.mrb[0].mxu0
  %v1909 = vadd.f32 0.0, %v1908
  %v1910 = vpop.f32.mrb[0].mxu0
  %v1911 = vpop.f32.mrb[0].mxu0
  %v1912 = vadd.f32 0.0, %v1911
  %v1913 = vpop.f32.mrb[0].mxu0
  %1914 = vmatprep.mubr.bf16.mxu0 0
  %1915 = vmatmul.mubr.bf16.gmra.mrb[0].mxu0 %v1856
  %v1916 = vpop.f32.mrb[0].mxu0
  %v1917 = vadd.f32 0.0, %v1916
  %v1918 = vpop.f32.mrb[0].mxu0
  %v1919 = vpop.f32.mrb[0].mxu0
  %v1920 = vadd.f32 0.0, %v1919
  %v1921 = vpop.f32.mrb[0].mxu0
  %1922 = vdwg.mxu0
  %v1923 = vpack.c.bf16 %v1360, %v1357
  %v1924 = vpack.c.bf16 %v1368, %v1365
  %v1925 = vpack.c.bf16 %v1376, %v1373
  %v1926 = vpack.c.bf16 %v1384, %v1381
  %v1927 = vpack.c.bf16 %v1489, %v1486
  %v1928 = vpack.c.bf16 %v1497, %v1494
  %v1929 = vpack.c.bf16 %v1505, %v1502
  %v1930 = vpack.c.bf16 %v1513, %v1510
  %v1932 = vsel %vm689, %v1923, 0
  %v1935 = vsel %vm689, %v1924, 0
  %v1938 = vsel %vm689, %v1925, 0
  %v1941 = vsel %vm689, %v1926, 0
  %v1944 = vsel %vm689, %v1927, 0
  %v1947 = vsel %vm689, %v1928, 0
  %v1950 = vsel %vm689, %v1929, 0
  %v1953 = vsel %vm689, %v1930, 0
  %1955 = vmatprep.subr.bf16.mxu0 0
  %1956 = vmatpush1.bf16.xpose.msra.mxu0 %v1944
  %1957 = vmatprep.subr.bf16.mxu0 0
  %1958 = vmatpush1.bf16.xpose.msra.mxu0 %v1947
  %1959 = vmatprep.subr.bf16.mxu0 0
  %1960 = vmatpush1.bf16.xpose.msra.mxu0 %v1950
  %1961 = vmatprep.subr.bf16.mxu0 0
  %1962 = vmatpush1.bf16.xpose.msra.mxu0 %v1953
  %1963 = vmatprep.subr.bf16.mxu0 0
  %1964 = vmatpush1.bf16.xpose.msra.mxu0 0
  %1965 = vmatprep.subr.bf16.mxu0 0
  %1966 = vmatpush1.bf16.xpose.msra.mxu0 0
  %1967 = vmatprep.subr.bf16.mxu0 0
  %1968 = vmatpush1.bf16.xpose.msra.mxu0 0
  %1969 = vmatprep.subr.bf16.mxu0 0
  %1970 = vmatpush1.bf16.xpose.msra.mxu0 0
  %1971 = vmatprep.subr.bf16.mxu0 0
  %1972 = vmatpush1.bf16.xpose.msra.mxu0 0
  %1973 = vmatprep.subr.bf16.mxu0 0
  %1974 = vmatpush1.bf16.xpose.msra.mxu0 0
  %1975 = vmatprep.subr.bf16.mxu0 0
  %1976 = vmatpush1.bf16.xpose.msra.mxu0 0
  %1977 = vmatprep.subr.bf16.mxu0 0
  %1978 = vmatpush1.bf16.xpose.msra.mxu0 0
  %1979 = vmatprep.subr.bf16.mxu0 0
  %1980 = vmatpush1.bf16.xpose.msra.mxu0 0
  %1981 = vmatprep.subr.bf16.mxu0 0
  %1982 = vmatpush1.bf16.xpose.msra.mxu0 0
  %1983 = vmatprep.subr.bf16.mxu0 0
  %1984 = vmatpush1.bf16.xpose.msra.mxu0 0
  %1985 = vmatprep.subr.bf16.mxu0 0
  %1986 = vmatpush1.bf16.xpose.msra.mxu0 0
  %1987 = vmatprep.mubr.bf16.mxu0 0
  %1988 = vmatmul.mubr.bf16.gmra.mrb[0].mxu0 %v1932
  %v1989 = vpop.f32.mrb[0].mxu0
  %v1990 = vadd.f32 0.0, %v1989
  %v1991 = vpop.f32.mrb[0].mxu0
  %v1992 = vpop.f32.mrb[0].mxu0
  %v1993 = vadd.f32 0.0, %v1992
  %v1994 = vpop.f32.mrb[0].mxu0
  %1995 = vmatprep.mubr.bf16.mxu0 0
  %1996 = vmatmul.mubr.bf16.gmra.mrb[0].mxu0 %v1935
  %v1997 = vpop.f32.mrb[0].mxu0
  %v1998 = vadd.f32 0.0, %v1997
  %v1999 = vpop.f32.mrb[0].mxu0
  %v2000 = vpop.f32.mrb[0].mxu0
  %v2001 = vadd.f32 0.0, %v2000
  %v2002 = vpop.f32.mrb[0].mxu0
  %2003 = vmatprep.mubr.bf16.mxu0 0
  %2004 = vmatmul.mubr.bf16.gmra.mrb[0].mxu0 %v1938
  %v2005 = vpop.f32.mrb[0].mxu0
  %v2006 = vadd.f32 0.0, %v2005
  %v2007 = vpop.f32.mrb[0].mxu0
  %v2008 = vpop.f32.mrb[0].mxu0
  %v2009 = vadd.f32 0.0, %v2008
  %v2010 = vpop.f32.mrb[0].mxu0
  %2011 = vmatprep.mubr.bf16.mxu0 0
  %2012 = vmatmul.mubr.bf16.gmra.mrb[0].mxu0 %v1941
  %v2013 = vpop.f32.mrb[0].mxu0
  %v2014 = vadd.f32 0.0, %v2013
  %v2015 = vpop.f32.mrb[0].mxu0
  %v2016 = vpop.f32.mrb[0].mxu0
  %v2017 = vadd.f32 0.0, %v2016
  %v2018 = vpop.f32.mrb[0].mxu0
  %2019 = vdwg.mxu0
  %v2020 = vmul.f32 %v1990, 0.125
  %v2021 = vmul.f32 %v1993, 0.125
  %v2022 = vmul.f32 %v1998, 0.125
  %v2023 = vmul.f32 %v2001, 0.125
  %v2024 = vmul.f32 %v2006, 0.125
  %v2025 = vmul.f32 %v2009, 0.125
  %v2026 = vmul.f32 %v2014, 0.125
  %v2027 = vmul.f32 %v2017, 0.125
  %v2028 = vsel %vm689, %v2020, -inf
  %2029 = vmax.xlane.f32.xlu0 %v2028
  %v2030 = vpop.xlane.xlu0 %2029
  %v2031 = vsel %vm689, %v2021, -inf
  %2032 = vmax.xlane.f32.xlu0 %v2031
  %v2033 = vpop.xlane.xlu0 %2032
  %v2034 = vsel %vm689, %v2022, -inf
  %2035 = vmax.xlane.f32.xlu0 %v2034
  %v2036 = vpop.xlane.xlu0 %2035
  %v2037 = vsel %vm689, %v2023, -inf
  %2038 = vmax.xlane.f32.xlu0 %v2037
  %v2039 = vpop.xlane.xlu0 %2038
  %v2040 = vsel %vm689, %v2024, -inf
  %2041 = vmax.xlane.f32.xlu0 %v2040
  %v2042 = vpop.xlane.xlu0 %2041
  %v2043 = vsel %vm689, %v2025, -inf
  %2044 = vmax.xlane.f32.xlu0 %v2043
  %v2045 = vpop.xlane.xlu0 %2044
  %v2046 = vsel %vm689, %v2026, -inf
  %2047 = vmax.xlane.f32.xlu0 %v2046
  %v2048 = vpop.xlane.xlu0 %2047
  %v2049 = vsel %vm689, %v2027, -inf
  %2050 = vmax.xlane.f32.xlu0 %v2049
  %v2051 = vpop.xlane.xlu0 %2050
  %v2052 = vsub.f32 %v2020, %v2030
  %v2053 = vsub.f32 %v2021, %v2033
  %v2054 = vsub.f32 %v2022, %v2036
  %v2055 = vsub.f32 %v2023, %v2039
  %v2056 = vsub.f32 %v2024, %v2042
  %v2057 = vsub.f32 %v2025, %v2045
  %v2058 = vsub.f32 %v2026, %v2048
  %v2059 = vsub.f32 %v2027, %v2051
  %v2060 = vmul.f32 %v2052, 1.442695
  %v2061 = vpow.pop %v2060
  %v2062 = vmul.f32 %v2053, 1.442695
  %v2063 = vpow.pop %v2062
  %v2064 = vmul.f32 %v2054, 1.442695
  %v2065 = vpow.pop %v2064
  %v2066 = vmul.f32 %v2055, 1.442695
  %v2067 = vpow.pop %v2066
  %v2068 = vmul.f32 %v2056, 1.442695
  %v2069 = vpow.pop %v2068
  %v2070 = vmul.f32 %v2057, 1.442695
  %v2071 = vpow.pop %v2070
  %v2072 = vmul.f32 %v2058, 1.442695
  %v2073 = vpow.pop %v2072
  %v2074 = vmul.f32 %v2059, 1.442695
  %v2075 = vpow.pop %v2074
  %v2076 = vsel %vm689, %v2061, 0.0
  %2077 = vadd.xlane.f32.xlu0 %v2076
  %v2078 = vpop.xlane.xlu0 %2077
  %v2079 = vsel %vm689, %v2063, 0.0
  %2080 = vadd.xlane.f32.xlu0 %v2079
  %v2081 = vpop.xlane.xlu0 %2080
  %v2082 = vsel %vm689, %v2065, 0.0
  %2083 = vadd.xlane.f32.xlu0 %v2082
  %v2084 = vpop.xlane.xlu0 %2083
  %v2085 = vsel %vm689, %v2067, 0.0
  %2086 = vadd.xlane.f32.xlu0 %v2085
  %v2087 = vpop.xlane.xlu0 %2086
  %v2088 = vsel %vm689, %v2069, 0.0
  %2089 = vadd.xlane.f32.xlu0 %v2088
  %v2090 = vpop.xlane.xlu0 %2089
  %v2091 = vsel %vm689, %v2071, 0.0
  %2092 = vadd.xlane.f32.xlu0 %v2091
  %v2093 = vpop.xlane.xlu0 %2092
  %v2094 = vsel %vm689, %v2073, 0.0
  %2095 = vadd.xlane.f32.xlu0 %v2094
  %v2096 = vpop.xlane.xlu0 %2095
  %v2097 = vsel %vm689, %v2075, 0.0
  %2098 = vadd.xlane.f32.xlu0 %v2097
  %v2099 = vpop.xlane.xlu0 %2098
  %v2100 = vrcp.pop %v2078
  %v2101 = vmul.f32 %v2061, %v2100
  %v2102 = vrcp.pop %v2081
  %v2103 = vmul.f32 %v2063, %v2102
  %v2104 = vrcp.pop %v2084
  %v2105 = vmul.f32 %v2065, %v2104
  %v2106 = vrcp.pop %v2087
  %v2107 = vmul.f32 %v2067, %v2106
  %v2108 = vrcp.pop %v2090
  %v2109 = vmul.f32 %v2069, %v2108
  %v2110 = vrcp.pop %v2093
  %v2111 = vmul.f32 %v2071, %v2110
  %v2112 = vrcp.pop %v2096
  %v2113 = vmul.f32 %v2073, %v2112
  %v2114 = vrcp.pop %v2099
  %v2115 = vmul.f32 %v2075, %v2114
  %v2116 = vpack.c.bf16 %v2103, %v2101
  %v2117 = vpack.c.bf16 %v2107, %v2105
  %v2118 = vpack.c.bf16 %v2111, %v2109
  %v2119 = vpack.c.bf16 %v2115, %v2113
  %v2120 = vpack.c.bf16 %v1618, %v1615
  %v2121 = vpack.c.bf16 %v1626, %v1623
  %v2122 = vpack.c.bf16 %v1634, %v1631
  %v2123 = vpack.c.bf16 %v1642, %v1639
  %v2125 = vsel %vm689, %v2116, 0
  %v2128 = vsel %vm689, %v2117, 0
  %v2131 = vsel %vm689, %v2118, 0
  %v2134 = vsel %vm689, %v2119, 0
  %2136 = vmatprep.subr.bf16.mxu0 0
  %2137 = vmatpush1.bf16.msra.mxu0 %v2120
  %2138 = vmatprep.subr.bf16.mxu0 0
  %2139 = vmatpush1.bf16.msra.mxu0 %v2121
  %2140 = vmatprep.subr.bf16.mxu0 0
  %2141 = vmatpush1.bf16.msra.mxu0 %v2122
  %2142 = vmatprep.subr.bf16.mxu0 0
  %2143 = vmatpush1.bf16.msra.mxu0 %v2123
  %2144 = vmatprep.subr.bf16.mxu0 0
  %2145 = vmatpush1.bf16.msra.mxu0 0
  %2146 = vmatprep.subr.bf16.mxu0 0
  %2147 = vmatpush1.bf16.msra.mxu0 0
  %2148 = vmatprep.subr.bf16.mxu0 0
  %2149 = vmatpush1.bf16.msra.mxu0 0
  %2150 = vmatprep.subr.bf16.mxu0 0
  %2151 = vmatpush1.bf16.msra.mxu0 0
  %2152 = vmatprep.subr.bf16.mxu0 0
  %2153 = vmatpush1.bf16.msra.mxu0 0
  %2154 = vmatprep.subr.bf16.mxu0 0
  %2155 = vmatpush1.bf16.msra.mxu0 0
  %2156 = vmatprep.subr.bf16.mxu0 0
  %2157 = vmatpush1.bf16.msra.mxu0 0
  %2158 = vmatprep.subr.bf16.mxu0 0
  %2159 = vmatpush1.bf16.msra.mxu0 0
  %2160 = vmatprep.subr.bf16.mxu0 0
  %2161 = vmatpush1.bf16.msra.mxu0 0
  %2162 = vmatprep.subr.bf16.mxu0 0
  %2163 = vmatpush1.bf16.msra.mxu0 0
  %2164 = vmatprep.subr.bf16.mxu0 0
  %2165 = vmatpush1.bf16.msra.mxu0 0
  %2166 = vmatprep.subr.bf16.mxu0 0
  %2167 = vmatpush1.bf16.msra.mxu0 0
  %2168 = vmatprep.mubr.bf16.mxu0 0
  %2169 = vmatmul.mubr.bf16.gmra.mrb[0].mxu0 %v2125
  %v2170 = vpop.f32.mrb[0].mxu0
  %v2171 = vadd.f32 0.0, %v2170
  %v2172 = vpop.f32.mrb[0].mxu0
  %v2173 = vpop.f32.mrb[0].mxu0
  %v2174 = vadd.f32 0.0, %v2173
  %v2175 = vpop.f32.mrb[0].mxu0
  %2176 = vmatprep.mubr.bf16.mxu0 0
  %2177 = vmatmul.mubr.bf16.gmra.mrb[0].mxu0 %v2128
  %v2178 = vpop.f32.mrb[0].mxu0
  %v2179 = vadd.f32 0.0, %v2178
  %v2180 = vpop.f32.mrb[0].mxu0
  %v2181 = vpop.f32.mrb[0].mxu0
  %v2182 = vadd.f32 0.0, %v2181
  %v2183 = vpop.f32.mrb[0].mxu0
  %2184 = vmatprep.mubr.bf16.mxu0 0
  %2185 = vmatmul.mubr.bf16.gmra.mrb[0].mxu0 %v2131
  %v2186 = vpop.f32.mrb[0].mxu0
  %v2187 = vadd.f32 0.0, %v2186
  %v2188 = vpop.f32.mrb[0].mxu0
  %v2189 = vpop.f32.mrb[0].mxu0
  %v2190 = vadd.f32 0.0, %v2189
  %v2191 = vpop.f32.mrb[0].mxu0
  %2192 = vmatprep.mubr.bf16.mxu0 0
  %2193 = vmatmul.mubr.bf16.gmra.mrb[0].mxu0 %v2134
  %v2194 = vpop.f32.mrb[0].mxu0
  %v2195 = vadd.f32 0.0, %v2194
  %v2196 = vpop.f32.mrb[0].mxu0
  %v2197 = vpop.f32.mrb[0].mxu0
  %v2198 = vadd.f32 0.0, %v2197
  %v2199 = vpop.f32.mrb[0].mxu0
  %2200 = vdwg.mxu0
  %v2201 = vadd.f32 %v959, %v1893
  %v2202 = vadd.f32 %v960, %v1896
  %v2203 = vadd.f32 %v961, %v1901
  %v2204 = vadd.f32 %v962, %v1904
  %v2205 = vadd.f32 %v963, %v1909
  %v2206 = vadd.f32 %v964, %v1912
  %v2207 = vadd.f32 %v965, %v1917
  %v2208 = vadd.f32 %v966, %v1920
  %v2209 = vadd.f32 %v967, %v2171
  %v2210 = vadd.f32 %v968, %v2174
  %v2211 = vadd.f32 %v969, %v2179
  %v2212 = vadd.f32 %v970, %v2182
  %v2213 = vadd.f32 %v971, %v2187
  %v2214 = vadd.f32 %v972, %v2190
  %v2215 = vadd.f32 %v973, %v2195
  %v2216 = vadd.f32 %v974, %v2198
  %v2217 = vld [vmem:[%s35] sm:$0x1]
  %v2218 = vld [vmem:[%s37] sm:$0x1]
  %v2219 = vsel %vm689, %v2201, 0.0
  %2220 = vadd.xlane.f32.xlu0 %v2219
  %v2221 = vpop.xlane.xlu0 %2220
  %v2222 = vsel %vm689, %v2202, 0.0
  %2223 = vadd.xlane.f32.xlu0 %v2222
  %v2224 = vpop.xlane.xlu0 %2223
  %v2225 = vsel %vm689, %v2203, 0.0
  %2226 = vadd.xlane.f32.xlu0 %v2225
  %v2227 = vpop.xlane.xlu0 %2226
  %v2228 = vsel %vm689, %v2204, 0.0
  %2229 = vadd.xlane.f32.xlu0 %v2228
  %v2230 = vpop.xlane.xlu0 %2229
  %v2231 = vsel %vm689, %v2205, 0.0
  %2232 = vadd.xlane.f32.xlu0 %v2231
  %v2233 = vpop.xlane.xlu0 %2232
  %v2234 = vsel %vm689, %v2206, 0.0
  %2235 = vadd.xlane.f32.xlu0 %v2234
  %v2236 = vpop.xlane.xlu0 %2235
  %v2237 = vsel %vm689, %v2207, 0.0
  %2238 = vadd.xlane.f32.xlu0 %v2237
  %v2239 = vpop.xlane.xlu0 %2238
  %v2240 = vsel %vm689, %v2208, 0.0
  %2241 = vadd.xlane.f32.xlu0 %v2240
  %v2242 = vpop.xlane.xlu0 %2241
  %v2243 = vsel %vm689, %v2209, 0.0
  %2244 = vadd.xlane.f32.xlu0 %v2243
  %v2245 = vpop.xlane.xlu0 %2244
  %v2246 = vsel %vm689, %v2210, 0.0
  %2247 = vadd.xlane.f32.xlu0 %v2246
  %v2248 = vpop.xlane.xlu0 %2247
  %v2249 = vsel %vm689, %v2211, 0.0
  %2250 = vadd.xlane.f32.xlu0 %v2249
  %v2251 = vpop.xlane.xlu0 %2250
  %v2252 = vsel %vm689, %v2212, 0.0
  %2253 = vadd.xlane.f32.xlu0 %v2252
  %v2254 = vpop.xlane.xlu0 %2253
  %v2255 = vsel %vm689, %v2213, 0.0
  %2256 = vadd.xlane.f32.xlu0 %v2255
  %v2257 = vpop.xlane.xlu0 %2256
  %v2258 = vsel %vm689, %v2214, 0.0
  %2259 = vadd.xlane.f32.xlu0 %v2258
  %v2260 = vpop.xlane.xlu0 %2259
  %v2261 = vsel %vm689, %v2215, 0.0
  %2262 = vadd.xlane.f32.xlu0 %v2261
  %v2263 = vpop.xlane.xlu0 %2262
  %v2264 = vsel %vm689, %v2216, 0.0
  %2265 = vadd.xlane.f32.xlu0 %v2264
  %v2266 = vpop.xlane.xlu0 %2265
  %v2267 = vmul.f32 %v2221, %v738
  %v2268 = vmul.f32 %v2224, %v738
  %v2269 = vmul.f32 %v2227, %v738
  %v2270 = vmul.f32 %v2230, %v738
  %v2271 = vmul.f32 %v2233, %v738
  %v2272 = vmul.f32 %v2236, %v738
  %v2273 = vmul.f32 %v2239, %v738
  %v2274 = vmul.f32 %v2242, %v738
  %v2275 = vmul.f32 %v2245, %v738
  %v2276 = vmul.f32 %v2248, %v738
  %v2277 = vmul.f32 %v2251, %v738
  %v2278 = vmul.f32 %v2254, %v738
  %v2279 = vmul.f32 %v2257, %v738
  %v2280 = vmul.f32 %v2260, %v738
  %v2281 = vmul.f32 %v2263, %v738
  %v2282 = vmul.f32 %v2266, %v738
  %v2283 = vsub.f32 %v2201, %v2267
  %v2284 = vsub.f32 %v2202, %v2268
  %v2285 = vsub.f32 %v2203, %v2269
  %v2286 = vsub.f32 %v2204, %v2270
  %v2287 = vsub.f32 %v2205, %v2271
  %v2288 = vsub.f32 %v2206, %v2272
  %v2289 = vsub.f32 %v2207, %v2273
  %v2290 = vsub.f32 %v2208, %v2274
  %v2291 = vsub.f32 %v2209, %v2275
  %v2292 = vsub.f32 %v2210, %v2276
  %v2293 = vsub.f32 %v2211, %v2277
  %v2294 = vsub.f32 %v2212, %v2278
  %v2295 = vsub.f32 %v2213, %v2279
  %v2296 = vsub.f32 %v2214, %v2280
  %v2297 = vsub.f32 %v2215, %v2281
  %v2298 = vsub.f32 %v2216, %v2282
  %v2299 = vmul.f32 %v2283, %v2283
  %v2300 = vmul.f32 %v2284, %v2284
  %v2301 = vmul.f32 %v2285, %v2285
  %v2302 = vmul.f32 %v2286, %v2286
  %v2303 = vmul.f32 %v2287, %v2287
  %v2304 = vmul.f32 %v2288, %v2288
  %v2305 = vmul.f32 %v2289, %v2289
  %v2306 = vmul.f32 %v2290, %v2290
  %v2307 = vmul.f32 %v2291, %v2291
  %v2308 = vmul.f32 %v2292, %v2292
  %v2309 = vmul.f32 %v2293, %v2293
  %v2310 = vmul.f32 %v2294, %v2294
  %v2311 = vmul.f32 %v2295, %v2295
  %v2312 = vmul.f32 %v2296, %v2296
  %v2313 = vmul.f32 %v2297, %v2297
  %v2314 = vmul.f32 %v2298, %v2298
  %v2315 = vsel %vm689, %v2299, 0.0
  %2316 = vadd.xlane.f32.xlu0 %v2315
  %v2317 = vpop.xlane.xlu0 %2316
  %v2318 = vsel %vm689, %v2300, 0.0
  %2319 = vadd.xlane.f32.xlu0 %v2318
  %v2320 = vpop.xlane.xlu0 %2319
  %v2321 = vsel %vm689, %v2301, 0.0
  %2322 = vadd.xlane.f32.xlu0 %v2321
  %v2323 = vpop.xlane.xlu0 %2322
  %v2324 = vsel %vm689, %v2302, 0.0
  %2325 = vadd.xlane.f32.xlu0 %v2324
  %v2326 = vpop.xlane.xlu0 %2325
  %v2327 = vsel %vm689, %v2303, 0.0
  %2328 = vadd.xlane.f32.xlu0 %v2327
  %v2329 = vpop.xlane.xlu0 %2328
  %v2330 = vsel %vm689, %v2304, 0.0
  %2331 = vadd.xlane.f32.xlu0 %v2330
  %v2332 = vpop.xlane.xlu0 %2331
  %v2333 = vsel %vm689, %v2305, 0.0
  %2334 = vadd.xlane.f32.xlu0 %v2333
  %v2335 = vpop.xlane.xlu0 %2334
  %v2336 = vsel %vm689, %v2306, 0.0
  %2337 = vadd.xlane.f32.xlu0 %v2336
  %v2338 = vpop.xlane.xlu0 %2337
  %v2339 = vsel %vm689, %v2307, 0.0
  %2340 = vadd.xlane.f32.xlu0 %v2339
  %v2341 = vpop.xlane.xlu0 %2340
  %v2342 = vsel %vm689, %v2308, 0.0
  %2343 = vadd.xlane.f32.xlu0 %v2342
  %v2344 = vpop.xlane.xlu0 %2343
  %v2345 = vsel %vm689, %v2309, 0.0
  %2346 = vadd.xlane.f32.xlu0 %v2345
  %v2347 = vpop.xlane.xlu0 %2346
  %v2348 = vsel %vm689, %v2310, 0.0
  %2349 = vadd.xlane.f32.xlu0 %v2348
  %v2350 = vpop.xlane.xlu0 %2349
  %v2351 = vsel %vm689, %v2311, 0.0
  %2352 = vadd.xlane.f32.xlu0 %v2351
  %v2353 = vpop.xlane.xlu0 %2352
  %v2354 = vsel %vm689, %v2312, 0.0
  %2355 = vadd.xlane.f32.xlu0 %v2354
  %v2356 = vpop.xlane.xlu0 %2355
  %v2357 = vsel %vm689, %v2313, 0.0
  %2358 = vadd.xlane.f32.xlu0 %v2357
  %v2359 = vpop.xlane.xlu0 %2358
  %v2360 = vsel %vm689, %v2314, 0.0
  %2361 = vadd.xlane.f32.xlu0 %v2360
  %v2362 = vpop.xlane.xlu0 %2361
  %v2363 = vmul.f32 %v2317, %v738
  %v2364 = vmul.f32 %v2320, %v738
  %v2365 = vmul.f32 %v2323, %v738
  %v2366 = vmul.f32 %v2326, %v738
  %v2367 = vmul.f32 %v2329, %v738
  %v2368 = vmul.f32 %v2332, %v738
  %v2369 = vmul.f32 %v2335, %v738
  %v2370 = vmul.f32 %v2338, %v738
  %v2371 = vmul.f32 %v2341, %v738
  %v2372 = vmul.f32 %v2344, %v738
  %v2373 = vmul.f32 %v2347, %v738
  %v2374 = vmul.f32 %v2350, %v738
  %v2375 = vmul.f32 %v2353, %v738
  %v2376 = vmul.f32 %v2356, %v738
  %v2377 = vmul.f32 %v2359, %v738
  %v2378 = vmul.f32 %v2362, %v738
  %v2379 = vadd.f32 %v2363, 1e-05
  %v2380 = vadd.f32 %v2364, 1e-05
  %v2381 = vadd.f32 %v2365, 1e-05
  %v2382 = vadd.f32 %v2366, 1e-05
  %v2383 = vadd.f32 %v2367, 1e-05
  %v2384 = vadd.f32 %v2368, 1e-05
  %v2385 = vadd.f32 %v2369, 1e-05
  %v2386 = vadd.f32 %v2370, 1e-05
  %v2387 = vadd.f32 %v2371, 1e-05
  %v2388 = vadd.f32 %v2372, 1e-05
  %v2389 = vadd.f32 %v2373, 1e-05
  %v2390 = vadd.f32 %v2374, 1e-05
  %v2391 = vadd.f32 %v2375, 1e-05
  %v2392 = vadd.f32 %v2376, 1e-05
  %v2393 = vadd.f32 %v2377, 1e-05
  %v2394 = vadd.f32 %v2378, 1e-05
  %v2395 = vrsqrt.pop %v2379
  %v2396 = vrsqrt.pop %v2380
  %v2397 = vrsqrt.pop %v2381
  %v2398 = vrsqrt.pop %v2382
  %v2399 = vrsqrt.pop %v2383
  %v2400 = vrsqrt.pop %v2384
  %v2401 = vrsqrt.pop %v2385
  %v2402 = vrsqrt.pop %v2386
  %v2403 = vrsqrt.pop %v2387
  %v2404 = vrsqrt.pop %v2388
  %v2405 = vrsqrt.pop %v2389
  %v2406 = vrsqrt.pop %v2390
  %v2407 = vrsqrt.pop %v2391
  %v2408 = vrsqrt.pop %v2392
  %v2409 = vrsqrt.pop %v2393
  %v2410 = vrsqrt.pop %v2394
  %v2411 = vmul.f32 %v2283, %v2395
  %v2412 = vmul.f32 %v2284, %v2396
  %v2413 = vmul.f32 %v2285, %v2397
  %v2414 = vmul.f32 %v2286, %v2398
  %v2415 = vmul.f32 %v2287, %v2399
  %v2416 = vmul.f32 %v2288, %v2400
  %v2417 = vmul.f32 %v2289, %v2401
  %v2418 = vmul.f32 %v2290, %v2402
  %v2419 = vmul.f32 %v2291, %v2403
  %v2420 = vmul.f32 %v2292, %v2404
  %v2421 = vmul.f32 %v2293, %v2405
  %v2422 = vmul.f32 %v2294, %v2406
  %v2423 = vmul.f32 %v2295, %v2407
  %v2424 = vmul.f32 %v2296, %v2408
  %v2425 = vmul.f32 %v2297, %v2409
  %v2426 = vmul.f32 %v2298, %v2410
  %v2427 = vlaneseq
  %v2428 = vshrl.u32 %v2427, 7
  %v2429 = vsub.s32 0, %v2428
  %v2430 = vrot.slane %v2217, %v2429
  %v2431 = vmul.f32 %v2411, %v2430
  %v2432 = vmul.f32 %v2412, %v2430
  %v2433 = vmul.f32 %v2413, %v2430
  %v2434 = vmul.f32 %v2414, %v2430
  %v2435 = vmul.f32 %v2415, %v2430
  %v2436 = vmul.f32 %v2416, %v2430
  %v2437 = vmul.f32 %v2417, %v2430
  %v2438 = vmul.f32 %v2418, %v2430
  %v2439 = vmul.f32 %v2419, %v2430
  %v2440 = vmul.f32 %v2420, %v2430
  %v2441 = vmul.f32 %v2421, %v2430
  %v2442 = vmul.f32 %v2422, %v2430
  %v2443 = vmul.f32 %v2423, %v2430
  %v2444 = vmul.f32 %v2424, %v2430
  %v2445 = vmul.f32 %v2425, %v2430
  %v2446 = vmul.f32 %v2426, %v2430
  %v2447 = vlaneseq
  %v2448 = vshrl.u32 %v2447, 7
  %v2449 = vsub.s32 0, %v2448
  %v2450 = vrot.slane %v2218, %v2449
  %v2451 = vadd.f32 %v2431, %v2450
  %v2452 = vadd.f32 %v2432, %v2450
  %v2453 = vadd.f32 %v2433, %v2450
  %v2454 = vadd.f32 %v2434, %v2450
  %v2455 = vadd.f32 %v2435, %v2450
  %v2456 = vadd.f32 %v2436, %v2450
  %v2457 = vadd.f32 %v2437, %v2450
  %v2458 = vadd.f32 %v2438, %v2450
  %v2459 = vadd.f32 %v2439, %v2450
  %v2460 = vadd.f32 %v2440, %v2450
  %v2461 = vadd.f32 %v2441, %v2450
  %v2462 = vadd.f32 %v2442, %v2450
  %v2463 = vadd.f32 %v2443, %v2450
  %v2464 = vadd.f32 %v2444, %v2450
  %v2465 = vadd.f32 %v2445, %v2450
  %v2466 = vadd.f32 %v2446, %v2450
  %v2467 = vld [vmem:[%s39] sm:$0xf]
  %v2468 = vld [vmem:[%s39 + $0x4] sm:$0xf]
  %v2469 = vld [vmem:[%s39 + $0x8] sm:$0xf]
  %v2470 = vld [vmem:[%s39 + $0xc] sm:$0xf]
  %v2471 = vld [vmem:[%s39 + $0x10] sm:$0xf]
  %v2472 = vld [vmem:[%s39 + $0x14] sm:$0xf]
  %v2473 = vld [vmem:[%s39 + $0x18] sm:$0xf]
  %v2474 = vld [vmem:[%s39 + $0x1c] sm:$0xf]
  %v2475 = vpack.c.bf16 %v2452, %v2451
  %v2476 = vpack.c.bf16 %v2454, %v2453
  %v2477 = vpack.c.bf16 %v2456, %v2455
  %v2478 = vpack.c.bf16 %v2458, %v2457
  %v2479 = vpack.c.bf16 %v2460, %v2459
  %v2480 = vpack.c.bf16 %v2462, %v2461
  %v2481 = vpack.c.bf16 %v2464, %v2463
  %v2482 = vpack.c.bf16 %v2466, %v2465
  %v2491 = vunpack.c.l.b16 %v2467
  %v2492 = vunpack.c.l.b16 %v2468
  %v2493 = vunpack.c.l.b16 %v2469
  %v2494 = vunpack.c.l.b16 %v2470
  %v2495 = vunpack.c.l.b16 %v2471
  %v2496 = vunpack.c.l.b16 %v2472
  %v2497 = vunpack.c.l.b16 %v2473
  %v2498 = vunpack.c.l.b16 %v2474
  %v2499 = vpack.c.b16 %v2492, %v2491
  %v2500 = vpack.c.b16 %v2494, %v2493
  %v2501 = vpack.c.b16 %v2496, %v2495
  %v2502 = vpack.c.b16 %v2498, %v2497
  %v2508 = vsel %vm689, %v2475, 0
  %v2511 = vsel %vm689, %v2476, 0
  %v2514 = vsel %vm689, %v2477, 0
  %v2517 = vsel %vm689, %v2478, 0
  %v2520 = vsel %vm689, %v2479, 0
  %v2523 = vsel %vm689, %v2480, 0
  %v2526 = vsel %vm689, %v2481, 0
  %v2529 = vsel %vm689, %v2482, 0
  %2531 = vmatprep.subr.bf16.mxu0 0
  %2532 = vmatpush1.bf16.msra.mxu0 %v2499
  %2533 = vmatprep.subr.bf16.mxu0 0
  %2534 = vmatpush1.bf16.msra.mxu0 %v2500
  %2535 = vmatprep.subr.bf16.mxu0 0
  %2536 = vmatpush1.bf16.msra.mxu0 %v2501
  %2537 = vmatprep.subr.bf16.mxu0 0
  %2538 = vmatpush1.bf16.msra.mxu0 %v2502
  %2539 = vmatprep.subr.bf16.mxu0 0
  %2540 = vmatpush1.bf16.msra.mxu0 0
  %2541 = vmatprep.subr.bf16.mxu0 0
  %2542 = vmatpush1.bf16.msra.mxu0 0
  %2543 = vmatprep.subr.bf16.mxu0 0
  %2544 = vmatpush1.bf16.msra.mxu0 0
  %2545 = vmatprep.subr.bf16.mxu0 0
  %2546 = vmatpush1.bf16.msra.mxu0 0
  %2547 = vmatprep.subr.bf16.mxu0 0
  %2548 = vmatpush1.bf16.msra.mxu0 0
  %2549 = vmatprep.subr.bf16.mxu0 0
  %2550 = vmatpush1.bf16.msra.mxu0 0
  %2551 = vmatprep.subr.bf16.mxu0 0
  %2552 = vmatpush1.bf16.msra.mxu0 0
  %2553 = vmatprep.subr.bf16.mxu0 0
  %2554 = vmatpush1.bf16.msra.mxu0 0
  %2555 = vmatprep.subr.bf16.mxu0 0
  %2556 = vmatpush1.bf16.msra.mxu0 0
  %2557 = vmatprep.subr.bf16.mxu0 0
  %2558 = vmatpush1.bf16.msra.mxu0 0
  %2559 = vmatprep.subr.bf16.mxu0 0
  %2560 = vmatpush1.bf16.msra.mxu0 0
  %2561 = vmatprep.subr.bf16.mxu0 0
  %2562 = vmatpush1.bf16.msra.mxu0 0
  %2563 = vmatprep.mubr.bf16.mxu0 0
  %2564 = vmatmul.mubr.bf16.gmra.mrb[0].mxu0 %v2508
  %v2565 = vpop.f32.mrb[0].mxu0
  %v2566 = vadd.f32 0.0, %v2565
  %v2567 = vpop.f32.mrb[0].mxu0
  %v2568 = vpop.f32.mrb[0].mxu0
  %v2569 = vadd.f32 0.0, %v2568
  %v2570 = vpop.f32.mrb[0].mxu0
  %2571 = vmatprep.mubr.bf16.mxu0 0
  %2572 = vmatmul.mubr.bf16.gmra.mrb[0].mxu0 %v2511
  %v2573 = vpop.f32.mrb[0].mxu0
  %v2574 = vadd.f32 0.0, %v2573
  %v2575 = vpop.f32.mrb[0].mxu0
  %v2576 = vpop.f32.mrb[0].mxu0
  %v2577 = vadd.f32 0.0, %v2576
  %v2578 = vpop.f32.mrb[0].mxu0
  %2579 = vmatprep.mubr.bf16.mxu0 0
  %2580 = vmatmul.mubr.bf16.gmra.mrb[0].mxu0 %v2514
  %v2581 = vpop.f32.mrb[0].mxu0
  %v2582 = vadd.f32 0.0, %v2581
  %v2583 = vpop.f32.mrb[0].mxu0
  %v2584 = vpop.f32.mrb[0].mxu0
  %v2585 = vadd.f32 0.0, %v2584
  %v2586 = vpop.f32.mrb[0].mxu0
  %2587 = vmatprep.mubr.bf16.mxu0 0
  %2588 = vmatmul.mubr.bf16.gmra.mrb[0].mxu0 %v2517
  %v2589 = vpop.f32.mrb[0].mxu0
  %v2590 = vadd.f32 0.0, %v2589
  %v2591 = vpop.f32.mrb[0].mxu0
  %v2592 = vpop.f32.mrb[0].mxu0
  %v2593 = vadd.f32 0.0, %v2592
  %v2594 = vpop.f32.mrb[0].mxu0
  %2595 = vmatprep.mubr.bf16.mxu0 0
  %2596 = vmatmul.mubr.bf16.gmra.mrb[0].mxu0 %v2520
  %v2597 = vpop.f32.mrb[0].mxu0
  %v2598 = vadd.f32 0.0, %v2597
  %v2599 = vpop.f32.mrb[0].mxu0
  %v2600 = vpop.f32.mrb[0].mxu0
  %v2601 = vadd.f32 0.0, %v2600
  %v2602 = vpop.f32.mrb[0].mxu0
  %2603 = vmatprep.mubr.bf16.mxu0 0
  %2604 = vmatmul.mubr.bf16.gmra.mrb[0].mxu0 %v2523
  %v2605 = vpop.f32.mrb[0].mxu0
  %v2606 = vadd.f32 0.0, %v2605
  %v2607 = vpop.f32.mrb[0].mxu0
  %v2608 = vpop.f32.mrb[0].mxu0
  %v2609 = vadd.f32 0.0, %v2608
  %v2610 = vpop.f32.mrb[0].mxu0
  %2611 = vmatprep.mubr.bf16.mxu0 0
  %2612 = vmatmul.mubr.bf16.gmra.mrb[0].mxu0 %v2526
  %v2613 = vpop.f32.mrb[0].mxu0
  %v2614 = vadd.f32 0.0, %v2613
  %v2615 = vpop.f32.mrb[0].mxu0
  %v2616 = vpop.f32.mrb[0].mxu0
  %v2617 = vadd.f32 0.0, %v2616
  %v2618 = vpop.f32.mrb[0].mxu0
  %2619 = vmatprep.mubr.bf16.mxu0 0
  %2620 = vmatmul.mubr.bf16.gmra.mrb[0].mxu0 %v2529
  %v2621 = vpop.f32.mrb[0].mxu0
  %v2622 = vadd.f32 0.0, %v2621
  %v2623 = vpop.f32.mrb[0].mxu0
  %v2624 = vpop.f32.mrb[0].mxu0
  %v2625 = vadd.f32 0.0, %v2624
  %v2626 = vpop.f32.mrb[0].mxu0
  %2627 = vdwg.mxu0
  %v2628 = vld [vmem:[%s41] sm:$0xf]
  %v2629 = vld [vmem:[%s41 + $0x4] sm:$0xf]
  %v2630 = vld [vmem:[%s41 + $0x8] sm:$0xf]
  %v2631 = vld [vmem:[%s41 + $0xc] sm:$0xf]
  %v2632 = vld [vmem:[%s41 + $0x10] sm:$0xf]
  %v2633 = vld [vmem:[%s41 + $0x14] sm:$0xf]
  %v2634 = vld [vmem:[%s41 + $0x18] sm:$0xf]
  %v2635 = vld [vmem:[%s41 + $0x1c] sm:$0xf]
  %v2636 = vpack.c.bf16 %v975, %v975
  %v2645 = vunpack.c.l.b16 %v2628
  %v2646 = vunpack.c.l.b16 %v2629
  %v2647 = vunpack.c.l.b16 %v2630
  %v2648 = vunpack.c.l.b16 %v2631
  %v2649 = vunpack.c.l.b16 %v2632
  %v2650 = vunpack.c.l.b16 %v2633
  %v2651 = vunpack.c.l.b16 %v2634
  %v2652 = vunpack.c.l.b16 %v2635
  %v2653 = vpack.c.b16 %v2646, %v2645
  %v2654 = vpack.c.b16 %v2648, %v2647
  %v2655 = vpack.c.b16 %v2650, %v2649
  %v2656 = vpack.c.b16 %v2652, %v2651
  %v2662 = vsel %vm689, %v2636, 0
  %2664 = vmatprep.subr.bf16.mxu0 0
  %2665 = vmatpush1.bf16.msra.mxu0 %v2653
  %2666 = vmatprep.subr.bf16.mxu0 0
  %2667 = vmatpush1.bf16.msra.mxu0 %v2654
  %2668 = vmatprep.subr.bf16.mxu0 0
  %2669 = vmatpush1.bf16.msra.mxu0 %v2655
  %2670 = vmatprep.subr.bf16.mxu0 0
  %2671 = vmatpush1.bf16.msra.mxu0 %v2656
  %2672 = vmatprep.subr.bf16.mxu0 0
  %2673 = vmatpush1.bf16.msra.mxu0 0
  %2674 = vmatprep.subr.bf16.mxu0 0
  %2675 = vmatpush1.bf16.msra.mxu0 0
  %2676 = vmatprep.subr.bf16.mxu0 0
  %2677 = vmatpush1.bf16.msra.mxu0 0
  %2678 = vmatprep.subr.bf16.mxu0 0
  %2679 = vmatpush1.bf16.msra.mxu0 0
  %2680 = vmatprep.subr.bf16.mxu0 0
  %2681 = vmatpush1.bf16.msra.mxu0 0
  %2682 = vmatprep.subr.bf16.mxu0 0
  %2683 = vmatpush1.bf16.msra.mxu0 0
  %2684 = vmatprep.subr.bf16.mxu0 0
  %2685 = vmatpush1.bf16.msra.mxu0 0
  %2686 = vmatprep.subr.bf16.mxu0 0
  %2687 = vmatpush1.bf16.msra.mxu0 0
  %2688 = vmatprep.subr.bf16.mxu0 0
  %2689 = vmatpush1.bf16.msra.mxu0 0
  %2690 = vmatprep.subr.bf16.mxu0 0
  %2691 = vmatpush1.bf16.msra.mxu0 0
  %2692 = vmatprep.subr.bf16.mxu0 0
  %2693 = vmatpush1.bf16.msra.mxu0 0
  %2694 = vmatprep.subr.bf16.mxu0 0
  %2695 = vmatpush1.bf16.msra.mxu0 0
  %2696 = vmatprep.mubr.bf16.mxu0 0
  %2697 = vmatmul.mubr.bf16.gmra.mrb[0].mxu0 %v2662
  %v2698 = vpop.f32.mrb[0].mxu0
  %v2699 = vadd.f32 0.0, %v2698
  %v2700 = vpop.f32.mrb[0].mxu0
  %v2701 = vpop.f32.mrb[0].mxu0
  %v2702 = vpop.f32.mrb[0].mxu0
  %2703 = vdwg.mxu0
  %v2704 = vld [vmem:[%s43] sm:$0xf]
  %v2705 = vld [vmem:[%s43 + $0x4] sm:$0xf]
  %v2706 = vld [vmem:[%s43 + $0x8] sm:$0xf]
  %v2707 = vld [vmem:[%s43 + $0xc] sm:$0xf]
  %v2708 = vld [vmem:[%s43 + $0x10] sm:$0xf]
  %v2709 = vld [vmem:[%s43 + $0x14] sm:$0xf]
  %v2710 = vld [vmem:[%s43 + $0x18] sm:$0xf]
  %v2711 = vld [vmem:[%s43 + $0x1c] sm:$0xf]
  %v2720 = vunpack.c.l.b16 %v2704
  %v2721 = vunpack.c.l.b16 %v2705
  %v2722 = vunpack.c.l.b16 %v2706
  %v2723 = vunpack.c.l.b16 %v2707
  %v2724 = vunpack.c.l.b16 %v2708
  %v2725 = vunpack.c.l.b16 %v2709
  %v2726 = vunpack.c.l.b16 %v2710
  %v2727 = vunpack.c.l.b16 %v2711
  %v2728 = vpack.c.b16 %v2721, %v2720
  %v2729 = vpack.c.b16 %v2723, %v2722
  %v2730 = vpack.c.b16 %v2725, %v2724
  %v2731 = vpack.c.b16 %v2727, %v2726
  %2736 = vmatprep.subr.bf16.mxu0 0
  %2737 = vmatpush1.bf16.msra.mxu0 %v2728
  %2738 = vmatprep.subr.bf16.mxu0 0
  %2739 = vmatpush1.bf16.msra.mxu0 %v2729
  %2740 = vmatprep.subr.bf16.mxu0 0
  %2741 = vmatpush1.bf16.msra.mxu0 %v2730
  %2742 = vmatprep.subr.bf16.mxu0 0
  %2743 = vmatpush1.bf16.msra.mxu0 %v2731
  %2744 = vmatprep.subr.bf16.mxu0 0
  %2745 = vmatpush1.bf16.msra.mxu0 0
  %2746 = vmatprep.subr.bf16.mxu0 0
  %2747 = vmatpush1.bf16.msra.mxu0 0
  %2748 = vmatprep.subr.bf16.mxu0 0
  %2749 = vmatpush1.bf16.msra.mxu0 0
  %2750 = vmatprep.subr.bf16.mxu0 0
  %2751 = vmatpush1.bf16.msra.mxu0 0
  %2752 = vmatprep.subr.bf16.mxu0 0
  %2753 = vmatpush1.bf16.msra.mxu0 0
  %2754 = vmatprep.subr.bf16.mxu0 0
  %2755 = vmatpush1.bf16.msra.mxu0 0
  %2756 = vmatprep.subr.bf16.mxu0 0
  %2757 = vmatpush1.bf16.msra.mxu0 0
  %2758 = vmatprep.subr.bf16.mxu0 0
  %2759 = vmatpush1.bf16.msra.mxu0 0
  %2760 = vmatprep.subr.bf16.mxu0 0
  %2761 = vmatpush1.bf16.msra.mxu0 0
  %2762 = vmatprep.subr.bf16.mxu0 0
  %2763 = vmatpush1.bf16.msra.mxu0 0
  %2764 = vmatprep.subr.bf16.mxu0 0
  %2765 = vmatpush1.bf16.msra.mxu0 0
  %2766 = vmatprep.subr.bf16.mxu0 0
  %2767 = vmatpush1.bf16.msra.mxu0 0
  %2768 = vmatprep.mubr.bf16.mxu0 0
  %2769 = vmatmul.mubr.bf16.gmra.mrb[0].mxu0 %v2662
  %v2770 = vpop.f32.mrb[0].mxu0
  %v2771 = vadd.f32 0.0, %v2770
  %v2772 = vpop.f32.mrb[0].mxu0
  %v2773 = vpop.f32.mrb[0].mxu0
  %v2774 = vpop.f32.mrb[0].mxu0
  %2775 = vdwg.mxu0
  %v2776 = vlaneseq
  %v2777 = vshrl.u32 %v2776, 7
  %v2778 = vsub.s32 0, %v2777
  %v2779 = vrot.slane %v2699, %v2778
  %v2780 = vmul.f32 %v2566, %v2779
  %v2781 = vmul.f32 %v2569, %v2779
  %v2782 = vmul.f32 %v2574, %v2779
  %v2783 = vmul.f32 %v2577, %v2779
  %v2784 = vmul.f32 %v2582, %v2779
  %v2785 = vmul.f32 %v2585, %v2779
  %v2786 = vmul.f32 %v2590, %v2779
  %v2787 = vmul.f32 %v2593, %v2779
  %v2788 = vsel %vm689, %v2780, 0.0
  %2789 = vadd.xlane.f32.xlu0 %v2788
  %v2790 = vpop.xlane.xlu0 %2789
  %v2791 = vsel %vm689, %v2781, 0.0
  %2792 = vadd.xlane.f32.xlu0 %v2791
  %v2793 = vpop.xlane.xlu0 %2792
  %v2794 = vsel %vm689, %v2782, 0.0
  %2795 = vadd.xlane.f32.xlu0 %v2794
  %v2796 = vpop.xlane.xlu0 %2795
  %v2797 = vsel %vm689, %v2783, 0.0
  %2798 = vadd.xlane.f32.xlu0 %v2797
  %v2799 = vpop.xlane.xlu0 %2798
  %v2800 = vsel %vm689, %v2784, 0.0
  %2801 = vadd.xlane.f32.xlu0 %v2800
  %v2802 = vpop.xlane.xlu0 %2801
  %v2803 = vsel %vm689, %v2785, 0.0
  %2804 = vadd.xlane.f32.xlu0 %v2803
  %v2805 = vpop.xlane.xlu0 %2804
  %v2806 = vsel %vm689, %v2786, 0.0
  %2807 = vadd.xlane.f32.xlu0 %v2806
  %v2808 = vpop.xlane.xlu0 %2807
  %v2809 = vsel %vm689, %v2787, 0.0
  %2810 = vadd.xlane.f32.xlu0 %v2809
  %v2811 = vpop.xlane.xlu0 %2810
  %v2812 = vmul.f32 %v2790, 0.125
  %v2813 = vmul.f32 %v2793, 0.125
  %v2814 = vmul.f32 %v2796, 0.125
  %v2815 = vmul.f32 %v2799, 0.125
  %v2816 = vmul.f32 %v2802, 0.125
  %v2817 = vmul.f32 %v2805, 0.125
  %v2818 = vmul.f32 %v2808, 0.125
  %v2819 = vmul.f32 %v2811, 0.125
  %v2820 = vlaneseq
  %v2821 = vshrl.u32 %v2820, 7
  %v2822 = vsub.s32 1, %v2821
  %v2823 = vrot.slane %v2699, %v2822
  %v2824 = vmul.f32 %v2566, %v2823
  %v2825 = vmul.f32 %v2569, %v2823
  %v2826 = vmul.f32 %v2574, %v2823
  %v2827 = vmul.f32 %v2577, %v2823
  %v2828 = vmul.f32 %v2582, %v2823
  %v2829 = vmul.f32 %v2585, %v2823
  %v2830 = vmul.f32 %v2590, %v2823
  %v2831 = vmul.f32 %v2593, %v2823
  %v2832 = vsel %vm689, %v2824, 0.0
  %2833 = vadd.xlane.f32.xlu0 %v2832
  %v2834 = vpop.xlane.xlu0 %2833
  %v2835 = vsel %vm689, %v2825, 0.0
  %2836 = vadd.xlane.f32.xlu0 %v2835
  %v2837 = vpop.xlane.xlu0 %2836
  %v2838 = vsel %vm689, %v2826, 0.0
  %2839 = vadd.xlane.f32.xlu0 %v2838
  %v2840 = vpop.xlane.xlu0 %2839
  %v2841 = vsel %vm689, %v2827, 0.0
  %2842 = vadd.xlane.f32.xlu0 %v2841
  %v2843 = vpop.xlane.xlu0 %2842
  %v2844 = vsel %vm689, %v2828, 0.0
  %2845 = vadd.xlane.f32.xlu0 %v2844
  %v2846 = vpop.xlane.xlu0 %2845
  %v2847 = vsel %vm689, %v2829, 0.0
  %2848 = vadd.xlane.f32.xlu0 %v2847
  %v2849 = vpop.xlane.xlu0 %2848
  %v2850 = vsel %vm689, %v2830, 0.0
  %2851 = vadd.xlane.f32.xlu0 %v2850
  %v2852 = vpop.xlane.xlu0 %2851
  %v2853 = vsel %vm689, %v2831, 0.0
  %2854 = vadd.xlane.f32.xlu0 %v2853
  %v2855 = vpop.xlane.xlu0 %2854
  %v2856 = vmul.f32 %v2834, 0.125
  %v2857 = vmul.f32 %v2837, 0.125
  %v2858 = vmul.f32 %v2840, 0.125
  %v2859 = vmul.f32 %v2843, 0.125
  %v2860 = vmul.f32 %v2846, 0.125
  %v2861 = vmul.f32 %v2849, 0.125
  %v2862 = vmul.f32 %v2852, 0.125
  %v2863 = vmul.f32 %v2855, 0.125
  %v2864 = vmax.f32 %v2812, %v2856
  %v2865 = vmax.f32 %v2813, %v2857
  %v2866 = vmax.f32 %v2814, %v2858
  %v2867 = vmax.f32 %v2815, %v2859
  %v2868 = vmax.f32 %v2816, %v2860
  %v2869 = vmax.f32 %v2817, %v2861
  %v2870 = vmax.f32 %v2818, %v2862
  %v2871 = vmax.f32 %v2819, %v2863
  %v2872 = vsub.f32 %v2812, %v2864
  %v2873 = vsub.f32 %v2813, %v2865
  %v2874 = vsub.f32 %v2814, %v2866
  %v2875 = vsub.f32 %v2815, %v2867
  %v2876 = vsub.f32 %v2816, %v2868
  %v2877 = vsub.f32 %v2817, %v2869
  %v2878 = vsub.f32 %v2818, %v2870
  %v2879 = vsub.f32 %v2819, %v2871
  %v2880 = vmul.f32 %v2872, 1.442695
  %v2881 = vpow.pop %v2880
  %v2882 = vmul.f32 %v2873, 1.442695
  %v2883 = vpow.pop %v2882
  %v2884 = vmul.f32 %v2874, 1.442695
  %v2885 = vpow.pop %v2884
  %v2886 = vmul.f32 %v2875, 1.442695
  %v2887 = vpow.pop %v2886
  %v2888 = vmul.f32 %v2876, 1.442695
  %v2889 = vpow.pop %v2888
  %v2890 = vmul.f32 %v2877, 1.442695
  %v2891 = vpow.pop %v2890
  %v2892 = vmul.f32 %v2878, 1.442695
  %v2893 = vpow.pop %v2892
  %v2894 = vmul.f32 %v2879, 1.442695
  %v2895 = vpow.pop %v2894
  %v2896 = vsub.f32 %v2856, %v2864
  %v2897 = vsub.f32 %v2857, %v2865
  %v2898 = vsub.f32 %v2858, %v2866
  %v2899 = vsub.f32 %v2859, %v2867
  %v2900 = vsub.f32 %v2860, %v2868
  %v2901 = vsub.f32 %v2861, %v2869
  %v2902 = vsub.f32 %v2862, %v2870
  %v2903 = vsub.f32 %v2863, %v2871
  %v2904 = vmul.f32 %v2896, 1.442695
  %v2905 = vpow.pop %v2904
  %v2906 = vmul.f32 %v2897, 1.442695
  %v2907 = vpow.pop %v2906
  %v2908 = vmul.f32 %v2898, 1.442695
  %v2909 = vpow.pop %v2908
  %v2910 = vmul.f32 %v2899, 1.442695
  %v2911 = vpow.pop %v2910
  %v2912 = vmul.f32 %v2900, 1.442695
  %v2913 = vpow.pop %v2912
  %v2914 = vmul.f32 %v2901, 1.442695
  %v2915 = vpow.pop %v2914
  %v2916 = vmul.f32 %v2902, 1.442695
  %v2917 = vpow.pop %v2916
  %v2918 = vmul.f32 %v2903, 1.442695
  %v2919 = vpow.pop %v2918
  %v2920 = vlaneseq
  %v2921 = vshrl.u32 %v2920, 7
  %v2922 = vsub.s32 0, %v2921
  %v2923 = vrot.slane %v2771, %v2922
  %v2924 = vmul.f32 %v2881, %v2923
  %v2925 = vmul.f32 %v2883, %v2923
  %v2926 = vmul.f32 %v2885, %v2923
  %v2927 = vmul.f32 %v2887, %v2923
  %v2928 = vmul.f32 %v2889, %v2923
  %v2929 = vmul.f32 %v2891, %v2923
  %v2930 = vmul.f32 %v2893, %v2923
  %v2931 = vmul.f32 %v2895, %v2923
  %v2932 = vlaneseq
  %v2933 = vshrl.u32 %v2932, 7
  %v2934 = vsub.s32 1, %v2933
  %v2935 = vrot.slane %v2771, %v2934
  %v2936 = vmul.f32 %v2905, %v2935
  %v2937 = vmul.f32 %v2907, %v2935
  %v2938 = vmul.f32 %v2909, %v2935
  %v2939 = vmul.f32 %v2911, %v2935
  %v2940 = vmul.f32 %v2913, %v2935
  %v2941 = vmul.f32 %v2915, %v2935
  %v2942 = vmul.f32 %v2917, %v2935
  %v2943 = vmul.f32 %v2919, %v2935
  %v2944 = vadd.f32 %v2924, %v2936
  %v2945 = vadd.f32 %v2925, %v2937
  %v2946 = vadd.f32 %v2926, %v2938
  %v2947 = vadd.f32 %v2927, %v2939
  %v2948 = vadd.f32 %v2928, %v2940
  %v2949 = vadd.f32 %v2929, %v2941
  %v2950 = vadd.f32 %v2930, %v2942
  %v2951 = vadd.f32 %v2931, %v2943
  %v2952 = vadd.f32 %v2881, %v2905
  %v2953 = vadd.f32 %v2883, %v2907
  %v2954 = vadd.f32 %v2885, %v2909
  %v2955 = vadd.f32 %v2887, %v2911
  %v2956 = vadd.f32 %v2889, %v2913
  %v2957 = vadd.f32 %v2891, %v2915
  %v2958 = vadd.f32 %v2893, %v2917
  %v2959 = vadd.f32 %v2895, %v2919
  %v2960 = vrcp.pop %v2952
  %v2961 = vmul.f32 %v2944, %v2960
  %v2962 = vrcp.pop %v2953
  %v2963 = vmul.f32 %v2945, %v2962
  %v2964 = vrcp.pop %v2954
  %v2965 = vmul.f32 %v2946, %v2964
  %v2966 = vrcp.pop %v2955
  %v2967 = vmul.f32 %v2947, %v2966
  %v2968 = vrcp.pop %v2956
  %v2969 = vmul.f32 %v2948, %v2968
  %v2970 = vrcp.pop %v2957
  %v2971 = vmul.f32 %v2949, %v2970
  %v2972 = vrcp.pop %v2958
  %v2973 = vmul.f32 %v2950, %v2972
  %v2974 = vrcp.pop %v2959
  %v2975 = vmul.f32 %v2951, %v2974
  %v2976 = vlaneseq
  %v2977 = vshrl.u32 %v2976, 7
  %v2978 = vsub.s32 2, %v2977
  %v2979 = vrot.slane %v2699, %v2978
  %v2980 = vmul.f32 %v2598, %v2979
  %v2981 = vmul.f32 %v2601, %v2979
  %v2982 = vmul.f32 %v2606, %v2979
  %v2983 = vmul.f32 %v2609, %v2979
  %v2984 = vmul.f32 %v2614, %v2979
  %v2985 = vmul.f32 %v2617, %v2979
  %v2986 = vmul.f32 %v2622, %v2979
  %v2987 = vmul.f32 %v2625, %v2979
  %v2988 = vsel %vm689, %v2980, 0.0
  %2989 = vadd.xlane.f32.xlu0 %v2988
  %v2990 = vpop.xlane.xlu0 %2989
  %v2991 = vsel %vm689, %v2981, 0.0
  %2992 = vadd.xlane.f32.xlu0 %v2991
  %v2993 = vpop.xlane.xlu0 %2992
  %v2994 = vsel %vm689, %v2982, 0.0
  %2995 = vadd.xlane.f32.xlu0 %v2994
  %v2996 = vpop.xlane.xlu0 %2995
  %v2997 = vsel %vm689, %v2983, 0.0
  %2998 = vadd.xlane.f32.xlu0 %v2997
  %v2999 = vpop.xlane.xlu0 %2998
  %v3000 = vsel %vm689, %v2984, 0.0
  %3001 = vadd.xlane.f32.xlu0 %v3000
  %v3002 = vpop.xlane.xlu0 %3001
  %v3003 = vsel %vm689, %v2985, 0.0
  %3004 = vadd.xlane.f32.xlu0 %v3003
  %v3005 = vpop.xlane.xlu0 %3004
  %v3006 = vsel %vm689, %v2986, 0.0
  %3007 = vadd.xlane.f32.xlu0 %v3006
  %v3008 = vpop.xlane.xlu0 %3007
  %v3009 = vsel %vm689, %v2987, 0.0
  %3010 = vadd.xlane.f32.xlu0 %v3009
  %v3011 = vpop.xlane.xlu0 %3010
  %v3012 = vmul.f32 %v2990, 0.125
  %v3013 = vmul.f32 %v2993, 0.125
  %v3014 = vmul.f32 %v2996, 0.125
  %v3015 = vmul.f32 %v2999, 0.125
  %v3016 = vmul.f32 %v3002, 0.125
  %v3017 = vmul.f32 %v3005, 0.125
  %v3018 = vmul.f32 %v3008, 0.125
  %v3019 = vmul.f32 %v3011, 0.125
  %v3020 = vlaneseq
  %v3021 = vshrl.u32 %v3020, 7
  %v3022 = vsub.s32 3, %v3021
  %v3023 = vrot.slane %v2699, %v3022
  %v3024 = vmul.f32 %v2598, %v3023
  %v3025 = vmul.f32 %v2601, %v3023
  %v3026 = vmul.f32 %v2606, %v3023
  %v3027 = vmul.f32 %v2609, %v3023
  %v3028 = vmul.f32 %v2614, %v3023
  %v3029 = vmul.f32 %v2617, %v3023
  %v3030 = vmul.f32 %v2622, %v3023
  %v3031 = vmul.f32 %v2625, %v3023
  %v3032 = vsel %vm689, %v3024, 0.0
  %3033 = vadd.xlane.f32.xlu0 %v3032
  %v3034 = vpop.xlane.xlu0 %3033
  %v3035 = vsel %vm689, %v3025, 0.0
  %3036 = vadd.xlane.f32.xlu0 %v3035
  %v3037 = vpop.xlane.xlu0 %3036
  %v3038 = vsel %vm689, %v3026, 0.0
  %3039 = vadd.xlane.f32.xlu0 %v3038
  %v3040 = vpop.xlane.xlu0 %3039
  %v3041 = vsel %vm689, %v3027, 0.0
  %3042 = vadd.xlane.f32.xlu0 %v3041
  %v3043 = vpop.xlane.xlu0 %3042
  %v3044 = vsel %vm689, %v3028, 0.0
  %3045 = vadd.xlane.f32.xlu0 %v3044
  %v3046 = vpop.xlane.xlu0 %3045
  %v3047 = vsel %vm689, %v3029, 0.0
  %3048 = vadd.xlane.f32.xlu0 %v3047
  %v3049 = vpop.xlane.xlu0 %3048
  %v3050 = vsel %vm689, %v3030, 0.0
  %3051 = vadd.xlane.f32.xlu0 %v3050
  %v3052 = vpop.xlane.xlu0 %3051
  %v3053 = vsel %vm689, %v3031, 0.0
  %3054 = vadd.xlane.f32.xlu0 %v3053
  %v3055 = vpop.xlane.xlu0 %3054
  %v3056 = vmul.f32 %v3034, 0.125
  %v3057 = vmul.f32 %v3037, 0.125
  %v3058 = vmul.f32 %v3040, 0.125
  %v3059 = vmul.f32 %v3043, 0.125
  %v3060 = vmul.f32 %v3046, 0.125
  %v3061 = vmul.f32 %v3049, 0.125
  %v3062 = vmul.f32 %v3052, 0.125
  %v3063 = vmul.f32 %v3055, 0.125
  %v3064 = vmax.f32 %v3012, %v3056
  %v3065 = vmax.f32 %v3013, %v3057
  %v3066 = vmax.f32 %v3014, %v3058
  %v3067 = vmax.f32 %v3015, %v3059
  %v3068 = vmax.f32 %v3016, %v3060
  %v3069 = vmax.f32 %v3017, %v3061
  %v3070 = vmax.f32 %v3018, %v3062
  %v3071 = vmax.f32 %v3019, %v3063
  %v3072 = vsub.f32 %v3012, %v3064
  %v3073 = vsub.f32 %v3013, %v3065
  %v3074 = vsub.f32 %v3014, %v3066
  %v3075 = vsub.f32 %v3015, %v3067
  %v3076 = vsub.f32 %v3016, %v3068
  %v3077 = vsub.f32 %v3017, %v3069
  %v3078 = vsub.f32 %v3018, %v3070
  %v3079 = vsub.f32 %v3019, %v3071
  %v3080 = vmul.f32 %v3072, 1.442695
  %v3081 = vpow.pop %v3080
  %v3082 = vmul.f32 %v3073, 1.442695
  %v3083 = vpow.pop %v3082
  %v3084 = vmul.f32 %v3074, 1.442695
  %v3085 = vpow.pop %v3084
  %v3086 = vmul.f32 %v3075, 1.442695
  %v3087 = vpow.pop %v3086
  %v3088 = vmul.f32 %v3076, 1.442695
  %v3089 = vpow.pop %v3088
  %v3090 = vmul.f32 %v3077, 1.442695
  %v3091 = vpow.pop %v3090
  %v3092 = vmul.f32 %v3078, 1.442695
  %v3093 = vpow.pop %v3092
  %v3094 = vmul.f32 %v3079, 1.442695
  %v3095 = vpow.pop %v3094
  %v3096 = vsub.f32 %v3056, %v3064
  %v3097 = vsub.f32 %v3057, %v3065
  %v3098 = vsub.f32 %v3058, %v3066
  %v3099 = vsub.f32 %v3059, %v3067
  %v3100 = vsub.f32 %v3060, %v3068
  %v3101 = vsub.f32 %v3061, %v3069
  %v3102 = vsub.f32 %v3062, %v3070
  %v3103 = vsub.f32 %v3063, %v3071
  %v3104 = vmul.f32 %v3096, 1.442695
  %v3105 = vpow.pop %v3104
  %v3106 = vmul.f32 %v3097, 1.442695
  %v3107 = vpow.pop %v3106
  %v3108 = vmul.f32 %v3098, 1.442695
  %v3109 = vpow.pop %v3108
  %v3110 = vmul.f32 %v3099, 1.442695
  %v3111 = vpow.pop %v3110
  %v3112 = vmul.f32 %v3100, 1.442695
  %v3113 = vpow.pop %v3112
  %v3114 = vmul.f32 %v3101, 1.442695
  %v3115 = vpow.pop %v3114
  %v3116 = vmul.f32 %v3102, 1.442695
  %v3117 = vpow.pop %v3116
  %v3118 = vmul.f32 %v3103, 1.442695
  %v3119 = vpow.pop %v3118
  %v3120 = vlaneseq
  %v3121 = vshrl.u32 %v3120, 7
  %v3122 = vsub.s32 2, %v3121
  %v3123 = vrot.slane %v2771, %v3122
  %v3124 = vmul.f32 %v3081, %v3123
  %v3125 = vmul.f32 %v3083, %v3123
  %v3126 = vmul.f32 %v3085, %v3123
  %v3127 = vmul.f32 %v3087, %v3123
  %v3128 = vmul.f32 %v3089, %v3123
  %v3129 = vmul.f32 %v3091, %v3123
  %v3130 = vmul.f32 %v3093, %v3123
  %v3131 = vmul.f32 %v3095, %v3123
  %v3132 = vlaneseq
  %v3133 = vshrl.u32 %v3132, 7
  %v3134 = vsub.s32 3, %v3133
  %v3135 = vrot.slane %v2771, %v3134
  %v3136 = vmul.f32 %v3105, %v3135
  %v3137 = vmul.f32 %v3107, %v3135
  %v3138 = vmul.f32 %v3109, %v3135
  %v3139 = vmul.f32 %v3111, %v3135
  %v3140 = vmul.f32 %v3113, %v3135
  %v3141 = vmul.f32 %v3115, %v3135
  %v3142 = vmul.f32 %v3117, %v3135
  %v3143 = vmul.f32 %v3119, %v3135
  %v3144 = vadd.f32 %v3124, %v3136
  %v3145 = vadd.f32 %v3125, %v3137
  %v3146 = vadd.f32 %v3126, %v3138
  %v3147 = vadd.f32 %v3127, %v3139
  %v3148 = vadd.f32 %v3128, %v3140
  %v3149 = vadd.f32 %v3129, %v3141
  %v3150 = vadd.f32 %v3130, %v3142
  %v3151 = vadd.f32 %v3131, %v3143
  %v3152 = vadd.f32 %v3081, %v3105
  %v3153 = vadd.f32 %v3083, %v3107
  %v3154 = vadd.f32 %v3085, %v3109
  %v3155 = vadd.f32 %v3087, %v3111
  %v3156 = vadd.f32 %v3089, %v3113
  %v3157 = vadd.f32 %v3091, %v3115
  %v3158 = vadd.f32 %v3093, %v3117
  %v3159 = vadd.f32 %v3095, %v3119
  %v3160 = vrcp.pop %v3152
  %v3161 = vmul.f32 %v3144, %v3160
  %v3162 = vrcp.pop %v3153
  %v3163 = vmul.f32 %v3145, %v3162
  %v3164 = vrcp.pop %v3154
  %v3165 = vmul.f32 %v3146, %v3164
  %v3166 = vrcp.pop %v3155
  %v3167 = vmul.f32 %v3147, %v3166
  %v3168 = vrcp.pop %v3156
  %v3169 = vmul.f32 %v3148, %v3168
  %v3170 = vrcp.pop %v3157
  %v3171 = vmul.f32 %v3149, %v3170
  %v3172 = vrcp.pop %v3158
  %v3173 = vmul.f32 %v3150, %v3172
  %v3174 = vrcp.pop %v3159
  %v3175 = vmul.f32 %v3151, %v3174
  %v3176 = vadd.f32 %v2201, %v2961
  %v3177 = vadd.f32 %v2202, %v2963
  %v3178 = vadd.f32 %v2203, %v2965
  %v3179 = vadd.f32 %v2204, %v2967
  %v3180 = vadd.f32 %v2205, %v2969
  %v3181 = vadd.f32 %v2206, %v2971
  %v3182 = vadd.f32 %v2207, %v2973
  %v3183 = vadd.f32 %v2208, %v2975
  %v3184 = vadd.f32 %v2209, %v3161
  %v3185 = vadd.f32 %v2210, %v3163
  %v3186 = vadd.f32 %v2211, %v3165
  %v3187 = vadd.f32 %v2212, %v3167
  %v3188 = vadd.f32 %v2213, %v3169
  %v3189 = vadd.f32 %v2214, %v3171
  %v3190 = vadd.f32 %v2215, %v3173
  %v3191 = vadd.f32 %v2216, %v3175
  %v3192 = vld [vmem:[%s45] sm:$0x1]
  %v3193 = vld [vmem:[%s47] sm:$0x1]
  %v3194 = vsel %vm689, %v3176, 0.0
  %3195 = vadd.xlane.f32.xlu0 %v3194
  %v3196 = vpop.xlane.xlu0 %3195
  %v3197 = vsel %vm689, %v3177, 0.0
  %3198 = vadd.xlane.f32.xlu0 %v3197
  %v3199 = vpop.xlane.xlu0 %3198
  %v3200 = vsel %vm689, %v3178, 0.0
  %3201 = vadd.xlane.f32.xlu0 %v3200
  %v3202 = vpop.xlane.xlu0 %3201
  %v3203 = vsel %vm689, %v3179, 0.0
  %3204 = vadd.xlane.f32.xlu0 %v3203
  %v3205 = vpop.xlane.xlu0 %3204
  %v3206 = vsel %vm689, %v3180, 0.0
  %3207 = vadd.xlane.f32.xlu0 %v3206
  %v3208 = vpop.xlane.xlu0 %3207
  %v3209 = vsel %vm689, %v3181, 0.0
  %3210 = vadd.xlane.f32.xlu0 %v3209
  %v3211 = vpop.xlane.xlu0 %3210
  %v3212 = vsel %vm689, %v3182, 0.0
  %3213 = vadd.xlane.f32.xlu0 %v3212
  %v3214 = vpop.xlane.xlu0 %3213
  %v3215 = vsel %vm689, %v3183, 0.0
  %3216 = vadd.xlane.f32.xlu0 %v3215
  %v3217 = vpop.xlane.xlu0 %3216
  %v3218 = vsel %vm689, %v3184, 0.0
  %3219 = vadd.xlane.f32.xlu0 %v3218
  %v3220 = vpop.xlane.xlu0 %3219
  %v3221 = vsel %vm689, %v3185, 0.0
  %3222 = vadd.xlane.f32.xlu0 %v3221
  %v3223 = vpop.xlane.xlu0 %3222
  %v3224 = vsel %vm689, %v3186, 0.0
  %3225 = vadd.xlane.f32.xlu0 %v3224
  %v3226 = vpop.xlane.xlu0 %3225
  %v3227 = vsel %vm689, %v3187, 0.0
  %3228 = vadd.xlane.f32.xlu0 %v3227
  %v3229 = vpop.xlane.xlu0 %3228
  %v3230 = vsel %vm689, %v3188, 0.0
  %3231 = vadd.xlane.f32.xlu0 %v3230
  %v3232 = vpop.xlane.xlu0 %3231
  %v3233 = vsel %vm689, %v3189, 0.0
  %3234 = vadd.xlane.f32.xlu0 %v3233
  %v3235 = vpop.xlane.xlu0 %3234
  %v3236 = vsel %vm689, %v3190, 0.0
  %3237 = vadd.xlane.f32.xlu0 %v3236
  %v3238 = vpop.xlane.xlu0 %3237
  %v3239 = vsel %vm689, %v3191, 0.0
  %3240 = vadd.xlane.f32.xlu0 %v3239
  %v3241 = vpop.xlane.xlu0 %3240
  %v3242 = vmul.f32 %v3196, %v738
  %v3243 = vmul.f32 %v3199, %v738
  %v3244 = vmul.f32 %v3202, %v738
  %v3245 = vmul.f32 %v3205, %v738
  %v3246 = vmul.f32 %v3208, %v738
  %v3247 = vmul.f32 %v3211, %v738
  %v3248 = vmul.f32 %v3214, %v738
  %v3249 = vmul.f32 %v3217, %v738
  %v3250 = vmul.f32 %v3220, %v738
  %v3251 = vmul.f32 %v3223, %v738
  %v3252 = vmul.f32 %v3226, %v738
  %v3253 = vmul.f32 %v3229, %v738
  %v3254 = vmul.f32 %v3232, %v738
  %v3255 = vmul.f32 %v3235, %v738
  %v3256 = vmul.f32 %v3238, %v738
  %v3257 = vmul.f32 %v3241, %v738
  %v3258 = vsub.f32 %v3176, %v3242
  %v3259 = vsub.f32 %v3177, %v3243
  %v3260 = vsub.f32 %v3178, %v3244
  %v3261 = vsub.f32 %v3179, %v3245
  %v3262 = vsub.f32 %v3180, %v3246
  %v3263 = vsub.f32 %v3181, %v3247
  %v3264 = vsub.f32 %v3182, %v3248
  %v3265 = vsub.f32 %v3183, %v3249
  %v3266 = vsub.f32 %v3184, %v3250
  %v3267 = vsub.f32 %v3185, %v3251
  %v3268 = vsub.f32 %v3186, %v3252
  %v3269 = vsub.f32 %v3187, %v3253
  %v3270 = vsub.f32 %v3188, %v3254
  %v3271 = vsub.f32 %v3189, %v3255
  %v3272 = vsub.f32 %v3190, %v3256
  %v3273 = vsub.f32 %v3191, %v3257
  %v3274 = vmul.f32 %v3258, %v3258
  %v3275 = vmul.f32 %v3259, %v3259
  %v3276 = vmul.f32 %v3260, %v3260
  %v3277 = vmul.f32 %v3261, %v3261
  %v3278 = vmul.f32 %v3262, %v3262
  %v3279 = vmul.f32 %v3263, %v3263
  %v3280 = vmul.f32 %v3264, %v3264
  %v3281 = vmul.f32 %v3265, %v3265
  %v3282 = vmul.f32 %v3266, %v3266
  %v3283 = vmul.f32 %v3267, %v3267
  %v3284 = vmul.f32 %v3268, %v3268
  %v3285 = vmul.f32 %v3269, %v3269
  %v3286 = vmul.f32 %v3270, %v3270
  %v3287 = vmul.f32 %v3271, %v3271
  %v3288 = vmul.f32 %v3272, %v3272
  %v3289 = vmul.f32 %v3273, %v3273
  %v3290 = vsel %vm689, %v3274, 0.0
  %3291 = vadd.xlane.f32.xlu0 %v3290
  %v3292 = vpop.xlane.xlu0 %3291
  %v3293 = vsel %vm689, %v3275, 0.0
  %3294 = vadd.xlane.f32.xlu0 %v3293
  %v3295 = vpop.xlane.xlu0 %3294
  %v3296 = vsel %vm689, %v3276, 0.0
  %3297 = vadd.xlane.f32.xlu0 %v3296
  %v3298 = vpop.xlane.xlu0 %3297
  %v3299 = vsel %vm689, %v3277, 0.0
  %3300 = vadd.xlane.f32.xlu0 %v3299
  %v3301 = vpop.xlane.xlu0 %3300
  %v3302 = vsel %vm689, %v3278, 0.0
  %3303 = vadd.xlane.f32.xlu0 %v3302
  %v3304 = vpop.xlane.xlu0 %3303
  %v3305 = vsel %vm689, %v3279, 0.0
  %3306 = vadd.xlane.f32.xlu0 %v3305
  %v3307 = vpop.xlane.xlu0 %3306
  %v3308 = vsel %vm689, %v3280, 0.0
  %3309 = vadd.xlane.f32.xlu0 %v3308
  %v3310 = vpop.xlane.xlu0 %3309
  %v3311 = vsel %vm689, %v3281, 0.0
  %3312 = vadd.xlane.f32.xlu0 %v3311
  %v3313 = vpop.xlane.xlu0 %3312
  %v3314 = vsel %vm689, %v3282, 0.0
  %3315 = vadd.xlane.f32.xlu0 %v3314
  %v3316 = vpop.xlane.xlu0 %3315
  %v3317 = vsel %vm689, %v3283, 0.0
  %3318 = vadd.xlane.f32.xlu0 %v3317
  %v3319 = vpop.xlane.xlu0 %3318
  %v3320 = vsel %vm689, %v3284, 0.0
  %3321 = vadd.xlane.f32.xlu0 %v3320
  %v3322 = vpop.xlane.xlu0 %3321
  %v3323 = vsel %vm689, %v3285, 0.0
  %3324 = vadd.xlane.f32.xlu0 %v3323
  %v3325 = vpop.xlane.xlu0 %3324
  %v3326 = vsel %vm689, %v3286, 0.0
  %3327 = vadd.xlane.f32.xlu0 %v3326
  %v3328 = vpop.xlane.xlu0 %3327
  %v3329 = vsel %vm689, %v3287, 0.0
  %3330 = vadd.xlane.f32.xlu0 %v3329
  %v3331 = vpop.xlane.xlu0 %3330
  %v3332 = vsel %vm689, %v3288, 0.0
  %3333 = vadd.xlane.f32.xlu0 %v3332
  %v3334 = vpop.xlane.xlu0 %3333
  %v3335 = vsel %vm689, %v3289, 0.0
  %3336 = vadd.xlane.f32.xlu0 %v3335
  %v3337 = vpop.xlane.xlu0 %3336
  %v3338 = vmul.f32 %v3292, %v738
  %v3339 = vmul.f32 %v3295, %v738
  %v3340 = vmul.f32 %v3298, %v738
  %v3341 = vmul.f32 %v3301, %v738
  %v3342 = vmul.f32 %v3304, %v738
  %v3343 = vmul.f32 %v3307, %v738
  %v3344 = vmul.f32 %v3310, %v738
  %v3345 = vmul.f32 %v3313, %v738
  %v3346 = vmul.f32 %v3316, %v738
  %v3347 = vmul.f32 %v3319, %v738
  %v3348 = vmul.f32 %v3322, %v738
  %v3349 = vmul.f32 %v3325, %v738
  %v3350 = vmul.f32 %v3328, %v738
  %v3351 = vmul.f32 %v3331, %v738
  %v3352 = vmul.f32 %v3334, %v738
  %v3353 = vmul.f32 %v3337, %v738
  %v3354 = vadd.f32 %v3338, 1e-05
  %v3355 = vadd.f32 %v3339, 1e-05
  %v3356 = vadd.f32 %v3340, 1e-05
  %v3357 = vadd.f32 %v3341, 1e-05
  %v3358 = vadd.f32 %v3342, 1e-05
  %v3359 = vadd.f32 %v3343, 1e-05
  %v3360 = vadd.f32 %v3344, 1e-05
  %v3361 = vadd.f32 %v3345, 1e-05
  %v3362 = vadd.f32 %v3346, 1e-05
  %v3363 = vadd.f32 %v3347, 1e-05
  %v3364 = vadd.f32 %v3348, 1e-05
  %v3365 = vadd.f32 %v3349, 1e-05
  %v3366 = vadd.f32 %v3350, 1e-05
  %v3367 = vadd.f32 %v3351, 1e-05
  %v3368 = vadd.f32 %v3352, 1e-05
  %v3369 = vadd.f32 %v3353, 1e-05
  %v3370 = vrsqrt.pop %v3354
  %v3371 = vrsqrt.pop %v3355
  %v3372 = vrsqrt.pop %v3356
  %v3373 = vrsqrt.pop %v3357
  %v3374 = vrsqrt.pop %v3358
  %v3375 = vrsqrt.pop %v3359
  %v3376 = vrsqrt.pop %v3360
  %v3377 = vrsqrt.pop %v3361
  %v3378 = vrsqrt.pop %v3362
  %v3379 = vrsqrt.pop %v3363
  %v3380 = vrsqrt.pop %v3364
  %v3381 = vrsqrt.pop %v3365
  %v3382 = vrsqrt.pop %v3366
  %v3383 = vrsqrt.pop %v3367
  %v3384 = vrsqrt.pop %v3368
  %v3385 = vrsqrt.pop %v3369
  %v3386 = vmul.f32 %v3258, %v3370
  %v3387 = vmul.f32 %v3259, %v3371
  %v3388 = vmul.f32 %v3260, %v3372
  %v3389 = vmul.f32 %v3261, %v3373
  %v3390 = vmul.f32 %v3262, %v3374
  %v3391 = vmul.f32 %v3263, %v3375
  %v3392 = vmul.f32 %v3264, %v3376
  %v3393 = vmul.f32 %v3265, %v3377
  %v3394 = vmul.f32 %v3266, %v3378
  %v3395 = vmul.f32 %v3267, %v3379
  %v3396 = vmul.f32 %v3268, %v3380
  %v3397 = vmul.f32 %v3269, %v3381
  %v3398 = vmul.f32 %v3270, %v3382
  %v3399 = vmul.f32 %v3271, %v3383
  %v3400 = vmul.f32 %v3272, %v3384
  %v3401 = vmul.f32 %v3273, %v3385
  %v3402 = vlaneseq
  %v3403 = vshrl.u32 %v3402, 7
  %v3404 = vsub.s32 0, %v3403
  %v3405 = vrot.slane %v3192, %v3404
  %v3406 = vmul.f32 %v3386, %v3405
  %v3407 = vmul.f32 %v3387, %v3405
  %v3408 = vmul.f32 %v3388, %v3405
  %v3409 = vmul.f32 %v3389, %v3405
  %v3410 = vmul.f32 %v3390, %v3405
  %v3411 = vmul.f32 %v3391, %v3405
  %v3412 = vmul.f32 %v3392, %v3405
  %v3413 = vmul.f32 %v3393, %v3405
  %v3414 = vmul.f32 %v3394, %v3405
  %v3415 = vmul.f32 %v3395, %v3405
  %v3416 = vmul.f32 %v3396, %v3405
  %v3417 = vmul.f32 %v3397, %v3405
  %v3418 = vmul.f32 %v3398, %v3405
  %v3419 = vmul.f32 %v3399, %v3405
  %v3420 = vmul.f32 %v3400, %v3405
  %v3421 = vmul.f32 %v3401, %v3405
  %v3422 = vlaneseq
  %v3423 = vshrl.u32 %v3422, 7
  %v3424 = vsub.s32 0, %v3423
  %v3425 = vrot.slane %v3193, %v3424
  %v3426 = vadd.f32 %v3406, %v3425
  %v3427 = vadd.f32 %v3407, %v3425
  %v3428 = vadd.f32 %v3408, %v3425
  %v3429 = vadd.f32 %v3409, %v3425
  %v3430 = vadd.f32 %v3410, %v3425
  %v3431 = vadd.f32 %v3411, %v3425
  %v3432 = vadd.f32 %v3412, %v3425
  %v3433 = vadd.f32 %v3413, %v3425
  %v3434 = vadd.f32 %v3414, %v3425
  %v3435 = vadd.f32 %v3415, %v3425
  %v3436 = vadd.f32 %v3416, %v3425
  %v3437 = vadd.f32 %v3417, %v3425
  %v3438 = vadd.f32 %v3418, %v3425
  %v3439 = vadd.f32 %v3419, %v3425
  %v3440 = vadd.f32 %v3420, %v3425
  %v3441 = vadd.f32 %v3421, %v3425
  %v3442 = vld [vmem:[%s49] sm:$0xff]
  %v3443 = vld [vmem:[%s49 + $0x8] sm:$0xff]
  %v3444 = vld [vmem:[%s49 + $0x10] sm:$0xff]
  %v3445 = vld [vmem:[%s49 + $0x18] sm:$0xff]
  %v3446 = vld [vmem:[%s49 + $0x20] sm:$0xff]
  %v3447 = vld [vmem:[%s49 + $0x28] sm:$0xff]
  %v3448 = vld [vmem:[%s49 + $0x30] sm:$0xff]
  %v3449 = vld [vmem:[%s49 + $0x38] sm:$0xff]
  %v3450 = vpack.c.bf16 %v3427, %v3426
  %v3451 = vpack.c.bf16 %v3429, %v3428
  %v3452 = vpack.c.bf16 %v3431, %v3430
  %v3453 = vpack.c.bf16 %v3433, %v3432
  %v3454 = vpack.c.bf16 %v3435, %v3434
  %v3455 = vpack.c.bf16 %v3437, %v3436
  %v3456 = vpack.c.bf16 %v3439, %v3438
  %v3457 = vpack.c.bf16 %v3441, %v3440
  %v3458 = vld [vmem:[%s51] ss:$2 sm:$0x3]
  %v3460 = vlaneseq
  %v3461 = vshrl.u32 %v3460, 7
  %v3462 = vsub.s32 0, %v3461
  %v3463 = vrot.slane %v3458, %v3462
  %v3464 = vlaneseq
  %v3465 = vshrl.u32 %v3464, 7
  %v3466 = vsub.s32 1, %v3465
  %v3467 = vrot.slane %v3458, %v3466
  %v3478 = vunpack.c.l.b16 %v3442
  %v3479 = vunpack.c.h.b16 %v3442
  %v3480 = vunpack.c.l.b16 %v3443
  %v3481 = vunpack.c.h.b16 %v3443
  %v3482 = vunpack.c.l.b16 %v3444
  %v3483 = vunpack.c.h.b16 %v3444
  %v3484 = vunpack.c.l.b16 %v3445
  %v3485 = vunpack.c.h.b16 %v3445
  %v3486 = vunpack.c.l.b16 %v3446
  %v3487 = vunpack.c.h.b16 %v3446
  %v3488 = vunpack.c.l.b16 %v3447
  %v3489 = vunpack.c.h.b16 %v3447
  %v3490 = vunpack.c.l.b16 %v3448
  %v3491 = vunpack.c.h.b16 %v3448
  %v3492 = vunpack.c.l.b16 %v3449
  %v3493 = vunpack.c.h.b16 %v3449
  %v3494 = vpack.c.b16 %v3480, %v3478
  %v3495 = vpack.c.b16 %v3481, %v3479
  %v3496 = vpack.c.b16 %v3484, %v3482
  %v3497 = vpack.c.b16 %v3485, %v3483
  %v3498 = vpack.c.b16 %v3488, %v3486
  %v3499 = vpack.c.b16 %v3489, %v3487
  %v3500 = vpack.c.b16 %v3492, %v3490
  %v3501 = vpack.c.b16 %v3493, %v3491
  %v3511 = vsel %vm689, %v3450, 0
  %v3514 = vsel %vm689, %v3451, 0
  %v3517 = vsel %vm689, %v3452, 0
  %v3520 = vsel %vm689, %v3453, 0
  %v3523 = vsel %vm689, %v3454, 0
  %v3526 = vsel %vm689, %v3455, 0
  %v3529 = vsel %vm689, %v3456, 0
  %v3532 = vsel %vm689, %v3457, 0
  %3534 = vmatprep.subr.bf16.mxu0 %v3495
  %3535 = vmatpush1.bf16.msra.mxu0 %v3494
  %3536 = vmatprep.subr.bf16.mxu0 %v3497
  %3537 = vmatpush1.bf16.msra.mxu0 %v3496
  %3538 = vmatprep.subr.bf16.mxu0 %v3499
  %3539 = vmatpush1.bf16.msra.mxu0 %v3498
  %3540 = vmatprep.subr.bf16.mxu0 %v3501
  %3541 = vmatpush1.bf16.msra.mxu0 %v3500
  %3542 = vmatprep.subr.bf16.mxu0 0
  %3543 = vmatpush1.bf16.msra.mxu0 0
  %3544 = vmatprep.subr.bf16.mxu0 0
  %3545 = vmatpush1.bf16.msra.mxu0 0
  %3546 = vmatprep.subr.bf16.mxu0 0
  %3547 = vmatpush1.bf16.msra.mxu0 0
  %3548 = vmatprep.subr.bf16.mxu0 0
  %3549 = vmatpush1.bf16.msra.mxu0 0
  %3550 = vmatprep.subr.bf16.mxu0 0
  %3551 = vmatpush1.bf16.msra.mxu0 0
  %3552 = vmatprep.subr.bf16.mxu0 0
  %3553 = vmatpush1.bf16.msra.mxu0 0
  %3554 = vmatprep.subr.bf16.mxu0 0
  %3555 = vmatpush1.bf16.msra.mxu0 0
  %3556 = vmatprep.subr.bf16.mxu0 0
  %3557 = vmatpush1.bf16.msra.mxu0 0
  %3558 = vmatprep.subr.bf16.mxu0 0
  %3559 = vmatpush1.bf16.msra.mxu0 0
  %3560 = vmatprep.subr.bf16.mxu0 0
  %3561 = vmatpush1.bf16.msra.mxu0 0
  %3562 = vmatprep.subr.bf16.mxu0 0
  %3563 = vmatpush1.bf16.msra.mxu0 0
  %3564 = vmatprep.subr.bf16.mxu0 0
  %3565 = vmatpush1.bf16.msra.mxu0 0
  %3566 = vmatprep.mubr.bf16.mxu0 0
  %3567 = vmatmul.mubr.bf16.gmra.mrb[0].mxu0 %v3511
  %v3568 = vpop.f32.mrb[0].mxu0
  %v3569 = vadd.f32 %v3463, %v3568
  %v3570 = vpop.f32.mrb[0].mxu0
  %v3571 = vadd.f32 %v3467, %v3570
  %v3572 = vpop.f32.mrb[0].mxu0
  %v3573 = vadd.f32 %v3463, %v3572
  %v3574 = vpop.f32.mrb[0].mxu0
  %v3575 = vadd.f32 %v3467, %v3574
  %3576 = vmatprep.mubr.bf16.mxu0 0
  %3577 = vmatmul.mubr.bf16.gmra.mrb[0].mxu0 %v3514
  %v3578 = vpop.f32.mrb[0].mxu0
  %v3579 = vadd.f32 %v3463, %v3578
  %v3580 = vpop.f32.mrb[0].mxu0
  %v3581 = vadd.f32 %v3467, %v3580
  %v3582 = vpop.f32.mrb[0].mxu0
  %v3583 = vadd.f32 %v3463, %v3582
  %v3584 = vpop.f32.mrb[0].mxu0
  %v3585 = vadd.f32 %v3467, %v3584
  %3586 = vmatprep.mubr.bf16.mxu0 0
  %3587 = vmatmul.mubr.bf16.gmra.mrb[0].mxu0 %v3517
  %v3588 = vpop.f32.mrb[0].mxu0
  %v3589 = vadd.f32 %v3463, %v3588
  %v3590 = vpop.f32.mrb[0].mxu0
  %v3591 = vadd.f32 %v3467, %v3590
  %v3592 = vpop.f32.mrb[0].mxu0
  %v3593 = vadd.f32 %v3463, %v3592
  %v3594 = vpop.f32.mrb[0].mxu0
  %v3595 = vadd.f32 %v3467, %v3594
  %3596 = vmatprep.mubr.bf16.mxu0 0
  %3597 = vmatmul.mubr.bf16.gmra.mrb[0].mxu0 %v3520
  %v3598 = vpop.f32.mrb[0].mxu0
  %v3599 = vadd.f32 %v3463, %v3598
  %v3600 = vpop.f32.mrb[0].mxu0
  %v3601 = vadd.f32 %v3467, %v3600
  %v3602 = vpop.f32.mrb[0].mxu0
  %v3603 = vadd.f32 %v3463, %v3602
  %v3604 = vpop.f32.mrb[0].mxu0
  %v3605 = vadd.f32 %v3467, %v3604
  %3606 = vmatprep.mubr.bf16.mxu0 0
  %3607 = vmatmul.mubr.bf16.gmra.mrb[0].mxu0 %v3523
  %v3608 = vpop.f32.mrb[0].mxu0
  %v3609 = vadd.f32 %v3463, %v3608
  %v3610 = vpop.f32.mrb[0].mxu0
  %v3611 = vadd.f32 %v3467, %v3610
  %v3612 = vpop.f32.mrb[0].mxu0
  %v3613 = vadd.f32 %v3463, %v3612
  %v3614 = vpop.f32.mrb[0].mxu0
  %v3615 = vadd.f32 %v3467, %v3614
  %3616 = vmatprep.mubr.bf16.mxu0 0
  %3617 = vmatmul.mubr.bf16.gmra.mrb[0].mxu0 %v3526
  %v3618 = vpop.f32.mrb[0].mxu0
  %v3619 = vadd.f32 %v3463, %v3618
  %v3620 = vpop.f32.mrb[0].mxu0
  %v3621 = vadd.f32 %v3467, %v3620
  %v3622 = vpop.f32.mrb[0].mxu0
  %v3623 = vadd.f32 %v3463, %v3622
  %v3624 = vpop.f32.mrb[0].mxu0
  %v3625 = vadd.f32 %v3467, %v3624
  %3626 = vmatprep.mubr.bf16.mxu0 0
  %3627 = vmatmul.mubr.bf16.gmra.mrb[0].mxu0 %v3529
  %v3628 = vpop.f32.mrb[0].mxu0
  %v3629 = vadd.f32 %v3463, %v3628
  %v3630 = vpop.f32.mrb[0].mxu0
  %v3631 = vadd.f32 %v3467, %v3630
  %v3632 = vpop.f32.mrb[0].mxu0
  %v3633 = vadd.f32 %v3463, %v3632
  %v3634 = vpop.f32.mrb[0].mxu0
  %v3635 = vadd.f32 %v3467, %v3634
  %3636 = vmatprep.mubr.bf16.mxu0 0
  %3637 = vmatmul.mubr.bf16.gmra.mrb[0].mxu0 %v3532
  %v3638 = vpop.f32.mrb[0].mxu0
  %v3639 = vadd.f32 %v3463, %v3638
  %v3640 = vpop.f32.mrb[0].mxu0
  %v3641 = vadd.f32 %v3467, %v3640
  %v3642 = vpop.f32.mrb[0].mxu0
  %v3643 = vadd.f32 %v3463, %v3642
  %v3644 = vpop.f32.mrb[0].mxu0
  %v3645 = vadd.f32 %v3467, %v3644
  %3646 = vdwg.mxu0
  %v3647 = vld [vmem:[%s7] sm:$0xff]
  %v3648 = vld [vmem:[%s7 + $0x8] sm:$0xff]
  %v3649 = vld [vmem:[%s7 + $0x10] sm:$0xff]
  %v3650 = vld [vmem:[%s7 + $0x18] sm:$0xff]
  %v3651 = vld [vmem:[%s7 + $0x20] sm:$0xff]
  %v3652 = vld [vmem:[%s7 + $0x28] sm:$0xff]
  %v3653 = vld [vmem:[%s7 + $0x30] sm:$0xff]
  %v3654 = vld [vmem:[%s7 + $0x38] sm:$0xff]
  %v3655 = vld [vmem:[%s7 + $0x40] sm:$0xff]
  %v3656 = vld [vmem:[%s7 + $0x48] sm:$0xff]
  %v3657 = vld [vmem:[%s7 + $0x50] sm:$0xff]
  %v3658 = vld [vmem:[%s7 + $0x58] sm:$0xff]
  %v3659 = vld [vmem:[%s7 + $0x60] sm:$0xff]
  %v3660 = vld [vmem:[%s7 + $0x68] sm:$0xff]
  %v3661 = vld [vmem:[%s7 + $0x70] sm:$0xff]
  %v3662 = vld [vmem:[%s7 + $0x78] sm:$0xff]
  %3663 = vmatprep.subr.mxu0 %v3571
  %3664 = vmatpush1.msra.mxu0 %v3569
  %3665 = vmatprep.subr.mxu0 %v3575
  %3666 = vmatpush1.msra.mxu0 %v3573
  %3667 = vmatprep.subr.mxu0 %v3581
  %3668 = vmatpush1.msra.mxu0 %v3579
  %3669 = vmatprep.subr.mxu0 %v3585
  %3670 = vmatpush1.msra.mxu0 %v3583
  %3671 = vmatprep.subr.mxu0 %v3591
  %3672 = vmatpush1.msra.mxu0 %v3589
  %3673 = vmatprep.subr.mxu0 %v3595
  %3674 = vmatpush1.msra.mxu0 %v3593
  %3675 = vmatprep.subr.mxu0 %v3601
  %3676 = vmatpush1.msra.mxu0 %v3599
  %3677 = vmatprep.subr.mxu0 %v3605
  %3678 = vmatpush1.msra.mxu0 %v3603
  %3679 = vmatprep.subr.mxu0 %v3611
  %3680 = vmatpush1.msra.mxu0 %v3609
  %3681 = vmatprep.subr.mxu0 %v3615
  %3682 = vmatpush1.msra.mxu0 %v3613
  %3683 = vmatprep.subr.mxu0 %v3621
  %3684 = vmatpush1.msra.mxu0 %v3619
  %3685 = vmatprep.subr.mxu0 %v3625
  %3686 = vmatpush1.msra.mxu0 %v3623
  %3687 = vmatprep.subr.mxu0 %v3631
  %3688 = vmatpush1.msra.mxu0 %v3629
  %3689 = vmatprep.subr.mxu0 %v3635
  %3690 = vmatpush1.msra.mxu0 %v3633
  %3691 = vmatprep.subr.mxu0 %v3641
  %3692 = vmatpush1.msra.mxu0 %v3639
  %3693 = vmatprep.subr.mxu0 %v3645
  %3694 = vmatpush1.msra.mxu0 %v3643
  %3695 = vmatprep.subr.mxu0 0.0
  %3696 = vmatpush1.msra.mxu0 0.0
  %3697 = vmatprep.subr.mxu0 0.0
  %3698 = vmatpush1.msra.mxu0 0.0
  %3699 = vmatprep.subr.mxu0 0.0
  %3700 = vmatpush1.msra.mxu0 0.0
  %3701 = vmatprep.subr.mxu0 0.0
  %3702 = vmatpush1.msra.mxu0 0.0
  %3703 = vmatprep.subr.mxu0 0.0
  %3704 = vmatpush1.msra.mxu0 0.0
  %3705 = vmatprep.subr.mxu0 0.0
  %3706 = vmatpush1.msra.mxu0 0.0
  %3707 = vmatprep.subr.mxu0 0.0
  %3708 = vmatpush1.msra.mxu0 0.0
  %3709 = vmatprep.subr.mxu0 0.0
  %3710 = vmatpush1.msra.mxu0 0.0
  %3711 = vmatprep.subr.mxu0 0.0
  %3712 = vmatpush1.msra.mxu0 0.0
  %3713 = vmatprep.subr.mxu0 0.0
  %3714 = vmatpush1.msra.mxu0 0.0
  %3715 = vmatprep.subr.mxu0 0.0
  %3716 = vmatpush1.msra.mxu0 0.0
  %3717 = vmatprep.subr.mxu0 0.0
  %3718 = vmatpush1.msra.mxu0 0.0
  %3719 = vmatprep.subr.mxu0 0.0
  %3720 = vmatpush1.msra.mxu0 0.0
  %3721 = vmatprep.subr.mxu0 0.0
  %3722 = vmatpush1.msra.mxu0 0.0
  %3723 = vmatprep.subr.mxu0 0.0
  %3724 = vmatpush1.msra.mxu0 0.0
  %3725 = vmatprep.subr.mxu0 0.0
  %3726 = vmatpush1.msra.mxu0 0.0
  %3727 = vmatprep.mubr.f32.mxu0 0.0
  %3728 = vmatmul.mubr.f32.gmra.mrb[0].mxu0 %v3647
  %v3729 = vpop.f32.mrb[0].mxu0
  %v3730 = vadd.f32 0.0, %v3729
  %v3731 = vpop.f32.mrb[0].mxu0
  %v3732 = vadd.f32 0.0, %v3731
  %3733 = vmatprep.mubr.f32.mxu0 0.0
  %3734 = vmatmul.mubr.f32.gmra.mrb[0].mxu0 %v3648
  %v3735 = vpop.f32.mrb[0].mxu0
  %v3736 = vadd.f32 0.0, %v3735
  %v3737 = vpop.f32.mrb[0].mxu0
  %v3738 = vadd.f32 0.0, %v3737
  %3739 = vmatprep.mubr.f32.mxu0 0.0
  %3740 = vmatmul.mubr.f32.gmra.mrb[0].mxu0 %v3649
  %v3741 = vpop.f32.mrb[0].mxu0
  %v3742 = vadd.f32 0.0, %v3741
  %v3743 = vpop.f32.mrb[0].mxu0
  %v3744 = vadd.f32 0.0, %v3743
  %3745 = vmatprep.mubr.f32.mxu0 0.0
  %3746 = vmatmul.mubr.f32.gmra.mrb[0].mxu0 %v3650
  %v3747 = vpop.f32.mrb[0].mxu0
  %v3748 = vadd.f32 0.0, %v3747
  %v3749 = vpop.f32.mrb[0].mxu0
  %v3750 = vadd.f32 0.0, %v3749
  %3751 = vmatprep.mubr.f32.mxu0 0.0
  %3752 = vmatmul.mubr.f32.gmra.mrb[0].mxu0 %v3651
  %v3753 = vpop.f32.mrb[0].mxu0
  %v3754 = vadd.f32 0.0, %v3753
  %v3755 = vpop.f32.mrb[0].mxu0
  %v3756 = vadd.f32 0.0, %v3755
  %3757 = vmatprep.mubr.f32.mxu0 0.0
  %3758 = vmatmul.mubr.f32.gmra.mrb[0].mxu0 %v3652
  %v3759 = vpop.f32.mrb[0].mxu0
  %v3760 = vadd.f32 0.0, %v3759
  %v3761 = vpop.f32.mrb[0].mxu0
  %v3762 = vadd.f32 0.0, %v3761
  %3763 = vmatprep.mubr.f32.mxu0 0.0
  %3764 = vmatmul.mubr.f32.gmra.mrb[0].mxu0 %v3653
  %v3765 = vpop.f32.mrb[0].mxu0
  %v3766 = vadd.f32 0.0, %v3765
  %v3767 = vpop.f32.mrb[0].mxu0
  %v3768 = vadd.f32 0.0, %v3767
  %3769 = vmatprep.mubr.f32.mxu0 0.0
  %3770 = vmatmul.mubr.f32.gmra.mrb[0].mxu0 %v3654
  %v3771 = vpop.f32.mrb[0].mxu0
  %v3772 = vadd.f32 0.0, %v3771
  %v3773 = vpop.f32.mrb[0].mxu0
  %v3774 = vadd.f32 0.0, %v3773
  %3775 = vmatprep.mubr.f32.mxu0 0.0
  %3776 = vmatmul.mubr.f32.gmra.mrb[0].mxu0 %v3655
  %v3777 = vpop.f32.mrb[0].mxu0
  %v3778 = vadd.f32 0.0, %v3777
  %v3779 = vpop.f32.mrb[0].mxu0
  %v3780 = vadd.f32 0.0, %v3779
  %3781 = vmatprep.mubr.f32.mxu0 0.0
  %3782 = vmatmul.mubr.f32.gmra.mrb[0].mxu0 %v3656
  %v3783 = vpop.f32.mrb[0].mxu0
  %v3784 = vadd.f32 0.0, %v3783
  %v3785 = vpop.f32.mrb[0].mxu0
  %v3786 = vadd.f32 0.0, %v3785
  %3787 = vmatprep.mubr.f32.mxu0 0.0
  %3788 = vmatmul.mubr.f32.gmra.mrb[0].mxu0 %v3657
  %v3789 = vpop.f32.mrb[0].mxu0
  %v3790 = vadd.f32 0.0, %v3789
  %v3791 = vpop.f32.mrb[0].mxu0
  %v3792 = vadd.f32 0.0, %v3791
  %3793 = vmatprep.mubr.f32.mxu0 0.0
  %3794 = vmatmul.mubr.f32.gmra.mrb[0].mxu0 %v3658
  %v3795 = vpop.f32.mrb[0].mxu0
  %v3796 = vadd.f32 0.0, %v3795
  %v3797 = vpop.f32.mrb[0].mxu0
  %v3798 = vadd.f32 0.0, %v3797
  %3799 = vmatprep.mubr.f32.mxu0 0.0
  %3800 = vmatmul.mubr.f32.gmra.mrb[0].mxu0 %v3659
  %v3801 = vpop.f32.mrb[0].mxu0
  %v3802 = vadd.f32 0.0, %v3801
  %v3803 = vpop.f32.mrb[0].mxu0
  %v3804 = vadd.f32 0.0, %v3803
  %3805 = vmatprep.mubr.f32.mxu0 0.0
  %3806 = vmatmul.mubr.f32.gmra.mrb[0].mxu0 %v3660
  %v3807 = vpop.f32.mrb[0].mxu0
  %v3808 = vadd.f32 0.0, %v3807
  %v3809 = vpop.f32.mrb[0].mxu0
  %v3810 = vadd.f32 0.0, %v3809
  %3811 = vmatprep.mubr.f32.mxu0 0.0
  %3812 = vmatmul.mubr.f32.gmra.mrb[0].mxu0 %v3661
  %v3813 = vpop.f32.mrb[0].mxu0
  %v3814 = vadd.f32 0.0, %v3813
  %v3815 = vpop.f32.mrb[0].mxu0
  %v3816 = vadd.f32 0.0, %v3815
  %3817 = vmatprep.mubr.f32.mxu0 0.0
  %3818 = vmatmul.mubr.f32.gmra.mrb[0].mxu0 %v3662
  %v3819 = vpop.f32.mrb[0].mxu0
  %v3820 = vadd.f32 0.0, %v3819
  %v3821 = vpop.f32.mrb[0].mxu0
  %v3822 = vadd.f32 0.0, %v3821
  %3823 = vdwg.mxu0
  %v3824 = vld [vmem:[%s53] ss:$8 sm:$0x3]
  %v3826 = vlaneseq
  %v3827 = vshrl.u32 %v3826, 7
  %v3828 = vsub.s32 0, %v3827
  %v3829 = vrot.slane %v3824, %v3828
  %v3830 = vlaneseq
  %v3831 = vshrl.u32 %v3830, 7
  %v3832 = vsub.s32 1, %v3831
  %v3833 = vrot.slane %v3824, %v3832
  %v3836 = vmul.f32 %v3730, %v3829
  %v3837 = vmul.f32 %v3732, %v3833
  %v3838 = vmul.f32 %v3736, %v3829
  %v3839 = vmul.f32 %v3738, %v3833
  %v3840 = vmul.f32 %v3742, %v3829
  %v3841 = vmul.f32 %v3744, %v3833
  %v3842 = vmul.f32 %v3748, %v3829
  %v3843 = vmul.f32 %v3750, %v3833
  %v3844 = vmul.f32 %v3754, %v3829
  %v3845 = vmul.f32 %v3756, %v3833
  %v3846 = vmul.f32 %v3760, %v3829
  %v3847 = vmul.f32 %v3762, %v3833
  %v3848 = vmul.f32 %v3766, %v3829
  %v3849 = vmul.f32 %v3768, %v3833
  %v3850 = vmul.f32 %v3772, %v3829
  %v3851 = vmul.f32 %v3774, %v3833
  %v3852 = vmul.f32 %v3778, %v3829
  %v3853 = vmul.f32 %v3780, %v3833
  %v3854 = vmul.f32 %v3784, %v3829
  %v3855 = vmul.f32 %v3786, %v3833
  %v3856 = vmul.f32 %v3790, %v3829
  %v3857 = vmul.f32 %v3792, %v3833
  %v3858 = vmul.f32 %v3796, %v3829
  %v3859 = vmul.f32 %v3798, %v3833
  %v3860 = vmul.f32 %v3802, %v3829
  %v3861 = vmul.f32 %v3804, %v3833
  %v3862 = vmul.f32 %v3808, %v3829
  %v3863 = vmul.f32 %v3810, %v3833
  %v3864 = vmul.f32 %v3814, %v3829
  %v3865 = vmul.f32 %v3816, %v3833
  %v3866 = vmul.f32 %v3820, %v3829
  %v3867 = vmul.f32 %v3822, %v3833
  %v3868 = vadd.f32 %v3836, 0.0
  %v3869 = vadd.f32 %v3837, 0.0
  %v3870 = vadd.f32 %v3838, 0.0
  %v3871 = vadd.f32 %v3839, 0.0
  %v3872 = vadd.f32 %v3840, 0.0
  %v3873 = vadd.f32 %v3841, 0.0
  %v3874 = vadd.f32 %v3842, 0.0
  %v3875 = vadd.f32 %v3843, 0.0
  %v3876 = vadd.f32 %v3844, 0.0
  %v3877 = vadd.f32 %v3845, 0.0
  %v3878 = vadd.f32 %v3846, 0.0
  %v3879 = vadd.f32 %v3847, 0.0
  %v3880 = vadd.f32 %v3848, 0.0
  %v3881 = vadd.f32 %v3849, 0.0
  %v3882 = vadd.f32 %v3850, 0.0
  %v3883 = vadd.f32 %v3851, 0.0
  %v3884 = vadd.f32 %v3852, 0.0
  %v3885 = vadd.f32 %v3853, 0.0
  %v3886 = vadd.f32 %v3854, 0.0
  %v3887 = vadd.f32 %v3855, 0.0
  %v3888 = vadd.f32 %v3856, 0.0
  %v3889 = vadd.f32 %v3857, 0.0
  %v3890 = vadd.f32 %v3858, 0.0
  %v3891 = vadd.f32 %v3859, 0.0
  %v3892 = vadd.f32 %v3860, 0.0
  %v3893 = vadd.f32 %v3861, 0.0
  %v3894 = vadd.f32 %v3862, 0.0
  %v3895 = vadd.f32 %v3863, 0.0
  %v3896 = vadd.f32 %v3864, 0.0
  %v3897 = vadd.f32 %v3865, 0.0
  %v3898 = vadd.f32 %v3866, 0.0
  %v3899 = vadd.f32 %v3867, 0.0
  %v3900 = vld [vmem:[%s7 + $0x80] sm:$0xff]
  %v3901 = vld [vmem:[%s7 + $0x88] sm:$0xff]
  %v3902 = vld [vmem:[%s7 + $0x90] sm:$0xff]
  %v3903 = vld [vmem:[%s7 + $0x98] sm:$0xff]
  %v3904 = vld [vmem:[%s7 + $0xa0] sm:$0xff]
  %v3905 = vld [vmem:[%s7 + $0xa8] sm:$0xff]
  %v3906 = vld [vmem:[%s7 + $0xb0] sm:$0xff]
  %v3907 = vld [vmem:[%s7 + $0xb8] sm:$0xff]
  %v3908 = vld [vmem:[%s7 + $0xc0] sm:$0xff]
  %v3909 = vld [vmem:[%s7 + $0xc8] sm:$0xff]
  %v3910 = vld [vmem:[%s7 + $0xd0] sm:$0xff]
  %v3911 = vld [vmem:[%s7 + $0xd8] sm:$0xff]
  %v3912 = vld [vmem:[%s7 + $0xe0] sm:$0xff]
  %v3913 = vld [vmem:[%s7 + $0xe8] sm:$0xff]
  %v3914 = vld [vmem:[%s7 + $0xf0] sm:$0xff]
  %v3915 = vld [vmem:[%s7 + $0xf8] sm:$0xff]
  %3916 = vmatprep.subr.mxu0 %v3571
  %3917 = vmatpush1.msra.mxu0 %v3569
  %3918 = vmatprep.subr.mxu0 %v3575
  %3919 = vmatpush1.msra.mxu0 %v3573
  %3920 = vmatprep.subr.mxu0 %v3581
  %3921 = vmatpush1.msra.mxu0 %v3579
  %3922 = vmatprep.subr.mxu0 %v3585
  %3923 = vmatpush1.msra.mxu0 %v3583
  %3924 = vmatprep.subr.mxu0 %v3591
  %3925 = vmatpush1.msra.mxu0 %v3589
  %3926 = vmatprep.subr.mxu0 %v3595
  %3927 = vmatpush1.msra.mxu0 %v3593
  %3928 = vmatprep.subr.mxu0 %v3601
  %3929 = vmatpush1.msra.mxu0 %v3599
  %3930 = vmatprep.subr.mxu0 %v3605
  %3931 = vmatpush1.msra.mxu0 %v3603
  %3932 = vmatprep.subr.mxu0 %v3611
  %3933 = vmatpush1.msra.mxu0 %v3609
  %3934 = vmatprep.subr.mxu0 %v3615
  %3935 = vmatpush1.msra.mxu0 %v3613
  %3936 = vmatprep.subr.mxu0 %v3621
  %3937 = vmatpush1.msra.mxu0 %v3619
  %3938 = vmatprep.subr.mxu0 %v3625
  %3939 = vmatpush1.msra.mxu0 %v3623
  %3940 = vmatprep.subr.mxu0 %v3631
  %3941 = vmatpush1.msra.mxu0 %v3629
  %3942 = vmatprep.subr.mxu0 %v3635
  %3943 = vmatpush1.msra.mxu0 %v3633
  %3944 = vmatprep.subr.mxu0 %v3641
  %3945 = vmatpush1.msra.mxu0 %v3639
  %3946 = vmatprep.subr.mxu0 %v3645
  %3947 = vmatpush1.msra.mxu0 %v3643
  %3948 = vmatprep.subr.mxu0 0.0
  %3949 = vmatpush1.msra.mxu0 0.0
  %3950 = vmatprep.subr.mxu0 0.0
  %3951 = vmatpush1.msra.mxu0 0.0
  %3952 = vmatprep.subr.mxu0 0.0
  %3953 = vmatpush1.msra.mxu0 0.0
  %3954 = vmatprep.subr.mxu0 0.0
  %3955 = vmatpush1.msra.mxu0 0.0
  %3956 = vmatprep.subr.mxu0 0.0
  %3957 = vmatpush1.msra.mxu0 0.0
  %3958 = vmatprep.subr.mxu0 0.0
  %3959 = vmatpush1.msra.mxu0 0.0
  %3960 = vmatprep.subr.mxu0 0.0
  %3961 = vmatpush1.msra.mxu0 0.0
  %3962 = vmatprep.subr.mxu0 0.0
  %3963 = vmatpush1.msra.mxu0 0.0
  %3964 = vmatprep.subr.mxu0 0.0
  %3965 = vmatpush1.msra.mxu0 0.0
  %3966 = vmatprep.subr.mxu0 0.0
  %3967 = vmatpush1.msra.mxu0 0.0
  %3968 = vmatprep.subr.mxu0 0.0
  %3969 = vmatpush1.msra.mxu0 0.0
  %3970 = vmatprep.subr.mxu0 0.0
  %3971 = vmatpush1.msra.mxu0 0.0
  %3972 = vmatprep.subr.mxu0 0.0
  %3973 = vmatpush1.msra.mxu0 0.0
  %3974 = vmatprep.subr.mxu0 0.0
  %3975 = vmatpush1.msra.mxu0 0.0
  %3976 = vmatprep.subr.mxu0 0.0
  %3977 = vmatpush1.msra.mxu0 0.0
  %3978 = vmatprep.subr.mxu0 0.0
  %3979 = vmatpush1.msra.mxu0 0.0
  %3980 = vmatprep.mubr.f32.mxu0 0.0
  %3981 = vmatmul.mubr.f32.gmra.mrb[0].mxu0 %v3900
  %v3982 = vpop.f32.mrb[0].mxu0
  %v3983 = vadd.f32 0.0, %v3982
  %v3984 = vpop.f32.mrb[0].mxu0
  %v3985 = vadd.f32 0.0, %v3984
  %3986 = vmatprep.mubr.f32.mxu0 0.0
  %3987 = vmatmul.mubr.f32.gmra.mrb[0].mxu0 %v3901
  %v3988 = vpop.f32.mrb[0].mxu0
  %v3989 = vadd.f32 0.0, %v3988
  %v3990 = vpop.f32.mrb[0].mxu0
  %v3991 = vadd.f32 0.0, %v3990
  %3992 = vmatprep.mubr.f32.mxu0 0.0
  %3993 = vmatmul.mubr.f32.gmra.mrb[0].mxu0 %v3902
  %v3994 = vpop.f32.mrb[0].mxu0
  %v3995 = vadd.f32 0.0, %v3994
  %v3996 = vpop.f32.mrb[0].mxu0
  %v3997 = vadd.f32 0.0, %v3996
  %3998 = vmatprep.mubr.f32.mxu0 0.0
  %3999 = vmatmul.mubr.f32.gmra.mrb[0].mxu0 %v3903
  %v4000 = vpop.f32.mrb[0].mxu0
  %v4001 = vadd.f32 0.0, %v4000
  %v4002 = vpop.f32.mrb[0].mxu0
  %v4003 = vadd.f32 0.0, %v4002
  %4004 = vmatprep.mubr.f32.mxu0 0.0
  %4005 = vmatmul.mubr.f32.gmra.mrb[0].mxu0 %v3904
  %v4006 = vpop.f32.mrb[0].mxu0
  %v4007 = vadd.f32 0.0, %v4006
  %v4008 = vpop.f32.mrb[0].mxu0
  %v4009 = vadd.f32 0.0, %v4008
  %4010 = vmatprep.mubr.f32.mxu0 0.0
  %4011 = vmatmul.mubr.f32.gmra.mrb[0].mxu0 %v3905
  %v4012 = vpop.f32.mrb[0].mxu0
  %v4013 = vadd.f32 0.0, %v4012
  %v4014 = vpop.f32.mrb[0].mxu0
  %v4015 = vadd.f32 0.0, %v4014
  %4016 = vmatprep.mubr.f32.mxu0 0.0
  %4017 = vmatmul.mubr.f32.gmra.mrb[0].mxu0 %v3906
  %v4018 = vpop.f32.mrb[0].mxu0
  %v4019 = vadd.f32 0.0, %v4018
  %v4020 = vpop.f32.mrb[0].mxu0
  %v4021 = vadd.f32 0.0, %v4020
  %4022 = vmatprep.mubr.f32.mxu0 0.0
  %4023 = vmatmul.mubr.f32.gmra.mrb[0].mxu0 %v3907
  %v4024 = vpop.f32.mrb[0].mxu0
  %v4025 = vadd.f32 0.0, %v4024
  %v4026 = vpop.f32.mrb[0].mxu0
  %v4027 = vadd.f32 0.0, %v4026
  %4028 = vmatprep.mubr.f32.mxu0 0.0
  %4029 = vmatmul.mubr.f32.gmra.mrb[0].mxu0 %v3908
  %v4030 = vpop.f32.mrb[0].mxu0
  %v4031 = vadd.f32 0.0, %v4030
  %v4032 = vpop.f32.mrb[0].mxu0
  %v4033 = vadd.f32 0.0, %v4032
  %4034 = vmatprep.mubr.f32.mxu0 0.0
  %4035 = vmatmul.mubr.f32.gmra.mrb[0].mxu0 %v3909
  %v4036 = vpop.f32.mrb[0].mxu0
  %v4037 = vadd.f32 0.0, %v4036
  %v4038 = vpop.f32.mrb[0].mxu0
  %v4039 = vadd.f32 0.0, %v4038
  %4040 = vmatprep.mubr.f32.mxu0 0.0
  %4041 = vmatmul.mubr.f32.gmra.mrb[0].mxu0 %v3910
  %v4042 = vpop.f32.mrb[0].mxu0
  %v4043 = vadd.f32 0.0, %v4042
  %v4044 = vpop.f32.mrb[0].mxu0
  %v4045 = vadd.f32 0.0, %v4044
  %4046 = vmatprep.mubr.f32.mxu0 0.0
  %4047 = vmatmul.mubr.f32.gmra.mrb[0].mxu0 %v3911
  %v4048 = vpop.f32.mrb[0].mxu0
  %v4049 = vadd.f32 0.0, %v4048
  %v4050 = vpop.f32.mrb[0].mxu0
  %v4051 = vadd.f32 0.0, %v4050
  %4052 = vmatprep.mubr.f32.mxu0 0.0
  %4053 = vmatmul.mubr.f32.gmra.mrb[0].mxu0 %v3912
  %v4054 = vpop.f32.mrb[0].mxu0
  %v4055 = vadd.f32 0.0, %v4054
  %v4056 = vpop.f32.mrb[0].mxu0
  %v4057 = vadd.f32 0.0, %v4056
  %4058 = vmatprep.mubr.f32.mxu0 0.0
  %4059 = vmatmul.mubr.f32.gmra.mrb[0].mxu0 %v3913
  %v4060 = vpop.f32.mrb[0].mxu0
  %v4061 = vadd.f32 0.0, %v4060
  %v4062 = vpop.f32.mrb[0].mxu0
  %v4063 = vadd.f32 0.0, %v4062
  %4064 = vmatprep.mubr.f32.mxu0 0.0
  %4065 = vmatmul.mubr.f32.gmra.mrb[0].mxu0 %v3914
  %v4066 = vpop.f32.mrb[0].mxu0
  %v4067 = vadd.f32 0.0, %v4066
  %v4068 = vpop.f32.mrb[0].mxu0
  %v4069 = vadd.f32 0.0, %v4068
  %4070 = vmatprep.mubr.f32.mxu0 0.0
  %4071 = vmatmul.mubr.f32.gmra.mrb[0].mxu0 %v3915
  %v4072 = vpop.f32.mrb[0].mxu0
  %v4073 = vadd.f32 0.0, %v4072
  %v4074 = vpop.f32.mrb[0].mxu0
  %v4075 = vadd.f32 0.0, %v4074
  %4076 = vdwg.mxu0
  %s4077 = scalar_lea.vmem %s53, 1
  %v4078 = vld [vmem:[%s4077] ss:$8 sm:$0x3]
  %v4080 = vlaneseq
  %v4081 = vshrl.u32 %v4080, 7
  %v4082 = vsub.s32 0, %v4081
  %v4083 = vrot.slane %v4078, %v4082
  %v4084 = vlaneseq
  %v4085 = vshrl.u32 %v4084, 7
  %v4086 = vsub.s32 1, %v4085
  %v4087 = vrot.slane %v4078, %v4086
  %v4090 = vmul.f32 %v3983, %v4083
  %v4091 = vmul.f32 %v3985, %v4087
  %v4092 = vmul.f32 %v3989, %v4083
  %v4093 = vmul.f32 %v3991, %v4087
  %v4094 = vmul.f32 %v3995, %v4083
  %v4095 = vmul.f32 %v3997, %v4087
  %v4096 = vmul.f32 %v4001, %v4083
  %v4097 = vmul.f32 %v4003, %v4087
  %v4098 = vmul.f32 %v4007, %v4083
  %v4099 = vmul.f32 %v4009, %v4087
  %v4100 = vmul.f32 %v4013, %v4083
  %v4101 = vmul.f32 %v4015, %v4087
  %v4102 = vmul.f32 %v4019, %v4083
  %v4103 = vmul.f32 %v4021, %v4087
  %v4104 = vmul.f32 %v4025, %v4083
  %v4105 = vmul.f32 %v4027, %v4087
  %v4106 = vmul.f32 %v4031, %v4083
  %v4107 = vmul.f32 %v4033, %v4087
  %v4108 = vmul.f32 %v4037, %v4083
  %v4109 = vmul.f32 %v4039, %v4087
  %v4110 = vmul.f32 %v4043, %v4083
  %v4111 = vmul.f32 %v4045, %v4087
  %v4112 = vmul.f32 %v4049, %v4083
  %v4113 = vmul.f32 %v4051, %v4087
  %v4114 = vmul.f32 %v4055, %v4083
  %v4115 = vmul.f32 %v4057, %v4087
  %v4116 = vmul.f32 %v4061, %v4083
  %v4117 = vmul.f32 %v4063, %v4087
  %v4118 = vmul.f32 %v4067, %v4083
  %v4119 = vmul.f32 %v4069, %v4087
  %v4120 = vmul.f32 %v4073, %v4083
  %v4121 = vmul.f32 %v4075, %v4087
  %v4122 = vadd.f32 %v3868, %v4090
  %v4123 = vadd.f32 %v3869, %v4091
  %v4124 = vadd.f32 %v3870, %v4092
  %v4125 = vadd.f32 %v3871, %v4093
  %v4126 = vadd.f32 %v3872, %v4094
  %v4127 = vadd.f32 %v3873, %v4095
  %v4128 = vadd.f32 %v3874, %v4096
  %v4129 = vadd.f32 %v3875, %v4097
  %v4130 = vadd.f32 %v3876, %v4098
  %v4131 = vadd.f32 %v3877, %v4099
  %v4132 = vadd.f32 %v3878, %v4100
  %v4133 = vadd.f32 %v3879, %v4101
  %v4134 = vadd.f32 %v3880, %v4102
  %v4135 = vadd.f32 %v3881, %v4103
  %v4136 = vadd.f32 %v3882, %v4104
  %v4137 = vadd.f32 %v3883, %v4105
  %v4138 = vadd.f32 %v3884, %v4106
  %v4139 = vadd.f32 %v3885, %v4107
  %v4140 = vadd.f32 %v3886, %v4108
  %v4141 = vadd.f32 %v3887, %v4109
  %v4142 = vadd.f32 %v3888, %v4110
  %v4143 = vadd.f32 %v3889, %v4111
  %v4144 = vadd.f32 %v3890, %v4112
  %v4145 = vadd.f32 %v3891, %v4113
  %v4146 = vadd.f32 %v3892, %v4114
  %v4147 = vadd.f32 %v3893, %v4115
  %v4148 = vadd.f32 %v3894, %v4116
  %v4149 = vadd.f32 %v3895, %v4117
  %v4150 = vadd.f32 %v3896, %v4118
  %v4151 = vadd.f32 %v3897, %v4119
  %v4152 = vadd.f32 %v3898, %v4120
  %v4153 = vadd.f32 %v3899, %v4121
  %v4154 = vld [vmem:[%s7 + $0x100] sm:$0xff]
  %v4155 = vld [vmem:[%s7 + $0x108] sm:$0xff]
  %v4156 = vld [vmem:[%s7 + $0x110] sm:$0xff]
  %v4157 = vld [vmem:[%s7 + $0x118] sm:$0xff]
  %v4158 = vld [vmem:[%s7 + $0x120] sm:$0xff]
  %v4159 = vld [vmem:[%s7 + $0x128] sm:$0xff]
  %v4160 = vld [vmem:[%s7 + $0x130] sm:$0xff]
  %v4161 = vld [vmem:[%s7 + $0x138] sm:$0xff]
  %v4162 = vld [vmem:[%s7 + $0x140] sm:$0xff]
  %v4163 = vld [vmem:[%s7 + $0x148] sm:$0xff]
  %v4164 = vld [vmem:[%s7 + $0x150] sm:$0xff]
  %v4165 = vld [vmem:[%s7 + $0x158] sm:$0xff]
  %v4166 = vld [vmem:[%s7 + $0x160] sm:$0xff]
  %v4167 = vld [vmem:[%s7 + $0x168] sm:$0xff]
  %v4168 = vld [vmem:[%s7 + $0x170] sm:$0xff]
  %v4169 = vld [vmem:[%s7 + $0x178] sm:$0xff]
  %4170 = vmatprep.subr.mxu0 %v3571
  %4171 = vmatpush1.msra.mxu0 %v3569
  %4172 = vmatprep.subr.mxu0 %v3575
  %4173 = vmatpush1.msra.mxu0 %v3573
  %4174 = vmatprep.subr.mxu0 %v3581
  %4175 = vmatpush1.msra.mxu0 %v3579
  %4176 = vmatprep.subr.mxu0 %v3585
  %4177 = vmatpush1.msra.mxu0 %v3583
  %4178 = vmatprep.subr.mxu0 %v3591
  %4179 = vmatpush1.msra.mxu0 %v3589
  %4180 = vmatprep.subr.mxu0 %v3595
  %4181 = vmatpush1.msra.mxu0 %v3593
  %4182 = vmatprep.subr.mxu0 %v3601
  %4183 = vmatpush1.msra.mxu0 %v3599
  %4184 = vmatprep.subr.mxu0 %v3605
  %4185 = vmatpush1.msra.mxu0 %v3603
  %4186 = vmatprep.subr.mxu0 %v3611
  %4187 = vmatpush1.msra.mxu0 %v3609
  %4188 = vmatprep.subr.mxu0 %v3615
  %4189 = vmatpush1.msra.mxu0 %v3613
  %4190 = vmatprep.subr.mxu0 %v3621
  %4191 = vmatpush1.msra.mxu0 %v3619
  %4192 = vmatprep.subr.mxu0 %v3625
  %4193 = vmatpush1.msra.mxu0 %v3623
  %4194 = vmatprep.subr.mxu0 %v3631
  %4195 = vmatpush1.msra.mxu0 %v3629
  %4196 = vmatprep.subr.mxu0 %v3635
  %4197 = vmatpush1.msra.mxu0 %v3633
  %4198 = vmatprep.subr.mxu0 %v3641
  %4199 = vmatpush1.msra.mxu0 %v3639
  %4200 = vmatprep.subr.mxu0 %v3645
  %4201 = vmatpush1.msra.mxu0 %v3643
  %4202 = vmatprep.subr.mxu0 0.0
  %4203 = vmatpush1.msra.mxu0 0.0
  %4204 = vmatprep.subr.mxu0 0.0
  %4205 = vmatpush1.msra.mxu0 0.0
  %4206 = vmatprep.subr.mxu0 0.0
  %4207 = vmatpush1.msra.mxu0 0.0
  %4208 = vmatprep.subr.mxu0 0.0
  %4209 = vmatpush1.msra.mxu0 0.0
  %4210 = vmatprep.subr.mxu0 0.0
  %4211 = vmatpush1.msra.mxu0 0.0
  %4212 = vmatprep.subr.mxu0 0.0
  %4213 = vmatpush1.msra.mxu0 0.0
  %4214 = vmatprep.subr.mxu0 0.0
  %4215 = vmatpush1.msra.mxu0 0.0
  %4216 = vmatprep.subr.mxu0 0.0
  %4217 = vmatpush1.msra.mxu0 0.0
  %4218 = vmatprep.subr.mxu0 0.0
  %4219 = vmatpush1.msra.mxu0 0.0
  %4220 = vmatprep.subr.mxu0 0.0
  %4221 = vmatpush1.msra.mxu0 0.0
  %4222 = vmatprep.subr.mxu0 0.0
  %4223 = vmatpush1.msra.mxu0 0.0
  %4224 = vmatprep.subr.mxu0 0.0
  %4225 = vmatpush1.msra.mxu0 0.0
  %4226 = vmatprep.subr.mxu0 0.0
  %4227 = vmatpush1.msra.mxu0 0.0
  %4228 = vmatprep.subr.mxu0 0.0
  %4229 = vmatpush1.msra.mxu0 0.0
  %4230 = vmatprep.subr.mxu0 0.0
  %4231 = vmatpush1.msra.mxu0 0.0
  %4232 = vmatprep.subr.mxu0 0.0
  %4233 = vmatpush1.msra.mxu0 0.0
  %4234 = vmatprep.mubr.f32.mxu0 0.0
  %4235 = vmatmul.mubr.f32.gmra.mrb[0].mxu0 %v4154
  %v4236 = vpop.f32.mrb[0].mxu0
  %v4237 = vadd.f32 0.0, %v4236
  %v4238 = vpop.f32.mrb[0].mxu0
  %v4239 = vadd.f32 0.0, %v4238
  %4240 = vmatprep.mubr.f32.mxu0 0.0
  %4241 = vmatmul.mubr.f32.gmra.mrb[0].mxu0 %v4155
  %v4242 = vpop.f32.mrb[0].mxu0
  %v4243 = vadd.f32 0.0, %v4242
  %v4244 = vpop.f32.mrb[0].mxu0
  %v4245 = vadd.f32 0.0, %v4244
  %4246 = vmatprep.mubr.f32.mxu0 0.0
  %4247 = vmatmul.mubr.f32.gmra.mrb[0].mxu0 %v4156
  %v4248 = vpop.f32.mrb[0].mxu0
  %v4249 = vadd.f32 0.0, %v4248
  %v4250 = vpop.f32.mrb[0].mxu0
  %v4251 = vadd.f32 0.0, %v4250
  %4252 = vmatprep.mubr.f32.mxu0 0.0
  %4253 = vmatmul.mubr.f32.gmra.mrb[0].mxu0 %v4157
  %v4254 = vpop.f32.mrb[0].mxu0
  %v4255 = vadd.f32 0.0, %v4254
  %v4256 = vpop.f32.mrb[0].mxu0
  %v4257 = vadd.f32 0.0, %v4256
  %4258 = vmatprep.mubr.f32.mxu0 0.0
  %4259 = vmatmul.mubr.f32.gmra.mrb[0].mxu0 %v4158
  %v4260 = vpop.f32.mrb[0].mxu0
  %v4261 = vadd.f32 0.0, %v4260
  %v4262 = vpop.f32.mrb[0].mxu0
  %v4263 = vadd.f32 0.0, %v4262
  %4264 = vmatprep.mubr.f32.mxu0 0.0
  %4265 = vmatmul.mubr.f32.gmra.mrb[0].mxu0 %v4159
  %v4266 = vpop.f32.mrb[0].mxu0
  %v4267 = vadd.f32 0.0, %v4266
  %v4268 = vpop.f32.mrb[0].mxu0
  %v4269 = vadd.f32 0.0, %v4268
  %4270 = vmatprep.mubr.f32.mxu0 0.0
  %4271 = vmatmul.mubr.f32.gmra.mrb[0].mxu0 %v4160
  %v4272 = vpop.f32.mrb[0].mxu0
  %v4273 = vadd.f32 0.0, %v4272
  %v4274 = vpop.f32.mrb[0].mxu0
  %v4275 = vadd.f32 0.0, %v4274
  %4276 = vmatprep.mubr.f32.mxu0 0.0
  %4277 = vmatmul.mubr.f32.gmra.mrb[0].mxu0 %v4161
  %v4278 = vpop.f32.mrb[0].mxu0
  %v4279 = vadd.f32 0.0, %v4278
  %v4280 = vpop.f32.mrb[0].mxu0
  %v4281 = vadd.f32 0.0, %v4280
  %4282 = vmatprep.mubr.f32.mxu0 0.0
  %4283 = vmatmul.mubr.f32.gmra.mrb[0].mxu0 %v4162
  %v4284 = vpop.f32.mrb[0].mxu0
  %v4285 = vadd.f32 0.0, %v4284
  %v4286 = vpop.f32.mrb[0].mxu0
  %v4287 = vadd.f32 0.0, %v4286
  %4288 = vmatprep.mubr.f32.mxu0 0.0
  %4289 = vmatmul.mubr.f32.gmra.mrb[0].mxu0 %v4163
  %v4290 = vpop.f32.mrb[0].mxu0
  %v4291 = vadd.f32 0.0, %v4290
  %v4292 = vpop.f32.mrb[0].mxu0
  %v4293 = vadd.f32 0.0, %v4292
  %4294 = vmatprep.mubr.f32.mxu0 0.0
  %4295 = vmatmul.mubr.f32.gmra.mrb[0].mxu0 %v4164
  %v4296 = vpop.f32.mrb[0].mxu0
  %v4297 = vadd.f32 0.0, %v4296
  %v4298 = vpop.f32.mrb[0].mxu0
  %v4299 = vadd.f32 0.0, %v4298
  %4300 = vmatprep.mubr.f32.mxu0 0.0
  %4301 = vmatmul.mubr.f32.gmra.mrb[0].mxu0 %v4165
  %v4302 = vpop.f32.mrb[0].mxu0
  %v4303 = vadd.f32 0.0, %v4302
  %v4304 = vpop.f32.mrb[0].mxu0
  %v4305 = vadd.f32 0.0, %v4304
  %4306 = vmatprep.mubr.f32.mxu0 0.0
  %4307 = vmatmul.mubr.f32.gmra.mrb[0].mxu0 %v4166
  %v4308 = vpop.f32.mrb[0].mxu0
  %v4309 = vadd.f32 0.0, %v4308
  %v4310 = vpop.f32.mrb[0].mxu0
  %v4311 = vadd.f32 0.0, %v4310
  %4312 = vmatprep.mubr.f32.mxu0 0.0
  %4313 = vmatmul.mubr.f32.gmra.mrb[0].mxu0 %v4167
  %v4314 = vpop.f32.mrb[0].mxu0
  %v4315 = vadd.f32 0.0, %v4314
  %v4316 = vpop.f32.mrb[0].mxu0
  %v4317 = vadd.f32 0.0, %v4316
  %4318 = vmatprep.mubr.f32.mxu0 0.0
  %4319 = vmatmul.mubr.f32.gmra.mrb[0].mxu0 %v4168
  %v4320 = vpop.f32.mrb[0].mxu0
  %v4321 = vadd.f32 0.0, %v4320
  %v4322 = vpop.f32.mrb[0].mxu0
  %v4323 = vadd.f32 0.0, %v4322
  %4324 = vmatprep.mubr.f32.mxu0 0.0
  %4325 = vmatmul.mubr.f32.gmra.mrb[0].mxu0 %v4169
  %v4326 = vpop.f32.mrb[0].mxu0
  %v4327 = vadd.f32 0.0, %v4326
  %v4328 = vpop.f32.mrb[0].mxu0
  %v4329 = vadd.f32 0.0, %v4328
  %4330 = vdwg.mxu0
  %s4331 = scalar_lea.vmem %s53, 2
  %v4332 = vld [vmem:[%s4331] ss:$8 sm:$0x3]
  %v4334 = vlaneseq
  %v4335 = vshrl.u32 %v4334, 7
  %v4336 = vsub.s32 0, %v4335
  %v4337 = vrot.slane %v4332, %v4336
  %v4338 = vlaneseq
  %v4339 = vshrl.u32 %v4338, 7
  %v4340 = vsub.s32 1, %v4339
  %v4341 = vrot.slane %v4332, %v4340
  %v4344 = vmul.f32 %v4237, %v4337
  %v4345 = vmul.f32 %v4239, %v4341
  %v4346 = vmul.f32 %v4243, %v4337
  %v4347 = vmul.f32 %v4245, %v4341
  %v4348 = vmul.f32 %v4249, %v4337
  %v4349 = vmul.f32 %v4251, %v4341
  %v4350 = vmul.f32 %v4255, %v4337
  %v4351 = vmul.f32 %v4257, %v4341
  %v4352 = vmul.f32 %v4261, %v4337
  %v4353 = vmul.f32 %v4263, %v4341
  %v4354 = vmul.f32 %v4267, %v4337
  %v4355 = vmul.f32 %v4269, %v4341
  %v4356 = vmul.f32 %v4273, %v4337
  %v4357 = vmul.f32 %v4275, %v4341
  %v4358 = vmul.f32 %v4279, %v4337
  %v4359 = vmul.f32 %v4281, %v4341
  %v4360 = vmul.f32 %v4285, %v4337
  %v4361 = vmul.f32 %v4287, %v4341
  %v4362 = vmul.f32 %v4291, %v4337
  %v4363 = vmul.f32 %v4293, %v4341
  %v4364 = vmul.f32 %v4297, %v4337
  %v4365 = vmul.f32 %v4299, %v4341
  %v4366 = vmul.f32 %v4303, %v4337
  %v4367 = vmul.f32 %v4305, %v4341
  %v4368 = vmul.f32 %v4309, %v4337
  %v4369 = vmul.f32 %v4311, %v4341
  %v4370 = vmul.f32 %v4315, %v4337
  %v4371 = vmul.f32 %v4317, %v4341
  %v4372 = vmul.f32 %v4321, %v4337
  %v4373 = vmul.f32 %v4323, %v4341
  %v4374 = vmul.f32 %v4327, %v4337
  %v4375 = vmul.f32 %v4329, %v4341
  %v4376 = vadd.f32 %v4122, %v4344
  %v4377 = vadd.f32 %v4123, %v4345
  %v4378 = vadd.f32 %v4124, %v4346
  %v4379 = vadd.f32 %v4125, %v4347
  %v4380 = vadd.f32 %v4126, %v4348
  %v4381 = vadd.f32 %v4127, %v4349
  %v4382 = vadd.f32 %v4128, %v4350
  %v4383 = vadd.f32 %v4129, %v4351
  %v4384 = vadd.f32 %v4130, %v4352
  %v4385 = vadd.f32 %v4131, %v4353
  %v4386 = vadd.f32 %v4132, %v4354
  %v4387 = vadd.f32 %v4133, %v4355
  %v4388 = vadd.f32 %v4134, %v4356
  %v4389 = vadd.f32 %v4135, %v4357
  %v4390 = vadd.f32 %v4136, %v4358
  %v4391 = vadd.f32 %v4137, %v4359
  %v4392 = vadd.f32 %v4138, %v4360
  %v4393 = vadd.f32 %v4139, %v4361
  %v4394 = vadd.f32 %v4140, %v4362
  %v4395 = vadd.f32 %v4141, %v4363
  %v4396 = vadd.f32 %v4142, %v4364
  %v4397 = vadd.f32 %v4143, %v4365
  %v4398 = vadd.f32 %v4144, %v4366
  %v4399 = vadd.f32 %v4145, %v4367
  %v4400 = vadd.f32 %v4146, %v4368
  %v4401 = vadd.f32 %v4147, %v4369
  %v4402 = vadd.f32 %v4148, %v4370
  %v4403 = vadd.f32 %v4149, %v4371
  %v4404 = vadd.f32 %v4150, %v4372
  %v4405 = vadd.f32 %v4151, %v4373
  %v4406 = vadd.f32 %v4152, %v4374
  %v4407 = vadd.f32 %v4153, %v4375
  %v4408 = vld [vmem:[%s7 + $0x180] sm:$0xff]
  %v4409 = vld [vmem:[%s7 + $0x188] sm:$0xff]
  %v4410 = vld [vmem:[%s7 + $0x190] sm:$0xff]
  %v4411 = vld [vmem:[%s7 + $0x198] sm:$0xff]
  %v4412 = vld [vmem:[%s7 + $0x1a0] sm:$0xff]
  %v4413 = vld [vmem:[%s7 + $0x1a8] sm:$0xff]
  %v4414 = vld [vmem:[%s7 + $0x1b0] sm:$0xff]
  %v4415 = vld [vmem:[%s7 + $0x1b8] sm:$0xff]
  %v4416 = vld [vmem:[%s7 + $0x1c0] sm:$0xff]
  %v4417 = vld [vmem:[%s7 + $0x1c8] sm:$0xff]
  %v4418 = vld [vmem:[%s7 + $0x1d0] sm:$0xff]
  %v4419 = vld [vmem:[%s7 + $0x1d8] sm:$0xff]
  %v4420 = vld [vmem:[%s7 + $0x1e0] sm:$0xff]
  %v4421 = vld [vmem:[%s7 + $0x1e8] sm:$0xff]
  %v4422 = vld [vmem:[%s7 + $0x1f0] sm:$0xff]
  %v4423 = vld [vmem:[%s7 + $0x1f8] sm:$0xff]
  %4424 = vmatprep.subr.mxu0 %v3571
  %4425 = vmatpush1.msra.mxu0 %v3569
  %4426 = vmatprep.subr.mxu0 %v3575
  %4427 = vmatpush1.msra.mxu0 %v3573
  %4428 = vmatprep.subr.mxu0 %v3581
  %4429 = vmatpush1.msra.mxu0 %v3579
  %4430 = vmatprep.subr.mxu0 %v3585
  %4431 = vmatpush1.msra.mxu0 %v3583
  %4432 = vmatprep.subr.mxu0 %v3591
  %4433 = vmatpush1.msra.mxu0 %v3589
  %4434 = vmatprep.subr.mxu0 %v3595
  %4435 = vmatpush1.msra.mxu0 %v3593
  %4436 = vmatprep.subr.mxu0 %v3601
  %4437 = vmatpush1.msra.mxu0 %v3599
  %4438 = vmatprep.subr.mxu0 %v3605
  %4439 = vmatpush1.msra.mxu0 %v3603
  %4440 = vmatprep.subr.mxu0 %v3611
  %4441 = vmatpush1.msra.mxu0 %v3609
  %4442 = vmatprep.subr.mxu0 %v3615
  %4443 = vmatpush1.msra.mxu0 %v3613
  %4444 = vmatprep.subr.mxu0 %v3621
  %4445 = vmatpush1.msra.mxu0 %v3619
  %4446 = vmatprep.subr.mxu0 %v3625
  %4447 = vmatpush1.msra.mxu0 %v3623
  %4448 = vmatprep.subr.mxu0 %v3631
  %4449 = vmatpush1.msra.mxu0 %v3629
  %4450 = vmatprep.subr.mxu0 %v3635
  %4451 = vmatpush1.msra.mxu0 %v3633
  %4452 = vmatprep.subr.mxu0 %v3641
  %4453 = vmatpush1.msra.mxu0 %v3639
  %4454 = vmatprep.subr.mxu0 %v3645
  %4455 = vmatpush1.msra.mxu0 %v3643
  %4456 = vmatprep.subr.mxu0 0.0
  %4457 = vmatpush1.msra.mxu0 0.0
  %4458 = vmatprep.subr.mxu0 0.0
  %4459 = vmatpush1.msra.mxu0 0.0
  %4460 = vmatprep.subr.mxu0 0.0
  %4461 = vmatpush1.msra.mxu0 0.0
  %4462 = vmatprep.subr.mxu0 0.0
  %4463 = vmatpush1.msra.mxu0 0.0
  %4464 = vmatprep.subr.mxu0 0.0
  %4465 = vmatpush1.msra.mxu0 0.0
  %4466 = vmatprep.subr.mxu0 0.0
  %4467 = vmatpush1.msra.mxu0 0.0
  %4468 = vmatprep.subr.mxu0 0.0
  %4469 = vmatpush1.msra.mxu0 0.0
  %4470 = vmatprep.subr.mxu0 0.0
  %4471 = vmatpush1.msra.mxu0 0.0
  %4472 = vmatprep.subr.mxu0 0.0
  %4473 = vmatpush1.msra.mxu0 0.0
  %4474 = vmatprep.subr.mxu0 0.0
  %4475 = vmatpush1.msra.mxu0 0.0
  %4476 = vmatprep.subr.mxu0 0.0
  %4477 = vmatpush1.msra.mxu0 0.0
  %4478 = vmatprep.subr.mxu0 0.0
  %4479 = vmatpush1.msra.mxu0 0.0
  %4480 = vmatprep.subr.mxu0 0.0
  %4481 = vmatpush1.msra.mxu0 0.0
  %4482 = vmatprep.subr.mxu0 0.0
  %4483 = vmatpush1.msra.mxu0 0.0
  %4484 = vmatprep.subr.mxu0 0.0
  %4485 = vmatpush1.msra.mxu0 0.0
  %4486 = vmatprep.subr.mxu0 0.0
  %4487 = vmatpush1.msra.mxu0 0.0
  %4488 = vmatprep.mubr.f32.mxu0 0.0
  %4489 = vmatmul.mubr.f32.gmra.mrb[0].mxu0 %v4408
  %v4490 = vpop.f32.mrb[0].mxu0
  %v4491 = vadd.f32 0.0, %v4490
  %v4492 = vpop.f32.mrb[0].mxu0
  %v4493 = vadd.f32 0.0, %v4492
  %4494 = vmatprep.mubr.f32.mxu0 0.0
  %4495 = vmatmul.mubr.f32.gmra.mrb[0].mxu0 %v4409
  %v4496 = vpop.f32.mrb[0].mxu0
  %v4497 = vadd.f32 0.0, %v4496
  %v4498 = vpop.f32.mrb[0].mxu0
  %v4499 = vadd.f32 0.0, %v4498
  %4500 = vmatprep.mubr.f32.mxu0 0.0
  %4501 = vmatmul.mubr.f32.gmra.mrb[0].mxu0 %v4410
  %v4502 = vpop.f32.mrb[0].mxu0
  %v4503 = vadd.f32 0.0, %v4502
  %v4504 = vpop.f32.mrb[0].mxu0
  %v4505 = vadd.f32 0.0, %v4504
  %4506 = vmatprep.mubr.f32.mxu0 0.0
  %4507 = vmatmul.mubr.f32.gmra.mrb[0].mxu0 %v4411
  %v4508 = vpop.f32.mrb[0].mxu0
  %v4509 = vadd.f32 0.0, %v4508
  %v4510 = vpop.f32.mrb[0].mxu0
  %v4511 = vadd.f32 0.0, %v4510
  %4512 = vmatprep.mubr.f32.mxu0 0.0
  %4513 = vmatmul.mubr.f32.gmra.mrb[0].mxu0 %v4412
  %v4514 = vpop.f32.mrb[0].mxu0
  %v4515 = vadd.f32 0.0, %v4514
  %v4516 = vpop.f32.mrb[0].mxu0
  %v4517 = vadd.f32 0.0, %v4516
  %4518 = vmatprep.mubr.f32.mxu0 0.0
  %4519 = vmatmul.mubr.f32.gmra.mrb[0].mxu0 %v4413
  %v4520 = vpop.f32.mrb[0].mxu0
  %v4521 = vadd.f32 0.0, %v4520
  %v4522 = vpop.f32.mrb[0].mxu0
  %v4523 = vadd.f32 0.0, %v4522
  %4524 = vmatprep.mubr.f32.mxu0 0.0
  %4525 = vmatmul.mubr.f32.gmra.mrb[0].mxu0 %v4414
  %v4526 = vpop.f32.mrb[0].mxu0
  %v4527 = vadd.f32 0.0, %v4526
  %v4528 = vpop.f32.mrb[0].mxu0
  %v4529 = vadd.f32 0.0, %v4528
  %4530 = vmatprep.mubr.f32.mxu0 0.0
  %4531 = vmatmul.mubr.f32.gmra.mrb[0].mxu0 %v4415
  %v4532 = vpop.f32.mrb[0].mxu0
  %v4533 = vadd.f32 0.0, %v4532
  %v4534 = vpop.f32.mrb[0].mxu0
  %v4535 = vadd.f32 0.0, %v4534
  %4536 = vmatprep.mubr.f32.mxu0 0.0
  %4537 = vmatmul.mubr.f32.gmra.mrb[0].mxu0 %v4416
  %v4538 = vpop.f32.mrb[0].mxu0
  %v4539 = vadd.f32 0.0, %v4538
  %v4540 = vpop.f32.mrb[0].mxu0
  %v4541 = vadd.f32 0.0, %v4540
  %4542 = vmatprep.mubr.f32.mxu0 0.0
  %4543 = vmatmul.mubr.f32.gmra.mrb[0].mxu0 %v4417
  %v4544 = vpop.f32.mrb[0].mxu0
  %v4545 = vadd.f32 0.0, %v4544
  %v4546 = vpop.f32.mrb[0].mxu0
  %v4547 = vadd.f32 0.0, %v4546
  %4548 = vmatprep.mubr.f32.mxu0 0.0
  %4549 = vmatmul.mubr.f32.gmra.mrb[0].mxu0 %v4418
  %v4550 = vpop.f32.mrb[0].mxu0
  %v4551 = vadd.f32 0.0, %v4550
  %v4552 = vpop.f32.mrb[0].mxu0
  %v4553 = vadd.f32 0.0, %v4552
  %4554 = vmatprep.mubr.f32.mxu0 0.0
  %4555 = vmatmul.mubr.f32.gmra.mrb[0].mxu0 %v4419
  %v4556 = vpop.f32.mrb[0].mxu0
  %v4557 = vadd.f32 0.0, %v4556
  %v4558 = vpop.f32.mrb[0].mxu0
  %v4559 = vadd.f32 0.0, %v4558
  %4560 = vmatprep.mubr.f32.mxu0 0.0
  %4561 = vmatmul.mubr.f32.gmra.mrb[0].mxu0 %v4420
  %v4562 = vpop.f32.mrb[0].mxu0
  %v4563 = vadd.f32 0.0, %v4562
  %v4564 = vpop.f32.mrb[0].mxu0
  %v4565 = vadd.f32 0.0, %v4564
  %4566 = vmatprep.mubr.f32.mxu0 0.0
  %4567 = vmatmul.mubr.f32.gmra.mrb[0].mxu0 %v4421
  %v4568 = vpop.f32.mrb[0].mxu0
  %v4569 = vadd.f32 0.0, %v4568
  %v4570 = vpop.f32.mrb[0].mxu0
  %v4571 = vadd.f32 0.0, %v4570
  %4572 = vmatprep.mubr.f32.mxu0 0.0
  %4573 = vmatmul.mubr.f32.gmra.mrb[0].mxu0 %v4422
  %v4574 = vpop.f32.mrb[0].mxu0
  %v4575 = vadd.f32 0.0, %v4574
  %v4576 = vpop.f32.mrb[0].mxu0
  %v4577 = vadd.f32 0.0, %v4576
  %4578 = vmatprep.mubr.f32.mxu0 0.0
  %4579 = vmatmul.mubr.f32.gmra.mrb[0].mxu0 %v4423
  %v4580 = vpop.f32.mrb[0].mxu0
  %v4581 = vadd.f32 0.0, %v4580
  %v4582 = vpop.f32.mrb[0].mxu0
  %v4583 = vadd.f32 0.0, %v4582
  %4584 = vdwg.mxu0
  %s4585 = scalar_lea.vmem %s53, 3
  %v4586 = vld [vmem:[%s4585] ss:$8 sm:$0x3]
  %v4588 = vlaneseq
  %v4589 = vshrl.u32 %v4588, 7
  %v4590 = vsub.s32 0, %v4589
  %v4591 = vrot.slane %v4586, %v4590
  %v4592 = vlaneseq
  %v4593 = vshrl.u32 %v4592, 7
  %v4594 = vsub.s32 1, %v4593
  %v4595 = vrot.slane %v4586, %v4594
  %v4598 = vmul.f32 %v4491, %v4591
  %v4599 = vmul.f32 %v4493, %v4595
  %v4600 = vmul.f32 %v4497, %v4591
  %v4601 = vmul.f32 %v4499, %v4595
  %v4602 = vmul.f32 %v4503, %v4591
  %v4603 = vmul.f32 %v4505, %v4595
  %v4604 = vmul.f32 %v4509, %v4591
  %v4605 = vmul.f32 %v4511, %v4595
  %v4606 = vmul.f32 %v4515, %v4591
  %v4607 = vmul.f32 %v4517, %v4595
  %v4608 = vmul.f32 %v4521, %v4591
  %v4609 = vmul.f32 %v4523, %v4595
  %v4610 = vmul.f32 %v4527, %v4591
  %v4611 = vmul.f32 %v4529, %v4595
  %v4612 = vmul.f32 %v4533, %v4591
  %v4613 = vmul.f32 %v4535, %v4595
  %v4614 = vmul.f32 %v4539, %v4591
  %v4615 = vmul.f32 %v4541, %v4595
  %v4616 = vmul.f32 %v4545, %v4591
  %v4617 = vmul.f32 %v4547, %v4595
  %v4618 = vmul.f32 %v4551, %v4591
  %v4619 = vmul.f32 %v4553, %v4595
  %v4620 = vmul.f32 %v4557, %v4591
  %v4621 = vmul.f32 %v4559, %v4595
  %v4622 = vmul.f32 %v4563, %v4591
  %v4623 = vmul.f32 %v4565, %v4595
  %v4624 = vmul.f32 %v4569, %v4591
  %v4625 = vmul.f32 %v4571, %v4595
  %v4626 = vmul.f32 %v4575, %v4591
  %v4627 = vmul.f32 %v4577, %v4595
  %v4628 = vmul.f32 %v4581, %v4591
  %v4629 = vmul.f32 %v4583, %v4595
  %v4630 = vadd.f32 %v4376, %v4598
  %v4631 = vadd.f32 %v4377, %v4599
  %v4632 = vadd.f32 %v4378, %v4600
  %v4633 = vadd.f32 %v4379, %v4601
  %v4634 = vadd.f32 %v4380, %v4602
  %v4635 = vadd.f32 %v4381, %v4603
  %v4636 = vadd.f32 %v4382, %v4604
  %v4637 = vadd.f32 %v4383, %v4605
  %v4638 = vadd.f32 %v4384, %v4606
  %v4639 = vadd.f32 %v4385, %v4607
  %v4640 = vadd.f32 %v4386, %v4608
  %v4641 = vadd.f32 %v4387, %v4609
  %v4642 = vadd.f32 %v4388, %v4610
  %v4643 = vadd.f32 %v4389, %v4611
  %v4644 = vadd.f32 %v4390, %v4612
  %v4645 = vadd.f32 %v4391, %v4613
  %v4646 = vadd.f32 %v4392, %v4614
  %v4647 = vadd.f32 %v4393, %v4615
  %v4648 = vadd.f32 %v4394, %v4616
  %v4649 = vadd.f32 %v4395, %v4617
  %v4650 = vadd.f32 %v4396, %v4618
  %v4651 = vadd.f32 %v4397, %v4619
  %v4652 = vadd.f32 %v4398, %v4620
  %v4653 = vadd.f32 %v4399, %v4621
  %v4654 = vadd.f32 %v4400, %v4622
  %v4655 = vadd.f32 %v4401, %v4623
  %v4656 = vadd.f32 %v4402, %v4624
  %v4657 = vadd.f32 %v4403, %v4625
  %v4658 = vadd.f32 %v4404, %v4626
  %v4659 = vadd.f32 %v4405, %v4627
  %v4660 = vadd.f32 %v4406, %v4628
  %v4661 = vadd.f32 %v4407, %v4629
  %v4662 = vld [vmem:[%s7 + $0x200] sm:$0xff]
  %v4663 = vld [vmem:[%s7 + $0x208] sm:$0xff]
  %v4664 = vld [vmem:[%s7 + $0x210] sm:$0xff]
  %v4665 = vld [vmem:[%s7 + $0x218] sm:$0xff]
  %v4666 = vld [vmem:[%s7 + $0x220] sm:$0xff]
  %v4667 = vld [vmem:[%s7 + $0x228] sm:$0xff]
  %v4668 = vld [vmem:[%s7 + $0x230] sm:$0xff]
  %v4669 = vld [vmem:[%s7 + $0x238] sm:$0xff]
  %v4670 = vld [vmem:[%s7 + $0x240] sm:$0xff]
  %v4671 = vld [vmem:[%s7 + $0x248] sm:$0xff]
  %v4672 = vld [vmem:[%s7 + $0x250] sm:$0xff]
  %v4673 = vld [vmem:[%s7 + $0x258] sm:$0xff]
  %v4674 = vld [vmem:[%s7 + $0x260] sm:$0xff]
  %v4675 = vld [vmem:[%s7 + $0x268] sm:$0xff]
  %v4676 = vld [vmem:[%s7 + $0x270] sm:$0xff]
  %v4677 = vld [vmem:[%s7 + $0x278] sm:$0xff]
  %4678 = vmatprep.subr.mxu0 %v3571
  %4679 = vmatpush1.msra.mxu0 %v3569
  %4680 = vmatprep.subr.mxu0 %v3575
  %4681 = vmatpush1.msra.mxu0 %v3573
  %4682 = vmatprep.subr.mxu0 %v3581
  %4683 = vmatpush1.msra.mxu0 %v3579
  %4684 = vmatprep.subr.mxu0 %v3585
  %4685 = vmatpush1.msra.mxu0 %v3583
  %4686 = vmatprep.subr.mxu0 %v3591
  %4687 = vmatpush1.msra.mxu0 %v3589
  %4688 = vmatprep.subr.mxu0 %v3595
  %4689 = vmatpush1.msra.mxu0 %v3593
  %4690 = vmatprep.subr.mxu0 %v3601
  %4691 = vmatpush1.msra.mxu0 %v3599
  %4692 = vmatprep.subr.mxu0 %v3605
  %4693 = vmatpush1.msra.mxu0 %v3603
  %4694 = vmatprep.subr.mxu0 %v3611
  %4695 = vmatpush1.msra.mxu0 %v3609
  %4696 = vmatprep.subr.mxu0 %v3615
  %4697 = vmatpush1.msra.mxu0 %v3613
  %4698 = vmatprep.subr.mxu0 %v3621
  %4699 = vmatpush1.msra.mxu0 %v3619
  %4700 = vmatprep.subr.mxu0 %v3625
  %4701 = vmatpush1.msra.mxu0 %v3623
  %4702 = vmatprep.subr.mxu0 %v3631
  %4703 = vmatpush1.msra.mxu0 %v3629
  %4704 = vmatprep.subr.mxu0 %v3635
  %4705 = vmatpush1.msra.mxu0 %v3633
  %4706 = vmatprep.subr.mxu0 %v3641
  %4707 = vmatpush1.msra.mxu0 %v3639
  %4708 = vmatprep.subr.mxu0 %v3645
  %4709 = vmatpush1.msra.mxu0 %v3643
  %4710 = vmatprep.subr.mxu0 0.0
  %4711 = vmatpush1.msra.mxu0 0.0
  %4712 = vmatprep.subr.mxu0 0.0
  %4713 = vmatpush1.msra.mxu0 0.0
  %4714 = vmatprep.subr.mxu0 0.0
  %4715 = vmatpush1.msra.mxu0 0.0
  %4716 = vmatprep.subr.mxu0 0.0
  %4717 = vmatpush1.msra.mxu0 0.0
  %4718 = vmatprep.subr.mxu0 0.0
  %4719 = vmatpush1.msra.mxu0 0.0
  %4720 = vmatprep.subr.mxu0 0.0
  %4721 = vmatpush1.msra.mxu0 0.0
  %4722 = vmatprep.subr.mxu0 0.0
  %4723 = vmatpush1.msra.mxu0 0.0
  %4724 = vmatprep.subr.mxu0 0.0
  %4725 = vmatpush1.msra.mxu0 0.0
  %4726 = vmatprep.subr.mxu0 0.0
  %4727 = vmatpush1.msra.mxu0 0.0
  %4728 = vmatprep.subr.mxu0 0.0
  %4729 = vmatpush1.msra.mxu0 0.0
  %4730 = vmatprep.subr.mxu0 0.0
  %4731 = vmatpush1.msra.mxu0 0.0
  %4732 = vmatprep.subr.mxu0 0.0
  %4733 = vmatpush1.msra.mxu0 0.0
  %4734 = vmatprep.subr.mxu0 0.0
  %4735 = vmatpush1.msra.mxu0 0.0
  %4736 = vmatprep.subr.mxu0 0.0
  %4737 = vmatpush1.msra.mxu0 0.0
  %4738 = vmatprep.subr.mxu0 0.0
  %4739 = vmatpush1.msra.mxu0 0.0
  %4740 = vmatprep.subr.mxu0 0.0
  %4741 = vmatpush1.msra.mxu0 0.0
  %4742 = vmatprep.mubr.f32.mxu0 0.0
  %4743 = vmatmul.mubr.f32.gmra.mrb[0].mxu0 %v4662
  %v4744 = vpop.f32.mrb[0].mxu0
  %v4745 = vadd.f32 0.0, %v4744
  %v4746 = vpop.f32.mrb[0].mxu0
  %v4747 = vadd.f32 0.0, %v4746
  %4748 = vmatprep.mubr.f32.mxu0 0.0
  %4749 = vmatmul.mubr.f32.gmra.mrb[0].mxu0 %v4663
  %v4750 = vpop.f32.mrb[0].mxu0
  %v4751 = vadd.f32 0.0, %v4750
  %v4752 = vpop.f32.mrb[0].mxu0
  %v4753 = vadd.f32 0.0, %v4752
  %4754 = vmatprep.mubr.f32.mxu0 0.0
  %4755 = vmatmul.mubr.f32.gmra.mrb[0].mxu0 %v4664
  %v4756 = vpop.f32.mrb[0].mxu0
  %v4757 = vadd.f32 0.0, %v4756
  %v4758 = vpop.f32.mrb[0].mxu0
  %v4759 = vadd.f32 0.0, %v4758
  %4760 = vmatprep.mubr.f32.mxu0 0.0
  %4761 = vmatmul.mubr.f32.gmra.mrb[0].mxu0 %v4665
  %v4762 = vpop.f32.mrb[0].mxu0
  %v4763 = vadd.f32 0.0, %v4762
  %v4764 = vpop.f32.mrb[0].mxu0
  %v4765 = vadd.f32 0.0, %v4764
  %4766 = vmatprep.mubr.f32.mxu0 0.0
  %4767 = vmatmul.mubr.f32.gmra.mrb[0].mxu0 %v4666
  %v4768 = vpop.f32.mrb[0].mxu0
  %v4769 = vadd.f32 0.0, %v4768
  %v4770 = vpop.f32.mrb[0].mxu0
  %v4771 = vadd.f32 0.0, %v4770
  %4772 = vmatprep.mubr.f32.mxu0 0.0
  %4773 = vmatmul.mubr.f32.gmra.mrb[0].mxu0 %v4667
  %v4774 = vpop.f32.mrb[0].mxu0
  %v4775 = vadd.f32 0.0, %v4774
  %v4776 = vpop.f32.mrb[0].mxu0
  %v4777 = vadd.f32 0.0, %v4776
  %4778 = vmatprep.mubr.f32.mxu0 0.0
  %4779 = vmatmul.mubr.f32.gmra.mrb[0].mxu0 %v4668
  %v4780 = vpop.f32.mrb[0].mxu0
  %v4781 = vadd.f32 0.0, %v4780
  %v4782 = vpop.f32.mrb[0].mxu0
  %v4783 = vadd.f32 0.0, %v4782
  %4784 = vmatprep.mubr.f32.mxu0 0.0
  %4785 = vmatmul.mubr.f32.gmra.mrb[0].mxu0 %v4669
  %v4786 = vpop.f32.mrb[0].mxu0
  %v4787 = vadd.f32 0.0, %v4786
  %v4788 = vpop.f32.mrb[0].mxu0
  %v4789 = vadd.f32 0.0, %v4788
  %4790 = vmatprep.mubr.f32.mxu0 0.0
  %4791 = vmatmul.mubr.f32.gmra.mrb[0].mxu0 %v4670
  %v4792 = vpop.f32.mrb[0].mxu0
  %v4793 = vadd.f32 0.0, %v4792
  %v4794 = vpop.f32.mrb[0].mxu0
  %v4795 = vadd.f32 0.0, %v4794
  %4796 = vmatprep.mubr.f32.mxu0 0.0
  %4797 = vmatmul.mubr.f32.gmra.mrb[0].mxu0 %v4671
  %v4798 = vpop.f32.mrb[0].mxu0
  %v4799 = vadd.f32 0.0, %v4798
  %v4800 = vpop.f32.mrb[0].mxu0
  %v4801 = vadd.f32 0.0, %v4800
  %4802 = vmatprep.mubr.f32.mxu0 0.0
  %4803 = vmatmul.mubr.f32.gmra.mrb[0].mxu0 %v4672
  %v4804 = vpop.f32.mrb[0].mxu0
  %v4805 = vadd.f32 0.0, %v4804
  %v4806 = vpop.f32.mrb[0].mxu0
  %v4807 = vadd.f32 0.0, %v4806
  %4808 = vmatprep.mubr.f32.mxu0 0.0
  %4809 = vmatmul.mubr.f32.gmra.mrb[0].mxu0 %v4673
  %v4810 = vpop.f32.mrb[0].mxu0
  %v4811 = vadd.f32 0.0, %v4810
  %v4812 = vpop.f32.mrb[0].mxu0
  %v4813 = vadd.f32 0.0, %v4812
  %4814 = vmatprep.mubr.f32.mxu0 0.0
  %4815 = vmatmul.mubr.f32.gmra.mrb[0].mxu0 %v4674
  %v4816 = vpop.f32.mrb[0].mxu0
  %v4817 = vadd.f32 0.0, %v4816
  %v4818 = vpop.f32.mrb[0].mxu0
  %v4819 = vadd.f32 0.0, %v4818
  %4820 = vmatprep.mubr.f32.mxu0 0.0
  %4821 = vmatmul.mubr.f32.gmra.mrb[0].mxu0 %v4675
  %v4822 = vpop.f32.mrb[0].mxu0
  %v4823 = vadd.f32 0.0, %v4822
  %v4824 = vpop.f32.mrb[0].mxu0
  %v4825 = vadd.f32 0.0, %v4824
  %4826 = vmatprep.mubr.f32.mxu0 0.0
  %4827 = vmatmul.mubr.f32.gmra.mrb[0].mxu0 %v4676
  %v4828 = vpop.f32.mrb[0].mxu0
  %v4829 = vadd.f32 0.0, %v4828
  %v4830 = vpop.f32.mrb[0].mxu0
  %v4831 = vadd.f32 0.0, %v4830
  %4832 = vmatprep.mubr.f32.mxu0 0.0
  %4833 = vmatmul.mubr.f32.gmra.mrb[0].mxu0 %v4677
  %v4834 = vpop.f32.mrb[0].mxu0
  %v4835 = vadd.f32 0.0, %v4834
  %v4836 = vpop.f32.mrb[0].mxu0
  %v4837 = vadd.f32 0.0, %v4836
  %4838 = vdwg.mxu0
  %s4839 = scalar_lea.vmem %s53, 4
  %v4840 = vld [vmem:[%s4839] ss:$8 sm:$0x3]
  %v4842 = vlaneseq
  %v4843 = vshrl.u32 %v4842, 7
  %v4844 = vsub.s32 0, %v4843
  %v4845 = vrot.slane %v4840, %v4844
  %v4846 = vlaneseq
  %v4847 = vshrl.u32 %v4846, 7
  %v4848 = vsub.s32 1, %v4847
  %v4849 = vrot.slane %v4840, %v4848
  %v4852 = vmul.f32 %v4745, %v4845
  %v4853 = vmul.f32 %v4747, %v4849
  %v4854 = vmul.f32 %v4751, %v4845
  %v4855 = vmul.f32 %v4753, %v4849
  %v4856 = vmul.f32 %v4757, %v4845
  %v4857 = vmul.f32 %v4759, %v4849
  %v4858 = vmul.f32 %v4763, %v4845
  %v4859 = vmul.f32 %v4765, %v4849
  %v4860 = vmul.f32 %v4769, %v4845
  %v4861 = vmul.f32 %v4771, %v4849
  %v4862 = vmul.f32 %v4775, %v4845
  %v4863 = vmul.f32 %v4777, %v4849
  %v4864 = vmul.f32 %v4781, %v4845
  %v4865 = vmul.f32 %v4783, %v4849
  %v4866 = vmul.f32 %v4787, %v4845
  %v4867 = vmul.f32 %v4789, %v4849
  %v4868 = vmul.f32 %v4793, %v4845
  %v4869 = vmul.f32 %v4795, %v4849
  %v4870 = vmul.f32 %v4799, %v4845
  %v4871 = vmul.f32 %v4801, %v4849
  %v4872 = vmul.f32 %v4805, %v4845
  %v4873 = vmul.f32 %v4807, %v4849
  %v4874 = vmul.f32 %v4811, %v4845
  %v4875 = vmul.f32 %v4813, %v4849
  %v4876 = vmul.f32 %v4817, %v4845
  %v4877 = vmul.f32 %v4819, %v4849
  %v4878 = vmul.f32 %v4823, %v4845
  %v4879 = vmul.f32 %v4825, %v4849
  %v4880 = vmul.f32 %v4829, %v4845
  %v4881 = vmul.f32 %v4831, %v4849
  %v4882 = vmul.f32 %v4835, %v4845
  %v4883 = vmul.f32 %v4837, %v4849
  %v4884 = vadd.f32 %v4630, %v4852
  %v4885 = vadd.f32 %v4631, %v4853
  %v4886 = vadd.f32 %v4632, %v4854
  %v4887 = vadd.f32 %v4633, %v4855
  %v4888 = vadd.f32 %v4634, %v4856
  %v4889 = vadd.f32 %v4635, %v4857
  %v4890 = vadd.f32 %v4636, %v4858
  %v4891 = vadd.f32 %v4637, %v4859
  %v4892 = vadd.f32 %v4638, %v4860
  %v4893 = vadd.f32 %v4639, %v4861
  %v4894 = vadd.f32 %v4640, %v4862
  %v4895 = vadd.f32 %v4641, %v4863
  %v4896 = vadd.f32 %v4642, %v4864
  %v4897 = vadd.f32 %v4643, %v4865
  %v4898 = vadd.f32 %v4644, %v4866
  %v4899 = vadd.f32 %v4645, %v4867
  %v4900 = vadd.f32 %v4646, %v4868
  %v4901 = vadd.f32 %v4647, %v4869
  %v4902 = vadd.f32 %v4648, %v4870
  %v4903 = vadd.f32 %v4649, %v4871
  %v4904 = vadd.f32 %v4650, %v4872
  %v4905 = vadd.f32 %v4651, %v4873
  %v4906 = vadd.f32 %v4652, %v4874
  %v4907 = vadd.f32 %v4653, %v4875
  %v4908 = vadd.f32 %v4654, %v4876
  %v4909 = vadd.f32 %v4655, %v4877
  %v4910 = vadd.f32 %v4656, %v4878
  %v4911 = vadd.f32 %v4657, %v4879
  %v4912 = vadd.f32 %v4658, %v4880
  %v4913 = vadd.f32 %v4659, %v4881
  %v4914 = vadd.f32 %v4660, %v4882
  %v4915 = vadd.f32 %v4661, %v4883
  %v4916 = vld [vmem:[%s7 + $0x280] sm:$0xff]
  %v4917 = vld [vmem:[%s7 + $0x288] sm:$0xff]
  %v4918 = vld [vmem:[%s7 + $0x290] sm:$0xff]
  %v4919 = vld [vmem:[%s7 + $0x298] sm:$0xff]
  %v4920 = vld [vmem:[%s7 + $0x2a0] sm:$0xff]
  %v4921 = vld [vmem:[%s7 + $0x2a8] sm:$0xff]
  %v4922 = vld [vmem:[%s7 + $0x2b0] sm:$0xff]
  %v4923 = vld [vmem:[%s7 + $0x2b8] sm:$0xff]
  %v4924 = vld [vmem:[%s7 + $0x2c0] sm:$0xff]
  %v4925 = vld [vmem:[%s7 + $0x2c8] sm:$0xff]
  %v4926 = vld [vmem:[%s7 + $0x2d0] sm:$0xff]
  %v4927 = vld [vmem:[%s7 + $0x2d8] sm:$0xff]
  %v4928 = vld [vmem:[%s7 + $0x2e0] sm:$0xff]
  %v4929 = vld [vmem:[%s7 + $0x2e8] sm:$0xff]
  %v4930 = vld [vmem:[%s7 + $0x2f0] sm:$0xff]
  %v4931 = vld [vmem:[%s7 + $0x2f8] sm:$0xff]
  %4932 = vmatprep.subr.mxu0 %v3571
  %4933 = vmatpush1.msra.mxu0 %v3569
  %4934 = vmatprep.subr.mxu0 %v3575
  %4935 = vmatpush1.msra.mxu0 %v3573
  %4936 = vmatprep.subr.mxu0 %v3581
  %4937 = vmatpush1.msra.mxu0 %v3579
  %4938 = vmatprep.subr.mxu0 %v3585
  %4939 = vmatpush1.msra.mxu0 %v3583
  %4940 = vmatprep.subr.mxu0 %v3591
  %4941 = vmatpush1.msra.mxu0 %v3589
  %4942 = vmatprep.subr.mxu0 %v3595
  %4943 = vmatpush1.msra.mxu0 %v3593
  %4944 = vmatprep.subr.mxu0 %v3601
  %4945 = vmatpush1.msra.mxu0 %v3599
  %4946 = vmatprep.subr.mxu0 %v3605
  %4947 = vmatpush1.msra.mxu0 %v3603
  %4948 = vmatprep.subr.mxu0 %v3611
  %4949 = vmatpush1.msra.mxu0 %v3609
  %4950 = vmatprep.subr.mxu0 %v3615
  %4951 = vmatpush1.msra.mxu0 %v3613
  %4952 = vmatprep.subr.mxu0 %v3621
  %4953 = vmatpush1.msra.mxu0 %v3619
  %4954 = vmatprep.subr.mxu0 %v3625
  %4955 = vmatpush1.msra.mxu0 %v3623
  %4956 = vmatprep.subr.mxu0 %v3631
  %4957 = vmatpush1.msra.mxu0 %v3629
  %4958 = vmatprep.subr.mxu0 %v3635
  %4959 = vmatpush1.msra.mxu0 %v3633
  %4960 = vmatprep.subr.mxu0 %v3641
  %4961 = vmatpush1.msra.mxu0 %v3639
  %4962 = vmatprep.subr.mxu0 %v3645
  %4963 = vmatpush1.msra.mxu0 %v3643
  %4964 = vmatprep.subr.mxu0 0.0
  %4965 = vmatpush1.msra.mxu0 0.0
  %4966 = vmatprep.subr.mxu0 0.0
  %4967 = vmatpush1.msra.mxu0 0.0
  %4968 = vmatprep.subr.mxu0 0.0
  %4969 = vmatpush1.msra.mxu0 0.0
  %4970 = vmatprep.subr.mxu0 0.0
  %4971 = vmatpush1.msra.mxu0 0.0
  %4972 = vmatprep.subr.mxu0 0.0
  %4973 = vmatpush1.msra.mxu0 0.0
  %4974 = vmatprep.subr.mxu0 0.0
  %4975 = vmatpush1.msra.mxu0 0.0
  %4976 = vmatprep.subr.mxu0 0.0
  %4977 = vmatpush1.msra.mxu0 0.0
  %4978 = vmatprep.subr.mxu0 0.0
  %4979 = vmatpush1.msra.mxu0 0.0
  %4980 = vmatprep.subr.mxu0 0.0
  %4981 = vmatpush1.msra.mxu0 0.0
  %4982 = vmatprep.subr.mxu0 0.0
  %4983 = vmatpush1.msra.mxu0 0.0
  %4984 = vmatprep.subr.mxu0 0.0
  %4985 = vmatpush1.msra.mxu0 0.0
  %4986 = vmatprep.subr.mxu0 0.0
  %4987 = vmatpush1.msra.mxu0 0.0
  %4988 = vmatprep.subr.mxu0 0.0
  %4989 = vmatpush1.msra.mxu0 0.0
  %4990 = vmatprep.subr.mxu0 0.0
  %4991 = vmatpush1.msra.mxu0 0.0
  %4992 = vmatprep.subr.mxu0 0.0
  %4993 = vmatpush1.msra.mxu0 0.0
  %4994 = vmatprep.subr.mxu0 0.0
  %4995 = vmatpush1.msra.mxu0 0.0
  %4996 = vmatprep.mubr.f32.mxu0 0.0
  %4997 = vmatmul.mubr.f32.gmra.mrb[0].mxu0 %v4916
  %v4998 = vpop.f32.mrb[0].mxu0
  %v4999 = vadd.f32 0.0, %v4998
  %v5000 = vpop.f32.mrb[0].mxu0
  %v5001 = vadd.f32 0.0, %v5000
  %5002 = vmatprep.mubr.f32.mxu0 0.0
  %5003 = vmatmul.mubr.f32.gmra.mrb[0].mxu0 %v4917
  %v5004 = vpop.f32.mrb[0].mxu0
  %v5005 = vadd.f32 0.0, %v5004
  %v5006 = vpop.f32.mrb[0].mxu0
  %v5007 = vadd.f32 0.0, %v5006
  %5008 = vmatprep.mubr.f32.mxu0 0.0
  %5009 = vmatmul.mubr.f32.gmra.mrb[0].mxu0 %v4918
  %v5010 = vpop.f32.mrb[0].mxu0
  %v5011 = vadd.f32 0.0, %v5010
  %v5012 = vpop.f32.mrb[0].mxu0
  %v5013 = vadd.f32 0.0, %v5012
  %5014 = vmatprep.mubr.f32.mxu0 0.0
  %5015 = vmatmul.mubr.f32.gmra.mrb[0].mxu0 %v4919
  %v5016 = vpop.f32.mrb[0].mxu0
  %v5017 = vadd.f32 0.0, %v5016
  %v5018 = vpop.f32.mrb[0].mxu0
  %v5019 = vadd.f32 0.0, %v5018
  %5020 = vmatprep.mubr.f32.mxu0 0.0
  %5021 = vmatmul.mubr.f32.gmra.mrb[0].mxu0 %v4920
  %v5022 = vpop.f32.mrb[0].mxu0
  %v5023 = vadd.f32 0.0, %v5022
  %v5024 = vpop.f32.mrb[0].mxu0
  %v5025 = vadd.f32 0.0, %v5024
  %5026 = vmatprep.mubr.f32.mxu0 0.0
  %5027 = vmatmul.mubr.f32.gmra.mrb[0].mxu0 %v4921
  %v5028 = vpop.f32.mrb[0].mxu0
  %v5029 = vadd.f32 0.0, %v5028
  %v5030 = vpop.f32.mrb[0].mxu0
  %v5031 = vadd.f32 0.0, %v5030
  %5032 = vmatprep.mubr.f32.mxu0 0.0
  %5033 = vmatmul.mubr.f32.gmra.mrb[0].mxu0 %v4922
  %v5034 = vpop.f32.mrb[0].mxu0
  %v5035 = vadd.f32 0.0, %v5034
  %v5036 = vpop.f32.mrb[0].mxu0
  %v5037 = vadd.f32 0.0, %v5036
  %5038 = vmatprep.mubr.f32.mxu0 0.0
  %5039 = vmatmul.mubr.f32.gmra.mrb[0].mxu0 %v4923
  %v5040 = vpop.f32.mrb[0].mxu0
  %v5041 = vadd.f32 0.0, %v5040
  %v5042 = vpop.f32.mrb[0].mxu0
  %v5043 = vadd.f32 0.0, %v5042
  %5044 = vmatprep.mubr.f32.mxu0 0.0
  %5045 = vmatmul.mubr.f32.gmra.mrb[0].mxu0 %v4924
  %v5046 = vpop.f32.mrb[0].mxu0
  %v5047 = vadd.f32 0.0, %v5046
  %v5048 = vpop.f32.mrb[0].mxu0
  %v5049 = vadd.f32 0.0, %v5048
  %5050 = vmatprep.mubr.f32.mxu0 0.0
  %5051 = vmatmul.mubr.f32.gmra.mrb[0].mxu0 %v4925
  %v5052 = vpop.f32.mrb[0].mxu0
  %v5053 = vadd.f32 0.0, %v5052
  %v5054 = vpop.f32.mrb[0].mxu0
  %v5055 = vadd.f32 0.0, %v5054
  %5056 = vmatprep.mubr.f32.mxu0 0.0
  %5057 = vmatmul.mubr.f32.gmra.mrb[0].mxu0 %v4926
  %v5058 = vpop.f32.mrb[0].mxu0
  %v5059 = vadd.f32 0.0, %v5058
  %v5060 = vpop.f32.mrb[0].mxu0
  %v5061 = vadd.f32 0.0, %v5060
  %5062 = vmatprep.mubr.f32.mxu0 0.0
  %5063 = vmatmul.mubr.f32.gmra.mrb[0].mxu0 %v4927
  %v5064 = vpop.f32.mrb[0].mxu0
  %v5065 = vadd.f32 0.0, %v5064
  %v5066 = vpop.f32.mrb[0].mxu0
  %v5067 = vadd.f32 0.0, %v5066
  %5068 = vmatprep.mubr.f32.mxu0 0.0
  %5069 = vmatmul.mubr.f32.gmra.mrb[0].mxu0 %v4928
  %v5070 = vpop.f32.mrb[0].mxu0
  %v5071 = vadd.f32 0.0, %v5070
  %v5072 = vpop.f32.mrb[0].mxu0
  %v5073 = vadd.f32 0.0, %v5072
  %5074 = vmatprep.mubr.f32.mxu0 0.0
  %5075 = vmatmul.mubr.f32.gmra.mrb[0].mxu0 %v4929
  %v5076 = vpop.f32.mrb[0].mxu0
  %v5077 = vadd.f32 0.0, %v5076
  %v5078 = vpop.f32.mrb[0].mxu0
  %v5079 = vadd.f32 0.0, %v5078
  %5080 = vmatprep.mubr.f32.mxu0 0.0
  %5081 = vmatmul.mubr.f32.gmra.mrb[0].mxu0 %v4930
  %v5082 = vpop.f32.mrb[0].mxu0
  %v5083 = vadd.f32 0.0, %v5082
  %v5084 = vpop.f32.mrb[0].mxu0
  %v5085 = vadd.f32 0.0, %v5084
  %5086 = vmatprep.mubr.f32.mxu0 0.0
  %5087 = vmatmul.mubr.f32.gmra.mrb[0].mxu0 %v4931
  %v5088 = vpop.f32.mrb[0].mxu0
  %v5089 = vadd.f32 0.0, %v5088
  %v5090 = vpop.f32.mrb[0].mxu0
  %v5091 = vadd.f32 0.0, %v5090
  %5092 = vdwg.mxu0
  %s5093 = scalar_lea.vmem %s53, 5
  %v5094 = vld [vmem:[%s5093] ss:$8 sm:$0x3]
  %v5096 = vlaneseq
  %v5097 = vshrl.u32 %v5096, 7
  %v5098 = vsub.s32 0, %v5097
  %v5099 = vrot.slane %v5094, %v5098
  %v5100 = vlaneseq
  %v5101 = vshrl.u32 %v5100, 7
  %v5102 = vsub.s32 1, %v5101
  %v5103 = vrot.slane %v5094, %v5102
  %v5106 = vmul.f32 %v4999, %v5099
  %v5107 = vmul.f32 %v5001, %v5103
  %v5108 = vmul.f32 %v5005, %v5099
  %v5109 = vmul.f32 %v5007, %v5103
  %v5110 = vmul.f32 %v5011, %v5099
  %v5111 = vmul.f32 %v5013, %v5103
  %v5112 = vmul.f32 %v5017, %v5099
  %v5113 = vmul.f32 %v5019, %v5103
  %v5114 = vmul.f32 %v5023, %v5099
  %v5115 = vmul.f32 %v5025, %v5103
  %v5116 = vmul.f32 %v5029, %v5099
  %v5117 = vmul.f32 %v5031, %v5103
  %v5118 = vmul.f32 %v5035, %v5099
  %v5119 = vmul.f32 %v5037, %v5103
  %v5120 = vmul.f32 %v5041, %v5099
  %v5121 = vmul.f32 %v5043, %v5103
  %v5122 = vmul.f32 %v5047, %v5099
  %v5123 = vmul.f32 %v5049, %v5103
  %v5124 = vmul.f32 %v5053, %v5099
  %v5125 = vmul.f32 %v5055, %v5103
  %v5126 = vmul.f32 %v5059, %v5099
  %v5127 = vmul.f32 %v5061, %v5103
  %v5128 = vmul.f32 %v5065, %v5099
  %v5129 = vmul.f32 %v5067, %v5103
  %v5130 = vmul.f32 %v5071, %v5099
  %v5131 = vmul.f32 %v5073, %v5103
  %v5132 = vmul.f32 %v5077, %v5099
  %v5133 = vmul.f32 %v5079, %v5103
  %v5134 = vmul.f32 %v5083, %v5099
  %v5135 = vmul.f32 %v5085, %v5103
  %v5136 = vmul.f32 %v5089, %v5099
  %v5137 = vmul.f32 %v5091, %v5103
  %v5138 = vadd.f32 %v4884, %v5106
  %v5139 = vadd.f32 %v4885, %v5107
  %v5140 = vadd.f32 %v4886, %v5108
  %v5141 = vadd.f32 %v4887, %v5109
  %v5142 = vadd.f32 %v4888, %v5110
  %v5143 = vadd.f32 %v4889, %v5111
  %v5144 = vadd.f32 %v4890, %v5112
  %v5145 = vadd.f32 %v4891, %v5113
  %v5146 = vadd.f32 %v4892, %v5114
  %v5147 = vadd.f32 %v4893, %v5115
  %v5148 = vadd.f32 %v4894, %v5116
  %v5149 = vadd.f32 %v4895, %v5117
  %v5150 = vadd.f32 %v4896, %v5118
  %v5151 = vadd.f32 %v4897, %v5119
  %v5152 = vadd.f32 %v4898, %v5120
  %v5153 = vadd.f32 %v4899, %v5121
  %v5154 = vadd.f32 %v4900, %v5122
  %v5155 = vadd.f32 %v4901, %v5123
  %v5156 = vadd.f32 %v4902, %v5124
  %v5157 = vadd.f32 %v4903, %v5125
  %v5158 = vadd.f32 %v4904, %v5126
  %v5159 = vadd.f32 %v4905, %v5127
  %v5160 = vadd.f32 %v4906, %v5128
  %v5161 = vadd.f32 %v4907, %v5129
  %v5162 = vadd.f32 %v4908, %v5130
  %v5163 = vadd.f32 %v4909, %v5131
  %v5164 = vadd.f32 %v4910, %v5132
  %v5165 = vadd.f32 %v4911, %v5133
  %v5166 = vadd.f32 %v4912, %v5134
  %v5167 = vadd.f32 %v4913, %v5135
  %v5168 = vadd.f32 %v4914, %v5136
  %v5169 = vadd.f32 %v4915, %v5137
  %v5170 = vld [vmem:[%s7 + $0x300] sm:$0xff]
  %v5171 = vld [vmem:[%s7 + $0x308] sm:$0xff]
  %v5172 = vld [vmem:[%s7 + $0x310] sm:$0xff]
  %v5173 = vld [vmem:[%s7 + $0x318] sm:$0xff]
  %v5174 = vld [vmem:[%s7 + $0x320] sm:$0xff]
  %v5175 = vld [vmem:[%s7 + $0x328] sm:$0xff]
  %v5176 = vld [vmem:[%s7 + $0x330] sm:$0xff]
  %v5177 = vld [vmem:[%s7 + $0x338] sm:$0xff]
  %v5178 = vld [vmem:[%s7 + $0x340] sm:$0xff]
  %v5179 = vld [vmem:[%s7 + $0x348] sm:$0xff]
  %v5180 = vld [vmem:[%s7 + $0x350] sm:$0xff]
  %v5181 = vld [vmem:[%s7 + $0x358] sm:$0xff]
  %v5182 = vld [vmem:[%s7 + $0x360] sm:$0xff]
  %v5183 = vld [vmem:[%s7 + $0x368] sm:$0xff]
  %v5184 = vld [vmem:[%s7 + $0x370] sm:$0xff]
  %v5185 = vld [vmem:[%s7 + $0x378] sm:$0xff]
  %5186 = vmatprep.subr.mxu0 %v3571
  %5187 = vmatpush1.msra.mxu0 %v3569
  %5188 = vmatprep.subr.mxu0 %v3575
  %5189 = vmatpush1.msra.mxu0 %v3573
  %5190 = vmatprep.subr.mxu0 %v3581
  %5191 = vmatpush1.msra.mxu0 %v3579
  %5192 = vmatprep.subr.mxu0 %v3585
  %5193 = vmatpush1.msra.mxu0 %v3583
  %5194 = vmatprep.subr.mxu0 %v3591
  %5195 = vmatpush1.msra.mxu0 %v3589
  %5196 = vmatprep.subr.mxu0 %v3595
  %5197 = vmatpush1.msra.mxu0 %v3593
  %5198 = vmatprep.subr.mxu0 %v3601
  %5199 = vmatpush1.msra.mxu0 %v3599
  %5200 = vmatprep.subr.mxu0 %v3605
  %5201 = vmatpush1.msra.mxu0 %v3603
  %5202 = vmatprep.subr.mxu0 %v3611
  %5203 = vmatpush1.msra.mxu0 %v3609
  %5204 = vmatprep.subr.mxu0 %v3615
  %5205 = vmatpush1.msra.mxu0 %v3613
  %5206 = vmatprep.subr.mxu0 %v3621
  %5207 = vmatpush1.msra.mxu0 %v3619
  %5208 = vmatprep.subr.mxu0 %v3625
  %5209 = vmatpush1.msra.mxu0 %v3623
  %5210 = vmatprep.subr.mxu0 %v3631
  %5211 = vmatpush1.msra.mxu0 %v3629
  %5212 = vmatprep.subr.mxu0 %v3635
  %5213 = vmatpush1.msra.mxu0 %v3633
  %5214 = vmatprep.subr.mxu0 %v3641
  %5215 = vmatpush1.msra.mxu0 %v3639
  %5216 = vmatprep.subr.mxu0 %v3645
  %5217 = vmatpush1.msra.mxu0 %v3643
  %5218 = vmatprep.subr.mxu0 0.0
  %5219 = vmatpush1.msra.mxu0 0.0
  %5220 = vmatprep.subr.mxu0 0.0
  %5221 = vmatpush1.msra.mxu0 0.0
  %5222 = vmatprep.subr.mxu0 0.0
  %5223 = vmatpush1.msra.mxu0 0.0
  %5224 = vmatprep.subr.mxu0 0.0
  %5225 = vmatpush1.msra.mxu0 0.0
  %5226 = vmatprep.subr.mxu0 0.0
  %5227 = vmatpush1.msra.mxu0 0.0
  %5228 = vmatprep.subr.mxu0 0.0
  %5229 = vmatpush1.msra.mxu0 0.0
  %5230 = vmatprep.subr.mxu0 0.0
  %5231 = vmatpush1.msra.mxu0 0.0
  %5232 = vmatprep.subr.mxu0 0.0
  %5233 = vmatpush1.msra.mxu0 0.0
  %5234 = vmatprep.subr.mxu0 0.0
  %5235 = vmatpush1.msra.mxu0 0.0
  %5236 = vmatprep.subr.mxu0 0.0
  %5237 = vmatpush1.msra.mxu0 0.0
  %5238 = vmatprep.subr.mxu0 0.0
  %5239 = vmatpush1.msra.mxu0 0.0
  %5240 = vmatprep.subr.mxu0 0.0
  %5241 = vmatpush1.msra.mxu0 0.0
  %5242 = vmatprep.subr.mxu0 0.0
  %5243 = vmatpush1.msra.mxu0 0.0
  %5244 = vmatprep.subr.mxu0 0.0
  %5245 = vmatpush1.msra.mxu0 0.0
  %5246 = vmatprep.subr.mxu0 0.0
  %5247 = vmatpush1.msra.mxu0 0.0
  %5248 = vmatprep.subr.mxu0 0.0
  %5249 = vmatpush1.msra.mxu0 0.0
  %5250 = vmatprep.mubr.f32.mxu0 0.0
  %5251 = vmatmul.mubr.f32.gmra.mrb[0].mxu0 %v5170
  %v5252 = vpop.f32.mrb[0].mxu0
  %v5253 = vadd.f32 0.0, %v5252
  %v5254 = vpop.f32.mrb[0].mxu0
  %v5255 = vadd.f32 0.0, %v5254
  %5256 = vmatprep.mubr.f32.mxu0 0.0
  %5257 = vmatmul.mubr.f32.gmra.mrb[0].mxu0 %v5171
  %v5258 = vpop.f32.mrb[0].mxu0
  %v5259 = vadd.f32 0.0, %v5258
  %v5260 = vpop.f32.mrb[0].mxu0
  %v5261 = vadd.f32 0.0, %v5260
  %5262 = vmatprep.mubr.f32.mxu0 0.0
  %5263 = vmatmul.mubr.f32.gmra.mrb[0].mxu0 %v5172
  %v5264 = vpop.f32.mrb[0].mxu0
  %v5265 = vadd.f32 0.0, %v5264
  %v5266 = vpop.f32.mrb[0].mxu0
  %v5267 = vadd.f32 0.0, %v5266
  %5268 = vmatprep.mubr.f32.mxu0 0.0
  %5269 = vmatmul.mubr.f32.gmra.mrb[0].mxu0 %v5173
  %v5270 = vpop.f32.mrb[0].mxu0
  %v5271 = vadd.f32 0.0, %v5270
  %v5272 = vpop.f32.mrb[0].mxu0
  %v5273 = vadd.f32 0.0, %v5272
  %5274 = vmatprep.mubr.f32.mxu0 0.0
  %5275 = vmatmul.mubr.f32.gmra.mrb[0].mxu0 %v5174
  %v5276 = vpop.f32.mrb[0].mxu0
  %v5277 = vadd.f32 0.0, %v5276
  %v5278 = vpop.f32.mrb[0].mxu0
  %v5279 = vadd.f32 0.0, %v5278
  %5280 = vmatprep.mubr.f32.mxu0 0.0
  %5281 = vmatmul.mubr.f32.gmra.mrb[0].mxu0 %v5175
  %v5282 = vpop.f32.mrb[0].mxu0
  %v5283 = vadd.f32 0.0, %v5282
  %v5284 = vpop.f32.mrb[0].mxu0
  %v5285 = vadd.f32 0.0, %v5284
  %5286 = vmatprep.mubr.f32.mxu0 0.0
  %5287 = vmatmul.mubr.f32.gmra.mrb[0].mxu0 %v5176
  %v5288 = vpop.f32.mrb[0].mxu0
  %v5289 = vadd.f32 0.0, %v5288
  %v5290 = vpop.f32.mrb[0].mxu0
  %v5291 = vadd.f32 0.0, %v5290
  %5292 = vmatprep.mubr.f32.mxu0 0.0
  %5293 = vmatmul.mubr.f32.gmra.mrb[0].mxu0 %v5177
  %v5294 = vpop.f32.mrb[0].mxu0
  %v5295 = vadd.f32 0.0, %v5294
  %v5296 = vpop.f32.mrb[0].mxu0
  %v5297 = vadd.f32 0.0, %v5296
  %5298 = vmatprep.mubr.f32.mxu0 0.0
  %5299 = vmatmul.mubr.f32.gmra.mrb[0].mxu0 %v5178
  %v5300 = vpop.f32.mrb[0].mxu0
  %v5301 = vadd.f32 0.0, %v5300
  %v5302 = vpop.f32.mrb[0].mxu0
  %v5303 = vadd.f32 0.0, %v5302
  %5304 = vmatprep.mubr.f32.mxu0 0.0
  %5305 = vmatmul.mubr.f32.gmra.mrb[0].mxu0 %v5179
  %v5306 = vpop.f32.mrb[0].mxu0
  %v5307 = vadd.f32 0.0, %v5306
  %v5308 = vpop.f32.mrb[0].mxu0
  %v5309 = vadd.f32 0.0, %v5308
  %5310 = vmatprep.mubr.f32.mxu0 0.0
  %5311 = vmatmul.mubr.f32.gmra.mrb[0].mxu0 %v5180
  %v5312 = vpop.f32.mrb[0].mxu0
  %v5313 = vadd.f32 0.0, %v5312
  %v5314 = vpop.f32.mrb[0].mxu0
  %v5315 = vadd.f32 0.0, %v5314
  %5316 = vmatprep.mubr.f32.mxu0 0.0
  %5317 = vmatmul.mubr.f32.gmra.mrb[0].mxu0 %v5181
  %v5318 = vpop.f32.mrb[0].mxu0
  %v5319 = vadd.f32 0.0, %v5318
  %v5320 = vpop.f32.mrb[0].mxu0
  %v5321 = vadd.f32 0.0, %v5320
  %5322 = vmatprep.mubr.f32.mxu0 0.0
  %5323 = vmatmul.mubr.f32.gmra.mrb[0].mxu0 %v5182
  %v5324 = vpop.f32.mrb[0].mxu0
  %v5325 = vadd.f32 0.0, %v5324
  %v5326 = vpop.f32.mrb[0].mxu0
  %v5327 = vadd.f32 0.0, %v5326
  %5328 = vmatprep.mubr.f32.mxu0 0.0
  %5329 = vmatmul.mubr.f32.gmra.mrb[0].mxu0 %v5183
  %v5330 = vpop.f32.mrb[0].mxu0
  %v5331 = vadd.f32 0.0, %v5330
  %v5332 = vpop.f32.mrb[0].mxu0
  %v5333 = vadd.f32 0.0, %v5332
  %5334 = vmatprep.mubr.f32.mxu0 0.0
  %5335 = vmatmul.mubr.f32.gmra.mrb[0].mxu0 %v5184
  %v5336 = vpop.f32.mrb[0].mxu0
  %v5337 = vadd.f32 0.0, %v5336
  %v5338 = vpop.f32.mrb[0].mxu0
  %v5339 = vadd.f32 0.0, %v5338
  %5340 = vmatprep.mubr.f32.mxu0 0.0
  %5341 = vmatmul.mubr.f32.gmra.mrb[0].mxu0 %v5185
  %v5342 = vpop.f32.mrb[0].mxu0
  %v5343 = vadd.f32 0.0, %v5342
  %v5344 = vpop.f32.mrb[0].mxu0
  %v5345 = vadd.f32 0.0, %v5344
  %5346 = vdwg.mxu0
  %s5347 = scalar_lea.vmem %s53, 6
  %v5348 = vld [vmem:[%s5347] ss:$8 sm:$0x3]
  %v5350 = vlaneseq
  %v5351 = vshrl.u32 %v5350, 7
  %v5352 = vsub.s32 0, %v5351
  %v5353 = vrot.slane %v5348, %v5352
  %v5354 = vlaneseq
  %v5355 = vshrl.u32 %v5354, 7
  %v5356 = vsub.s32 1, %v5355
  %v5357 = vrot.slane %v5348, %v5356
  %v5360 = vmul.f32 %v5253, %v5353
  %v5361 = vmul.f32 %v5255, %v5357
  %v5362 = vmul.f32 %v5259, %v5353
  %v5363 = vmul.f32 %v5261, %v5357
  %v5364 = vmul.f32 %v5265, %v5353
  %v5365 = vmul.f32 %v5267, %v5357
  %v5366 = vmul.f32 %v5271, %v5353
  %v5367 = vmul.f32 %v5273, %v5357
  %v5368 = vmul.f32 %v5277, %v5353
  %v5369 = vmul.f32 %v5279, %v5357
  %v5370 = vmul.f32 %v5283, %v5353
  %v5371 = vmul.f32 %v5285, %v5357
  %v5372 = vmul.f32 %v5289, %v5353
  %v5373 = vmul.f32 %v5291, %v5357
  %v5374 = vmul.f32 %v5295, %v5353
  %v5375 = vmul.f32 %v5297, %v5357
  %v5376 = vmul.f32 %v5301, %v5353
  %v5377 = vmul.f32 %v5303, %v5357
  %v5378 = vmul.f32 %v5307, %v5353
  %v5379 = vmul.f32 %v5309, %v5357
  %v5380 = vmul.f32 %v5313, %v5353
  %v5381 = vmul.f32 %v5315, %v5357
  %v5382 = vmul.f32 %v5319, %v5353
  %v5383 = vmul.f32 %v5321, %v5357
  %v5384 = vmul.f32 %v5325, %v5353
  %v5385 = vmul.f32 %v5327, %v5357
  %v5386 = vmul.f32 %v5331, %v5353
  %v5387 = vmul.f32 %v5333, %v5357
  %v5388 = vmul.f32 %v5337, %v5353
  %v5389 = vmul.f32 %v5339, %v5357
  %v5390 = vmul.f32 %v5343, %v5353
  %v5391 = vmul.f32 %v5345, %v5357
  %v5392 = vadd.f32 %v5138, %v5360
  %v5393 = vadd.f32 %v5139, %v5361
  %v5394 = vadd.f32 %v5140, %v5362
  %v5395 = vadd.f32 %v5141, %v5363
  %v5396 = vadd.f32 %v5142, %v5364
  %v5397 = vadd.f32 %v5143, %v5365
  %v5398 = vadd.f32 %v5144, %v5366
  %v5399 = vadd.f32 %v5145, %v5367
  %v5400 = vadd.f32 %v5146, %v5368
  %v5401 = vadd.f32 %v5147, %v5369
  %v5402 = vadd.f32 %v5148, %v5370
  %v5403 = vadd.f32 %v5149, %v5371
  %v5404 = vadd.f32 %v5150, %v5372
  %v5405 = vadd.f32 %v5151, %v5373
  %v5406 = vadd.f32 %v5152, %v5374
  %v5407 = vadd.f32 %v5153, %v5375
  %v5408 = vadd.f32 %v5154, %v5376
  %v5409 = vadd.f32 %v5155, %v5377
  %v5410 = vadd.f32 %v5156, %v5378
  %v5411 = vadd.f32 %v5157, %v5379
  %v5412 = vadd.f32 %v5158, %v5380
  %v5413 = vadd.f32 %v5159, %v5381
  %v5414 = vadd.f32 %v5160, %v5382
  %v5415 = vadd.f32 %v5161, %v5383
  %v5416 = vadd.f32 %v5162, %v5384
  %v5417 = vadd.f32 %v5163, %v5385
  %v5418 = vadd.f32 %v5164, %v5386
  %v5419 = vadd.f32 %v5165, %v5387
  %v5420 = vadd.f32 %v5166, %v5388
  %v5421 = vadd.f32 %v5167, %v5389
  %v5422 = vadd.f32 %v5168, %v5390
  %v5423 = vadd.f32 %v5169, %v5391
  %v5424 = vld [vmem:[%s7 + $0x380] sm:$0xff]
  %v5425 = vld [vmem:[%s7 + $0x388] sm:$0xff]
  %v5426 = vld [vmem:[%s7 + $0x390] sm:$0xff]
  %v5427 = vld [vmem:[%s7 + $0x398] sm:$0xff]
  %v5428 = vld [vmem:[%s7 + $0x3a0] sm:$0xff]
  %v5429 = vld [vmem:[%s7 + $0x3a8] sm:$0xff]
  %v5430 = vld [vmem:[%s7 + $0x3b0] sm:$0xff]
  %v5431 = vld [vmem:[%s7 + $0x3b8] sm:$0xff]
  %v5432 = vld [vmem:[%s7 + $0x3c0] sm:$0xff]
  %v5433 = vld [vmem:[%s7 + $0x3c8] sm:$0xff]
  %v5434 = vld [vmem:[%s7 + $0x3d0] sm:$0xff]
  %v5435 = vld [vmem:[%s7 + $0x3d8] sm:$0xff]
  %v5436 = vld [vmem:[%s7 + $0x3e0] sm:$0xff]
  %v5437 = vld [vmem:[%s7 + $0x3e8] sm:$0xff]
  %v5438 = vld [vmem:[%s7 + $0x3f0] sm:$0xff]
  %v5439 = vld [vmem:[%s7 + $0x3f8] sm:$0xff]
  %5440 = vmatprep.subr.mxu0 %v3571
  %5441 = vmatpush1.msra.mxu0 %v3569
  %5442 = vmatprep.subr.mxu0 %v3575
  %5443 = vmatpush1.msra.mxu0 %v3573
  %5444 = vmatprep.subr.mxu0 %v3581
  %5445 = vmatpush1.msra.mxu0 %v3579
  %5446 = vmatprep.subr.mxu0 %v3585
  %5447 = vmatpush1.msra.mxu0 %v3583
  %5448 = vmatprep.subr.mxu0 %v3591
  %5449 = vmatpush1.msra.mxu0 %v3589
  %5450 = vmatprep.subr.mxu0 %v3595
  %5451 = vmatpush1.msra.mxu0 %v3593
  %5452 = vmatprep.subr.mxu0 %v3601
  %5453 = vmatpush1.msra.mxu0 %v3599
  %5454 = vmatprep.subr.mxu0 %v3605
  %5455 = vmatpush1.msra.mxu0 %v3603
  %5456 = vmatprep.subr.mxu0 %v3611
  %5457 = vmatpush1.msra.mxu0 %v3609
  %5458 = vmatprep.subr.mxu0 %v3615
  %5459 = vmatpush1.msra.mxu0 %v3613
  %5460 = vmatprep.subr.mxu0 %v3621
  %5461 = vmatpush1.msra.mxu0 %v3619
  %5462 = vmatprep.subr.mxu0 %v3625
  %5463 = vmatpush1.msra.mxu0 %v3623
  %5464 = vmatprep.subr.mxu0 %v3631
  %5465 = vmatpush1.msra.mxu0 %v3629
  %5466 = vmatprep.subr.mxu0 %v3635
  %5467 = vmatpush1.msra.mxu0 %v3633
  %5468 = vmatprep.subr.mxu0 %v3641
  %5469 = vmatpush1.msra.mxu0 %v3639
  %5470 = vmatprep.subr.mxu0 %v3645
  %5471 = vmatpush1.msra.mxu0 %v3643
  %5472 = vmatprep.subr.mxu0 0.0
  %5473 = vmatpush1.msra.mxu0 0.0
  %5474 = vmatprep.subr.mxu0 0.0
  %5475 = vmatpush1.msra.mxu0 0.0
  %5476 = vmatprep.subr.mxu0 0.0
  %5477 = vmatpush1.msra.mxu0 0.0
  %5478 = vmatprep.subr.mxu0 0.0
  %5479 = vmatpush1.msra.mxu0 0.0
  %5480 = vmatprep.subr.mxu0 0.0
  %5481 = vmatpush1.msra.mxu0 0.0
  %5482 = vmatprep.subr.mxu0 0.0
  %5483 = vmatpush1.msra.mxu0 0.0
  %5484 = vmatprep.subr.mxu0 0.0
  %5485 = vmatpush1.msra.mxu0 0.0
  %5486 = vmatprep.subr.mxu0 0.0
  %5487 = vmatpush1.msra.mxu0 0.0
  %5488 = vmatprep.subr.mxu0 0.0
  %5489 = vmatpush1.msra.mxu0 0.0
  %5490 = vmatprep.subr.mxu0 0.0
  %5491 = vmatpush1.msra.mxu0 0.0
  %5492 = vmatprep.subr.mxu0 0.0
  %5493 = vmatpush1.msra.mxu0 0.0
  %5494 = vmatprep.subr.mxu0 0.0
  %5495 = vmatpush1.msra.mxu0 0.0
  %5496 = vmatprep.subr.mxu0 0.0
  %5497 = vmatpush1.msra.mxu0 0.0
  %5498 = vmatprep.subr.mxu0 0.0
  %5499 = vmatpush1.msra.mxu0 0.0
  %5500 = vmatprep.subr.mxu0 0.0
  %5501 = vmatpush1.msra.mxu0 0.0
  %5502 = vmatprep.subr.mxu0 0.0
  %5503 = vmatpush1.msra.mxu0 0.0
  %5504 = vmatprep.mubr.f32.mxu0 0.0
  %5505 = vmatmul.mubr.f32.gmra.mrb[0].mxu0 %v5424
  %v5506 = vpop.f32.mrb[0].mxu0
  %v5507 = vadd.f32 0.0, %v5506
  %v5508 = vpop.f32.mrb[0].mxu0
  %v5509 = vadd.f32 0.0, %v5508
  %5510 = vmatprep.mubr.f32.mxu0 0.0
  %5511 = vmatmul.mubr.f32.gmra.mrb[0].mxu0 %v5425
  %v5512 = vpop.f32.mrb[0].mxu0
  %v5513 = vadd.f32 0.0, %v5512
  %v5514 = vpop.f32.mrb[0].mxu0
  %v5515 = vadd.f32 0.0, %v5514
  %5516 = vmatprep.mubr.f32.mxu0 0.0
  %5517 = vmatmul.mubr.f32.gmra.mrb[0].mxu0 %v5426
  %v5518 = vpop.f32.mrb[0].mxu0
  %v5519 = vadd.f32 0.0, %v5518
  %v5520 = vpop.f32.mrb[0].mxu0
  %v5521 = vadd.f32 0.0, %v5520
  %5522 = vmatprep.mubr.f32.mxu0 0.0
  %5523 = vmatmul.mubr.f32.gmra.mrb[0].mxu0 %v5427
  %v5524 = vpop.f32.mrb[0].mxu0
  %v5525 = vadd.f32 0.0, %v5524
  %v5526 = vpop.f32.mrb[0].mxu0
  %v5527 = vadd.f32 0.0, %v5526
  %5528 = vmatprep.mubr.f32.mxu0 0.0
  %5529 = vmatmul.mubr.f32.gmra.mrb[0].mxu0 %v5428
  %v5530 = vpop.f32.mrb[0].mxu0
  %v5531 = vadd.f32 0.0, %v5530
  %v5532 = vpop.f32.mrb[0].mxu0
  %v5533 = vadd.f32 0.0, %v5532
  %5534 = vmatprep.mubr.f32.mxu0 0.0
  %5535 = vmatmul.mubr.f32.gmra.mrb[0].mxu0 %v5429
  %v5536 = vpop.f32.mrb[0].mxu0
  %v5537 = vadd.f32 0.0, %v5536
  %v5538 = vpop.f32.mrb[0].mxu0
  %v5539 = vadd.f32 0.0, %v5538
  %5540 = vmatprep.mubr.f32.mxu0 0.0
  %5541 = vmatmul.mubr.f32.gmra.mrb[0].mxu0 %v5430
  %v5542 = vpop.f32.mrb[0].mxu0
  %v5543 = vadd.f32 0.0, %v5542
  %v5544 = vpop.f32.mrb[0].mxu0
  %v5545 = vadd.f32 0.0, %v5544
  %5546 = vmatprep.mubr.f32.mxu0 0.0
  %5547 = vmatmul.mubr.f32.gmra.mrb[0].mxu0 %v5431
  %v5548 = vpop.f32.mrb[0].mxu0
  %v5549 = vadd.f32 0.0, %v5548
  %v5550 = vpop.f32.mrb[0].mxu0
  %v5551 = vadd.f32 0.0, %v5550
  %5552 = vmatprep.mubr.f32.mxu0 0.0
  %5553 = vmatmul.mubr.f32.gmra.mrb[0].mxu0 %v5432
  %v5554 = vpop.f32.mrb[0].mxu0
  %v5555 = vadd.f32 0.0, %v5554
  %v5556 = vpop.f32.mrb[0].mxu0
  %v5557 = vadd.f32 0.0, %v5556
  %5558 = vmatprep.mubr.f32.mxu0 0.0
  %5559 = vmatmul.mubr.f32.gmra.mrb[0].mxu0 %v5433
  %v5560 = vpop.f32.mrb[0].mxu0
  %v5561 = vadd.f32 0.0, %v5560
  %v5562 = vpop.f32.mrb[0].mxu0
  %v5563 = vadd.f32 0.0, %v5562
  %5564 = vmatprep.mubr.f32.mxu0 0.0
  %5565 = vmatmul.mubr.f32.gmra.mrb[0].mxu0 %v5434
  %v5566 = vpop.f32.mrb[0].mxu0
  %v5567 = vadd.f32 0.0, %v5566
  %v5568 = vpop.f32.mrb[0].mxu0
  %v5569 = vadd.f32 0.0, %v5568
  %5570 = vmatprep.mubr.f32.mxu0 0.0
  %5571 = vmatmul.mubr.f32.gmra.mrb[0].mxu0 %v5435
  %v5572 = vpop.f32.mrb[0].mxu0
  %v5573 = vadd.f32 0.0, %v5572
  %v5574 = vpop.f32.mrb[0].mxu0
  %v5575 = vadd.f32 0.0, %v5574
  %5576 = vmatprep.mubr.f32.mxu0 0.0
  %5577 = vmatmul.mubr.f32.gmra.mrb[0].mxu0 %v5436
  %v5578 = vpop.f32.mrb[0].mxu0
  %v5579 = vadd.f32 0.0, %v5578
  %v5580 = vpop.f32.mrb[0].mxu0
  %v5581 = vadd.f32 0.0, %v5580
  %5582 = vmatprep.mubr.f32.mxu0 0.0
  %5583 = vmatmul.mubr.f32.gmra.mrb[0].mxu0 %v5437
  %v5584 = vpop.f32.mrb[0].mxu0
  %v5585 = vadd.f32 0.0, %v5584
  %v5586 = vpop.f32.mrb[0].mxu0
  %v5587 = vadd.f32 0.0, %v5586
  %5588 = vmatprep.mubr.f32.mxu0 0.0
  %5589 = vmatmul.mubr.f32.gmra.mrb[0].mxu0 %v5438
  %v5590 = vpop.f32.mrb[0].mxu0
  %v5591 = vadd.f32 0.0, %v5590
  %v5592 = vpop.f32.mrb[0].mxu0
  %v5593 = vadd.f32 0.0, %v5592
  %5594 = vmatprep.mubr.f32.mxu0 0.0
  %5595 = vmatmul.mubr.f32.gmra.mrb[0].mxu0 %v5439
  %v5596 = vpop.f32.mrb[0].mxu0
  %v5597 = vadd.f32 0.0, %v5596
  %v5598 = vpop.f32.mrb[0].mxu0
  %v5599 = vadd.f32 0.0, %v5598
  %5600 = vdwg.mxu0
  %s5601 = scalar_lea.vmem %s53, 7
  %v5602 = vld [vmem:[%s5601] ss:$8 sm:$0x3]
  %v5604 = vlaneseq
  %v5605 = vshrl.u32 %v5604, 7
  %v5606 = vsub.s32 0, %v5605
  %v5607 = vrot.slane %v5602, %v5606
  %v5608 = vlaneseq
  %v5609 = vshrl.u32 %v5608, 7
  %v5610 = vsub.s32 1, %v5609
  %v5611 = vrot.slane %v5602, %v5610
  %v5614 = vmul.f32 %v5507, %v5607
  %v5615 = vmul.f32 %v5509, %v5611
  %v5616 = vmul.f32 %v5513, %v5607
  %v5617 = vmul.f32 %v5515, %v5611
  %v5618 = vmul.f32 %v5519, %v5607
  %v5619 = vmul.f32 %v5521, %v5611
  %v5620 = vmul.f32 %v5525, %v5607
  %v5621 = vmul.f32 %v5527, %v5611
  %v5622 = vmul.f32 %v5531, %v5607
  %v5623 = vmul.f32 %v5533, %v5611
  %v5624 = vmul.f32 %v5537, %v5607
  %v5625 = vmul.f32 %v5539, %v5611
  %v5626 = vmul.f32 %v5543, %v5607
  %v5627 = vmul.f32 %v5545, %v5611
  %v5628 = vmul.f32 %v5549, %v5607
  %v5629 = vmul.f32 %v5551, %v5611
  %v5630 = vmul.f32 %v5555, %v5607
  %v5631 = vmul.f32 %v5557, %v5611
  %v5632 = vmul.f32 %v5561, %v5607
  %v5633 = vmul.f32 %v5563, %v5611
  %v5634 = vmul.f32 %v5567, %v5607
  %v5635 = vmul.f32 %v5569, %v5611
  %v5636 = vmul.f32 %v5573, %v5607
  %v5637 = vmul.f32 %v5575, %v5611
  %v5638 = vmul.f32 %v5579, %v5607
  %v5639 = vmul.f32 %v5581, %v5611
  %v5640 = vmul.f32 %v5585, %v5607
  %v5641 = vmul.f32 %v5587, %v5611
  %v5642 = vmul.f32 %v5591, %v5607
  %v5643 = vmul.f32 %v5593, %v5611
  %v5644 = vmul.f32 %v5597, %v5607
  %v5645 = vmul.f32 %v5599, %v5611
  %v5646 = vadd.f32 %v5392, %v5614
  %v5647 = vadd.f32 %v5393, %v5615
  %v5648 = vadd.f32 %v5394, %v5616
  %v5649 = vadd.f32 %v5395, %v5617
  %v5650 = vadd.f32 %v5396, %v5618
  %v5651 = vadd.f32 %v5397, %v5619
  %v5652 = vadd.f32 %v5398, %v5620
  %v5653 = vadd.f32 %v5399, %v5621
  %v5654 = vadd.f32 %v5400, %v5622
  %v5655 = vadd.f32 %v5401, %v5623
  %v5656 = vadd.f32 %v5402, %v5624
  %v5657 = vadd.f32 %v5403, %v5625
  %v5658 = vadd.f32 %v5404, %v5626
  %v5659 = vadd.f32 %v5405, %v5627
  %v5660 = vadd.f32 %v5406, %v5628
  %v5661 = vadd.f32 %v5407, %v5629
  %v5662 = vadd.f32 %v5408, %v5630
  %v5663 = vadd.f32 %v5409, %v5631
  %v5664 = vadd.f32 %v5410, %v5632
  %v5665 = vadd.f32 %v5411, %v5633
  %v5666 = vadd.f32 %v5412, %v5634
  %v5667 = vadd.f32 %v5413, %v5635
  %v5668 = vadd.f32 %v5414, %v5636
  %v5669 = vadd.f32 %v5415, %v5637
  %v5670 = vadd.f32 %v5416, %v5638
  %v5671 = vadd.f32 %v5417, %v5639
  %v5672 = vadd.f32 %v5418, %v5640
  %v5673 = vadd.f32 %v5419, %v5641
  %v5674 = vadd.f32 %v5420, %v5642
  %v5675 = vadd.f32 %v5421, %v5643
  %v5676 = vadd.f32 %v5422, %v5644
  %v5677 = vadd.f32 %v5423, %v5645
  %v5678 = vld [vmem:[%s7 + $0x400] sm:$0xff]
  %v5679 = vld [vmem:[%s7 + $0x408] sm:$0xff]
  %v5680 = vld [vmem:[%s7 + $0x410] sm:$0xff]
  %v5681 = vld [vmem:[%s7 + $0x418] sm:$0xff]
  %v5682 = vld [vmem:[%s7 + $0x420] sm:$0xff]
  %v5683 = vld [vmem:[%s7 + $0x428] sm:$0xff]
  %v5684 = vld [vmem:[%s7 + $0x430] sm:$0xff]
  %v5685 = vld [vmem:[%s7 + $0x438] sm:$0xff]
  %v5686 = vld [vmem:[%s7 + $0x440] sm:$0xff]
  %v5687 = vld [vmem:[%s7 + $0x448] sm:$0xff]
  %v5688 = vld [vmem:[%s7 + $0x450] sm:$0xff]
  %v5689 = vld [vmem:[%s7 + $0x458] sm:$0xff]
  %v5690 = vld [vmem:[%s7 + $0x460] sm:$0xff]
  %v5691 = vld [vmem:[%s7 + $0x468] sm:$0xff]
  %v5692 = vld [vmem:[%s7 + $0x470] sm:$0xff]
  %v5693 = vld [vmem:[%s7 + $0x478] sm:$0xff]
  %5694 = vmatprep.subr.mxu0 %v3571
  %5695 = vmatpush1.msra.mxu0 %v3569
  %5696 = vmatprep.subr.mxu0 %v3575
  %5697 = vmatpush1.msra.mxu0 %v3573
  %5698 = vmatprep.subr.mxu0 %v3581
  %5699 = vmatpush1.msra.mxu0 %v3579
  %5700 = vmatprep.subr.mxu0 %v3585
  %5701 = vmatpush1.msra.mxu0 %v3583
  %5702 = vmatprep.subr.mxu0 %v3591
  %5703 = vmatpush1.msra.mxu0 %v3589
  %5704 = vmatprep.subr.mxu0 %v3595
  %5705 = vmatpush1.msra.mxu0 %v3593
  %5706 = vmatprep.subr.mxu0 %v3601
  %5707 = vmatpush1.msra.mxu0 %v3599
  %5708 = vmatprep.subr.mxu0 %v3605
  %5709 = vmatpush1.msra.mxu0 %v3603
  %5710 = vmatprep.subr.mxu0 %v3611
  %5711 = vmatpush1.msra.mxu0 %v3609
  %5712 = vmatprep.subr.mxu0 %v3615
  %5713 = vmatpush1.msra.mxu0 %v3613
  %5714 = vmatprep.subr.mxu0 %v3621
  %5715 = vmatpush1.msra.mxu0 %v3619
  %5716 = vmatprep.subr.mxu0 %v3625
  %5717 = vmatpush1.msra.mxu0 %v3623
  %5718 = vmatprep.subr.mxu0 %v3631
  %5719 = vmatpush1.msra.mxu0 %v3629
  %5720 = vmatprep.subr.mxu0 %v3635
  %5721 = vmatpush1.msra.mxu0 %v3633
  %5722 = vmatprep.subr.mxu0 %v3641
  %5723 = vmatpush1.msra.mxu0 %v3639
  %5724 = vmatprep.subr.mxu0 %v3645
  %5725 = vmatpush1.msra.mxu0 %v3643
  %5726 = vmatprep.subr.mxu0 0.0
  %5727 = vmatpush1.msra.mxu0 0.0
  %5728 = vmatprep.subr.mxu0 0.0
  %5729 = vmatpush1.msra.mxu0 0.0
  %5730 = vmatprep.subr.mxu0 0.0
  %5731 = vmatpush1.msra.mxu0 0.0
  %5732 = vmatprep.subr.mxu0 0.0
  %5733 = vmatpush1.msra.mxu0 0.0
  %5734 = vmatprep.subr.mxu0 0.0
  %5735 = vmatpush1.msra.mxu0 0.0
  %5736 = vmatprep.subr.mxu0 0.0
  %5737 = vmatpush1.msra.mxu0 0.0
  %5738 = vmatprep.subr.mxu0 0.0
  %5739 = vmatpush1.msra.mxu0 0.0
  %5740 = vmatprep.subr.mxu0 0.0
  %5741 = vmatpush1.msra.mxu0 0.0
  %5742 = vmatprep.subr.mxu0 0.0
  %5743 = vmatpush1.msra.mxu0 0.0
  %5744 = vmatprep.subr.mxu0 0.0
  %5745 = vmatpush1.msra.mxu0 0.0
  %5746 = vmatprep.subr.mxu0 0.0
  %5747 = vmatpush1.msra.mxu0 0.0
  %5748 = vmatprep.subr.mxu0 0.0
  %5749 = vmatpush1.msra.mxu0 0.0
  %5750 = vmatprep.subr.mxu0 0.0
  %5751 = vmatpush1.msra.mxu0 0.0
  %5752 = vmatprep.subr.mxu0 0.0
  %5753 = vmatpush1.msra.mxu0 0.0
  %5754 = vmatprep.subr.mxu0 0.0
  %5755 = vmatpush1.msra.mxu0 0.0
  %5756 = vmatprep.subr.mxu0 0.0
  %5757 = vmatpush1.msra.mxu0 0.0
  %5758 = vmatprep.mubr.f32.mxu0 0.0
  %5759 = vmatmul.mubr.f32.gmra.mrb[0].mxu0 %v5678
  %v5760 = vpop.f32.mrb[0].mxu0
  %v5761 = vadd.f32 0.0, %v5760
  %v5762 = vpop.f32.mrb[0].mxu0
  %v5763 = vadd.f32 0.0, %v5762
  %5764 = vmatprep.mubr.f32.mxu0 0.0
  %5765 = vmatmul.mubr.f32.gmra.mrb[0].mxu0 %v5679
  %v5766 = vpop.f32.mrb[0].mxu0
  %v5767 = vadd.f32 0.0, %v5766
  %v5768 = vpop.f32.mrb[0].mxu0
  %v5769 = vadd.f32 0.0, %v5768
  %5770 = vmatprep.mubr.f32.mxu0 0.0
  %5771 = vmatmul.mubr.f32.gmra.mrb[0].mxu0 %v5680
  %v5772 = vpop.f32.mrb[0].mxu0
  %v5773 = vadd.f32 0.0, %v5772
  %v5774 = vpop.f32.mrb[0].mxu0
  %v5775 = vadd.f32 0.0, %v5774
  %5776 = vmatprep.mubr.f32.mxu0 0.0
  %5777 = vmatmul.mubr.f32.gmra.mrb[0].mxu0 %v5681
  %v5778 = vpop.f32.mrb[0].mxu0
  %v5779 = vadd.f32 0.0, %v5778
  %v5780 = vpop.f32.mrb[0].mxu0
  %v5781 = vadd.f32 0.0, %v5780
  %5782 = vmatprep.mubr.f32.mxu0 0.0
  %5783 = vmatmul.mubr.f32.gmra.mrb[0].mxu0 %v5682
  %v5784 = vpop.f32.mrb[0].mxu0
  %v5785 = vadd.f32 0.0, %v5784
  %v5786 = vpop.f32.mrb[0].mxu0
  %v5787 = vadd.f32 0.0, %v5786
  %5788 = vmatprep.mubr.f32.mxu0 0.0
  %5789 = vmatmul.mubr.f32.gmra.mrb[0].mxu0 %v5683
  %v5790 = vpop.f32.mrb[0].mxu0
  %v5791 = vadd.f32 0.0, %v5790
  %v5792 = vpop.f32.mrb[0].mxu0
  %v5793 = vadd.f32 0.0, %v5792
  %5794 = vmatprep.mubr.f32.mxu0 0.0
  %5795 = vmatmul.mubr.f32.gmra.mrb[0].mxu0 %v5684
  %v5796 = vpop.f32.mrb[0].mxu0
  %v5797 = vadd.f32 0.0, %v5796
  %v5798 = vpop.f32.mrb[0].mxu0
  %v5799 = vadd.f32 0.0, %v5798
  %5800 = vmatprep.mubr.f32.mxu0 0.0
  %5801 = vmatmul.mubr.f32.gmra.mrb[0].mxu0 %v5685
  %v5802 = vpop.f32.mrb[0].mxu0
  %v5803 = vadd.f32 0.0, %v5802
  %v5804 = vpop.f32.mrb[0].mxu0
  %v5805 = vadd.f32 0.0, %v5804
  %5806 = vmatprep.mubr.f32.mxu0 0.0
  %5807 = vmatmul.mubr.f32.gmra.mrb[0].mxu0 %v5686
  %v5808 = vpop.f32.mrb[0].mxu0
  %v5809 = vadd.f32 0.0, %v5808
  %v5810 = vpop.f32.mrb[0].mxu0
  %v5811 = vadd.f32 0.0, %v5810
  %5812 = vmatprep.mubr.f32.mxu0 0.0
  %5813 = vmatmul.mubr.f32.gmra.mrb[0].mxu0 %v5687
  %v5814 = vpop.f32.mrb[0].mxu0
  %v5815 = vadd.f32 0.0, %v5814
  %v5816 = vpop.f32.mrb[0].mxu0
  %v5817 = vadd.f32 0.0, %v5816
  %5818 = vmatprep.mubr.f32.mxu0 0.0
  %5819 = vmatmul.mubr.f32.gmra.mrb[0].mxu0 %v5688
  %v5820 = vpop.f32.mrb[0].mxu0
  %v5821 = vadd.f32 0.0, %v5820
  %v5822 = vpop.f32.mrb[0].mxu0
  %v5823 = vadd.f32 0.0, %v5822
  %5824 = vmatprep.mubr.f32.mxu0 0.0
  %5825 = vmatmul.mubr.f32.gmra.mrb[0].mxu0 %v5689
  %v5826 = vpop.f32.mrb[0].mxu0
  %v5827 = vadd.f32 0.0, %v5826
  %v5828 = vpop.f32.mrb[0].mxu0
  %v5829 = vadd.f32 0.0, %v5828
  %5830 = vmatprep.mubr.f32.mxu0 0.0
  %5831 = vmatmul.mubr.f32.gmra.mrb[0].mxu0 %v5690
  %v5832 = vpop.f32.mrb[0].mxu0
  %v5833 = vadd.f32 0.0, %v5832
  %v5834 = vpop.f32.mrb[0].mxu0
  %v5835 = vadd.f32 0.0, %v5834
  %5836 = vmatprep.mubr.f32.mxu0 0.0
  %5837 = vmatmul.mubr.f32.gmra.mrb[0].mxu0 %v5691
  %v5838 = vpop.f32.mrb[0].mxu0
  %v5839 = vadd.f32 0.0, %v5838
  %v5840 = vpop.f32.mrb[0].mxu0
  %v5841 = vadd.f32 0.0, %v5840
  %5842 = vmatprep.mubr.f32.mxu0 0.0
  %5843 = vmatmul.mubr.f32.gmra.mrb[0].mxu0 %v5692
  %v5844 = vpop.f32.mrb[0].mxu0
  %v5845 = vadd.f32 0.0, %v5844
  %v5846 = vpop.f32.mrb[0].mxu0
  %v5847 = vadd.f32 0.0, %v5846
  %5848 = vmatprep.mubr.f32.mxu0 0.0
  %5849 = vmatmul.mubr.f32.gmra.mrb[0].mxu0 %v5693
  %v5850 = vpop.f32.mrb[0].mxu0
  %v5851 = vadd.f32 0.0, %v5850
  %v5852 = vpop.f32.mrb[0].mxu0
  %v5853 = vadd.f32 0.0, %v5852
  %5854 = vdwg.mxu0
  %s5855 = scalar_lea.vmem %s53, 16
  %v5856 = vld [vmem:[%s5855] ss:$8 sm:$0x3]
  %v5858 = vlaneseq
  %v5859 = vshrl.u32 %v5858, 7
  %v5860 = vsub.s32 0, %v5859
  %v5861 = vrot.slane %v5856, %v5860
  %v5862 = vlaneseq
  %v5863 = vshrl.u32 %v5862, 7
  %v5864 = vsub.s32 1, %v5863
  %v5865 = vrot.slane %v5856, %v5864
  %v5868 = vmul.f32 %v5761, %v5861
  %v5869 = vmul.f32 %v5763, %v5865
  %v5870 = vmul.f32 %v5767, %v5861
  %v5871 = vmul.f32 %v5769, %v5865
  %v5872 = vmul.f32 %v5773, %v5861
  %v5873 = vmul.f32 %v5775, %v5865
  %v5874 = vmul.f32 %v5779, %v5861
  %v5875 = vmul.f32 %v5781, %v5865
  %v5876 = vmul.f32 %v5785, %v5861
  %v5877 = vmul.f32 %v5787, %v5865
  %v5878 = vmul.f32 %v5791, %v5861
  %v5879 = vmul.f32 %v5793, %v5865
  %v5880 = vmul.f32 %v5797, %v5861
  %v5881 = vmul.f32 %v5799, %v5865
  %v5882 = vmul.f32 %v5803, %v5861
  %v5883 = vmul.f32 %v5805, %v5865
  %v5884 = vmul.f32 %v5809, %v5861
  %v5885 = vmul.f32 %v5811, %v5865
  %v5886 = vmul.f32 %v5815, %v5861
  %v5887 = vmul.f32 %v5817, %v5865
  %v5888 = vmul.f32 %v5821, %v5861
  %v5889 = vmul.f32 %v5823, %v5865
  %v5890 = vmul.f32 %v5827, %v5861
  %v5891 = vmul.f32 %v5829, %v5865
  %v5892 = vmul.f32 %v5833, %v5861
  %v5893 = vmul.f32 %v5835, %v5865
  %v5894 = vmul.f32 %v5839, %v5861
  %v5895 = vmul.f32 %v5841, %v5865
  %v5896 = vmul.f32 %v5845, %v5861
  %v5897 = vmul.f32 %v5847, %v5865
  %v5898 = vmul.f32 %v5851, %v5861
  %v5899 = vmul.f32 %v5853, %v5865
  %v5900 = vadd.f32 %v5646, %v5868
  %v5901 = vadd.f32 %v5647, %v5869
  %v5902 = vadd.f32 %v5648, %v5870
  %v5903 = vadd.f32 %v5649, %v5871
  %v5904 = vadd.f32 %v5650, %v5872
  %v5905 = vadd.f32 %v5651, %v5873
  %v5906 = vadd.f32 %v5652, %v5874
  %v5907 = vadd.f32 %v5653, %v5875
  %v5908 = vadd.f32 %v5654, %v5876
  %v5909 = vadd.f32 %v5655, %v5877
  %v5910 = vadd.f32 %v5656, %v5878
  %v5911 = vadd.f32 %v5657, %v5879
  %v5912 = vadd.f32 %v5658, %v5880
  %v5913 = vadd.f32 %v5659, %v5881
  %v5914 = vadd.f32 %v5660, %v5882
  %v5915 = vadd.f32 %v5661, %v5883
  %v5916 = vadd.f32 %v5662, %v5884
  %v5917 = vadd.f32 %v5663, %v5885
  %v5918 = vadd.f32 %v5664, %v5886
  %v5919 = vadd.f32 %v5665, %v5887
  %v5920 = vadd.f32 %v5666, %v5888
  %v5921 = vadd.f32 %v5667, %v5889
  %v5922 = vadd.f32 %v5668, %v5890
  %v5923 = vadd.f32 %v5669, %v5891
  %v5924 = vadd.f32 %v5670, %v5892
  %v5925 = vadd.f32 %v5671, %v5893
  %v5926 = vadd.f32 %v5672, %v5894
  %v5927 = vadd.f32 %v5673, %v5895
  %v5928 = vadd.f32 %v5674, %v5896
  %v5929 = vadd.f32 %v5675, %v5897
  %v5930 = vadd.f32 %v5676, %v5898
  %v5931 = vadd.f32 %v5677, %v5899
  %v5932 = vld [vmem:[%s55] ss:$2 sm:$0x3]
  %v5934 = vlaneseq
  %v5935 = vshrl.u32 %v5934, 7
  %v5936 = vsub.s32 0, %v5935
  %v5937 = vrot.slane %v5932, %v5936
  %v5938 = vlaneseq
  %v5939 = vshrl.u32 %v5938, 7
  %v5940 = vsub.s32 1, %v5939
  %v5941 = vrot.slane %v5932, %v5940
  %v5944 = vadd.f32 %v5900, %v5937
  %v5945 = vadd.f32 %v5901, %v5941
  %v5946 = vadd.f32 %v5902, %v5937
  %v5947 = vadd.f32 %v5903, %v5941
  %v5948 = vadd.f32 %v5904, %v5937
  %v5949 = vadd.f32 %v5905, %v5941
  %v5950 = vadd.f32 %v5906, %v5937
  %v5951 = vadd.f32 %v5907, %v5941
  %v5952 = vadd.f32 %v5908, %v5937
  %v5953 = vadd.f32 %v5909, %v5941
  %v5954 = vadd.f32 %v5910, %v5937
  %v5955 = vadd.f32 %v5911, %v5941
  %v5956 = vadd.f32 %v5912, %v5937
  %v5957 = vadd.f32 %v5913, %v5941
  %v5958 = vadd.f32 %v5914, %v5937
  %v5959 = vadd.f32 %v5915, %v5941
  %v5960 = vadd.f32 %v5916, %v5937
  %v5961 = vadd.f32 %v5917, %v5941
  %v5962 = vadd.f32 %v5918, %v5937
  %v5963 = vadd.f32 %v5919, %v5941
  %v5964 = vadd.f32 %v5920, %v5937
  %v5965 = vadd.f32 %v5921, %v5941
  %v5966 = vadd.f32 %v5922, %v5937
  %v5967 = vadd.f32 %v5923, %v5941
  %v5968 = vadd.f32 %v5924, %v5937
  %v5969 = vadd.f32 %v5925, %v5941
  %v5970 = vadd.f32 %v5926, %v5937
  %v5971 = vadd.f32 %v5927, %v5941
  %v5972 = vadd.f32 %v5928, %v5937
  %v5973 = vadd.f32 %v5929, %v5941
  %v5974 = vadd.f32 %v5930, %v5937
  %v5975 = vadd.f32 %v5931, %v5941
  %v5976 = vmul.f32 %v5944, 0.5
  %v5977 = vmul.f32 %v5945, 0.5
  %v5978 = vmul.f32 %v5946, 0.5
  %v5979 = vmul.f32 %v5947, 0.5
  %v5980 = vmul.f32 %v5948, 0.5
  %v5981 = vmul.f32 %v5949, 0.5
  %v5982 = vmul.f32 %v5950, 0.5
  %v5983 = vmul.f32 %v5951, 0.5
  %v5984 = vmul.f32 %v5952, 0.5
  %v5985 = vmul.f32 %v5953, 0.5
  %v5986 = vmul.f32 %v5954, 0.5
  %v5987 = vmul.f32 %v5955, 0.5
  %v5988 = vmul.f32 %v5956, 0.5
  %v5989 = vmul.f32 %v5957, 0.5
  %v5990 = vmul.f32 %v5958, 0.5
  %v5991 = vmul.f32 %v5959, 0.5
  %v5992 = vmul.f32 %v5960, 0.5
  %v5993 = vmul.f32 %v5961, 0.5
  %v5994 = vmul.f32 %v5962, 0.5
  %v5995 = vmul.f32 %v5963, 0.5
  %v5996 = vmul.f32 %v5964, 0.5
  %v5997 = vmul.f32 %v5965, 0.5
  %v5998 = vmul.f32 %v5966, 0.5
  %v5999 = vmul.f32 %v5967, 0.5
  %v6000 = vmul.f32 %v5968, 0.5
  %v6001 = vmul.f32 %v5969, 0.5
  %v6002 = vmul.f32 %v5970, 0.5
  %v6003 = vmul.f32 %v5971, 0.5
  %v6004 = vmul.f32 %v5972, 0.5
  %v6005 = vmul.f32 %v5973, 0.5
  %v6006 = vmul.f32 %v5974, 0.5
  %v6007 = vmul.f32 %v5975, 0.5
  %v6008 = vmul.f32 %v5944, 0.70710677
  %v6009 = vmul.f32 %v5945, 0.70710677
  %v6010 = vmul.f32 %v5946, 0.70710677
  %v6011 = vmul.f32 %v5947, 0.70710677
  %v6012 = vmul.f32 %v5948, 0.70710677
  %v6013 = vmul.f32 %v5949, 0.70710677
  %v6014 = vmul.f32 %v5950, 0.70710677
  %v6015 = vmul.f32 %v5951, 0.70710677
  %v6016 = vmul.f32 %v5952, 0.70710677
  %v6017 = vmul.f32 %v5953, 0.70710677
  %v6018 = vmul.f32 %v5954, 0.70710677
  %v6019 = vmul.f32 %v5955, 0.70710677
  %v6020 = vmul.f32 %v5956, 0.70710677
  %v6021 = vmul.f32 %v5957, 0.70710677
  %v6022 = vmul.f32 %v5958, 0.70710677
  %v6023 = vmul.f32 %v5959, 0.70710677
  %v6024 = vmul.f32 %v5960, 0.70710677
  %v6025 = vmul.f32 %v5961, 0.70710677
  %v6026 = vmul.f32 %v5962, 0.70710677
  %v6027 = vmul.f32 %v5963, 0.70710677
  %v6028 = vmul.f32 %v5964, 0.70710677
  %v6029 = vmul.f32 %v5965, 0.70710677
  %v6030 = vmul.f32 %v5966, 0.70710677
  %v6031 = vmul.f32 %v5967, 0.70710677
  %v6032 = vmul.f32 %v5968, 0.70710677
  %v6033 = vmul.f32 %v5969, 0.70710677
  %v6034 = vmul.f32 %v5970, 0.70710677
  %v6035 = vmul.f32 %v5971, 0.70710677
  %v6036 = vmul.f32 %v5972, 0.70710677
  %v6037 = vmul.f32 %v5973, 0.70710677
  %v6038 = vmul.f32 %v5974, 0.70710677
  %v6039 = vmul.f32 %v5975, 0.70710677
  %v6040 = verf.f32.pop %v6008
  %v6041 = verf.f32.pop %v6009
  %v6042 = verf.f32.pop %v6010
  %v6043 = verf.f32.pop %v6011
  %v6044 = verf.f32.pop %v6012
  %v6045 = verf.f32.pop %v6013
  %v6046 = verf.f32.pop %v6014
  %v6047 = verf.f32.pop %v6015
  %v6048 = verf.f32.pop %v6016
  %v6049 = verf.f32.pop %v6017
  %v6050 = verf.f32.pop %v6018
  %v6051 = verf.f32.pop %v6019
  %v6052 = verf.f32.pop %v6020
  %v6053 = verf.f32.pop %v6021
  %v6054 = verf.f32.pop %v6022
  %v6055 = verf.f32.pop %v6023
  %v6056 = verf.f32.pop %v6024
  %v6057 = verf.f32.pop %v6025
  %v6058 = verf.f32.pop %v6026
  %v6059 = verf.f32.pop %v6027
  %v6060 = verf.f32.pop %v6028
  %v6061 = verf.f32.pop %v6029
  %v6062 = verf.f32.pop %v6030
  %v6063 = verf.f32.pop %v6031
  %v6064 = verf.f32.pop %v6032
  %v6065 = verf.f32.pop %v6033
  %v6066 = verf.f32.pop %v6034
  %v6067 = verf.f32.pop %v6035
  %v6068 = verf.f32.pop %v6036
  %v6069 = verf.f32.pop %v6037
  %v6070 = verf.f32.pop %v6038
  %v6071 = verf.f32.pop %v6039
  %v6072 = vadd.f32 %v6040, 1.0
  %v6073 = vadd.f32 %v6041, 1.0
  %v6074 = vadd.f32 %v6042, 1.0
  %v6075 = vadd.f32 %v6043, 1.0
  %v6076 = vadd.f32 %v6044, 1.0
  %v6077 = vadd.f32 %v6045, 1.0
  %v6078 = vadd.f32 %v6046, 1.0
  %v6079 = vadd.f32 %v6047, 1.0
  %v6080 = vadd.f32 %v6048, 1.0
  %v6081 = vadd.f32 %v6049, 1.0
  %v6082 = vadd.f32 %v6050, 1.0
  %v6083 = vadd.f32 %v6051, 1.0
  %v6084 = vadd.f32 %v6052, 1.0
  %v6085 = vadd.f32 %v6053, 1.0
  %v6086 = vadd.f32 %v6054, 1.0
  %v6087 = vadd.f32 %v6055, 1.0
  %v6088 = vadd.f32 %v6056, 1.0
  %v6089 = vadd.f32 %v6057, 1.0
  %v6090 = vadd.f32 %v6058, 1.0
  %v6091 = vadd.f32 %v6059, 1.0
  %v6092 = vadd.f32 %v6060, 1.0
  %v6093 = vadd.f32 %v6061, 1.0
  %v6094 = vadd.f32 %v6062, 1.0
  %v6095 = vadd.f32 %v6063, 1.0
  %v6096 = vadd.f32 %v6064, 1.0
  %v6097 = vadd.f32 %v6065, 1.0
  %v6098 = vadd.f32 %v6066, 1.0
  %v6099 = vadd.f32 %v6067, 1.0
  %v6100 = vadd.f32 %v6068, 1.0
  %v6101 = vadd.f32 %v6069, 1.0
  %v6102 = vadd.f32 %v6070, 1.0
  %v6103 = vadd.f32 %v6071, 1.0
  %v6104 = vmul.f32 %v5976, %v6072
  %v6105 = vmul.f32 %v5977, %v6073
  %v6106 = vmul.f32 %v5978, %v6074
  %v6107 = vmul.f32 %v5979, %v6075
  %v6108 = vmul.f32 %v5980, %v6076
  %v6109 = vmul.f32 %v5981, %v6077
  %v6110 = vmul.f32 %v5982, %v6078
  %v6111 = vmul.f32 %v5983, %v6079
  %v6112 = vmul.f32 %v5984, %v6080
  %v6113 = vmul.f32 %v5985, %v6081
  %v6114 = vmul.f32 %v5986, %v6082
  %v6115 = vmul.f32 %v5987, %v6083
  %v6116 = vmul.f32 %v5988, %v6084
  %v6117 = vmul.f32 %v5989, %v6085
  %v6118 = vmul.f32 %v5990, %v6086
  %v6119 = vmul.f32 %v5991, %v6087
  %v6120 = vmul.f32 %v5992, %v6088
  %v6121 = vmul.f32 %v5993, %v6089
  %v6122 = vmul.f32 %v5994, %v6090
  %v6123 = vmul.f32 %v5995, %v6091
  %v6124 = vmul.f32 %v5996, %v6092
  %v6125 = vmul.f32 %v5997, %v6093
  %v6126 = vmul.f32 %v5998, %v6094
  %v6127 = vmul.f32 %v5999, %v6095
  %v6128 = vmul.f32 %v6000, %v6096
  %v6129 = vmul.f32 %v6001, %v6097
  %v6130 = vmul.f32 %v6002, %v6098
  %v6131 = vmul.f32 %v6003, %v6099
  %v6132 = vmul.f32 %v6004, %v6100
  %v6133 = vmul.f32 %v6005, %v6101
  %v6134 = vmul.f32 %v6006, %v6102
  %v6135 = vmul.f32 %v6007, %v6103
  %v6136 = vld [vmem:[%s57] sm:$0xf]
  %v6137 = vld [vmem:[%s57 + $0x4] sm:$0xf]
  %v6138 = vld [vmem:[%s57 + $0x8] sm:$0xf]
  %v6139 = vld [vmem:[%s57 + $0xc] sm:$0xf]
  %v6140 = vld [vmem:[%s57 + $0x10] sm:$0xf]
  %v6141 = vld [vmem:[%s57 + $0x14] sm:$0xf]
  %v6142 = vld [vmem:[%s57 + $0x18] sm:$0xf]
  %v6143 = vld [vmem:[%s57 + $0x1c] sm:$0xf]
  %v6144 = vld [vmem:[%s57 + $0x20] sm:$0xf]
  %v6145 = vld [vmem:[%s57 + $0x24] sm:$0xf]
  %v6146 = vld [vmem:[%s57 + $0x28] sm:$0xf]
  %v6147 = vld [vmem:[%s57 + $0x2c] sm:$0xf]
  %v6148 = vld [vmem:[%s57 + $0x30] sm:$0xf]
  %v6149 = vld [vmem:[%s57 + $0x34] sm:$0xf]
  %v6150 = vld [vmem:[%s57 + $0x38] sm:$0xf]
  %v6151 = vld [vmem:[%s57 + $0x3c] sm:$0xf]
  %v6152 = vld [vmem:[%s57 + $0x40] sm:$0xf]
  %v6153 = vld [vmem:[%s57 + $0x44] sm:$0xf]
  %v6154 = vld [vmem:[%s57 + $0x48] sm:$0xf]
  %v6155 = vld [vmem:[%s57 + $0x4c] sm:$0xf]
  %v6156 = vld [vmem:[%s57 + $0x50] sm:$0xf]
  %v6157 = vld [vmem:[%s57 + $0x54] sm:$0xf]
  %v6158 = vld [vmem:[%s57 + $0x58] sm:$0xf]
  %v6159 = vld [vmem:[%s57 + $0x5c] sm:$0xf]
  %v6160 = vld [vmem:[%s57 + $0x60] sm:$0xf]
  %v6161 = vld [vmem:[%s57 + $0x64] sm:$0xf]
  %v6162 = vld [vmem:[%s57 + $0x68] sm:$0xf]
  %v6163 = vld [vmem:[%s57 + $0x6c] sm:$0xf]
  %v6164 = vld [vmem:[%s57 + $0x70] sm:$0xf]
  %v6165 = vld [vmem:[%s57 + $0x74] sm:$0xf]
  %v6166 = vld [vmem:[%s57 + $0x78] sm:$0xf]
  %v6167 = vld [vmem:[%s57 + $0x7c] sm:$0xf]
  %v6168 = vpack.c.bf16 %v6106, %v6104
  %v6169 = vpack.c.bf16 %v6107, %v6105
  %v6170 = vpack.c.bf16 %v6110, %v6108
  %v6171 = vpack.c.bf16 %v6111, %v6109
  %v6172 = vpack.c.bf16 %v6114, %v6112
  %v6173 = vpack.c.bf16 %v6115, %v6113
  %v6174 = vpack.c.bf16 %v6118, %v6116
  %v6175 = vpack.c.bf16 %v6119, %v6117
  %v6176 = vpack.c.bf16 %v6122, %v6120
  %v6177 = vpack.c.bf16 %v6123, %v6121
  %v6178 = vpack.c.bf16 %v6126, %v6124
  %v6179 = vpack.c.bf16 %v6127, %v6125
  %v6180 = vpack.c.bf16 %v6130, %v6128
  %v6181 = vpack.c.bf16 %v6131, %v6129
  %v6182 = vpack.c.bf16 %v6134, %v6132
  %v6183 = vpack.c.bf16 %v6135, %v6133
  %v6216 = vunpack.c.l.b16 %v6136
  %v6217 = vunpack.c.l.b16 %v6137
  %v6218 = vunpack.c.l.b16 %v6138
  %v6219 = vunpack.c.l.b16 %v6139
  %v6220 = vunpack.c.l.b16 %v6140
  %v6221 = vunpack.c.l.b16 %v6141
  %v6222 = vunpack.c.l.b16 %v6142
  %v6223 = vunpack.c.l.b16 %v6143
  %v6224 = vunpack.c.l.b16 %v6144
  %v6225 = vunpack.c.l.b16 %v6145
  %v6226 = vunpack.c.l.b16 %v6146
  %v6227 = vunpack.c.l.b16 %v6147
  %v6228 = vunpack.c.l.b16 %v6148
  %v6229 = vunpack.c.l.b16 %v6149
  %v6230 = vunpack.c.l.b16 %v6150
  %v6231 = vunpack.c.l.b16 %v6151
  %v6232 = vunpack.c.l.b16 %v6152
  %v6233 = vunpack.c.l.b16 %v6153
  %v6234 = vunpack.c.l.b16 %v6154
  %v6235 = vunpack.c.l.b16 %v6155
  %v6236 = vunpack.c.l.b16 %v6156
  %v6237 = vunpack.c.l.b16 %v6157
  %v6238 = vunpack.c.l.b16 %v6158
  %v6239 = vunpack.c.l.b16 %v6159
  %v6240 = vunpack.c.l.b16 %v6160
  %v6241 = vunpack.c.l.b16 %v6161
  %v6242 = vunpack.c.l.b16 %v6162
  %v6243 = vunpack.c.l.b16 %v6163
  %v6244 = vunpack.c.l.b16 %v6164
  %v6245 = vunpack.c.l.b16 %v6165
  %v6246 = vunpack.c.l.b16 %v6166
  %v6247 = vunpack.c.l.b16 %v6167
  %v6248 = vpack.c.b16 %v6217, %v6216
  %v6249 = vpack.c.b16 %v6219, %v6218
  %v6250 = vpack.c.b16 %v6221, %v6220
  %v6251 = vpack.c.b16 %v6223, %v6222
  %v6252 = vpack.c.b16 %v6225, %v6224
  %v6253 = vpack.c.b16 %v6227, %v6226
  %v6254 = vpack.c.b16 %v6229, %v6228
  %v6255 = vpack.c.b16 %v6231, %v6230
  %v6256 = vpack.c.b16 %v6233, %v6232
  %v6257 = vpack.c.b16 %v6235, %v6234
  %v6258 = vpack.c.b16 %v6237, %v6236
  %v6259 = vpack.c.b16 %v6239, %v6238
  %v6260 = vpack.c.b16 %v6241, %v6240
  %v6261 = vpack.c.b16 %v6243, %v6242
  %v6262 = vpack.c.b16 %v6245, %v6244
  %v6263 = vpack.c.b16 %v6247, %v6246
  %6280 = vmatprep.subr.bf16.mxu0 0
  %6281 = vmatpush1.bf16.msra.mxu0 %v6248
  %6282 = vmatprep.subr.bf16.mxu0 0
  %6283 = vmatpush1.bf16.msra.mxu0 %v6249
  %6284 = vmatprep.subr.bf16.mxu0 0
  %6285 = vmatpush1.bf16.msra.mxu0 %v6250
  %6286 = vmatprep.subr.bf16.mxu0 0
  %6287 = vmatpush1.bf16.msra.mxu0 %v6251
  %6288 = vmatprep.subr.bf16.mxu0 0
  %6289 = vmatpush1.bf16.msra.mxu0 %v6252
  %6290 = vmatprep.subr.bf16.mxu0 0
  %6291 = vmatpush1.bf16.msra.mxu0 %v6253
  %6292 = vmatprep.subr.bf16.mxu0 0
  %6293 = vmatpush1.bf16.msra.mxu0 %v6254
  %6294 = vmatprep.subr.bf16.mxu0 0
  %6295 = vmatpush1.bf16.msra.mxu0 %v6255
  %6296 = vmatprep.subr.bf16.mxu0 0
  %6297 = vmatpush1.bf16.msra.mxu0 %v6256
  %6298 = vmatprep.subr.bf16.mxu0 0
  %6299 = vmatpush1.bf16.msra.mxu0 %v6257
  %6300 = vmatprep.subr.bf16.mxu0 0
  %6301 = vmatpush1.bf16.msra.mxu0 %v6258
  %6302 = vmatprep.subr.bf16.mxu0 0
  %6303 = vmatpush1.bf16.msra.mxu0 %v6259
  %6304 = vmatprep.subr.bf16.mxu0 0
  %6305 = vmatpush1.bf16.msra.mxu0 %v6260
  %6306 = vmatprep.subr.bf16.mxu0 0
  %6307 = vmatpush1.bf16.msra.mxu0 %v6261
  %6308 = vmatprep.subr.bf16.mxu0 0
  %6309 = vmatpush1.bf16.msra.mxu0 %v6262
  %6310 = vmatprep.subr.bf16.mxu0 0
  %6311 = vmatpush1.bf16.msra.mxu0 %v6263
  %6312 = vmatprep.mubr.bf16.mxu0 %v6169
  %6313 = vmatmul.mubr.bf16.gmra.mrb[0].mxu0 %v6168
  %v6314 = vpop.f32.mrb[0].mxu0
  %v6315 = vadd.f32 0.0, %v6314
  %v6316 = vpop.f32.mrb[0].mxu0
  %v6317 = vpop.f32.mrb[0].mxu0
  %v6318 = vadd.f32 0.0, %v6317
  %v6319 = vpop.f32.mrb[0].mxu0
  %6320 = vmatprep.mubr.bf16.mxu0 %v6171
  %6321 = vmatmul.mubr.bf16.gmra.mrb[0].mxu0 %v6170
  %v6322 = vpop.f32.mrb[0].mxu0
  %v6323 = vadd.f32 0.0, %v6322
  %v6324 = vpop.f32.mrb[0].mxu0
  %v6325 = vpop.f32.mrb[0].mxu0
  %v6326 = vadd.f32 0.0, %v6325
  %v6327 = vpop.f32.mrb[0].mxu0
  %6328 = vmatprep.mubr.bf16.mxu0 %v6173
  %6329 = vmatmul.mubr.bf16.gmra.mrb[0].mxu0 %v6172
  %v6330 = vpop.f32.mrb[0].mxu0
  %v6331 = vadd.f32 0.0, %v6330
  %v6332 = vpop.f32.mrb[0].mxu0
  %v6333 = vpop.f32.mrb[0].mxu0
  %v6334 = vadd.f32 0.0, %v6333
  %v6335 = vpop.f32.mrb[0].mxu0
  %6336 = vmatprep.mubr.bf16.mxu0 %v6175
  %6337 = vmatmul.mubr.bf16.gmra.mrb[0].mxu0 %v6174
  %v6338 = vpop.f32.mrb[0].mxu0
  %v6339 = vadd.f32 0.0, %v6338
  %v6340 = vpop.f32.mrb[0].mxu0
  %v6341 = vpop.f32.mrb[0].mxu0
  %v6342 = vadd.f32 0.0, %v6341
  %v6343 = vpop.f32.mrb[0].mxu0
  %6344 = vmatprep.mubr.bf16.mxu0 %v6177
  %6345 = vmatmul.mubr.bf16.gmra.mrb[0].mxu0 %v6176
  %v6346 = vpop.f32.mrb[0].mxu0
  %v6347 = vadd.f32 0.0, %v6346
  %v6348 = vpop.f32.mrb[0].mxu0
  %v6349 = vpop.f32.mrb[0].mxu0
  %v6350 = vadd.f32 0.0, %v6349
  %v6351 = vpop.f32.mrb[0].mxu0
  %6352 = vmatprep.mubr.bf16.mxu0 %v6179
  %6353 = vmatmul.mubr.bf16.gmra.mrb[0].mxu0 %v6178
  %v6354 = vpop.f32.mrb[0].mxu0
  %v6355 = vadd.f32 0.0, %v6354
  %v6356 = vpop.f32.mrb[0].mxu0
  %v6357 = vpop.f32.mrb[0].mxu0
  %v6358 = vadd.f32 0.0, %v6357
  %v6359 = vpop.f32.mrb[0].mxu0
  %6360 = vmatprep.mubr.bf16.mxu0 %v6181
  %6361 = vmatmul.mubr.bf16.gmra.mrb[0].mxu0 %v6180
  %v6362 = vpop.f32.mrb[0].mxu0
  %v6363 = vadd.f32 0.0, %v6362
  %v6364 = vpop.f32.mrb[0].mxu0
  %v6365 = vpop.f32.mrb[0].mxu0
  %v6366 = vadd.f32 0.0, %v6365
  %v6367 = vpop.f32.mrb[0].mxu0
  %6368 = vmatprep.mubr.bf16.mxu0 %v6183
  %6369 = vmatmul.mubr.bf16.gmra.mrb[0].mxu0 %v6182
  %v6370 = vpop.f32.mrb[0].mxu0
  %v6371 = vadd.f32 0.0, %v6370
  %v6372 = vpop.f32.mrb[0].mxu0
  %v6373 = vpop.f32.mrb[0].mxu0
  %v6374 = vadd.f32 0.0, %v6373
  %v6375 = vpop.f32.mrb[0].mxu0
  %6376 = vdwg.mxu0
  %v6377 = vadd.f32 %v3176, %v6315
  %v6378 = vadd.f32 %v3177, %v6318
  %v6379 = vadd.f32 %v3178, %v6323
  %v6380 = vadd.f32 %v3179, %v6326
  %v6381 = vadd.f32 %v3180, %v6331
  %v6382 = vadd.f32 %v3181, %v6334
  %v6383 = vadd.f32 %v3182, %v6339
  %v6384 = vadd.f32 %v3183, %v6342
  %v6385 = vadd.f32 %v3184, %v6347
  %v6386 = vadd.f32 %v3185, %v6350
  %v6387 = vadd.f32 %v3186, %v6355
  %v6388 = vadd.f32 %v3187, %v6358
  %v6389 = vadd.f32 %v3188, %v6363
  %v6390 = vadd.f32 %v3189, %v6366
  %v6391 = vadd.f32 %v3190, %v6371
  %v6392 = vadd.f32 %v3191, %v6374
  %v6393 = vld [vmem:[%s59] sm:$0x1]
  %v6394 = vlaneseq
  %v6395 = vshrl.u32 %v6394, 7
  %v6396 = vsub.s32 0, %v6395
  %v6397 = vrot.slane %v6393, %v6396
  %v6398 = vadd.f32 %v6377, %v6397
  %v6399 = vadd.f32 %v6378, %v6397
  %v6400 = vadd.f32 %v6379, %v6397
  %v6401 = vadd.f32 %v6380, %v6397
  %v6402 = vadd.f32 %v6381, %v6397
  %v6403 = vadd.f32 %v6382, %v6397
  %v6404 = vadd.f32 %v6383, %v6397
  %v6405 = vadd.f32 %v6384, %v6397
  %v6406 = vadd.f32 %v6385, %v6397
  %v6407 = vadd.f32 %v6386, %v6397
  %v6408 = vadd.f32 %v6387, %v6397
  %v6409 = vadd.f32 %v6388, %v6397
  %v6410 = vadd.f32 %v6389, %v6397
  %v6411 = vadd.f32 %v6390, %v6397
  %v6412 = vadd.f32 %v6391, %v6397
  %v6413 = vadd.f32 %v6392, %v6397
  %v6414 = vld [vmem:[%s25 + $0x1] sm:$0x1]
  %v6415 = vld [vmem:[%s27 + $0x1] sm:$0x1]
  %v6416 = vsel %vm689, %v6398, 0.0
  %6417 = vadd.xlane.f32.xlu0 %v6416
  %v6418 = vpop.xlane.xlu0 %6417
  %v6419 = vsel %vm689, %v6399, 0.0
  %6420 = vadd.xlane.f32.xlu0 %v6419
  %v6421 = vpop.xlane.xlu0 %6420
  %v6422 = vsel %vm689, %v6400, 0.0
  %6423 = vadd.xlane.f32.xlu0 %v6422
  %v6424 = vpop.xlane.xlu0 %6423
  %v6425 = vsel %vm689, %v6401, 0.0
  %6426 = vadd.xlane.f32.xlu0 %v6425
  %v6427 = vpop.xlane.xlu0 %6426
  %v6428 = vsel %vm689, %v6402, 0.0
  %6429 = vadd.xlane.f32.xlu0 %v6428
  %v6430 = vpop.xlane.xlu0 %6429
  %v6431 = vsel %vm689, %v6403, 0.0
  %6432 = vadd.xlane.f32.xlu0 %v6431
  %v6433 = vpop.xlane.xlu0 %6432
  %v6434 = vsel %vm689, %v6404, 0.0
  %6435 = vadd.xlane.f32.xlu0 %v6434
  %v6436 = vpop.xlane.xlu0 %6435
  %v6437 = vsel %vm689, %v6405, 0.0
  %6438 = vadd.xlane.f32.xlu0 %v6437
  %v6439 = vpop.xlane.xlu0 %6438
  %v6440 = vsel %vm689, %v6406, 0.0
  %6441 = vadd.xlane.f32.xlu0 %v6440
  %v6442 = vpop.xlane.xlu0 %6441
  %v6443 = vsel %vm689, %v6407, 0.0
  %6444 = vadd.xlane.f32.xlu0 %v6443
  %v6445 = vpop.xlane.xlu0 %6444
  %v6446 = vsel %vm689, %v6408, 0.0
  %6447 = vadd.xlane.f32.xlu0 %v6446
  %v6448 = vpop.xlane.xlu0 %6447
  %v6449 = vsel %vm689, %v6409, 0.0
  %6450 = vadd.xlane.f32.xlu0 %v6449
  %v6451 = vpop.xlane.xlu0 %6450
  %v6452 = vsel %vm689, %v6410, 0.0
  %6453 = vadd.xlane.f32.xlu0 %v6452
  %v6454 = vpop.xlane.xlu0 %6453
  %v6455 = vsel %vm689, %v6411, 0.0
  %6456 = vadd.xlane.f32.xlu0 %v6455
  %v6457 = vpop.xlane.xlu0 %6456
  %v6458 = vsel %vm689, %v6412, 0.0
  %6459 = vadd.xlane.f32.xlu0 %v6458
  %v6460 = vpop.xlane.xlu0 %6459
  %v6461 = vsel %vm689, %v6413, 0.0
  %6462 = vadd.xlane.f32.xlu0 %v6461
  %v6463 = vpop.xlane.xlu0 %6462
  %v6464 = vmul.f32 %v6418, %v738
  %v6465 = vmul.f32 %v6421, %v738
  %v6466 = vmul.f32 %v6424, %v738
  %v6467 = vmul.f32 %v6427, %v738
  %v6468 = vmul.f32 %v6430, %v738
  %v6469 = vmul.f32 %v6433, %v738
  %v6470 = vmul.f32 %v6436, %v738
  %v6471 = vmul.f32 %v6439, %v738
  %v6472 = vmul.f32 %v6442, %v738
  %v6473 = vmul.f32 %v6445, %v738
  %v6474 = vmul.f32 %v6448, %v738
  %v6475 = vmul.f32 %v6451, %v738
  %v6476 = vmul.f32 %v6454, %v738
  %v6477 = vmul.f32 %v6457, %v738
  %v6478 = vmul.f32 %v6460, %v738
  %v6479 = vmul.f32 %v6463, %v738
  %v6480 = vsub.f32 %v6398, %v6464
  %v6481 = vsub.f32 %v6399, %v6465
  %v6482 = vsub.f32 %v6400, %v6466
  %v6483 = vsub.f32 %v6401, %v6467
  %v6484 = vsub.f32 %v6402, %v6468
  %v6485 = vsub.f32 %v6403, %v6469
  %v6486 = vsub.f32 %v6404, %v6470
  %v6487 = vsub.f32 %v6405, %v6471
  %v6488 = vsub.f32 %v6406, %v6472
  %v6489 = vsub.f32 %v6407, %v6473
  %v6490 = vsub.f32 %v6408, %v6474
  %v6491 = vsub.f32 %v6409, %v6475
  %v6492 = vsub.f32 %v6410, %v6476
  %v6493 = vsub.f32 %v6411, %v6477
  %v6494 = vsub.f32 %v6412, %v6478
  %v6495 = vsub.f32 %v6413, %v6479
  %v6496 = vmul.f32 %v6480, %v6480
  %v6497 = vmul.f32 %v6481, %v6481
  %v6498 = vmul.f32 %v6482, %v6482
  %v6499 = vmul.f32 %v6483, %v6483
  %v6500 = vmul.f32 %v6484, %v6484
  %v6501 = vmul.f32 %v6485, %v6485
  %v6502 = vmul.f32 %v6486, %v6486
  %v6503 = vmul.f32 %v6487, %v6487
  %v6504 = vmul.f32 %v6488, %v6488
  %v6505 = vmul.f32 %v6489, %v6489
  %v6506 = vmul.f32 %v6490, %v6490
  %v6507 = vmul.f32 %v6491, %v6491
  %v6508 = vmul.f32 %v6492, %v6492
  %v6509 = vmul.f32 %v6493, %v6493
  %v6510 = vmul.f32 %v6494, %v6494
  %v6511 = vmul.f32 %v6495, %v6495
  %v6512 = vsel %vm689, %v6496, 0.0
  %6513 = vadd.xlane.f32.xlu0 %v6512
  %v6514 = vpop.xlane.xlu0 %6513
  %v6515 = vsel %vm689, %v6497, 0.0
  %6516 = vadd.xlane.f32.xlu0 %v6515
  %v6517 = vpop.xlane.xlu0 %6516
  %v6518 = vsel %vm689, %v6498, 0.0
  %6519 = vadd.xlane.f32.xlu0 %v6518
  %v6520 = vpop.xlane.xlu0 %6519
  %v6521 = vsel %vm689, %v6499, 0.0
  %6522 = vadd.xlane.f32.xlu0 %v6521
  %v6523 = vpop.xlane.xlu0 %6522
  %v6524 = vsel %vm689, %v6500, 0.0
  %6525 = vadd.xlane.f32.xlu0 %v6524
  %v6526 = vpop.xlane.xlu0 %6525
  %v6527 = vsel %vm689, %v6501, 0.0
  %6528 = vadd.xlane.f32.xlu0 %v6527
  %v6529 = vpop.xlane.xlu0 %6528
  %v6530 = vsel %vm689, %v6502, 0.0
  %6531 = vadd.xlane.f32.xlu0 %v6530
  %v6532 = vpop.xlane.xlu0 %6531
  %v6533 = vsel %vm689, %v6503, 0.0
  %6534 = vadd.xlane.f32.xlu0 %v6533
  %v6535 = vpop.xlane.xlu0 %6534
  %v6536 = vsel %vm689, %v6504, 0.0
  %6537 = vadd.xlane.f32.xlu0 %v6536
  %v6538 = vpop.xlane.xlu0 %6537
  %v6539 = vsel %vm689, %v6505, 0.0
  %6540 = vadd.xlane.f32.xlu0 %v6539
  %v6541 = vpop.xlane.xlu0 %6540
  %v6542 = vsel %vm689, %v6506, 0.0
  %6543 = vadd.xlane.f32.xlu0 %v6542
  %v6544 = vpop.xlane.xlu0 %6543
  %v6545 = vsel %vm689, %v6507, 0.0
  %6546 = vadd.xlane.f32.xlu0 %v6545
  %v6547 = vpop.xlane.xlu0 %6546
  %v6548 = vsel %vm689, %v6508, 0.0
  %6549 = vadd.xlane.f32.xlu0 %v6548
  %v6550 = vpop.xlane.xlu0 %6549
  %v6551 = vsel %vm689, %v6509, 0.0
  %6552 = vadd.xlane.f32.xlu0 %v6551
  %v6553 = vpop.xlane.xlu0 %6552
  %v6554 = vsel %vm689, %v6510, 0.0
  %6555 = vadd.xlane.f32.xlu0 %v6554
  %v6556 = vpop.xlane.xlu0 %6555
  %v6557 = vsel %vm689, %v6511, 0.0
  %6558 = vadd.xlane.f32.xlu0 %v6557
  %v6559 = vpop.xlane.xlu0 %6558
  %v6560 = vmul.f32 %v6514, %v738
  %v6561 = vmul.f32 %v6517, %v738
  %v6562 = vmul.f32 %v6520, %v738
  %v6563 = vmul.f32 %v6523, %v738
  %v6564 = vmul.f32 %v6526, %v738
  %v6565 = vmul.f32 %v6529, %v738
  %v6566 = vmul.f32 %v6532, %v738
  %v6567 = vmul.f32 %v6535, %v738
  %v6568 = vmul.f32 %v6538, %v738
  %v6569 = vmul.f32 %v6541, %v738
  %v6570 = vmul.f32 %v6544, %v738
  %v6571 = vmul.f32 %v6547, %v738
  %v6572 = vmul.f32 %v6550, %v738
  %v6573 = vmul.f32 %v6553, %v738
  %v6574 = vmul.f32 %v6556, %v738
  %v6575 = vmul.f32 %v6559, %v738
  %v6576 = vadd.f32 %v6560, 1e-05
  %v6577 = vadd.f32 %v6561, 1e-05
  %v6578 = vadd.f32 %v6562, 1e-05
  %v6579 = vadd.f32 %v6563, 1e-05
  %v6580 = vadd.f32 %v6564, 1e-05
  %v6581 = vadd.f32 %v6565, 1e-05
  %v6582 = vadd.f32 %v6566, 1e-05
  %v6583 = vadd.f32 %v6567, 1e-05
  %v6584 = vadd.f32 %v6568, 1e-05
  %v6585 = vadd.f32 %v6569, 1e-05
  %v6586 = vadd.f32 %v6570, 1e-05
  %v6587 = vadd.f32 %v6571, 1e-05
  %v6588 = vadd.f32 %v6572, 1e-05
  %v6589 = vadd.f32 %v6573, 1e-05
  %v6590 = vadd.f32 %v6574, 1e-05
  %v6591 = vadd.f32 %v6575, 1e-05
  %v6592 = vrsqrt.pop %v6576
  %v6593 = vrsqrt.pop %v6577
  %v6594 = vrsqrt.pop %v6578
  %v6595 = vrsqrt.pop %v6579
  %v6596 = vrsqrt.pop %v6580
  %v6597 = vrsqrt.pop %v6581
  %v6598 = vrsqrt.pop %v6582
  %v6599 = vrsqrt.pop %v6583
  %v6600 = vrsqrt.pop %v6584
  %v6601 = vrsqrt.pop %v6585
  %v6602 = vrsqrt.pop %v6586
  %v6603 = vrsqrt.pop %v6587
  %v6604 = vrsqrt.pop %v6588
  %v6605 = vrsqrt.pop %v6589
  %v6606 = vrsqrt.pop %v6590
  %v6607 = vrsqrt.pop %v6591
  %v6608 = vmul.f32 %v6480, %v6592
  %v6609 = vmul.f32 %v6481, %v6593
  %v6610 = vmul.f32 %v6482, %v6594
  %v6611 = vmul.f32 %v6483, %v6595
  %v6612 = vmul.f32 %v6484, %v6596
  %v6613 = vmul.f32 %v6485, %v6597
  %v6614 = vmul.f32 %v6486, %v6598
  %v6615 = vmul.f32 %v6487, %v6599
  %v6616 = vmul.f32 %v6488, %v6600
  %v6617 = vmul.f32 %v6489, %v6601
  %v6618 = vmul.f32 %v6490, %v6602
  %v6619 = vmul.f32 %v6491, %v6603
  %v6620 = vmul.f32 %v6492, %v6604
  %v6621 = vmul.f32 %v6493, %v6605
  %v6622 = vmul.f32 %v6494, %v6606
  %v6623 = vmul.f32 %v6495, %v6607
  %v6624 = vlaneseq
  %v6625 = vshrl.u32 %v6624, 7
  %v6626 = vsub.s32 0, %v6625
  %v6627 = vrot.slane %v6414, %v6626
  %v6628 = vmul.f32 %v6608, %v6627
  %v6629 = vmul.f32 %v6609, %v6627
  %v6630 = vmul.f32 %v6610, %v6627
  %v6631 = vmul.f32 %v6611, %v6627
  %v6632 = vmul.f32 %v6612, %v6627
  %v6633 = vmul.f32 %v6613, %v6627
  %v6634 = vmul.f32 %v6614, %v6627
  %v6635 = vmul.f32 %v6615, %v6627
  %v6636 = vmul.f32 %v6616, %v6627
  %v6637 = vmul.f32 %v6617, %v6627
  %v6638 = vmul.f32 %v6618, %v6627
  %v6639 = vmul.f32 %v6619, %v6627
  %v6640 = vmul.f32 %v6620, %v6627
  %v6641 = vmul.f32 %v6621, %v6627
  %v6642 = vmul.f32 %v6622, %v6627
  %v6643 = vmul.f32 %v6623, %v6627
  %v6644 = vlaneseq
  %v6645 = vshrl.u32 %v6644, 7
  %v6646 = vsub.s32 0, %v6645
  %v6647 = vrot.slane %v6415, %v6646
  %v6648 = vadd.f32 %v6628, %v6647
  %v6649 = vadd.f32 %v6629, %v6647
  %v6650 = vadd.f32 %v6630, %v6647
  %v6651 = vadd.f32 %v6631, %v6647
  %v6652 = vadd.f32 %v6632, %v6647
  %v6653 = vadd.f32 %v6633, %v6647
  %v6654 = vadd.f32 %v6634, %v6647
  %v6655 = vadd.f32 %v6635, %v6647
  %v6656 = vadd.f32 %v6636, %v6647
  %v6657 = vadd.f32 %v6637, %v6647
  %v6658 = vadd.f32 %v6638, %v6647
  %v6659 = vadd.f32 %v6639, %v6647
  %v6660 = vadd.f32 %v6640, %v6647
  %v6661 = vadd.f32 %v6641, %v6647
  %v6662 = vadd.f32 %v6642, %v6647
  %v6663 = vadd.f32 %v6643, %v6647
  %s6664 = scalar_lea.vmem %s29, 32
  %v6665 = vld [vmem:[%s6664] sm:$0xf]
  %v6666 = vld [vmem:[%s6664 + $0x4] sm:$0xf]
  %v6667 = vld [vmem:[%s6664 + $0x8] sm:$0xf]
  %v6668 = vld [vmem:[%s6664 + $0xc] sm:$0xf]
  %v6669 = vld [vmem:[%s6664 + $0x10] sm:$0xf]
  %v6670 = vld [vmem:[%s6664 + $0x14] sm:$0xf]
  %v6671 = vld [vmem:[%s6664 + $0x18] sm:$0xf]
  %v6672 = vld [vmem:[%s6664 + $0x1c] sm:$0xf]
  %v6673 = vpack.c.bf16 %v6649, %v6648
  %v6674 = vpack.c.bf16 %v6651, %v6650
  %v6675 = vpack.c.bf16 %v6653, %v6652
  %v6676 = vpack.c.bf16 %v6655, %v6654
  %v6677 = vpack.c.bf16 %v6657, %v6656
  %v6678 = vpack.c.bf16 %v6659, %v6658
  %v6679 = vpack.c.bf16 %v6661, %v6660
  %v6680 = vpack.c.bf16 %v6663, %v6662
  %v6689 = vunpack.c.l.b16 %v6665
  %v6690 = vunpack.c.l.b16 %v6666
  %v6691 = vunpack.c.l.b16 %v6667
  %v6692 = vunpack.c.l.b16 %v6668
  %v6693 = vunpack.c.l.b16 %v6669
  %v6694 = vunpack.c.l.b16 %v6670
  %v6695 = vunpack.c.l.b16 %v6671
  %v6696 = vunpack.c.l.b16 %v6672
  %v6697 = vpack.c.b16 %v6690, %v6689
  %v6698 = vpack.c.b16 %v6692, %v6691
  %v6699 = vpack.c.b16 %v6694, %v6693
  %v6700 = vpack.c.b16 %v6696, %v6695
  %v6706 = vsel %vm689, %v6673, 0
  %v6709 = vsel %vm689, %v6674, 0
  %v6712 = vsel %vm689, %v6675, 0
  %v6715 = vsel %vm689, %v6676, 0
  %v6718 = vsel %vm689, %v6677, 0
  %v6721 = vsel %vm689, %v6678, 0
  %v6724 = vsel %vm689, %v6679, 0
  %v6727 = vsel %vm689, %v6680, 0
  %6729 = vmatprep.subr.bf16.mxu0 0
  %6730 = vmatpush1.bf16.msra.mxu0 %v6697
  %6731 = vmatprep.subr.bf16.mxu0 0
  %6732 = vmatpush1.bf16.msra.mxu0 %v6698
  %6733 = vmatprep.subr.bf16.mxu0 0
  %6734 = vmatpush1.bf16.msra.mxu0 %v6699
  %6735 = vmatprep.subr.bf16.mxu0 0
  %6736 = vmatpush1.bf16.msra.mxu0 %v6700
  %6737 = vmatprep.subr.bf16.mxu0 0
  %6738 = vmatpush1.bf16.msra.mxu0 0
  %6739 = vmatprep.subr.bf16.mxu0 0
  %6740 = vmatpush1.bf16.msra.mxu0 0
  %6741 = vmatprep.subr.bf16.mxu0 0
  %6742 = vmatpush1.bf16.msra.mxu0 0
  %6743 = vmatprep.subr.bf16.mxu0 0
  %6744 = vmatpush1.bf16.msra.mxu0 0
  %6745 = vmatprep.subr.bf16.mxu0 0
  %6746 = vmatpush1.bf16.msra.mxu0 0
  %6747 = vmatprep.subr.bf16.mxu0 0
  %6748 = vmatpush1.bf16.msra.mxu0 0
  %6749 = vmatprep.subr.bf16.mxu0 0
  %6750 = vmatpush1.bf16.msra.mxu0 0
  %6751 = vmatprep.subr.bf16.mxu0 0
  %6752 = vmatpush1.bf16.msra.mxu0 0
  %6753 = vmatprep.subr.bf16.mxu0 0
  %6754 = vmatpush1.bf16.msra.mxu0 0
  %6755 = vmatprep.subr.bf16.mxu0 0
  %6756 = vmatpush1.bf16.msra.mxu0 0
  %6757 = vmatprep.subr.bf16.mxu0 0
  %6758 = vmatpush1.bf16.msra.mxu0 0
  %6759 = vmatprep.subr.bf16.mxu0 0
  %6760 = vmatpush1.bf16.msra.mxu0 0
  %6761 = vmatprep.mubr.bf16.mxu0 0
  %6762 = vmatmul.mubr.bf16.gmra.mrb[0].mxu0 %v6706
  %v6763 = vpop.f32.mrb[0].mxu0
  %v6764 = vadd.f32 0.0, %v6763
  %v6765 = vpop.f32.mrb[0].mxu0
  %v6766 = vpop.f32.mrb[0].mxu0
  %v6767 = vadd.f32 0.0, %v6766
  %v6768 = vpop.f32.mrb[0].mxu0
  %6769 = vmatprep.mubr.bf16.mxu0 0
  %6770 = vmatmul.mubr.bf16.gmra.mrb[0].mxu0 %v6709
  %v6771 = vpop.f32.mrb[0].mxu0
  %v6772 = vadd.f32 0.0, %v6771
  %v6773 = vpop.f32.mrb[0].mxu0
  %v6774 = vpop.f32.mrb[0].mxu0
  %v6775 = vadd.f32 0.0, %v6774
  %v6776 = vpop.f32.mrb[0].mxu0
  %6777 = vmatprep.mubr.bf16.mxu0 0
  %6778 = vmatmul.mubr.bf16.gmra.mrb[0].mxu0 %v6712
  %v6779 = vpop.f32.mrb[0].mxu0
  %v6780 = vadd.f32 0.0, %v6779
  %v6781 = vpop.f32.mrb[0].mxu0
  %v6782 = vpop.f32.mrb[0].mxu0
  %v6783 = vadd.f32 0.0, %v6782
  %v6784 = vpop.f32.mrb[0].mxu0
  %6785 = vmatprep.mubr.bf16.mxu0 0
  %6786 = vmatmul.mubr.bf16.gmra.mrb[0].mxu0 %v6715
  %v6787 = vpop.f32.mrb[0].mxu0
  %v6788 = vadd.f32 0.0, %v6787
  %v6789 = vpop.f32.mrb[0].mxu0
  %v6790 = vpop.f32.mrb[0].mxu0
  %v6791 = vadd.f32 0.0, %v6790
  %v6792 = vpop.f32.mrb[0].mxu0
  %6793 = vmatprep.mubr.bf16.mxu0 0
  %6794 = vmatmul.mubr.bf16.gmra.mrb[0].mxu0 %v6718
  %v6795 = vpop.f32.mrb[0].mxu0
  %v6796 = vadd.f32 0.0, %v6795
  %v6797 = vpop.f32.mrb[0].mxu0
  %v6798 = vpop.f32.mrb[0].mxu0
  %v6799 = vadd.f32 0.0, %v6798
  %v6800 = vpop.f32.mrb[0].mxu0
  %6801 = vmatprep.mubr.bf16.mxu0 0
  %6802 = vmatmul.mubr.bf16.gmra.mrb[0].mxu0 %v6721
  %v6803 = vpop.f32.mrb[0].mxu0
  %v6804 = vadd.f32 0.0, %v6803
  %v6805 = vpop.f32.mrb[0].mxu0
  %v6806 = vpop.f32.mrb[0].mxu0
  %v6807 = vadd.f32 0.0, %v6806
  %v6808 = vpop.f32.mrb[0].mxu0
  %6809 = vmatprep.mubr.bf16.mxu0 0
  %6810 = vmatmul.mubr.bf16.gmra.mrb[0].mxu0 %v6724
  %v6811 = vpop.f32.mrb[0].mxu0
  %v6812 = vadd.f32 0.0, %v6811
  %v6813 = vpop.f32.mrb[0].mxu0
  %v6814 = vpop.f32.mrb[0].mxu0
  %v6815 = vadd.f32 0.0, %v6814
  %v6816 = vpop.f32.mrb[0].mxu0
  %6817 = vmatprep.mubr.bf16.mxu0 0
  %6818 = vmatmul.mubr.bf16.gmra.mrb[0].mxu0 %v6727
  %v6819 = vpop.f32.mrb[0].mxu0
  %v6820 = vadd.f32 0.0, %v6819
  %v6821 = vpop.f32.mrb[0].mxu0
  %v6822 = vpop.f32.mrb[0].mxu0
  %v6823 = vadd.f32 0.0, %v6822
  %v6824 = vpop.f32.mrb[0].mxu0
  %6825 = vdwg.mxu0
  %s6826 = scalar_lea.vmem %s31, 32
  %v6827 = vld [vmem:[%s6826] sm:$0xf]
  %v6828 = vld [vmem:[%s6826 + $0x4] sm:$0xf]
  %v6829 = vld [vmem:[%s6826 + $0x8] sm:$0xf]
  %v6830 = vld [vmem:[%s6826 + $0xc] sm:$0xf]
  %v6831 = vld [vmem:[%s6826 + $0x10] sm:$0xf]
  %v6832 = vld [vmem:[%s6826 + $0x14] sm:$0xf]
  %v6833 = vld [vmem:[%s6826 + $0x18] sm:$0xf]
  %v6834 = vld [vmem:[%s6826 + $0x1c] sm:$0xf]
  %v6843 = vunpack.c.l.b16 %v6827
  %v6844 = vunpack.c.l.b16 %v6828
  %v6845 = vunpack.c.l.b16 %v6829
  %v6846 = vunpack.c.l.b16 %v6830
  %v6847 = vunpack.c.l.b16 %v6831
  %v6848 = vunpack.c.l.b16 %v6832
  %v6849 = vunpack.c.l.b16 %v6833
  %v6850 = vunpack.c.l.b16 %v6834
  %v6851 = vpack.c.b16 %v6844, %v6843
  %v6852 = vpack.c.b16 %v6846, %v6845
  %v6853 = vpack.c.b16 %v6848, %v6847
  %v6854 = vpack.c.b16 %v6850, %v6849
  %6859 = vmatprep.subr.bf16.mxu0 0
  %6860 = vmatpush1.bf16.msra.mxu0 %v6851
  %6861 = vmatprep.subr.bf16.mxu0 0
  %6862 = vmatpush1.bf16.msra.mxu0 %v6852
  %6863 = vmatprep.subr.bf16.mxu0 0
  %6864 = vmatpush1.bf16.msra.mxu0 %v6853
  %6865 = vmatprep.subr.bf16.mxu0 0
  %6866 = vmatpush1.bf16.msra.mxu0 %v6854
  %6867 = vmatprep.subr.bf16.mxu0 0
  %6868 = vmatpush1.bf16.msra.mxu0 0
  %6869 = vmatprep.subr.bf16.mxu0 0
  %6870 = vmatpush1.bf16.msra.mxu0 0
  %6871 = vmatprep.subr.bf16.mxu0 0
  %6872 = vmatpush1.bf16.msra.mxu0 0
  %6873 = vmatprep.subr.bf16.mxu0 0
  %6874 = vmatpush1.bf16.msra.mxu0 0
  %6875 = vmatprep.subr.bf16.mxu0 0
  %6876 = vmatpush1.bf16.msra.mxu0 0
  %6877 = vmatprep.subr.bf16.mxu0 0
  %6878 = vmatpush1.bf16.msra.mxu0 0
  %6879 = vmatprep.subr.bf16.mxu0 0
  %6880 = vmatpush1.bf16.msra.mxu0 0
  %6881 = vmatprep.subr.bf16.mxu0 0
  %6882 = vmatpush1.bf16.msra.mxu0 0
  %6883 = vmatprep.subr.bf16.mxu0 0
  %6884 = vmatpush1.bf16.msra.mxu0 0
  %6885 = vmatprep.subr.bf16.mxu0 0
  %6886 = vmatpush1.bf16.msra.mxu0 0
  %6887 = vmatprep.subr.bf16.mxu0 0
  %6888 = vmatpush1.bf16.msra.mxu0 0
  %6889 = vmatprep.subr.bf16.mxu0 0
  %6890 = vmatpush1.bf16.msra.mxu0 0
  %6891 = vmatprep.mubr.bf16.mxu0 0
  %6892 = vmatmul.mubr.bf16.gmra.mrb[0].mxu0 %v6706
  %v6893 = vpop.f32.mrb[0].mxu0
  %v6894 = vadd.f32 0.0, %v6893
  %v6895 = vpop.f32.mrb[0].mxu0
  %v6896 = vpop.f32.mrb[0].mxu0
  %v6897 = vadd.f32 0.0, %v6896
  %v6898 = vpop.f32.mrb[0].mxu0
  %6899 = vmatprep.mubr.bf16.mxu0 0
  %6900 = vmatmul.mubr.bf16.gmra.mrb[0].mxu0 %v6709
  %v6901 = vpop.f32.mrb[0].mxu0
  %v6902 = vadd.f32 0.0, %v6901
  %v6903 = vpop.f32.mrb[0].mxu0
  %v6904 = vpop.f32.mrb[0].mxu0
  %v6905 = vadd.f32 0.0, %v6904
  %v6906 = vpop.f32.mrb[0].mxu0
  %6907 = vmatprep.mubr.bf16.mxu0 0
  %6908 = vmatmul.mubr.bf16.gmra.mrb[0].mxu0 %v6712
  %v6909 = vpop.f32.mrb[0].mxu0
  %v6910 = vadd.f32 0.0, %v6909
  %v6911 = vpop.f32.mrb[0].mxu0
  %v6912 = vpop.f32.mrb[0].mxu0
  %v6913 = vadd.f32 0.0, %v6912
  %v6914 = vpop.f32.mrb[0].mxu0
  %6915 = vmatprep.mubr.bf16.mxu0 0
  %6916 = vmatmul.mubr.bf16.gmra.mrb[0].mxu0 %v6715
  %v6917 = vpop.f32.mrb[0].mxu0
  %v6918 = vadd.f32 0.0, %v6917
  %v6919 = vpop.f32.mrb[0].mxu0
  %v6920 = vpop.f32.mrb[0].mxu0
  %v6921 = vadd.f32 0.0, %v6920
  %v6922 = vpop.f32.mrb[0].mxu0
  %6923 = vmatprep.mubr.bf16.mxu0 0
  %6924 = vmatmul.mubr.bf16.gmra.mrb[0].mxu0 %v6718
  %v6925 = vpop.f32.mrb[0].mxu0
  %v6926 = vadd.f32 0.0, %v6925
  %v6927 = vpop.f32.mrb[0].mxu0
  %v6928 = vpop.f32.mrb[0].mxu0
  %v6929 = vadd.f32 0.0, %v6928
  %v6930 = vpop.f32.mrb[0].mxu0
  %6931 = vmatprep.mubr.bf16.mxu0 0
  %6932 = vmatmul.mubr.bf16.gmra.mrb[0].mxu0 %v6721
  %v6933 = vpop.f32.mrb[0].mxu0
  %v6934 = vadd.f32 0.0, %v6933
  %v6935 = vpop.f32.mrb[0].mxu0
  %v6936 = vpop.f32.mrb[0].mxu0
  %v6937 = vadd.f32 0.0, %v6936
  %v6938 = vpop.f32.mrb[0].mxu0
  %6939 = vmatprep.mubr.bf16.mxu0 0
  %6940 = vmatmul.mubr.bf16.gmra.mrb[0].mxu0 %v6724
  %v6941 = vpop.f32.mrb[0].mxu0
  %v6942 = vadd.f32 0.0, %v6941
  %v6943 = vpop.f32.mrb[0].mxu0
  %v6944 = vpop.f32.mrb[0].mxu0
  %v6945 = vadd.f32 0.0, %v6944
  %v6946 = vpop.f32.mrb[0].mxu0
  %6947 = vmatprep.mubr.bf16.mxu0 0
  %6948 = vmatmul.mubr.bf16.gmra.mrb[0].mxu0 %v6727
  %v6949 = vpop.f32.mrb[0].mxu0
  %v6950 = vadd.f32 0.0, %v6949
  %v6951 = vpop.f32.mrb[0].mxu0
  %v6952 = vpop.f32.mrb[0].mxu0
  %v6953 = vadd.f32 0.0, %v6952
  %v6954 = vpop.f32.mrb[0].mxu0
  %6955 = vdwg.mxu0
  %s6956 = scalar_lea.vmem %s33, 32
  %v6957 = vld [vmem:[%s6956] sm:$0xf]
  %v6958 = vld [vmem:[%s6956 + $0x4] sm:$0xf]
  %v6959 = vld [vmem:[%s6956 + $0x8] sm:$0xf]
  %v6960 = vld [vmem:[%s6956 + $0xc] sm:$0xf]
  %v6961 = vld [vmem:[%s6956 + $0x10] sm:$0xf]
  %v6962 = vld [vmem:[%s6956 + $0x14] sm:$0xf]
  %v6963 = vld [vmem:[%s6956 + $0x18] sm:$0xf]
  %v6964 = vld [vmem:[%s6956 + $0x1c] sm:$0xf]
  %v6973 = vunpack.c.l.b16 %v6957
  %v6974 = vunpack.c.l.b16 %v6958
  %v6975 = vunpack.c.l.b16 %v6959
  %v6976 = vunpack.c.l.b16 %v6960
  %v6977 = vunpack.c.l.b16 %v6961
  %v6978 = vunpack.c.l.b16 %v6962
  %v6979 = vunpack.c.l.b16 %v6963
  %v6980 = vunpack.c.l.b16 %v6964
  %v6981 = vpack.c.b16 %v6974, %v6973
  %v6982 = vpack.c.b16 %v6976, %v6975
  %v6983 = vpack.c.b16 %v6978, %v6977
  %v6984 = vpack.c.b16 %v6980, %v6979
  %6989 = vmatprep.subr.bf16.mxu0 0
  %6990 = vmatpush1.bf16.msra.mxu0 %v6981
  %6991 = vmatprep.subr.bf16.mxu0 0
  %6992 = vmatpush1.bf16.msra.mxu0 %v6982
  %6993 = vmatprep.subr.bf16.mxu0 0
  %6994 = vmatpush1.bf16.msra.mxu0 %v6983
  %6995 = vmatprep.subr.bf16.mxu0 0
  %6996 = vmatpush1.bf16.msra.mxu0 %v6984
  %6997 = vmatprep.subr.bf16.mxu0 0
  %6998 = vmatpush1.bf16.msra.mxu0 0
  %6999 = vmatprep.subr.bf16.mxu0 0
  %7000 = vmatpush1.bf16.msra.mxu0 0
  %7001 = vmatprep.subr.bf16.mxu0 0
  %7002 = vmatpush1.bf16.msra.mxu0 0
  %7003 = vmatprep.subr.bf16.mxu0 0
  %7004 = vmatpush1.bf16.msra.mxu0 0
  %7005 = vmatprep.subr.bf16.mxu0 0
  %7006 = vmatpush1.bf16.msra.mxu0 0
  %7007 = vmatprep.subr.bf16.mxu0 0
  %7008 = vmatpush1.bf16.msra.mxu0 0
  %7009 = vmatprep.subr.bf16.mxu0 0
  %7010 = vmatpush1.bf16.msra.mxu0 0
  %7011 = vmatprep.subr.bf16.mxu0 0
  %7012 = vmatpush1.bf16.msra.mxu0 0
  %7013 = vmatprep.subr.bf16.mxu0 0
  %7014 = vmatpush1.bf16.msra.mxu0 0
  %7015 = vmatprep.subr.bf16.mxu0 0
  %7016 = vmatpush1.bf16.msra.mxu0 0
  %7017 = vmatprep.subr.bf16.mxu0 0
  %7018 = vmatpush1.bf16.msra.mxu0 0
  %7019 = vmatprep.subr.bf16.mxu0 0
  %7020 = vmatpush1.bf16.msra.mxu0 0
  %7021 = vmatprep.mubr.bf16.mxu0 0
  %7022 = vmatmul.mubr.bf16.gmra.mrb[0].mxu0 %v6706
  %v7023 = vpop.f32.mrb[0].mxu0
  %v7024 = vadd.f32 0.0, %v7023
  %v7025 = vpop.f32.mrb[0].mxu0
  %v7026 = vpop.f32.mrb[0].mxu0
  %v7027 = vadd.f32 0.0, %v7026
  %v7028 = vpop.f32.mrb[0].mxu0
  %7029 = vmatprep.mubr.bf16.mxu0 0
  %7030 = vmatmul.mubr.bf16.gmra.mrb[0].mxu0 %v6709
  %v7031 = vpop.f32.mrb[0].mxu0
  %v7032 = vadd.f32 0.0, %v7031
  %v7033 = vpop.f32.mrb[0].mxu0
  %v7034 = vpop.f32.mrb[0].mxu0
  %v7035 = vadd.f32 0.0, %v7034
  %v7036 = vpop.f32.mrb[0].mxu0
  %7037 = vmatprep.mubr.bf16.mxu0 0
  %7038 = vmatmul.mubr.bf16.gmra.mrb[0].mxu0 %v6712
  %v7039 = vpop.f32.mrb[0].mxu0
  %v7040 = vadd.f32 0.0, %v7039
  %v7041 = vpop.f32.mrb[0].mxu0
  %v7042 = vpop.f32.mrb[0].mxu0
  %v7043 = vadd.f32 0.0, %v7042
  %v7044 = vpop.f32.mrb[0].mxu0
  %7045 = vmatprep.mubr.bf16.mxu0 0
  %7046 = vmatmul.mubr.bf16.gmra.mrb[0].mxu0 %v6715
  %v7047 = vpop.f32.mrb[0].mxu0
  %v7048 = vadd.f32 0.0, %v7047
  %v7049 = vpop.f32.mrb[0].mxu0
  %v7050 = vpop.f32.mrb[0].mxu0
  %v7051 = vadd.f32 0.0, %v7050
  %v7052 = vpop.f32.mrb[0].mxu0
  %7053 = vmatprep.mubr.bf16.mxu0 0
  %7054 = vmatmul.mubr.bf16.gmra.mrb[0].mxu0 %v6718
  %v7055 = vpop.f32.mrb[0].mxu0
  %v7056 = vadd.f32 0.0, %v7055
  %v7057 = vpop.f32.mrb[0].mxu0
  %v7058 = vpop.f32.mrb[0].mxu0
  %v7059 = vadd.f32 0.0, %v7058
  %v7060 = vpop.f32.mrb[0].mxu0
  %7061 = vmatprep.mubr.bf16.mxu0 0
  %7062 = vmatmul.mubr.bf16.gmra.mrb[0].mxu0 %v6721
  %v7063 = vpop.f32.mrb[0].mxu0
  %v7064 = vadd.f32 0.0, %v7063
  %v7065 = vpop.f32.mrb[0].mxu0
  %v7066 = vpop.f32.mrb[0].mxu0
  %v7067 = vadd.f32 0.0, %v7066
  %v7068 = vpop.f32.mrb[0].mxu0
  %7069 = vmatprep.mubr.bf16.mxu0 0
  %7070 = vmatmul.mubr.bf16.gmra.mrb[0].mxu0 %v6724
  %v7071 = vpop.f32.mrb[0].mxu0
  %v7072 = vadd.f32 0.0, %v7071
  %v7073 = vpop.f32.mrb[0].mxu0
  %v7074 = vpop.f32.mrb[0].mxu0
  %v7075 = vadd.f32 0.0, %v7074
  %v7076 = vpop.f32.mrb[0].mxu0
  %7077 = vmatprep.mubr.bf16.mxu0 0
  %7078 = vmatmul.mubr.bf16.gmra.mrb[0].mxu0 %v6727
  %v7079 = vpop.f32.mrb[0].mxu0
  %v7080 = vadd.f32 0.0, %v7079
  %v7081 = vpop.f32.mrb[0].mxu0
  %v7082 = vpop.f32.mrb[0].mxu0
  %v7083 = vadd.f32 0.0, %v7082
  %v7084 = vpop.f32.mrb[0].mxu0
  %7085 = vdwg.mxu0
  %v7086 = vpack.c.bf16 %v6767, %v6764
  %v7087 = vpack.c.bf16 %v6775, %v6772
  %v7088 = vpack.c.bf16 %v6783, %v6780
  %v7089 = vpack.c.bf16 %v6791, %v6788
  %v7090 = vpack.c.bf16 %v6897, %v6894
  %v7091 = vpack.c.bf16 %v6905, %v6902
  %v7092 = vpack.c.bf16 %v6913, %v6910
  %v7093 = vpack.c.bf16 %v6921, %v6918
  %v7095 = vsel %vm689, %v7086, 0
  %v7098 = vsel %vm689, %v7087, 0
  %v7101 = vsel %vm689, %v7088, 0
  %v7104 = vsel %vm689, %v7089, 0
  %v7107 = vsel %vm689, %v7090, 0
  %v7110 = vsel %vm689, %v7091, 0
  %v7113 = vsel %vm689, %v7092, 0
  %v7116 = vsel %vm689, %v7093, 0
  %7118 = vmatprep.subr.bf16.mxu0 0
  %7119 = vmatpush1.bf16.xpose.msra.mxu0 %v7107
  %7120 = vmatprep.subr.bf16.mxu0 0
  %7121 = vmatpush1.bf16.xpose.msra.mxu0 %v7110
  %7122 = vmatprep.subr.bf16.mxu0 0
  %7123 = vmatpush1.bf16.xpose.msra.mxu0 %v7113
  %7124 = vmatprep.subr.bf16.mxu0 0
  %7125 = vmatpush1.bf16.xpose.msra.mxu0 %v7116
  %7126 = vmatprep.subr.bf16.mxu0 0
  %7127 = vmatpush1.bf16.xpose.msra.mxu0 0
  %7128 = vmatprep.subr.bf16.mxu0 0
  %7129 = vmatpush1.bf16.xpose.msra.mxu0 0
  %7130 = vmatprep.subr.bf16.mxu0 0
  %7131 = vmatpush1.bf16.xpose.msra.mxu0 0
  %7132 = vmatprep.subr.bf16.mxu0 0
  %7133 = vmatpush1.bf16.xpose.msra.mxu0 0
  %7134 = vmatprep.subr.bf16.mxu0 0
  %7135 = vmatpush1.bf16.xpose.msra.mxu0 0
  %7136 = vmatprep.subr.bf16.mxu0 0
  %7137 = vmatpush1.bf16.xpose.msra.mxu0 0
  %7138 = vmatprep.subr.bf16.mxu0 0
  %7139 = vmatpush1.bf16.xpose.msra.mxu0 0
  %7140 = vmatprep.subr.bf16.mxu0 0
  %7141 = vmatpush1.bf16.xpose.msra.mxu0 0
  %7142 = vmatprep.subr.bf16.mxu0 0
  %7143 = vmatpush1.bf16.xpose.msra.mxu0 0
  %7144 = vmatprep.subr.bf16.mxu0 0
  %7145 = vmatpush1.bf16.xpose.msra.mxu0 0
  %7146 = vmatprep.subr.bf16.mxu0 0
  %7147 = vmatpush1.bf16.xpose.msra.mxu0 0
  %7148 = vmatprep.subr.bf16.mxu0 0
  %7149 = vmatpush1.bf16.xpose.msra.mxu0 0
  %7150 = vmatprep.mubr.bf16.mxu0 0
  %7151 = vmatmul.mubr.bf16.gmra.mrb[0].mxu0 %v7095
  %v7152 = vpop.f32.mrb[0].mxu0
  %v7153 = vadd.f32 0.0, %v7152
  %v7154 = vpop.f32.mrb[0].mxu0
  %v7155 = vpop.f32.mrb[0].mxu0
  %v7156 = vadd.f32 0.0, %v7155
  %v7157 = vpop.f32.mrb[0].mxu0
  %7158 = vmatprep.mubr.bf16.mxu0 0
  %7159 = vmatmul.mubr.bf16.gmra.mrb[0].mxu0 %v7098
  %v7160 = vpop.f32.mrb[0].mxu0
  %v7161 = vadd.f32 0.0, %v7160
  %v7162 = vpop.f32.mrb[0].mxu0
  %v7163 = vpop.f32.mrb[0].mxu0
  %v7164 = vadd.f32 0.0, %v7163
  %v7165 = vpop.f32.mrb[0].mxu0
  %7166 = vmatprep.mubr.bf16.mxu0 0
  %7167 = vmatmul.mubr.bf16.gmra.mrb[0].mxu0 %v7101
  %v7168 = vpop.f32.mrb[0].mxu0
  %v7169 = vadd.f32 0.0, %v7168
  %v7170 = vpop.f32.mrb[0].mxu0
  %v7171 = vpop.f32.mrb[0].mxu0
  %v7172 = vadd.f32 0.0, %v7171
  %v7173 = vpop.f32.mrb[0].mxu0
  %7174 = vmatprep.mubr.bf16.mxu0 0
  %7175 = vmatmul.mubr.bf16.gmra.mrb[0].mxu0 %v7104
  %v7176 = vpop.f32.mrb[0].mxu0
  %v7177 = vadd.f32 0.0, %v7176
  %v7178 = vpop.f32.mrb[0].mxu0
  %v7179 = vpop.f32.mrb[0].mxu0
  %v7180 = vadd.f32 0.0, %v7179
  %v7181 = vpop.f32.mrb[0].mxu0
  %7182 = vdwg.mxu0
  %v7183 = vmul.f32 %v7153, 0.125
  %v7184 = vmul.f32 %v7156, 0.125
  %v7185 = vmul.f32 %v7161, 0.125
  %v7186 = vmul.f32 %v7164, 0.125
  %v7187 = vmul.f32 %v7169, 0.125
  %v7188 = vmul.f32 %v7172, 0.125
  %v7189 = vmul.f32 %v7177, 0.125
  %v7190 = vmul.f32 %v7180, 0.125
  %v7191 = vsel %vm689, %v7183, -inf
  %7192 = vmax.xlane.f32.xlu0 %v7191
  %v7193 = vpop.xlane.xlu0 %7192
  %v7194 = vsel %vm689, %v7184, -inf
  %7195 = vmax.xlane.f32.xlu0 %v7194
  %v7196 = vpop.xlane.xlu0 %7195
  %v7197 = vsel %vm689, %v7185, -inf
  %7198 = vmax.xlane.f32.xlu0 %v7197
  %v7199 = vpop.xlane.xlu0 %7198
  %v7200 = vsel %vm689, %v7186, -inf
  %7201 = vmax.xlane.f32.xlu0 %v7200
  %v7202 = vpop.xlane.xlu0 %7201
  %v7203 = vsel %vm689, %v7187, -inf
  %7204 = vmax.xlane.f32.xlu0 %v7203
  %v7205 = vpop.xlane.xlu0 %7204
  %v7206 = vsel %vm689, %v7188, -inf
  %7207 = vmax.xlane.f32.xlu0 %v7206
  %v7208 = vpop.xlane.xlu0 %7207
  %v7209 = vsel %vm689, %v7189, -inf
  %7210 = vmax.xlane.f32.xlu0 %v7209
  %v7211 = vpop.xlane.xlu0 %7210
  %v7212 = vsel %vm689, %v7190, -inf
  %7213 = vmax.xlane.f32.xlu0 %v7212
  %v7214 = vpop.xlane.xlu0 %7213
  %v7215 = vsub.f32 %v7183, %v7193
  %v7216 = vsub.f32 %v7184, %v7196
  %v7217 = vsub.f32 %v7185, %v7199
  %v7218 = vsub.f32 %v7186, %v7202
  %v7219 = vsub.f32 %v7187, %v7205
  %v7220 = vsub.f32 %v7188, %v7208
  %v7221 = vsub.f32 %v7189, %v7211
  %v7222 = vsub.f32 %v7190, %v7214
  %v7223 = vmul.f32 %v7215, 1.442695
  %v7224 = vpow.pop %v7223
  %v7225 = vmul.f32 %v7216, 1.442695
  %v7226 = vpow.pop %v7225
  %v7227 = vmul.f32 %v7217, 1.442695
  %v7228 = vpow.pop %v7227
  %v7229 = vmul.f32 %v7218, 1.442695
  %v7230 = vpow.pop %v7229
  %v7231 = vmul.f32 %v7219, 1.442695
  %v7232 = vpow.pop %v7231
  %v7233 = vmul.f32 %v7220, 1.442695
  %v7234 = vpow.pop %v7233
  %v7235 = vmul.f32 %v7221, 1.442695
  %v7236 = vpow.pop %v7235
  %v7237 = vmul.f32 %v7222, 1.442695
  %v7238 = vpow.pop %v7237
  %v7239 = vsel %vm689, %v7224, 0.0
  %7240 = vadd.xlane.f32.xlu0 %v7239
  %v7241 = vpop.xlane.xlu0 %7240
  %v7242 = vsel %vm689, %v7226, 0.0
  %7243 = vadd.xlane.f32.xlu0 %v7242
  %v7244 = vpop.xlane.xlu0 %7243
  %v7245 = vsel %vm689, %v7228, 0.0
  %7246 = vadd.xlane.f32.xlu0 %v7245
  %v7247 = vpop.xlane.xlu0 %7246
  %v7248 = vsel %vm689, %v7230, 0.0
  %7249 = vadd.xlane.f32.xlu0 %v7248
  %v7250 = vpop.xlane.xlu0 %7249
  %v7251 = vsel %vm689, %v7232, 0.0
  %7252 = vadd.xlane.f32.xlu0 %v7251
  %v7253 = vpop.xlane.xlu0 %7252
  %v7254 = vsel %vm689, %v7234, 0.0
  %7255 = vadd.xlane.f32.xlu0 %v7254
  %v7256 = vpop.xlane.xlu0 %7255
  %v7257 = vsel %vm689, %v7236, 0.0
  %7258 = vadd.xlane.f32.xlu0 %v7257
  %v7259 = vpop.xlane.xlu0 %7258
  %v7260 = vsel %vm689, %v7238, 0.0
  %7261 = vadd.xlane.f32.xlu0 %v7260
  %v7262 = vpop.xlane.xlu0 %7261
  %v7263 = vrcp.pop %v7241
  %v7264 = vmul.f32 %v7224, %v7263
  %v7265 = vrcp.pop %v7244
  %v7266 = vmul.f32 %v7226, %v7265
  %v7267 = vrcp.pop %v7247
  %v7268 = vmul.f32 %v7228, %v7267
  %v7269 = vrcp.pop %v7250
  %v7270 = vmul.f32 %v7230, %v7269
  %v7271 = vrcp.pop %v7253
  %v7272 = vmul.f32 %v7232, %v7271
  %v7273 = vrcp.pop %v7256
  %v7274 = vmul.f32 %v7234, %v7273
  %v7275 = vrcp.pop %v7259
  %v7276 = vmul.f32 %v7236, %v7275
  %v7277 = vrcp.pop %v7262
  %v7278 = vmul.f32 %v7238, %v7277
  %v7279 = vpack.c.bf16 %v7266, %v7264
  %v7280 = vpack.c.bf16 %v7270, %v7268
  %v7281 = vpack.c.bf16 %v7274, %v7272
  %v7282 = vpack.c.bf16 %v7278, %v7276
  %v7283 = vpack.c.bf16 %v7027, %v7024
  %v7284 = vpack.c.bf16 %v7035, %v7032
  %v7285 = vpack.c.bf16 %v7043, %v7040
  %v7286 = vpack.c.bf16 %v7051, %v7048
  %v7288 = vsel %vm689, %v7279, 0
  %v7291 = vsel %vm689, %v7280, 0
  %v7294 = vsel %vm689, %v7281, 0
  %v7297 = vsel %vm689, %v7282, 0
  %7299 = vmatprep.subr.bf16.mxu0 0
  %7300 = vmatpush1.bf16.msra.mxu0 %v7283
  %7301 = vmatprep.subr.bf16.mxu0 0
  %7302 = vmatpush1.bf16.msra.mxu0 %v7284
  %7303 = vmatprep.subr.bf16.mxu0 0
  %7304 = vmatpush1.bf16.msra.mxu0 %v7285
  %7305 = vmatprep.subr.bf16.mxu0 0
  %7306 = vmatpush1.bf16.msra.mxu0 %v7286
  %7307 = vmatprep.subr.bf16.mxu0 0
  %7308 = vmatpush1.bf16.msra.mxu0 0
  %7309 = vmatprep.subr.bf16.mxu0 0
  %7310 = vmatpush1.bf16.msra.mxu0 0
  %7311 = vmatprep.subr.bf16.mxu0 0
  %7312 = vmatpush1.bf16.msra.mxu0 0
  %7313 = vmatprep.subr.bf16.mxu0 0
  %7314 = vmatpush1.bf16.msra.mxu0 0
  %7315 = vmatprep.subr.bf16.mxu0 0
  %7316 = vmatpush1.bf16.msra.mxu0 0
  %7317 = vmatprep.subr.bf16.mxu0 0
  %7318 = vmatpush1.bf16.msra.mxu0 0
  %7319 = vmatprep.subr.bf16.mxu0 0
  %7320 = vmatpush1.bf16.msra.mxu0 0
  %7321 = vmatprep.subr.bf16.mxu0 0
  %7322 = vmatpush1.bf16.msra.mxu0 0
  %7323 = vmatprep.subr.bf16.mxu0 0
  %7324 = vmatpush1.bf16.msra.mxu0 0
  %7325 = vmatprep.subr.bf16.mxu0 0
  %7326 = vmatpush1.bf16.msra.mxu0 0
  %7327 = vmatprep.subr.bf16.mxu0 0
  %7328 = vmatpush1.bf16.msra.mxu0 0
  %7329 = vmatprep.subr.bf16.mxu0 0
  %7330 = vmatpush1.bf16.msra.mxu0 0
  %7331 = vmatprep.mubr.bf16.mxu0 0
  %7332 = vmatmul.mubr.bf16.gmra.mrb[0].mxu0 %v7288
  %v7333 = vpop.f32.mrb[0].mxu0
  %v7334 = vadd.f32 0.0, %v7333
  %v7335 = vpop.f32.mrb[0].mxu0
  %v7336 = vpop.f32.mrb[0].mxu0
  %v7337 = vadd.f32 0.0, %v7336
  %v7338 = vpop.f32.mrb[0].mxu0
  %7339 = vmatprep.mubr.bf16.mxu0 0
  %7340 = vmatmul.mubr.bf16.gmra.mrb[0].mxu0 %v7291
  %v7341 = vpop.f32.mrb[0].mxu0
  %v7342 = vadd.f32 0.0, %v7341
  %v7343 = vpop.f32.mrb[0].mxu0
  %v7344 = vpop.f32.mrb[0].mxu0
  %v7345 = vadd.f32 0.0, %v7344
  %v7346 = vpop.f32.mrb[0].mxu0
  %7347 = vmatprep.mubr.bf16.mxu0 0
  %7348 = vmatmul.mubr.bf16.gmra.mrb[0].mxu0 %v7294
  %v7349 = vpop.f32.mrb[0].mxu0
  %v7350 = vadd.f32 0.0, %v7349
  %v7351 = vpop.f32.mrb[0].mxu0
  %v7352 = vpop.f32.mrb[0].mxu0
  %v7353 = vadd.f32 0.0, %v7352
  %v7354 = vpop.f32.mrb[0].mxu0
  %7355 = vmatprep.mubr.bf16.mxu0 0
  %7356 = vmatmul.mubr.bf16.gmra.mrb[0].mxu0 %v7297
  %v7357 = vpop.f32.mrb[0].mxu0
  %v7358 = vadd.f32 0.0, %v7357
  %v7359 = vpop.f32.mrb[0].mxu0
  %v7360 = vpop.f32.mrb[0].mxu0
  %v7361 = vadd.f32 0.0, %v7360
  %v7362 = vpop.f32.mrb[0].mxu0
  %7363 = vdwg.mxu0
  %v7364 = vpack.c.bf16 %v6799, %v6796
  %v7365 = vpack.c.bf16 %v6807, %v6804
  %v7366 = vpack.c.bf16 %v6815, %v6812
  %v7367 = vpack.c.bf16 %v6823, %v6820
  %v7368 = vpack.c.bf16 %v6929, %v6926
  %v7369 = vpack.c.bf16 %v6937, %v6934
  %v7370 = vpack.c.bf16 %v6945, %v6942
  %v7371 = vpack.c.bf16 %v6953, %v6950
  %v7373 = vsel %vm689, %v7364, 0
  %v7376 = vsel %vm689, %v7365, 0
  %v7379 = vsel %vm689, %v7366, 0
  %v7382 = vsel %vm689, %v7367, 0
  %v7385 = vsel %vm689, %v7368, 0
  %v7388 = vsel %vm689, %v7369, 0
  %v7391 = vsel %vm689, %v7370, 0
  %v7394 = vsel %vm689, %v7371, 0
  %7396 = vmatprep.subr.bf16.mxu0 0
  %7397 = vmatpush1.bf16.xpose.msra.mxu0 %v7385
  %7398 = vmatprep.subr.bf16.mxu0 0
  %7399 = vmatpush1.bf16.xpose.msra.mxu0 %v7388
  %7400 = vmatprep.subr.bf16.mxu0 0
  %7401 = vmatpush1.bf16.xpose.msra.mxu0 %v7391
  %7402 = vmatprep.subr.bf16.mxu0 0
  %7403 = vmatpush1.bf16.xpose.msra.mxu0 %v7394
  %7404 = vmatprep.subr.bf16.mxu0 0
  %7405 = vmatpush1.bf16.xpose.msra.mxu0 0
  %7406 = vmatprep.subr.bf16.mxu0 0
  %7407 = vmatpush1.bf16.xpose.msra.mxu0 0
  %7408 = vmatprep.subr.bf16.mxu0 0
  %7409 = vmatpush1.bf16.xpose.msra.mxu0 0
  %7410 = vmatprep.subr.bf16.mxu0 0
  %7411 = vmatpush1.bf16.xpose.msra.mxu0 0
  %7412 = vmatprep.subr.bf16.mxu0 0
  %7413 = vmatpush1.bf16.xpose.msra.mxu0 0
  %7414 = vmatprep.subr.bf16.mxu0 0
  %7415 = vmatpush1.bf16.xpose.msra.mxu0 0
  %7416 = vmatprep.subr.bf16.mxu0 0
  %7417 = vmatpush1.bf16.xpose.msra.mxu0 0
  %7418 = vmatprep.subr.bf16.mxu0 0
  %7419 = vmatpush1.bf16.xpose.msra.mxu0 0
  %7420 = vmatprep.subr.bf16.mxu0 0
  %7421 = vmatpush1.bf16.xpose.msra.mxu0 0
  %7422 = vmatprep.subr.bf16.mxu0 0
  %7423 = vmatpush1.bf16.xpose.msra.mxu0 0
  %7424 = vmatprep.subr.bf16.mxu0 0
  %7425 = vmatpush1.bf16.xpose.msra.mxu0 0
  %7426 = vmatprep.subr.bf16.mxu0 0
  %7427 = vmatpush1.bf16.xpose.msra.mxu0 0
  %7428 = vmatprep.mubr.bf16.mxu0 0
  %7429 = vmatmul.mubr.bf16.gmra.mrb[0].mxu0 %v7373
  %v7430 = vpop.f32.mrb[0].mxu0
  %v7431 = vadd.f32 0.0, %v7430
  %v7432 = vpop.f32.mrb[0].mxu0
  %v7433 = vpop.f32.mrb[0].mxu0
  %v7434 = vadd.f32 0.0, %v7433
  %v7435 = vpop.f32.mrb[0].mxu0
  %7436 = vmatprep.mubr.bf16.mxu0 0
  %7437 = vmatmul.mubr.bf16.gmra.mrb[0].mxu0 %v7376
  %v7438 = vpop.f32.mrb[0].mxu0
  %v7439 = vadd.f32 0.0, %v7438
  %v7440 = vpop.f32.mrb[0].mxu0
  %v7441 = vpop.f32.mrb[0].mxu0
  %v7442 = vadd.f32 0.0, %v7441
  %v7443 = vpop.f32.mrb[0].mxu0
  %7444 = vmatprep.mubr.bf16.mxu0 0
  %7445 = vmatmul.mubr.bf16.gmra.mrb[0].mxu0 %v7379
  %v7446 = vpop.f32.mrb[0].mxu0
  %v7447 = vadd.f32 0.0, %v7446
  %v7448 = vpop.f32.mrb[0].mxu0
  %v7449 = vpop.f32.mrb[0].mxu0
  %v7450 = vadd.f32 0.0, %v7449
  %v7451 = vpop.f32.mrb[0].mxu0
  %7452 = vmatprep.mubr.bf16.mxu0 0
  %7453 = vmatmul.mubr.bf16.gmra.mrb[0].mxu0 %v7382
  %v7454 = vpop.f32.mrb[0].mxu0
  %v7455 = vadd.f32 0.0, %v7454
  %v7456 = vpop.f32.mrb[0].mxu0
  %v7457 = vpop.f32.mrb[0].mxu0
  %v7458 = vadd.f32 0.0, %v7457
  %v7459 = vpop.f32.mrb[0].mxu0
  %7460 = vdwg.mxu0
  %v7461 = vmul.f32 %v7431, 0.125
  %v7462 = vmul.f32 %v7434, 0.125
  %v7463 = vmul.f32 %v7439, 0.125
  %v7464 = vmul.f32 %v7442, 0.125
  %v7465 = vmul.f32 %v7447, 0.125
  %v7466 = vmul.f32 %v7450, 0.125
  %v7467 = vmul.f32 %v7455, 0.125
  %v7468 = vmul.f32 %v7458, 0.125
  %v7469 = vsel %vm689, %v7461, -inf
  %7470 = vmax.xlane.f32.xlu0 %v7469
  %v7471 = vpop.xlane.xlu0 %7470
  %v7472 = vsel %vm689, %v7462, -inf
  %7473 = vmax.xlane.f32.xlu0 %v7472
  %v7474 = vpop.xlane.xlu0 %7473
  %v7475 = vsel %vm689, %v7463, -inf
  %7476 = vmax.xlane.f32.xlu0 %v7475
  %v7477 = vpop.xlane.xlu0 %7476
  %v7478 = vsel %vm689, %v7464, -inf
  %7479 = vmax.xlane.f32.xlu0 %v7478
  %v7480 = vpop.xlane.xlu0 %7479
  %v7481 = vsel %vm689, %v7465, -inf
  %7482 = vmax.xlane.f32.xlu0 %v7481
  %v7483 = vpop.xlane.xlu0 %7482
  %v7484 = vsel %vm689, %v7466, -inf
  %7485 = vmax.xlane.f32.xlu0 %v7484
  %v7486 = vpop.xlane.xlu0 %7485
  %v7487 = vsel %vm689, %v7467, -inf
  %7488 = vmax.xlane.f32.xlu0 %v7487
  %v7489 = vpop.xlane.xlu0 %7488
  %v7490 = vsel %vm689, %v7468, -inf
  %7491 = vmax.xlane.f32.xlu0 %v7490
  %v7492 = vpop.xlane.xlu0 %7491
  %v7493 = vsub.f32 %v7461, %v7471
  %v7494 = vsub.f32 %v7462, %v7474
  %v7495 = vsub.f32 %v7463, %v7477
  %v7496 = vsub.f32 %v7464, %v7480
  %v7497 = vsub.f32 %v7465, %v7483
  %v7498 = vsub.f32 %v7466, %v7486
  %v7499 = vsub.f32 %v7467, %v7489
  %v7500 = vsub.f32 %v7468, %v7492
  %v7501 = vmul.f32 %v7493, 1.442695
  %v7502 = vpow.pop %v7501
  %v7503 = vmul.f32 %v7494, 1.442695
  %v7504 = vpow.pop %v7503
  %v7505 = vmul.f32 %v7495, 1.442695
  %v7506 = vpow.pop %v7505
  %v7507 = vmul.f32 %v7496, 1.442695
  %v7508 = vpow.pop %v7507
  %v7509 = vmul.f32 %v7497, 1.442695
  %v7510 = vpow.pop %v7509
  %v7511 = vmul.f32 %v7498, 1.442695
  %v7512 = vpow.pop %v7511
  %v7513 = vmul.f32 %v7499, 1.442695
  %v7514 = vpow.pop %v7513
  %v7515 = vmul.f32 %v7500, 1.442695
  %v7516 = vpow.pop %v7515
  %v7517 = vsel %vm689, %v7502, 0.0
  %7518 = vadd.xlane.f32.xlu0 %v7517
  %v7519 = vpop.xlane.xlu0 %7518
  %v7520 = vsel %vm689, %v7504, 0.0
  %7521 = vadd.xlane.f32.xlu0 %v7520
  %v7522 = vpop.xlane.xlu0 %7521
  %v7523 = vsel %vm689, %v7506, 0.0
  %7524 = vadd.xlane.f32.xlu0 %v7523
  %v7525 = vpop.xlane.xlu0 %7524
  %v7526 = vsel %vm689, %v7508, 0.0
  %7527 = vadd.xlane.f32.xlu0 %v7526
  %v7528 = vpop.xlane.xlu0 %7527
  %v7529 = vsel %vm689, %v7510, 0.0
  %7530 = vadd.xlane.f32.xlu0 %v7529
  %v7531 = vpop.xlane.xlu0 %7530
  %v7532 = vsel %vm689, %v7512, 0.0
  %7533 = vadd.xlane.f32.xlu0 %v7532
  %v7534 = vpop.xlane.xlu0 %7533
  %v7535 = vsel %vm689, %v7514, 0.0
  %7536 = vadd.xlane.f32.xlu0 %v7535
  %v7537 = vpop.xlane.xlu0 %7536
  %v7538 = vsel %vm689, %v7516, 0.0
  %7539 = vadd.xlane.f32.xlu0 %v7538
  %v7540 = vpop.xlane.xlu0 %7539
  %v7541 = vrcp.pop %v7519
  %v7542 = vmul.f32 %v7502, %v7541
  %v7543 = vrcp.pop %v7522
  %v7544 = vmul.f32 %v7504, %v7543
  %v7545 = vrcp.pop %v7525
  %v7546 = vmul.f32 %v7506, %v7545
  %v7547 = vrcp.pop %v7528
  %v7548 = vmul.f32 %v7508, %v7547
  %v7549 = vrcp.pop %v7531
  %v7550 = vmul.f32 %v7510, %v7549
  %v7551 = vrcp.pop %v7534
  %v7552 = vmul.f32 %v7512, %v7551
  %v7553 = vrcp.pop %v7537
  %v7554 = vmul.f32 %v7514, %v7553
  %v7555 = vrcp.pop %v7540
  %v7556 = vmul.f32 %v7516, %v7555
  %v7557 = vpack.c.bf16 %v7544, %v7542
  %v7558 = vpack.c.bf16 %v7548, %v7546
  %v7559 = vpack.c.bf16 %v7552, %v7550
  %v7560 = vpack.c.bf16 %v7556, %v7554
  %v7561 = vpack.c.bf16 %v7059, %v7056
  %v7562 = vpack.c.bf16 %v7067, %v7064
  %v7563 = vpack.c.bf16 %v7075, %v7072
  %v7564 = vpack.c.bf16 %v7083, %v7080
  %v7566 = vsel %vm689, %v7557, 0
  %v7569 = vsel %vm689, %v7558, 0
  %v7572 = vsel %vm689, %v7559, 0
  %v7575 = vsel %vm689, %v7560, 0
  %7577 = vmatprep.subr.bf16.mxu0 0
  %7578 = vmatpush1.bf16.msra.mxu0 %v7561
  %7579 = vmatprep.subr.bf16.mxu0 0
  %7580 = vmatpush1.bf16.msra.mxu0 %v7562
  %7581 = vmatprep.subr.bf16.mxu0 0
  %7582 = vmatpush1.bf16.msra.mxu0 %v7563
  %7583 = vmatprep.subr.bf16.mxu0 0
  %7584 = vmatpush1.bf16.msra.mxu0 %v7564
  %7585 = vmatprep.subr.bf16.mxu0 0
  %7586 = vmatpush1.bf16.msra.mxu0 0
  %7587 = vmatprep.subr.bf16.mxu0 0
  %7588 = vmatpush1.bf16.msra.mxu0 0
  %7589 = vmatprep.subr.bf16.mxu0 0
  %7590 = vmatpush1.bf16.msra.mxu0 0
  %7591 = vmatprep.subr.bf16.mxu0 0
  %7592 = vmatpush1.bf16.msra.mxu0 0
  %7593 = vmatprep.subr.bf16.mxu0 0
  %7594 = vmatpush1.bf16.msra.mxu0 0
  %7595 = vmatprep.subr.bf16.mxu0 0
  %7596 = vmatpush1.bf16.msra.mxu0 0
  %7597 = vmatprep.subr.bf16.mxu0 0
  %7598 = vmatpush1.bf16.msra.mxu0 0
  %7599 = vmatprep.subr.bf16.mxu0 0
  %7600 = vmatpush1.bf16.msra.mxu0 0
  %7601 = vmatprep.subr.bf16.mxu0 0
  %7602 = vmatpush1.bf16.msra.mxu0 0
  %7603 = vmatprep.subr.bf16.mxu0 0
  %7604 = vmatpush1.bf16.msra.mxu0 0
  %7605 = vmatprep.subr.bf16.mxu0 0
  %7606 = vmatpush1.bf16.msra.mxu0 0
  %7607 = vmatprep.subr.bf16.mxu0 0
  %7608 = vmatpush1.bf16.msra.mxu0 0
  %7609 = vmatprep.mubr.bf16.mxu0 0
  %7610 = vmatmul.mubr.bf16.gmra.mrb[0].mxu0 %v7566
  %v7611 = vpop.f32.mrb[0].mxu0
  %v7612 = vadd.f32 0.0, %v7611
  %v7613 = vpop.f32.mrb[0].mxu0
  %v7614 = vpop.f32.mrb[0].mxu0
  %v7615 = vadd.f32 0.0, %v7614
  %v7616 = vpop.f32.mrb[0].mxu0
  %7617 = vmatprep.mubr.bf16.mxu0 0
  %7618 = vmatmul.mubr.bf16.gmra.mrb[0].mxu0 %v7569
  %v7619 = vpop.f32.mrb[0].mxu0
  %v7620 = vadd.f32 0.0, %v7619
  %v7621 = vpop.f32.mrb[0].mxu0
  %v7622 = vpop.f32.mrb[0].mxu0
  %v7623 = vadd.f32 0.0, %v7622
  %v7624 = vpop.f32.mrb[0].mxu0
  %7625 = vmatprep.mubr.bf16.mxu0 0
  %7626 = vmatmul.mubr.bf16.gmra.mrb[0].mxu0 %v7572
  %v7627 = vpop.f32.mrb[0].mxu0
  %v7628 = vadd.f32 0.0, %v7627
  %v7629 = vpop.f32.mrb[0].mxu0
  %v7630 = vpop.f32.mrb[0].mxu0
  %v7631 = vadd.f32 0.0, %v7630
  %v7632 = vpop.f32.mrb[0].mxu0
  %7633 = vmatprep.mubr.bf16.mxu0 0
  %7634 = vmatmul.mubr.bf16.gmra.mrb[0].mxu0 %v7575
  %v7635 = vpop.f32.mrb[0].mxu0
  %v7636 = vadd.f32 0.0, %v7635
  %v7637 = vpop.f32.mrb[0].mxu0
  %v7638 = vpop.f32.mrb[0].mxu0
  %v7639 = vadd.f32 0.0, %v7638
  %v7640 = vpop.f32.mrb[0].mxu0
  %7641 = vdwg.mxu0
  %v7642 = vadd.f32 %v6398, %v7334
  %v7643 = vadd.f32 %v6399, %v7337
  %v7644 = vadd.f32 %v6400, %v7342
  %v7645 = vadd.f32 %v6401, %v7345
  %v7646 = vadd.f32 %v6402, %v7350
  %v7647 = vadd.f32 %v6403, %v7353
  %v7648 = vadd.f32 %v6404, %v7358
  %v7649 = vadd.f32 %v6405, %v7361
  %v7650 = vadd.f32 %v6406, %v7612
  %v7651 = vadd.f32 %v6407, %v7615
  %v7652 = vadd.f32 %v6408, %v7620
  %v7653 = vadd.f32 %v6409, %v7623
  %v7654 = vadd.f32 %v6410, %v7628
  %v7655 = vadd.f32 %v6411, %v7631
  %v7656 = vadd.f32 %v6412, %v7636
  %v7657 = vadd.f32 %v6413, %v7639
  %v7658 = vld [vmem:[%s35 + $0x1] sm:$0x1]
  %v7659 = vld [vmem:[%s37 + $0x1] sm:$0x1]
  %v7660 = vsel %vm689, %v7642, 0.0
  %7661 = vadd.xlane.f32.xlu0 %v7660
  %v7662 = vpop.xlane.xlu0 %7661
  %v7663 = vsel %vm689, %v7643, 0.0
  %7664 = vadd.xlane.f32.xlu0 %v7663
  %v7665 = vpop.xlane.xlu0 %7664
  %v7666 = vsel %vm689, %v7644, 0.0
  %7667 = vadd.xlane.f32.xlu0 %v7666
  %v7668 = vpop.xlane.xlu0 %7667
  %v7669 = vsel %vm689, %v7645, 0.0
  %7670 = vadd.xlane.f32.xlu0 %v7669
  %v7671 = vpop.xlane.xlu0 %7670
  %v7672 = vsel %vm689, %v7646, 0.0
  %7673 = vadd.xlane.f32.xlu0 %v7672
  %v7674 = vpop.xlane.xlu0 %7673
  %v7675 = vsel %vm689, %v7647, 0.0
  %7676 = vadd.xlane.f32.xlu0 %v7675
  %v7677 = vpop.xlane.xlu0 %7676
  %v7678 = vsel %vm689, %v7648, 0.0
  %7679 = vadd.xlane.f32.xlu0 %v7678
  %v7680 = vpop.xlane.xlu0 %7679
  %v7681 = vsel %vm689, %v7649, 0.0
  %7682 = vadd.xlane.f32.xlu0 %v7681
  %v7683 = vpop.xlane.xlu0 %7682
  %v7684 = vsel %vm689, %v7650, 0.0
  %7685 = vadd.xlane.f32.xlu0 %v7684
  %v7686 = vpop.xlane.xlu0 %7685
  %v7687 = vsel %vm689, %v7651, 0.0
  %7688 = vadd.xlane.f32.xlu0 %v7687
  %v7689 = vpop.xlane.xlu0 %7688
  %v7690 = vsel %vm689, %v7652, 0.0
  %7691 = vadd.xlane.f32.xlu0 %v7690
  %v7692 = vpop.xlane.xlu0 %7691
  %v7693 = vsel %vm689, %v7653, 0.0
  %7694 = vadd.xlane.f32.xlu0 %v7693
  %v7695 = vpop.xlane.xlu0 %7694
  %v7696 = vsel %vm689, %v7654, 0.0
  %7697 = vadd.xlane.f32.xlu0 %v7696
  %v7698 = vpop.xlane.xlu0 %7697
  %v7699 = vsel %vm689, %v7655, 0.0
  %7700 = vadd.xlane.f32.xlu0 %v7699
  %v7701 = vpop.xlane.xlu0 %7700
  %v7702 = vsel %vm689, %v7656, 0.0
  %7703 = vadd.xlane.f32.xlu0 %v7702
  %v7704 = vpop.xlane.xlu0 %7703
  %v7705 = vsel %vm689, %v7657, 0.0
  %7706 = vadd.xlane.f32.xlu0 %v7705
  %v7707 = vpop.xlane.xlu0 %7706
  %v7708 = vmul.f32 %v7662, %v738
  %v7709 = vmul.f32 %v7665, %v738
  %v7710 = vmul.f32 %v7668, %v738
  %v7711 = vmul.f32 %v7671, %v738
  %v7712 = vmul.f32 %v7674, %v738
  %v7713 = vmul.f32 %v7677, %v738
  %v7714 = vmul.f32 %v7680, %v738
  %v7715 = vmul.f32 %v7683, %v738
  %v7716 = vmul.f32 %v7686, %v738
  %v7717 = vmul.f32 %v7689, %v738
  %v7718 = vmul.f32 %v7692, %v738
  %v7719 = vmul.f32 %v7695, %v738
  %v7720 = vmul.f32 %v7698, %v738
  %v7721 = vmul.f32 %v7701, %v738
  %v7722 = vmul.f32 %v7704, %v738
  %v7723 = vmul.f32 %v7707, %v738
  %v7724 = vsub.f32 %v7642, %v7708
  %v7725 = vsub.f32 %v7643, %v7709
  %v7726 = vsub.f32 %v7644, %v7710
  %v7727 = vsub.f32 %v7645, %v7711
  %v7728 = vsub.f32 %v7646, %v7712
  %v7729 = vsub.f32 %v7647, %v7713
  %v7730 = vsub.f32 %v7648, %v7714
  %v7731 = vsub.f32 %v7649, %v7715
  %v7732 = vsub.f32 %v7650, %v7716
  %v7733 = vsub.f32 %v7651, %v7717
  %v7734 = vsub.f32 %v7652, %v7718
  %v7735 = vsub.f32 %v7653, %v7719
  %v7736 = vsub.f32 %v7654, %v7720
  %v7737 = vsub.f32 %v7655, %v7721
  %v7738 = vsub.f32 %v7656, %v7722
  %v7739 = vsub.f32 %v7657, %v7723
  %v7740 = vmul.f32 %v7724, %v7724
  %v7741 = vmul.f32 %v7725, %v7725
  %v7742 = vmul.f32 %v7726, %v7726
  %v7743 = vmul.f32 %v7727, %v7727
  %v7744 = vmul.f32 %v7728, %v7728
  %v7745 = vmul.f32 %v7729, %v7729
  %v7746 = vmul.f32 %v7730, %v7730
  %v7747 = vmul.f32 %v7731, %v7731
  %v7748 = vmul.f32 %v7732, %v7732
  %v7749 = vmul.f32 %v7733, %v7733
  %v7750 = vmul.f32 %v7734, %v7734
  %v7751 = vmul.f32 %v7735, %v7735
  %v7752 = vmul.f32 %v7736, %v7736
  %v7753 = vmul.f32 %v7737, %v7737
  %v7754 = vmul.f32 %v7738, %v7738
  %v7755 = vmul.f32 %v7739, %v7739
  %v7756 = vsel %vm689, %v7740, 0.0
  %7757 = vadd.xlane.f32.xlu0 %v7756
  %v7758 = vpop.xlane.xlu0 %7757
  %v7759 = vsel %vm689, %v7741, 0.0
  %7760 = vadd.xlane.f32.xlu0 %v7759
  %v7761 = vpop.xlane.xlu0 %7760
  %v7762 = vsel %vm689, %v7742, 0.0
  %7763 = vadd.xlane.f32.xlu0 %v7762
  %v7764 = vpop.xlane.xlu0 %7763
  %v7765 = vsel %vm689, %v7743, 0.0
  %7766 = vadd.xlane.f32.xlu0 %v7765
  %v7767 = vpop.xlane.xlu0 %7766
  %v7768 = vsel %vm689, %v7744, 0.0
  %7769 = vadd.xlane.f32.xlu0 %v7768
  %v7770 = vpop.xlane.xlu0 %7769
  %v7771 = vsel %vm689, %v7745, 0.0
  %7772 = vadd.xlane.f32.xlu0 %v7771
  %v7773 = vpop.xlane.xlu0 %7772
  %v7774 = vsel %vm689, %v7746, 0.0
  %7775 = vadd.xlane.f32.xlu0 %v7774
  %v7776 = vpop.xlane.xlu0 %7775
  %v7777 = vsel %vm689, %v7747, 0.0
  %7778 = vadd.xlane.f32.xlu0 %v7777
  %v7779 = vpop.xlane.xlu0 %7778
  %v7780 = vsel %vm689, %v7748, 0.0
  %7781 = vadd.xlane.f32.xlu0 %v7780
  %v7782 = vpop.xlane.xlu0 %7781
  %v7783 = vsel %vm689, %v7749, 0.0
  %7784 = vadd.xlane.f32.xlu0 %v7783
  %v7785 = vpop.xlane.xlu0 %7784
  %v7786 = vsel %vm689, %v7750, 0.0
  %7787 = vadd.xlane.f32.xlu0 %v7786
  %v7788 = vpop.xlane.xlu0 %7787
  %v7789 = vsel %vm689, %v7751, 0.0
  %7790 = vadd.xlane.f32.xlu0 %v7789
  %v7791 = vpop.xlane.xlu0 %7790
  %v7792 = vsel %vm689, %v7752, 0.0
  %7793 = vadd.xlane.f32.xlu0 %v7792
  %v7794 = vpop.xlane.xlu0 %7793
  %v7795 = vsel %vm689, %v7753, 0.0
  %7796 = vadd.xlane.f32.xlu0 %v7795
  %v7797 = vpop.xlane.xlu0 %7796
  %v7798 = vsel %vm689, %v7754, 0.0
  %7799 = vadd.xlane.f32.xlu0 %v7798
  %v7800 = vpop.xlane.xlu0 %7799
  %v7801 = vsel %vm689, %v7755, 0.0
  %7802 = vadd.xlane.f32.xlu0 %v7801
  %v7803 = vpop.xlane.xlu0 %7802
  %v7804 = vmul.f32 %v7758, %v738
  %v7805 = vmul.f32 %v7761, %v738
  %v7806 = vmul.f32 %v7764, %v738
  %v7807 = vmul.f32 %v7767, %v738
  %v7808 = vmul.f32 %v7770, %v738
  %v7809 = vmul.f32 %v7773, %v738
  %v7810 = vmul.f32 %v7776, %v738
  %v7811 = vmul.f32 %v7779, %v738
  %v7812 = vmul.f32 %v7782, %v738
  %v7813 = vmul.f32 %v7785, %v738
  %v7814 = vmul.f32 %v7788, %v738
  %v7815 = vmul.f32 %v7791, %v738
  %v7816 = vmul.f32 %v7794, %v738
  %v7817 = vmul.f32 %v7797, %v738
  %v7818 = vmul.f32 %v7800, %v738
  %v7819 = vmul.f32 %v7803, %v738
  %v7820 = vadd.f32 %v7804, 1e-05
  %v7821 = vadd.f32 %v7805, 1e-05
  %v7822 = vadd.f32 %v7806, 1e-05
  %v7823 = vadd.f32 %v7807, 1e-05
  %v7824 = vadd.f32 %v7808, 1e-05
  %v7825 = vadd.f32 %v7809, 1e-05
  %v7826 = vadd.f32 %v7810, 1e-05
  %v7827 = vadd.f32 %v7811, 1e-05
  %v7828 = vadd.f32 %v7812, 1e-05
  %v7829 = vadd.f32 %v7813, 1e-05
  %v7830 = vadd.f32 %v7814, 1e-05
  %v7831 = vadd.f32 %v7815, 1e-05
  %v7832 = vadd.f32 %v7816, 1e-05
  %v7833 = vadd.f32 %v7817, 1e-05
  %v7834 = vadd.f32 %v7818, 1e-05
  %v7835 = vadd.f32 %v7819, 1e-05
  %v7836 = vrsqrt.pop %v7820
  %v7837 = vrsqrt.pop %v7821
  %v7838 = vrsqrt.pop %v7822
  %v7839 = vrsqrt.pop %v7823
  %v7840 = vrsqrt.pop %v7824
  %v7841 = vrsqrt.pop %v7825
  %v7842 = vrsqrt.pop %v7826
  %v7843 = vrsqrt.pop %v7827
  %v7844 = vrsqrt.pop %v7828
  %v7845 = vrsqrt.pop %v7829
  %v7846 = vrsqrt.pop %v7830
  %v7847 = vrsqrt.pop %v7831
  %v7848 = vrsqrt.pop %v7832
  %v7849 = vrsqrt.pop %v7833
  %v7850 = vrsqrt.pop %v7834
  %v7851 = vrsqrt.pop %v7835
  %v7852 = vmul.f32 %v7724, %v7836
  %v7853 = vmul.f32 %v7725, %v7837
  %v7854 = vmul.f32 %v7726, %v7838
  %v7855 = vmul.f32 %v7727, %v7839
  %v7856 = vmul.f32 %v7728, %v7840
  %v7857 = vmul.f32 %v7729, %v7841
  %v7858 = vmul.f32 %v7730, %v7842
  %v7859 = vmul.f32 %v7731, %v7843
  %v7860 = vmul.f32 %v7732, %v7844
  %v7861 = vmul.f32 %v7733, %v7845
  %v7862 = vmul.f32 %v7734, %v7846
  %v7863 = vmul.f32 %v7735, %v7847
  %v7864 = vmul.f32 %v7736, %v7848
  %v7865 = vmul.f32 %v7737, %v7849
  %v7866 = vmul.f32 %v7738, %v7850
  %v7867 = vmul.f32 %v7739, %v7851
  %v7868 = vlaneseq
  %v7869 = vshrl.u32 %v7868, 7
  %v7870 = vsub.s32 0, %v7869
  %v7871 = vrot.slane %v7658, %v7870
  %v7872 = vmul.f32 %v7852, %v7871
  %v7873 = vmul.f32 %v7853, %v7871
  %v7874 = vmul.f32 %v7854, %v7871
  %v7875 = vmul.f32 %v7855, %v7871
  %v7876 = vmul.f32 %v7856, %v7871
  %v7877 = vmul.f32 %v7857, %v7871
  %v7878 = vmul.f32 %v7858, %v7871
  %v7879 = vmul.f32 %v7859, %v7871
  %v7880 = vmul.f32 %v7860, %v7871
  %v7881 = vmul.f32 %v7861, %v7871
  %v7882 = vmul.f32 %v7862, %v7871
  %v7883 = vmul.f32 %v7863, %v7871
  %v7884 = vmul.f32 %v7864, %v7871
  %v7885 = vmul.f32 %v7865, %v7871
  %v7886 = vmul.f32 %v7866, %v7871
  %v7887 = vmul.f32 %v7867, %v7871
  %v7888 = vlaneseq
  %v7889 = vshrl.u32 %v7888, 7
  %v7890 = vsub.s32 0, %v7889
  %v7891 = vrot.slane %v7659, %v7890
  %v7892 = vadd.f32 %v7872, %v7891
  %v7893 = vadd.f32 %v7873, %v7891
  %v7894 = vadd.f32 %v7874, %v7891
  %v7895 = vadd.f32 %v7875, %v7891
  %v7896 = vadd.f32 %v7876, %v7891
  %v7897 = vadd.f32 %v7877, %v7891
  %v7898 = vadd.f32 %v7878, %v7891
  %v7899 = vadd.f32 %v7879, %v7891
  %v7900 = vadd.f32 %v7880, %v7891
  %v7901 = vadd.f32 %v7881, %v7891
  %v7902 = vadd.f32 %v7882, %v7891
  %v7903 = vadd.f32 %v7883, %v7891
  %v7904 = vadd.f32 %v7884, %v7891
  %v7905 = vadd.f32 %v7885, %v7891
  %v7906 = vadd.f32 %v7886, %v7891
  %v7907 = vadd.f32 %v7887, %v7891
  %s7908 = scalar_lea.vmem %s39, 32
  %v7909 = vld [vmem:[%s7908] sm:$0xf]
  %v7910 = vld [vmem:[%s7908 + $0x4] sm:$0xf]
  %v7911 = vld [vmem:[%s7908 + $0x8] sm:$0xf]
  %v7912 = vld [vmem:[%s7908 + $0xc] sm:$0xf]
  %v7913 = vld [vmem:[%s7908 + $0x10] sm:$0xf]
  %v7914 = vld [vmem:[%s7908 + $0x14] sm:$0xf]
  %v7915 = vld [vmem:[%s7908 + $0x18] sm:$0xf]
  %v7916 = vld [vmem:[%s7908 + $0x1c] sm:$0xf]
  %v7917 = vpack.c.bf16 %v7893, %v7892
  %v7918 = vpack.c.bf16 %v7895, %v7894
  %v7919 = vpack.c.bf16 %v7897, %v7896
  %v7920 = vpack.c.bf16 %v7899, %v7898
  %v7921 = vpack.c.bf16 %v7901, %v7900
  %v7922 = vpack.c.bf16 %v7903, %v7902
  %v7923 = vpack.c.bf16 %v7905, %v7904
  %v7924 = vpack.c.bf16 %v7907, %v7906
  %v7933 = vunpack.c.l.b16 %v7909
  %v7934 = vunpack.c.l.b16 %v7910
  %v7935 = vunpack.c.l.b16 %v7911
  %v7936 = vunpack.c.l.b16 %v7912
  %v7937 = vunpack.c.l.b16 %v7913
  %v7938 = vunpack.c.l.b16 %v7914
  %v7939 = vunpack.c.l.b16 %v7915
  %v7940 = vunpack.c.l.b16 %v7916
  %v7941 = vpack.c.b16 %v7934, %v7933
  %v7942 = vpack.c.b16 %v7936, %v7935
  %v7943 = vpack.c.b16 %v7938, %v7937
  %v7944 = vpack.c.b16 %v7940, %v7939
  %v7950 = vsel %vm689, %v7917, 0
  %v7953 = vsel %vm689, %v7918, 0
  %v7956 = vsel %vm689, %v7919, 0
  %v7959 = vsel %vm689, %v7920, 0
  %v7962 = vsel %vm689, %v7921, 0
  %v7965 = vsel %vm689, %v7922, 0
  %v7968 = vsel %vm689, %v7923, 0
  %v7971 = vsel %vm689, %v7924, 0
  %7973 = vmatprep.subr.bf16.mxu0 0
  %7974 = vmatpush1.bf16.msra.mxu0 %v7941
  %7975 = vmatprep.subr.bf16.mxu0 0
  %7976 = vmatpush1.bf16.msra.mxu0 %v7942
  %7977 = vmatprep.subr.bf16.mxu0 0
  %7978 = vmatpush1.bf16.msra.mxu0 %v7943
  %7979 = vmatprep.subr.bf16.mxu0 0
  %7980 = vmatpush1.bf16.msra.mxu0 %v7944
  %7981 = vmatprep.subr.bf16.mxu0 0
  %7982 = vmatpush1.bf16.msra.mxu0 0
  %7983 = vmatprep.subr.bf16.mxu0 0
  %7984 = vmatpush1.bf16.msra.mxu0 0
  %7985 = vmatprep.subr.bf16.mxu0 0
  %7986 = vmatpush1.bf16.msra.mxu0 0
  %7987 = vmatprep.subr.bf16.mxu0 0
  %7988 = vmatpush1.bf16.msra.mxu0 0
  %7989 = vmatprep.subr.bf16.mxu0 0
  %7990 = vmatpush1.bf16.msra.mxu0 0
  %7991 = vmatprep.subr.bf16.mxu0 0
  %7992 = vmatpush1.bf16.msra.mxu0 0
  %7993 = vmatprep.subr.bf16.mxu0 0
  %7994 = vmatpush1.bf16.msra.mxu0 0
  %7995 = vmatprep.subr.bf16.mxu0 0
  %7996 = vmatpush1.bf16.msra.mxu0 0
  %7997 = vmatprep.subr.bf16.mxu0 0
  %7998 = vmatpush1.bf16.msra.mxu0 0
  %7999 = vmatprep.subr.bf16.mxu0 0
  %8000 = vmatpush1.bf16.msra.mxu0 0
  %8001 = vmatprep.subr.bf16.mxu0 0
  %8002 = vmatpush1.bf16.msra.mxu0 0
  %8003 = vmatprep.subr.bf16.mxu0 0
  %8004 = vmatpush1.bf16.msra.mxu0 0
  %8005 = vmatprep.mubr.bf16.mxu0 0
  %8006 = vmatmul.mubr.bf16.gmra.mrb[0].mxu0 %v7950
  %v8007 = vpop.f32.mrb[0].mxu0
  %v8008 = vadd.f32 0.0, %v8007
  %v8009 = vpop.f32.mrb[0].mxu0
  %v8010 = vpop.f32.mrb[0].mxu0
  %v8011 = vadd.f32 0.0, %v8010
  %v8012 = vpop.f32.mrb[0].mxu0
  %8013 = vmatprep.mubr.bf16.mxu0 0
  %8014 = vmatmul.mubr.bf16.gmra.mrb[0].mxu0 %v7953
  %v8015 = vpop.f32.mrb[0].mxu0
  %v8016 = vadd.f32 0.0, %v8015
  %v8017 = vpop.f32.mrb[0].mxu0
  %v8018 = vpop.f32.mrb[0].mxu0
  %v8019 = vadd.f32 0.0, %v8018
  %v8020 = vpop.f32.mrb[0].mxu0
  %8021 = vmatprep.mubr.bf16.mxu0 0
  %8022 = vmatmul.mubr.bf16.gmra.mrb[0].mxu0 %v7956
  %v8023 = vpop.f32.mrb[0].mxu0
  %v8024 = vadd.f32 0.0, %v8023
  %v8025 = vpop.f32.mrb[0].mxu0
  %v8026 = vpop.f32.mrb[0].mxu0
  %v8027 = vadd.f32 0.0, %v8026
  %v8028 = vpop.f32.mrb[0].mxu0
  %8029 = vmatprep.mubr.bf16.mxu0 0
  %8030 = vmatmul.mubr.bf16.gmra.mrb[0].mxu0 %v7959
  %v8031 = vpop.f32.mrb[0].mxu0
  %v8032 = vadd.f32 0.0, %v8031
  %v8033 = vpop.f32.mrb[0].mxu0
  %v8034 = vpop.f32.mrb[0].mxu0
  %v8035 = vadd.f32 0.0, %v8034
  %v8036 = vpop.f32.mrb[0].mxu0
  %8037 = vmatprep.mubr.bf16.mxu0 0
  %8038 = vmatmul.mubr.bf16.gmra.mrb[0].mxu0 %v7962
  %v8039 = vpop.f32.mrb[0].mxu0
  %v8040 = vadd.f32 0.0, %v8039
  %v8041 = vpop.f32.mrb[0].mxu0
  %v8042 = vpop.f32.mrb[0].mxu0
  %v8043 = vadd.f32 0.0, %v8042
  %v8044 = vpop.f32.mrb[0].mxu0
  %8045 = vmatprep.mubr.bf16.mxu0 0
  %8046 = vmatmul.mubr.bf16.gmra.mrb[0].mxu0 %v7965
  %v8047 = vpop.f32.mrb[0].mxu0
  %v8048 = vadd.f32 0.0, %v8047
  %v8049 = vpop.f32.mrb[0].mxu0
  %v8050 = vpop.f32.mrb[0].mxu0
  %v8051 = vadd.f32 0.0, %v8050
  %v8052 = vpop.f32.mrb[0].mxu0
  %8053 = vmatprep.mubr.bf16.mxu0 0
  %8054 = vmatmul.mubr.bf16.gmra.mrb[0].mxu0 %v7968
  %v8055 = vpop.f32.mrb[0].mxu0
  %v8056 = vadd.f32 0.0, %v8055
  %v8057 = vpop.f32.mrb[0].mxu0
  %v8058 = vpop.f32.mrb[0].mxu0
  %v8059 = vadd.f32 0.0, %v8058
  %v8060 = vpop.f32.mrb[0].mxu0
  %8061 = vmatprep.mubr.bf16.mxu0 0
  %8062 = vmatmul.mubr.bf16.gmra.mrb[0].mxu0 %v7971
  %v8063 = vpop.f32.mrb[0].mxu0
  %v8064 = vadd.f32 0.0, %v8063
  %v8065 = vpop.f32.mrb[0].mxu0
  %v8066 = vpop.f32.mrb[0].mxu0
  %v8067 = vadd.f32 0.0, %v8066
  %v8068 = vpop.f32.mrb[0].mxu0
  %8069 = vdwg.mxu0
  %s8070 = scalar_lea.vmem %s41, 32
  %v8071 = vld [vmem:[%s8070] sm:$0xf]
  %v8072 = vld [vmem:[%s8070 + $0x4] sm:$0xf]
  %v8073 = vld [vmem:[%s8070 + $0x8] sm:$0xf]
  %v8074 = vld [vmem:[%s8070 + $0xc] sm:$0xf]
  %v8075 = vld [vmem:[%s8070 + $0x10] sm:$0xf]
  %v8076 = vld [vmem:[%s8070 + $0x14] sm:$0xf]
  %v8077 = vld [vmem:[%s8070 + $0x18] sm:$0xf]
  %v8078 = vld [vmem:[%s8070 + $0x1c] sm:$0xf]
  %v8087 = vunpack.c.l.b16 %v8071
  %v8088 = vunpack.c.l.b16 %v8072
  %v8089 = vunpack.c.l.b16 %v8073
  %v8090 = vunpack.c.l.b16 %v8074
  %v8091 = vunpack.c.l.b16 %v8075
  %v8092 = vunpack.c.l.b16 %v8076
  %v8093 = vunpack.c.l.b16 %v8077
  %v8094 = vunpack.c.l.b16 %v8078
  %v8095 = vpack.c.b16 %v8088, %v8087
  %v8096 = vpack.c.b16 %v8090, %v8089
  %v8097 = vpack.c.b16 %v8092, %v8091
  %v8098 = vpack.c.b16 %v8094, %v8093
  %8103 = vmatprep.subr.bf16.mxu0 0
  %8104 = vmatpush1.bf16.msra.mxu0 %v8095
  %8105 = vmatprep.subr.bf16.mxu0 0
  %8106 = vmatpush1.bf16.msra.mxu0 %v8096
  %8107 = vmatprep.subr.bf16.mxu0 0
  %8108 = vmatpush1.bf16.msra.mxu0 %v8097
  %8109 = vmatprep.subr.bf16.mxu0 0
  %8110 = vmatpush1.bf16.msra.mxu0 %v8098
  %8111 = vmatprep.subr.bf16.mxu0 0
  %8112 = vmatpush1.bf16.msra.mxu0 0
  %8113 = vmatprep.subr.bf16.mxu0 0
  %8114 = vmatpush1.bf16.msra.mxu0 0
  %8115 = vmatprep.subr.bf16.mxu0 0
  %8116 = vmatpush1.bf16.msra.mxu0 0
  %8117 = vmatprep.subr.bf16.mxu0 0
  %8118 = vmatpush1.bf16.msra.mxu0 0
  %8119 = vmatprep.subr.bf16.mxu0 0
  %8120 = vmatpush1.bf16.msra.mxu0 0
  %8121 = vmatprep.subr.bf16.mxu0 0
  %8122 = vmatpush1.bf16.msra.mxu0 0
  %8123 = vmatprep.subr.bf16.mxu0 0
  %8124 = vmatpush1.bf16.msra.mxu0 0
  %8125 = vmatprep.subr.bf16.mxu0 0
  %8126 = vmatpush1.bf16.msra.mxu0 0
  %8127 = vmatprep.subr.bf16.mxu0 0
  %8128 = vmatpush1.bf16.msra.mxu0 0
  %8129 = vmatprep.subr.bf16.mxu0 0
  %8130 = vmatpush1.bf16.msra.mxu0 0
  %8131 = vmatprep.subr.bf16.mxu0 0
  %8132 = vmatpush1.bf16.msra.mxu0 0
  %8133 = vmatprep.subr.bf16.mxu0 0
  %8134 = vmatpush1.bf16.msra.mxu0 0
  %8135 = vmatprep.mubr.bf16.mxu0 0
  %8136 = vmatmul.mubr.bf16.gmra.mrb[0].mxu0 %v2662
  %v8137 = vpop.f32.mrb[0].mxu0
  %v8138 = vadd.f32 0.0, %v8137
  %v8139 = vpop.f32.mrb[0].mxu0
  %v8140 = vpop.f32.mrb[0].mxu0
  %v8141 = vpop.f32.mrb[0].mxu0
  %8142 = vdwg.mxu0
  %s8143 = scalar_lea.vmem %s43, 32
  %v8144 = vld [vmem:[%s8143] sm:$0xf]
  %v8145 = vld [vmem:[%s8143 + $0x4] sm:$0xf]
  %v8146 = vld [vmem:[%s8143 + $0x8] sm:$0xf]
  %v8147 = vld [vmem:[%s8143 + $0xc] sm:$0xf]
  %v8148 = vld [vmem:[%s8143 + $0x10] sm:$0xf]
  %v8149 = vld [vmem:[%s8143 + $0x14] sm:$0xf]
  %v8150 = vld [vmem:[%s8143 + $0x18] sm:$0xf]
  %v8151 = vld [vmem:[%s8143 + $0x1c] sm:$0xf]
  %v8160 = vunpack.c.l.b16 %v8144
  %v8161 = vunpack.c.l.b16 %v8145
  %v8162 = vunpack.c.l.b16 %v8146
  %v8163 = vunpack.c.l.b16 %v8147
  %v8164 = vunpack.c.l.b16 %v8148
  %v8165 = vunpack.c.l.b16 %v8149
  %v8166 = vunpack.c.l.b16 %v8150
  %v8167 = vunpack.c.l.b16 %v8151
  %v8168 = vpack.c.b16 %v8161, %v8160
  %v8169 = vpack.c.b16 %v8163, %v8162
  %v8170 = vpack.c.b16 %v8165, %v8164
  %v8171 = vpack.c.b16 %v8167, %v8166
  %8176 = vmatprep.subr.bf16.mxu0 0
  %8177 = vmatpush1.bf16.msra.mxu0 %v8168
  %8178 = vmatprep.subr.bf16.mxu0 0
  %8179 = vmatpush1.bf16.msra.mxu0 %v8169
  %8180 = vmatprep.subr.bf16.mxu0 0
  %8181 = vmatpush1.bf16.msra.mxu0 %v8170
  %8182 = vmatprep.subr.bf16.mxu0 0
  %8183 = vmatpush1.bf16.msra.mxu0 %v8171
  %8184 = vmatprep.subr.bf16.mxu0 0
  %8185 = vmatpush1.bf16.msra.mxu0 0
  %8186 = vmatprep.subr.bf16.mxu0 0
  %8187 = vmatpush1.bf16.msra.mxu0 0
  %8188 = vmatprep.subr.bf16.mxu0 0
  %8189 = vmatpush1.bf16.msra.mxu0 0
  %8190 = vmatprep.subr.bf16.mxu0 0
  %8191 = vmatpush1.bf16.msra.mxu0 0
  %8192 = vmatprep.subr.bf16.mxu0 0
  %8193 = vmatpush1.bf16.msra.mxu0 0
  %8194 = vmatprep.subr.bf16.mxu0 0
  %8195 = vmatpush1.bf16.msra.mxu0 0
  %8196 = vmatprep.subr.bf16.mxu0 0
  %8197 = vmatpush1.bf16.msra.mxu0 0
  %8198 = vmatprep.subr.bf16.mxu0 0
  %8199 = vmatpush1.bf16.msra.mxu0 0
  %8200 = vmatprep.subr.bf16.mxu0 0
  %8201 = vmatpush1.bf16.msra.mxu0 0
  %8202 = vmatprep.subr.bf16.mxu0 0
  %8203 = vmatpush1.bf16.msra.mxu0 0
  %8204 = vmatprep.subr.bf16.mxu0 0
  %8205 = vmatpush1.bf16.msra.mxu0 0
  %8206 = vmatprep.subr.bf16.mxu0 0
  %8207 = vmatpush1.bf16.msra.mxu0 0
  %8208 = vmatprep.mubr.bf16.mxu0 0
  %8209 = vmatmul.mubr.bf16.gmra.mrb[0].mxu0 %v2662
  %v8210 = vpop.f32.mrb[0].mxu0
  %v8211 = vadd.f32 0.0, %v8210
  %v8212 = vpop.f32.mrb[0].mxu0
  %v8213 = vpop.f32.mrb[0].mxu0
  %v8214 = vpop.f32.mrb[0].mxu0
  %8215 = vdwg.mxu0
  %v8216 = vlaneseq
  %v8217 = vshrl.u32 %v8216, 7
  %v8218 = vsub.s32 0, %v8217
  %v8219 = vrot.slane %v8138, %v8218
  %v8220 = vmul.f32 %v8008, %v8219
  %v8221 = vmul.f32 %v8011, %v8219
  %v8222 = vmul.f32 %v8016, %v8219
  %v8223 = vmul.f32 %v8019, %v8219
  %v8224 = vmul.f32 %v8024, %v8219
  %v8225 = vmul.f32 %v8027, %v8219
  %v8226 = vmul.f32 %v8032, %v8219
  %v8227 = vmul.f32 %v8035, %v8219
  %v8228 = vsel %vm689, %v8220, 0.0
  %8229 = vadd.xlane.f32.xlu0 %v8228
  %v8230 = vpop.xlane.xlu0 %8229
  %v8231 = vsel %vm689, %v8221, 0.0
  %8232 = vadd.xlane.f32.xlu0 %v8231
  %v8233 = vpop.xlane.xlu0 %8232
  %v8234 = vsel %vm689, %v8222, 0.0
  %8235 = vadd.xlane.f32.xlu0 %v8234
  %v8236 = vpop.xlane.xlu0 %8235
  %v8237 = vsel %vm689, %v8223, 0.0
  %8238 = vadd.xlane.f32.xlu0 %v8237
  %v8239 = vpop.xlane.xlu0 %8238
  %v8240 = vsel %vm689, %v8224, 0.0
  %8241 = vadd.xlane.f32.xlu0 %v8240
  %v8242 = vpop.xlane.xlu0 %8241
  %v8243 = vsel %vm689, %v8225, 0.0
  %8244 = vadd.xlane.f32.xlu0 %v8243
  %v8245 = vpop.xlane.xlu0 %8244
  %v8246 = vsel %vm689, %v8226, 0.0
  %8247 = vadd.xlane.f32.xlu0 %v8246
  %v8248 = vpop.xlane.xlu0 %8247
  %v8249 = vsel %vm689, %v8227, 0.0
  %8250 = vadd.xlane.f32.xlu0 %v8249
  %v8251 = vpop.xlane.xlu0 %8250
  %v8252 = vmul.f32 %v8230, 0.125
  %v8253 = vmul.f32 %v8233, 0.125
  %v8254 = vmul.f32 %v8236, 0.125
  %v8255 = vmul.f32 %v8239, 0.125
  %v8256 = vmul.f32 %v8242, 0.125
  %v8257 = vmul.f32 %v8245, 0.125
  %v8258 = vmul.f32 %v8248, 0.125
  %v8259 = vmul.f32 %v8251, 0.125
  %v8260 = vlaneseq
  %v8261 = vshrl.u32 %v8260, 7
  %v8262 = vsub.s32 1, %v8261
  %v8263 = vrot.slane %v8138, %v8262
  %v8264 = vmul.f32 %v8008, %v8263
  %v8265 = vmul.f32 %v8011, %v8263
  %v8266 = vmul.f32 %v8016, %v8263
  %v8267 = vmul.f32 %v8019, %v8263
  %v8268 = vmul.f32 %v8024, %v8263
  %v8269 = vmul.f32 %v8027, %v8263
  %v8270 = vmul.f32 %v8032, %v8263
  %v8271 = vmul.f32 %v8035, %v8263
  %v8272 = vsel %vm689, %v8264, 0.0
  %8273 = vadd.xlane.f32.xlu0 %v8272
  %v8274 = vpop.xlane.xlu0 %8273
  %v8275 = vsel %vm689, %v8265, 0.0
  %8276 = vadd.xlane.f32.xlu0 %v8275
  %v8277 = vpop.xlane.xlu0 %8276
  %v8278 = vsel %vm689, %v8266, 0.0
  %8279 = vadd.xlane.f32.xlu0 %v8278
  %v8280 = vpop.xlane.xlu0 %8279
  %v8281 = vsel %vm689, %v8267, 0.0
  %8282 = vadd.xlane.f32.xlu0 %v8281
  %v8283 = vpop.xlane.xlu0 %8282
  %v8284 = vsel %vm689, %v8268, 0.0
  %8285 = vadd.xlane.f32.xlu0 %v8284
  %v8286 = vpop.xlane.xlu0 %8285
  %v8287 = vsel %vm689, %v8269, 0.0
  %8288 = vadd.xlane.f32.xlu0 %v8287
  %v8289 = vpop.xlane.xlu0 %8288
  %v8290 = vsel %vm689, %v8270, 0.0
  %8291 = vadd.xlane.f32.xlu0 %v8290
  %v8292 = vpop.xlane.xlu0 %8291
  %v8293 = vsel %vm689, %v8271, 0.0
  %8294 = vadd.xlane.f32.xlu0 %v8293
  %v8295 = vpop.xlane.xlu0 %8294
  %v8296 = vmul.f32 %v8274, 0.125
  %v8297 = vmul.f32 %v8277, 0.125
  %v8298 = vmul.f32 %v8280, 0.125
  %v8299 = vmul.f32 %v8283, 0.125
  %v8300 = vmul.f32 %v8286, 0.125
  %v8301 = vmul.f32 %v8289, 0.125
  %v8302 = vmul.f32 %v8292, 0.125
  %v8303 = vmul.f32 %v8295, 0.125
  %v8304 = vmax.f32 %v8252, %v8296
  %v8305 = vmax.f32 %v8253, %v8297
  %v8306 = vmax.f32 %v8254, %v8298
  %v8307 = vmax.f32 %v8255, %v8299
  %v8308 = vmax.f32 %v8256, %v8300
  %v8309 = vmax.f32 %v8257, %v8301
  %v8310 = vmax.f32 %v8258, %v8302
  %v8311 = vmax.f32 %v8259, %v8303
  %v8312 = vsub.f32 %v8252, %v8304
  %v8313 = vsub.f32 %v8253, %v8305
  %v8314 = vsub.f32 %v8254, %v8306
  %v8315 = vsub.f32 %v8255, %v8307
  %v8316 = vsub.f32 %v8256, %v8308
  %v8317 = vsub.f32 %v8257, %v8309
  %v8318 = vsub.f32 %v8258, %v8310
  %v8319 = vsub.f32 %v8259, %v8311
  %v8320 = vmul.f32 %v8312, 1.442695
  %v8321 = vpow.pop %v8320
  %v8322 = vmul.f32 %v8313, 1.442695
  %v8323 = vpow.pop %v8322
  %v8324 = vmul.f32 %v8314, 1.442695
  %v8325 = vpow.pop %v8324
  %v8326 = vmul.f32 %v8315, 1.442695
  %v8327 = vpow.pop %v8326
  %v8328 = vmul.f32 %v8316, 1.442695
  %v8329 = vpow.pop %v8328
  %v8330 = vmul.f32 %v8317, 1.442695
  %v8331 = vpow.pop %v8330
  %v8332 = vmul.f32 %v8318, 1.442695
  %v8333 = vpow.pop %v8332
  %v8334 = vmul.f32 %v8319, 1.442695
  %v8335 = vpow.pop %v8334
  %v8336 = vsub.f32 %v8296, %v8304
  %v8337 = vsub.f32 %v8297, %v8305
  %v8338 = vsub.f32 %v8298, %v8306
  %v8339 = vsub.f32 %v8299, %v8307
  %v8340 = vsub.f32 %v8300, %v8308
  %v8341 = vsub.f32 %v8301, %v8309
  %v8342 = vsub.f32 %v8302, %v8310
  %v8343 = vsub.f32 %v8303, %v8311
  %v8344 = vmul.f32 %v8336, 1.442695
  %v8345 = vpow.pop %v8344
  %v8346 = vmul.f32 %v8337, 1.442695
  %v8347 = vpow.pop %v8346
  %v8348 = vmul.f32 %v8338, 1.442695
  %v8349 = vpow.pop %v8348
  %v8350 = vmul.f32 %v8339, 1.442695
  %v8351 = vpow.pop %v8350
  %v8352 = vmul.f32 %v8340, 1.442695
  %v8353 = vpow.pop %v8352
  %v8354 = vmul.f32 %v8341, 1.442695
  %v8355 = vpow.pop %v8354
  %v8356 = vmul.f32 %v8342, 1.442695
  %v8357 = vpow.pop %v8356
  %v8358 = vmul.f32 %v8343, 1.442695
  %v8359 = vpow.pop %v8358
  %v8360 = vlaneseq
  %v8361 = vshrl.u32 %v8360, 7
  %v8362 = vsub.s32 0, %v8361
  %v8363 = vrot.slane %v8211, %v8362
  %v8364 = vmul.f32 %v8321, %v8363
  %v8365 = vmul.f32 %v8323, %v8363
  %v8366 = vmul.f32 %v8325, %v8363
  %v8367 = vmul.f32 %v8327, %v8363
  %v8368 = vmul.f32 %v8329, %v8363
  %v8369 = vmul.f32 %v8331, %v8363
  %v8370 = vmul.f32 %v8333, %v8363
  %v8371 = vmul.f32 %v8335, %v8363
  %v8372 = vlaneseq
  %v8373 = vshrl.u32 %v8372, 7
  %v8374 = vsub.s32 1, %v8373
  %v8375 = vrot.slane %v8211, %v8374
  %v8376 = vmul.f32 %v8345, %v8375
  %v8377 = vmul.f32 %v8347, %v8375
  %v8378 = vmul.f32 %v8349, %v8375
  %v8379 = vmul.f32 %v8351, %v8375
  %v8380 = vmul.f32 %v8353, %v8375
  %v8381 = vmul.f32 %v8355, %v8375
  %v8382 = vmul.f32 %v8357, %v8375
  %v8383 = vmul.f32 %v8359, %v8375
  %v8384 = vadd.f32 %v8364, %v8376
  %v8385 = vadd.f32 %v8365, %v8377
  %v8386 = vadd.f32 %v8366, %v8378
  %v8387 = vadd.f32 %v8367, %v8379
  %v8388 = vadd.f32 %v8368, %v8380
  %v8389 = vadd.f32 %v8369, %v8381
  %v8390 = vadd.f32 %v8370, %v8382
  %v8391 = vadd.f32 %v8371, %v8383
  %v8392 = vadd.f32 %v8321, %v8345
  %v8393 = vadd.f32 %v8323, %v8347
  %v8394 = vadd.f32 %v8325, %v8349
  %v8395 = vadd.f32 %v8327, %v8351
  %v8396 = vadd.f32 %v8329, %v8353
  %v8397 = vadd.f32 %v8331, %v8355
  %v8398 = vadd.f32 %v8333, %v8357
  %v8399 = vadd.f32 %v8335, %v8359
  %v8400 = vrcp.pop %v8392
  %v8401 = vmul.f32 %v8384, %v8400
  %v8402 = vrcp.pop %v8393
  %v8403 = vmul.f32 %v8385, %v8402
  %v8404 = vrcp.pop %v8394
  %v8405 = vmul.f32 %v8386, %v8404
  %v8406 = vrcp.pop %v8395
  %v8407 = vmul.f32 %v8387, %v8406
  %v8408 = vrcp.pop %v8396
  %v8409 = vmul.f32 %v8388, %v8408
  %v8410 = vrcp.pop %v8397
  %v8411 = vmul.f32 %v8389, %v8410
  %v8412 = vrcp.pop %v8398
  %v8413 = vmul.f32 %v8390, %v8412
  %v8414 = vrcp.pop %v8399
  %v8415 = vmul.f32 %v8391, %v8414
  %v8416 = vlaneseq
  %v8417 = vshrl.u32 %v8416, 7
  %v8418 = vsub.s32 2, %v8417
  %v8419 = vrot.slane %v8138, %v8418
  %v8420 = vmul.f32 %v8040, %v8419
  %v8421 = vmul.f32 %v8043, %v8419
  %v8422 = vmul.f32 %v8048, %v8419
  %v8423 = vmul.f32 %v8051, %v8419
  %v8424 = vmul.f32 %v8056, %v8419
  %v8425 = vmul.f32 %v8059, %v8419
  %v8426 = vmul.f32 %v8064, %v8419
  %v8427 = vmul.f32 %v8067, %v8419
  %v8428 = vsel %vm689, %v8420, 0.0
  %8429 = vadd.xlane.f32.xlu0 %v8428
  %v8430 = vpop.xlane.xlu0 %8429
  %v8431 = vsel %vm689, %v8421, 0.0
  %8432 = vadd.xlane.f32.xlu0 %v8431
  %v8433 = vpop.xlane.xlu0 %8432
  %v8434 = vsel %vm689, %v8422, 0.0
  %8435 = vadd.xlane.f32.xlu0 %v8434
  %v8436 = vpop.xlane.xlu0 %8435
  %v8437 = vsel %vm689, %v8423, 0.0
  %8438 = vadd.xlane.f32.xlu0 %v8437
  %v8439 = vpop.xlane.xlu0 %8438
  %v8440 = vsel %vm689, %v8424, 0.0
  %8441 = vadd.xlane.f32.xlu0 %v8440
  %v8442 = vpop.xlane.xlu0 %8441
  %v8443 = vsel %vm689, %v8425, 0.0
  %8444 = vadd.xlane.f32.xlu0 %v8443
  %v8445 = vpop.xlane.xlu0 %8444
  %v8446 = vsel %vm689, %v8426, 0.0
  %8447 = vadd.xlane.f32.xlu0 %v8446
  %v8448 = vpop.xlane.xlu0 %8447
  %v8449 = vsel %vm689, %v8427, 0.0
  %8450 = vadd.xlane.f32.xlu0 %v8449
  %v8451 = vpop.xlane.xlu0 %8450
  %v8452 = vmul.f32 %v8430, 0.125
  %v8453 = vmul.f32 %v8433, 0.125
  %v8454 = vmul.f32 %v8436, 0.125
  %v8455 = vmul.f32 %v8439, 0.125
  %v8456 = vmul.f32 %v8442, 0.125
  %v8457 = vmul.f32 %v8445, 0.125
  %v8458 = vmul.f32 %v8448, 0.125
  %v8459 = vmul.f32 %v8451, 0.125
  %v8460 = vlaneseq
  %v8461 = vshrl.u32 %v8460, 7
  %v8462 = vsub.s32 3, %v8461
  %v8463 = vrot.slane %v8138, %v8462
  %v8464 = vmul.f32 %v8040, %v8463
  %v8465 = vmul.f32 %v8043, %v8463
  %v8466 = vmul.f32 %v8048, %v8463
  %v8467 = vmul.f32 %v8051, %v8463
  %v8468 = vmul.f32 %v8056, %v8463
  %v8469 = vmul.f32 %v8059, %v8463
  %v8470 = vmul.f32 %v8064, %v8463
  %v8471 = vmul.f32 %v8067, %v8463
  %v8472 = vsel %vm689, %v8464, 0.0
  %8473 = vadd.xlane.f32.xlu0 %v8472
  %v8474 = vpop.xlane.xlu0 %8473
  %v8475 = vsel %vm689, %v8465, 0.0
  %8476 = vadd.xlane.f32.xlu0 %v8475
  %v8477 = vpop.xlane.xlu0 %8476
  %v8478 = vsel %vm689, %v8466, 0.0
  %8479 = vadd.xlane.f32.xlu0 %v8478
  %v8480 = vpop.xlane.xlu0 %8479
  %v8481 = vsel %vm689, %v8467, 0.0
  %8482 = vadd.xlane.f32.xlu0 %v8481
  %v8483 = vpop.xlane.xlu0 %8482
  %v8484 = vsel %vm689, %v8468, 0.0
  %8485 = vadd.xlane.f32.xlu0 %v8484
  %v8486 = vpop.xlane.xlu0 %8485
  %v8487 = vsel %vm689, %v8469, 0.0
  %8488 = vadd.xlane.f32.xlu0 %v8487
  %v8489 = vpop.xlane.xlu0 %8488
  %v8490 = vsel %vm689, %v8470, 0.0
  %8491 = vadd.xlane.f32.xlu0 %v8490
  %v8492 = vpop.xlane.xlu0 %8491
  %v8493 = vsel %vm689, %v8471, 0.0
  %8494 = vadd.xlane.f32.xlu0 %v8493
  %v8495 = vpop.xlane.xlu0 %8494
  %v8496 = vmul.f32 %v8474, 0.125
  %v8497 = vmul.f32 %v8477, 0.125
  %v8498 = vmul.f32 %v8480, 0.125
  %v8499 = vmul.f32 %v8483, 0.125
  %v8500 = vmul.f32 %v8486, 0.125
  %v8501 = vmul.f32 %v8489, 0.125
  %v8502 = vmul.f32 %v8492, 0.125
  %v8503 = vmul.f32 %v8495, 0.125
  %v8504 = vmax.f32 %v8452, %v8496
  %v8505 = vmax.f32 %v8453, %v8497
  %v8506 = vmax.f32 %v8454, %v8498
  %v8507 = vmax.f32 %v8455, %v8499
  %v8508 = vmax.f32 %v8456, %v8500
  %v8509 = vmax.f32 %v8457, %v8501
  %v8510 = vmax.f32 %v8458, %v8502
  %v8511 = vmax.f32 %v8459, %v8503
  %v8512 = vsub.f32 %v8452, %v8504
  %v8513 = vsub.f32 %v8453, %v8505
  %v8514 = vsub.f32 %v8454, %v8506
  %v8515 = vsub.f32 %v8455, %v8507
  %v8516 = vsub.f32 %v8456, %v8508
  %v8517 = vsub.f32 %v8457, %v8509
  %v8518 = vsub.f32 %v8458, %v8510
  %v8519 = vsub.f32 %v8459, %v8511
  %v8520 = vmul.f32 %v8512, 1.442695
  %v8521 = vpow.pop %v8520
  %v8522 = vmul.f32 %v8513, 1.442695
  %v8523 = vpow.pop %v8522
  %v8524 = vmul.f32 %v8514, 1.442695
  %v8525 = vpow.pop %v8524
  %v8526 = vmul.f32 %v8515, 1.442695
  %v8527 = vpow.pop %v8526
  %v8528 = vmul.f32 %v8516, 1.442695
  %v8529 = vpow.pop %v8528
  %v8530 = vmul.f32 %v8517, 1.442695
  %v8531 = vpow.pop %v8530
  %v8532 = vmul.f32 %v8518, 1.442695
  %v8533 = vpow.pop %v8532
  %v8534 = vmul.f32 %v8519, 1.442695
  %v8535 = vpow.pop %v8534
  %v8536 = vsub.f32 %v8496, %v8504
  %v8537 = vsub.f32 %v8497, %v8505
  %v8538 = vsub.f32 %v8498, %v8506
  %v8539 = vsub.f32 %v8499, %v8507
  %v8540 = vsub.f32 %v8500, %v8508
  %v8541 = vsub.f32 %v8501, %v8509
  %v8542 = vsub.f32 %v8502, %v8510
  %v8543 = vsub.f32 %v8503, %v8511
  %v8544 = vmul.f32 %v8536, 1.442695
  %v8545 = vpow.pop %v8544
  %v8546 = vmul.f32 %v8537, 1.442695
  %v8547 = vpow.pop %v8546
  %v8548 = vmul.f32 %v8538, 1.442695
  %v8549 = vpow.pop %v8548
  %v8550 = vmul.f32 %v8539, 1.442695
  %v8551 = vpow.pop %v8550
  %v8552 = vmul.f32 %v8540, 1.442695
  %v8553 = vpow.pop %v8552
  %v8554 = vmul.f32 %v8541, 1.442695
  %v8555 = vpow.pop %v8554
  %v8556 = vmul.f32 %v8542, 1.442695
  %v8557 = vpow.pop %v8556
  %v8558 = vmul.f32 %v8543, 1.442695
  %v8559 = vpow.pop %v8558
  %v8560 = vlaneseq
  %v8561 = vshrl.u32 %v8560, 7
  %v8562 = vsub.s32 2, %v8561
  %v8563 = vrot.slane %v8211, %v8562
  %v8564 = vmul.f32 %v8521, %v8563
  %v8565 = vmul.f32 %v8523, %v8563
  %v8566 = vmul.f32 %v8525, %v8563
  %v8567 = vmul.f32 %v8527, %v8563
  %v8568 = vmul.f32 %v8529, %v8563
  %v8569 = vmul.f32 %v8531, %v8563
  %v8570 = vmul.f32 %v8533, %v8563
  %v8571 = vmul.f32 %v8535, %v8563
  %v8572 = vlaneseq
  %v8573 = vshrl.u32 %v8572, 7
  %v8574 = vsub.s32 3, %v8573
  %v8575 = vrot.slane %v8211, %v8574
  %v8576 = vmul.f32 %v8545, %v8575
  %v8577 = vmul.f32 %v8547, %v8575
  %v8578 = vmul.f32 %v8549, %v8575
  %v8579 = vmul.f32 %v8551, %v8575
  %v8580 = vmul.f32 %v8553, %v8575
  %v8581 = vmul.f32 %v8555, %v8575
  %v8582 = vmul.f32 %v8557, %v8575
  %v8583 = vmul.f32 %v8559, %v8575
  %v8584 = vadd.f32 %v8564, %v8576
  %v8585 = vadd.f32 %v8565, %v8577
  %v8586 = vadd.f32 %v8566, %v8578
  %v8587 = vadd.f32 %v8567, %v8579
  %v8588 = vadd.f32 %v8568, %v8580
  %v8589 = vadd.f32 %v8569, %v8581
  %v8590 = vadd.f32 %v8570, %v8582
  %v8591 = vadd.f32 %v8571, %v8583
  %v8592 = vadd.f32 %v8521, %v8545
  %v8593 = vadd.f32 %v8523, %v8547
  %v8594 = vadd.f32 %v8525, %v8549
  %v8595 = vadd.f32 %v8527, %v8551
  %v8596 = vadd.f32 %v8529, %v8553
  %v8597 = vadd.f32 %v8531, %v8555
  %v8598 = vadd.f32 %v8533, %v8557
  %v8599 = vadd.f32 %v8535, %v8559
  %v8600 = vrcp.pop %v8592
  %v8601 = vmul.f32 %v8584, %v8600
  %v8602 = vrcp.pop %v8593
  %v8603 = vmul.f32 %v8585, %v8602
  %v8604 = vrcp.pop %v8594
  %v8605 = vmul.f32 %v8586, %v8604
  %v8606 = vrcp.pop %v8595
  %v8607 = vmul.f32 %v8587, %v8606
  %v8608 = vrcp.pop %v8596
  %v8609 = vmul.f32 %v8588, %v8608
  %v8610 = vrcp.pop %v8597
  %v8611 = vmul.f32 %v8589, %v8610
  %v8612 = vrcp.pop %v8598
  %v8613 = vmul.f32 %v8590, %v8612
  %v8614 = vrcp.pop %v8599
  %v8615 = vmul.f32 %v8591, %v8614
  %v8616 = vadd.f32 %v7642, %v8401
  %v8617 = vadd.f32 %v7643, %v8403
  %v8618 = vadd.f32 %v7644, %v8405
  %v8619 = vadd.f32 %v7645, %v8407
  %v8620 = vadd.f32 %v7646, %v8409
  %v8621 = vadd.f32 %v7647, %v8411
  %v8622 = vadd.f32 %v7648, %v8413
  %v8623 = vadd.f32 %v7649, %v8415
  %v8624 = vadd.f32 %v7650, %v8601
  %v8625 = vadd.f32 %v7651, %v8603
  %v8626 = vadd.f32 %v7652, %v8605
  %v8627 = vadd.f32 %v7653, %v8607
  %v8628 = vadd.f32 %v7654, %v8609
  %v8629 = vadd.f32 %v7655, %v8611
  %v8630 = vadd.f32 %v7656, %v8613
  %v8631 = vadd.f32 %v7657, %v8615
  %v8632 = vld [vmem:[%s45 + $0x1] sm:$0x1]
  %v8633 = vld [vmem:[%s47 + $0x1] sm:$0x1]
  %v8634 = vsel %vm689, %v8616, 0.0
  %8635 = vadd.xlane.f32.xlu0 %v8634
  %v8636 = vpop.xlane.xlu0 %8635
  %v8637 = vsel %vm689, %v8617, 0.0
  %8638 = vadd.xlane.f32.xlu0 %v8637
  %v8639 = vpop.xlane.xlu0 %8638
  %v8640 = vsel %vm689, %v8618, 0.0
  %8641 = vadd.xlane.f32.xlu0 %v8640
  %v8642 = vpop.xlane.xlu0 %8641
  %v8643 = vsel %vm689, %v8619, 0.0
  %8644 = vadd.xlane.f32.xlu0 %v8643
  %v8645 = vpop.xlane.xlu0 %8644
  %v8646 = vsel %vm689, %v8620, 0.0
  %8647 = vadd.xlane.f32.xlu0 %v8646
  %v8648 = vpop.xlane.xlu0 %8647
  %v8649 = vsel %vm689, %v8621, 0.0
  %8650 = vadd.xlane.f32.xlu0 %v8649
  %v8651 = vpop.xlane.xlu0 %8650
  %v8652 = vsel %vm689, %v8622, 0.0
  %8653 = vadd.xlane.f32.xlu0 %v8652
  %v8654 = vpop.xlane.xlu0 %8653
  %v8655 = vsel %vm689, %v8623, 0.0
  %8656 = vadd.xlane.f32.xlu0 %v8655
  %v8657 = vpop.xlane.xlu0 %8656
  %v8658 = vsel %vm689, %v8624, 0.0
  %8659 = vadd.xlane.f32.xlu0 %v8658
  %v8660 = vpop.xlane.xlu0 %8659
  %v8661 = vsel %vm689, %v8625, 0.0
  %8662 = vadd.xlane.f32.xlu0 %v8661
  %v8663 = vpop.xlane.xlu0 %8662
  %v8664 = vsel %vm689, %v8626, 0.0
  %8665 = vadd.xlane.f32.xlu0 %v8664
  %v8666 = vpop.xlane.xlu0 %8665
  %v8667 = vsel %vm689, %v8627, 0.0
  %8668 = vadd.xlane.f32.xlu0 %v8667
  %v8669 = vpop.xlane.xlu0 %8668
  %v8670 = vsel %vm689, %v8628, 0.0
  %8671 = vadd.xlane.f32.xlu0 %v8670
  %v8672 = vpop.xlane.xlu0 %8671
  %v8673 = vsel %vm689, %v8629, 0.0
  %8674 = vadd.xlane.f32.xlu0 %v8673
  %v8675 = vpop.xlane.xlu0 %8674
  %v8676 = vsel %vm689, %v8630, 0.0
  %8677 = vadd.xlane.f32.xlu0 %v8676
  %v8678 = vpop.xlane.xlu0 %8677
  %v8679 = vsel %vm689, %v8631, 0.0
  %8680 = vadd.xlane.f32.xlu0 %v8679
  %v8681 = vpop.xlane.xlu0 %8680
  %v8682 = vmul.f32 %v8636, %v738
  %v8683 = vmul.f32 %v8639, %v738
  %v8684 = vmul.f32 %v8642, %v738
  %v8685 = vmul.f32 %v8645, %v738
  %v8686 = vmul.f32 %v8648, %v738
  %v8687 = vmul.f32 %v8651, %v738
  %v8688 = vmul.f32 %v8654, %v738
  %v8689 = vmul.f32 %v8657, %v738
  %v8690 = vmul.f32 %v8660, %v738
  %v8691 = vmul.f32 %v8663, %v738
  %v8692 = vmul.f32 %v8666, %v738
  %v8693 = vmul.f32 %v8669, %v738
  %v8694 = vmul.f32 %v8672, %v738
  %v8695 = vmul.f32 %v8675, %v738
  %v8696 = vmul.f32 %v8678, %v738
  %v8697 = vmul.f32 %v8681, %v738
  %v8698 = vsub.f32 %v8616, %v8682
  %v8699 = vsub.f32 %v8617, %v8683
  %v8700 = vsub.f32 %v8618, %v8684
  %v8701 = vsub.f32 %v8619, %v8685
  %v8702 = vsub.f32 %v8620, %v8686
  %v8703 = vsub.f32 %v8621, %v8687
  %v8704 = vsub.f32 %v8622, %v8688
  %v8705 = vsub.f32 %v8623, %v8689
  %v8706 = vsub.f32 %v8624, %v8690
  %v8707 = vsub.f32 %v8625, %v8691
  %v8708 = vsub.f32 %v8626, %v8692
  %v8709 = vsub.f32 %v8627, %v8693
  %v8710 = vsub.f32 %v8628, %v8694
  %v8711 = vsub.f32 %v8629, %v8695
  %v8712 = vsub.f32 %v8630, %v8696
  %v8713 = vsub.f32 %v8631, %v8697
  %v8714 = vmul.f32 %v8698, %v8698
  %v8715 = vmul.f32 %v8699, %v8699
  %v8716 = vmul.f32 %v8700, %v8700
  %v8717 = vmul.f32 %v8701, %v8701
  %v8718 = vmul.f32 %v8702, %v8702
  %v8719 = vmul.f32 %v8703, %v8703
  %v8720 = vmul.f32 %v8704, %v8704
  %v8721 = vmul.f32 %v8705, %v8705
  %v8722 = vmul.f32 %v8706, %v8706
  %v8723 = vmul.f32 %v8707, %v8707
  %v8724 = vmul.f32 %v8708, %v8708
  %v8725 = vmul.f32 %v8709, %v8709
  %v8726 = vmul.f32 %v8710, %v8710
  %v8727 = vmul.f32 %v8711, %v8711
  %v8728 = vmul.f32 %v8712, %v8712
  %v8729 = vmul.f32 %v8713, %v8713
  %v8730 = vsel %vm689, %v8714, 0.0
  %8731 = vadd.xlane.f32.xlu0 %v8730
  %v8732 = vpop.xlane.xlu0 %8731
  %v8733 = vsel %vm689, %v8715, 0.0
  %8734 = vadd.xlane.f32.xlu0 %v8733
  %v8735 = vpop.xlane.xlu0 %8734
  %v8736 = vsel %vm689, %v8716, 0.0
  %8737 = vadd.xlane.f32.xlu0 %v8736
  %v8738 = vpop.xlane.xlu0 %8737
  %v8739 = vsel %vm689, %v8717, 0.0
  %8740 = vadd.xlane.f32.xlu0 %v8739
  %v8741 = vpop.xlane.xlu0 %8740
  %v8742 = vsel %vm689, %v8718, 0.0
  %8743 = vadd.xlane.f32.xlu0 %v8742
  %v8744 = vpop.xlane.xlu0 %8743
  %v8745 = vsel %vm689, %v8719, 0.0
  %8746 = vadd.xlane.f32.xlu0 %v8745
  %v8747 = vpop.xlane.xlu0 %8746
  %v8748 = vsel %vm689, %v8720, 0.0
  %8749 = vadd.xlane.f32.xlu0 %v8748
  %v8750 = vpop.xlane.xlu0 %8749
  %v8751 = vsel %vm689, %v8721, 0.0
  %8752 = vadd.xlane.f32.xlu0 %v8751
  %v8753 = vpop.xlane.xlu0 %8752
  %v8754 = vsel %vm689, %v8722, 0.0
  %8755 = vadd.xlane.f32.xlu0 %v8754
  %v8756 = vpop.xlane.xlu0 %8755
  %v8757 = vsel %vm689, %v8723, 0.0
  %8758 = vadd.xlane.f32.xlu0 %v8757
  %v8759 = vpop.xlane.xlu0 %8758
  %v8760 = vsel %vm689, %v8724, 0.0
  %8761 = vadd.xlane.f32.xlu0 %v8760
  %v8762 = vpop.xlane.xlu0 %8761
  %v8763 = vsel %vm689, %v8725, 0.0
  %8764 = vadd.xlane.f32.xlu0 %v8763
  %v8765 = vpop.xlane.xlu0 %8764
  %v8766 = vsel %vm689, %v8726, 0.0
  %8767 = vadd.xlane.f32.xlu0 %v8766
  %v8768 = vpop.xlane.xlu0 %8767
  %v8769 = vsel %vm689, %v8727, 0.0
  %8770 = vadd.xlane.f32.xlu0 %v8769
  %v8771 = vpop.xlane.xlu0 %8770
  %v8772 = vsel %vm689, %v8728, 0.0
  %8773 = vadd.xlane.f32.xlu0 %v8772
  %v8774 = vpop.xlane.xlu0 %8773
  %v8775 = vsel %vm689, %v8729, 0.0
  %8776 = vadd.xlane.f32.xlu0 %v8775
  %v8777 = vpop.xlane.xlu0 %8776
  %v8778 = vmul.f32 %v8732, %v738
  %v8779 = vmul.f32 %v8735, %v738
  %v8780 = vmul.f32 %v8738, %v738
  %v8781 = vmul.f32 %v8741, %v738
  %v8782 = vmul.f32 %v8744, %v738
  %v8783 = vmul.f32 %v8747, %v738
  %v8784 = vmul.f32 %v8750, %v738
  %v8785 = vmul.f32 %v8753, %v738
  %v8786 = vmul.f32 %v8756, %v738
  %v8787 = vmul.f32 %v8759, %v738
  %v8788 = vmul.f32 %v8762, %v738
  %v8789 = vmul.f32 %v8765, %v738
  %v8790 = vmul.f32 %v8768, %v738
  %v8791 = vmul.f32 %v8771, %v738
  %v8792 = vmul.f32 %v8774, %v738
  %v8793 = vmul.f32 %v8777, %v738
  %v8794 = vadd.f32 %v8778, 1e-05
  %v8795 = vadd.f32 %v8779, 1e-05
  %v8796 = vadd.f32 %v8780, 1e-05
  %v8797 = vadd.f32 %v8781, 1e-05
  %v8798 = vadd.f32 %v8782, 1e-05
  %v8799 = vadd.f32 %v8783, 1e-05
  %v8800 = vadd.f32 %v8784, 1e-05
  %v8801 = vadd.f32 %v8785, 1e-05
  %v8802 = vadd.f32 %v8786, 1e-05
  %v8803 = vadd.f32 %v8787, 1e-05
  %v8804 = vadd.f32 %v8788, 1e-05
  %v8805 = vadd.f32 %v8789, 1e-05
  %v8806 = vadd.f32 %v8790, 1e-05
  %v8807 = vadd.f32 %v8791, 1e-05
  %v8808 = vadd.f32 %v8792, 1e-05
  %v8809 = vadd.f32 %v8793, 1e-05
  %v8810 = vrsqrt.pop %v8794
  %v8811 = vrsqrt.pop %v8795
  %v8812 = vrsqrt.pop %v8796
  %v8813 = vrsqrt.pop %v8797
  %v8814 = vrsqrt.pop %v8798
  %v8815 = vrsqrt.pop %v8799
  %v8816 = vrsqrt.pop %v8800
  %v8817 = vrsqrt.pop %v8801
  %v8818 = vrsqrt.pop %v8802
  %v8819 = vrsqrt.pop %v8803
  %v8820 = vrsqrt.pop %v8804
  %v8821 = vrsqrt.pop %v8805
  %v8822 = vrsqrt.pop %v8806
  %v8823 = vrsqrt.pop %v8807
  %v8824 = vrsqrt.pop %v8808
  %v8825 = vrsqrt.pop %v8809
  %v8826 = vmul.f32 %v8698, %v8810
  %v8827 = vmul.f32 %v8699, %v8811
  %v8828 = vmul.f32 %v8700, %v8812
  %v8829 = vmul.f32 %v8701, %v8813
  %v8830 = vmul.f32 %v8702, %v8814
  %v8831 = vmul.f32 %v8703, %v8815
  %v8832 = vmul.f32 %v8704, %v8816
  %v8833 = vmul.f32 %v8705, %v8817
  %v8834 = vmul.f32 %v8706, %v8818
  %v8835 = vmul.f32 %v8707, %v8819
  %v8836 = vmul.f32 %v8708, %v8820
  %v8837 = vmul.f32 %v8709, %v8821
  %v8838 = vmul.f32 %v8710, %v8822
  %v8839 = vmul.f32 %v8711, %v8823
  %v8840 = vmul.f32 %v8712, %v8824
  %v8841 = vmul.f32 %v8713, %v8825
  %v8842 = vlaneseq
  %v8843 = vshrl.u32 %v8842, 7
  %v8844 = vsub.s32 0, %v8843
  %v8845 = vrot.slane %v8632, %v8844
  %v8846 = vmul.f32 %v8826, %v8845
  %v8847 = vmul.f32 %v8827, %v8845
  %v8848 = vmul.f32 %v8828, %v8845
  %v8849 = vmul.f32 %v8829, %v8845
  %v8850 = vmul.f32 %v8830, %v8845
  %v8851 = vmul.f32 %v8831, %v8845
  %v8852 = vmul.f32 %v8832, %v8845
  %v8853 = vmul.f32 %v8833, %v8845
  %v8854 = vmul.f32 %v8834, %v8845
  %v8855 = vmul.f32 %v8835, %v8845
  %v8856 = vmul.f32 %v8836, %v8845
  %v8857 = vmul.f32 %v8837, %v8845
  %v8858 = vmul.f32 %v8838, %v8845
  %v8859 = vmul.f32 %v8839, %v8845
  %v8860 = vmul.f32 %v8840, %v8845
  %v8861 = vmul.f32 %v8841, %v8845
  %v8862 = vlaneseq
  %v8863 = vshrl.u32 %v8862, 7
  %v8864 = vsub.s32 0, %v8863
  %v8865 = vrot.slane %v8633, %v8864
  %v8866 = vadd.f32 %v8846, %v8865
  %v8867 = vadd.f32 %v8847, %v8865
  %v8868 = vadd.f32 %v8848, %v8865
  %v8869 = vadd.f32 %v8849, %v8865
  %v8870 = vadd.f32 %v8850, %v8865
  %v8871 = vadd.f32 %v8851, %v8865
  %v8872 = vadd.f32 %v8852, %v8865
  %v8873 = vadd.f32 %v8853, %v8865
  %v8874 = vadd.f32 %v8854, %v8865
  %v8875 = vadd.f32 %v8855, %v8865
  %v8876 = vadd.f32 %v8856, %v8865
  %v8877 = vadd.f32 %v8857, %v8865
  %v8878 = vadd.f32 %v8858, %v8865
  %v8879 = vadd.f32 %v8859, %v8865
  %v8880 = vadd.f32 %v8860, %v8865
  %v8881 = vadd.f32 %v8861, %v8865
  %s8882 = scalar_lea.vmem %s49, 64
  %v8883 = vld [vmem:[%s8882] sm:$0xff]
  %v8884 = vld [vmem:[%s8882 + $0x8] sm:$0xff]
  %v8885 = vld [vmem:[%s8882 + $0x10] sm:$0xff]
  %v8886 = vld [vmem:[%s8882 + $0x18] sm:$0xff]
  %v8887 = vld [vmem:[%s8882 + $0x20] sm:$0xff]
  %v8888 = vld [vmem:[%s8882 + $0x28] sm:$0xff]
  %v8889 = vld [vmem:[%s8882 + $0x30] sm:$0xff]
  %v8890 = vld [vmem:[%s8882 + $0x38] sm:$0xff]
  %v8891 = vpack.c.bf16 %v8867, %v8866
  %v8892 = vpack.c.bf16 %v8869, %v8868
  %v8893 = vpack.c.bf16 %v8871, %v8870
  %v8894 = vpack.c.bf16 %v8873, %v8872
  %v8895 = vpack.c.bf16 %v8875, %v8874
  %v8896 = vpack.c.bf16 %v8877, %v8876
  %v8897 = vpack.c.bf16 %v8879, %v8878
  %v8898 = vpack.c.bf16 %v8881, %v8880
  %s8899 = scalar_lea.vmem %s51, 1
  %v8900 = vld [vmem:[%s8899] ss:$2 sm:$0x3]
  %v8902 = vlaneseq
  %v8903 = vshrl.u32 %v8902, 7
  %v8904 = vsub.s32 0, %v8903
  %v8905 = vrot.slane %v8900, %v8904
  %v8906 = vlaneseq
  %v8907 = vshrl.u32 %v8906, 7
  %v8908 = vsub.s32 1, %v8907
  %v8909 = vrot.slane %v8900, %v8908
  %v8920 = vunpack.c.l.b16 %v8883
  %v8921 = vunpack.c.h.b16 %v8883
  %v8922 = vunpack.c.l.b16 %v8884
  %v8923 = vunpack.c.h.b16 %v8884
  %v8924 = vunpack.c.l.b16 %v8885
  %v8925 = vunpack.c.h.b16 %v8885
  %v8926 = vunpack.c.l.b16 %v8886
  %v8927 = vunpack.c.h.b16 %v8886
  %v8928 = vunpack.c.l.b16 %v8887
  %v8929 = vunpack.c.h.b16 %v8887
  %v8930 = vunpack.c.l.b16 %v8888
  %v8931 = vunpack.c.h.b16 %v8888
  %v8932 = vunpack.c.l.b16 %v8889
  %v8933 = vunpack.c.h.b16 %v8889
  %v8934 = vunpack.c.l.b16 %v8890
  %v8935 = vunpack.c.h.b16 %v8890
  %v8936 = vpack.c.b16 %v8922, %v8920
  %v8937 = vpack.c.b16 %v8923, %v8921
  %v8938 = vpack.c.b16 %v8926, %v8924
  %v8939 = vpack.c.b16 %v8927, %v8925
  %v8940 = vpack.c.b16 %v8930, %v8928
  %v8941 = vpack.c.b16 %v8931, %v8929
  %v8942 = vpack.c.b16 %v8934, %v8932
  %v8943 = vpack.c.b16 %v8935, %v8933
  %v8953 = vsel %vm689, %v8891, 0
  %v8956 = vsel %vm689, %v8892, 0
  %v8959 = vsel %vm689, %v8893, 0
  %v8962 = vsel %vm689, %v8894, 0
  %v8965 = vsel %vm689, %v8895, 0
  %v8968 = vsel %vm689, %v8896, 0
  %v8971 = vsel %vm689, %v8897, 0
  %v8974 = vsel %vm689, %v8898, 0
  %8976 = vmatprep.subr.bf16.mxu0 %v8937
  %8977 = vmatpush1.bf16.msra.mxu0 %v8936
  %8978 = vmatprep.subr.bf16.mxu0 %v8939
  %8979 = vmatpush1.bf16.msra.mxu0 %v8938
  %8980 = vmatprep.subr.bf16.mxu0 %v8941
  %8981 = vmatpush1.bf16.msra.mxu0 %v8940
  %8982 = vmatprep.subr.bf16.mxu0 %v8943
  %8983 = vmatpush1.bf16.msra.mxu0 %v8942
  %8984 = vmatprep.subr.bf16.mxu0 0
  %8985 = vmatpush1.bf16.msra.mxu0 0
  %8986 = vmatprep.subr.bf16.mxu0 0
  %8987 = vmatpush1.bf16.msra.mxu0 0
  %8988 = vmatprep.subr.bf16.mxu0 0
  %8989 = vmatpush1.bf16.msra.mxu0 0
  %8990 = vmatprep.subr.bf16.mxu0 0
  %8991 = vmatpush1.bf16.msra.mxu0 0
  %8992 = vmatprep.subr.bf16.mxu0 0
  %8993 = vmatpush1.bf16.msra.mxu0 0
  %8994 = vmatprep.subr.bf16.mxu0 0
  %8995 = vmatpush1.bf16.msra.mxu0 0
  %8996 = vmatprep.subr.bf16.mxu0 0
  %8997 = vmatpush1.bf16.msra.mxu0 0
  %8998 = vmatprep.subr.bf16.mxu0 0
  %8999 = vmatpush1.bf16.msra.mxu0 0
  %9000 = vmatprep.subr.bf16.mxu0 0
  %9001 = vmatpush1.bf16.msra.mxu0 0
  %9002 = vmatprep.subr.bf16.mxu0 0
  %9003 = vmatpush1.bf16.msra.mxu0 0
  %9004 = vmatprep.subr.bf16.mxu0 0
  %9005 = vmatpush1.bf16.msra.mxu0 0
  %9006 = vmatprep.subr.bf16.mxu0 0
  %9007 = vmatpush1.bf16.msra.mxu0 0
  %9008 = vmatprep.mubr.bf16.mxu0 0
  %9009 = vmatmul.mubr.bf16.gmra.mrb[0].mxu0 %v8953
  %v9010 = vpop.f32.mrb[0].mxu0
  %v9011 = vadd.f32 %v8905, %v9010
  %v9012 = vpop.f32.mrb[0].mxu0
  %v9013 = vadd.f32 %v8909, %v9012
  %v9014 = vpop.f32.mrb[0].mxu0
  %v9015 = vadd.f32 %v8905, %v9014
  %v9016 = vpop.f32.mrb[0].mxu0
  %v9017 = vadd.f32 %v8909, %v9016
  %9018 = vmatprep.mubr.bf16.mxu0 0
  %9019 = vmatmul.mubr.bf16.gmra.mrb[0].mxu0 %v8956
  %v9020 = vpop.f32.mrb[0].mxu0
  %v9021 = vadd.f32 %v8905, %v9020
  %v9022 = vpop.f32.mrb[0].mxu0
  %v9023 = vadd.f32 %v8909, %v9022
  %v9024 = vpop.f32.mrb[0].mxu0
  %v9025 = vadd.f32 %v8905, %v9024
  %v9026 = vpop.f32.mrb[0].mxu0
  %v9027 = vadd.f32 %v8909, %v9026
  %9028 = vmatprep.mubr.bf16.mxu0 0
  %9029 = vmatmul.mubr.bf16.gmra.mrb[0].mxu0 %v8959
  %v9030 = vpop.f32.mrb[0].mxu0
  %v9031 = vadd.f32 %v8905, %v9030
  %v9032 = vpop.f32.mrb[0].mxu0
  %v9033 = vadd.f32 %v8909, %v9032
  %v9034 = vpop.f32.mrb[0].mxu0
  %v9035 = vadd.f32 %v8905, %v9034
  %v9036 = vpop.f32.mrb[0].mxu0
  %v9037 = vadd.f32 %v8909, %v9036
  %9038 = vmatprep.mubr.bf16.mxu0 0
  %9039 = vmatmul.mubr.bf16.gmra.mrb[0].mxu0 %v8962
  %v9040 = vpop.f32.mrb[0].mxu0
  %v9041 = vadd.f32 %v8905, %v9040
  %v9042 = vpop.f32.mrb[0].mxu0
  %v9043 = vadd.f32 %v8909, %v9042
  %v9044 = vpop.f32.mrb[0].mxu0
  %v9045 = vadd.f32 %v8905, %v9044
  %v9046 = vpop.f32.mrb[0].mxu0
  %v9047 = vadd.f32 %v8909, %v9046
  %9048 = vmatprep.mubr.bf16.mxu0 0
  %9049 = vmatmul.mubr.bf16.gmra.mrb[0].mxu0 %v8965
  %v9050 = vpop.f32.mrb[0].mxu0
  %v9051 = vadd.f32 %v8905, %v9050
  %v9052 = vpop.f32.mrb[0].mxu0
  %v9053 = vadd.f32 %v8909, %v9052
  %v9054 = vpop.f32.mrb[0].mxu0
  %v9055 = vadd.f32 %v8905, %v9054
  %v9056 = vpop.f32.mrb[0].mxu0
  %v9057 = vadd.f32 %v8909, %v9056
  %9058 = vmatprep.mubr.bf16.mxu0 0
  %9059 = vmatmul.mubr.bf16.gmra.mrb[0].mxu0 %v8968
  %v9060 = vpop.f32.mrb[0].mxu0
  %v9061 = vadd.f32 %v8905, %v9060
  %v9062 = vpop.f32.mrb[0].mxu0
  %v9063 = vadd.f32 %v8909, %v9062
  %v9064 = vpop.f32.mrb[0].mxu0
  %v9065 = vadd.f32 %v8905, %v9064
  %v9066 = vpop.f32.mrb[0].mxu0
  %v9067 = vadd.f32 %v8909, %v9066
  %9068 = vmatprep.mubr.bf16.mxu0 0
  %9069 = vmatmul.mubr.bf16.gmra.mrb[0].mxu0 %v8971
  %v9070 = vpop.f32.mrb[0].mxu0
  %v9071 = vadd.f32 %v8905, %v9070
  %v9072 = vpop.f32.mrb[0].mxu0
  %v9073 = vadd.f32 %v8909, %v9072
  %v9074 = vpop.f32.mrb[0].mxu0
  %v9075 = vadd.f32 %v8905, %v9074
  %v9076 = vpop.f32.mrb[0].mxu0
  %v9077 = vadd.f32 %v8909, %v9076
  %9078 = vmatprep.mubr.bf16.mxu0 0
  %9079 = vmatmul.mubr.bf16.gmra.mrb[0].mxu0 %v8974
  %v9080 = vpop.f32.mrb[0].mxu0
  %v9081 = vadd.f32 %v8905, %v9080
  %v9082 = vpop.f32.mrb[0].mxu0
  %v9083 = vadd.f32 %v8909, %v9082
  %v9084 = vpop.f32.mrb[0].mxu0
  %v9085 = vadd.f32 %v8905, %v9084
  %v9086 = vpop.f32.mrb[0].mxu0
  %v9087 = vadd.f32 %v8909, %v9086
  %9088 = vdwg.mxu0
  %9089 = vmatprep.subr.mxu0 %v9013
  %9090 = vmatpush1.msra.mxu0 %v9011
  %9091 = vmatprep.subr.mxu0 %v9017
  %9092 = vmatpush1.msra.mxu0 %v9015
  %9093 = vmatprep.subr.mxu0 %v9023
  %9094 = vmatpush1.msra.mxu0 %v9021
  %9095 = vmatprep.subr.mxu0 %v9027
  %9096 = vmatpush1.msra.mxu0 %v9025
  %9097 = vmatprep.subr.mxu0 %v9033
  %9098 = vmatpush1.msra.mxu0 %v9031
  %9099 = vmatprep.subr.mxu0 %v9037
  %9100 = vmatpush1.msra.mxu0 %v9035
  %9101 = vmatprep.subr.mxu0 %v9043
  %9102 = vmatpush1.msra.mxu0 %v9041
  %9103 = vmatprep.subr.mxu0 %v9047
  %9104 = vmatpush1.msra.mxu0 %v9045
  %9105 = vmatprep.subr.mxu0 %v9053
  %9106 = vmatpush1.msra.mxu0 %v9051
  %9107 = vmatprep.subr.mxu0 %v9057
  %9108 = vmatpush1.msra.mxu0 %v9055
  %9109 = vmatprep.subr.mxu0 %v9063
  %9110 = vmatpush1.msra.mxu0 %v9061
  %9111 = vmatprep.subr.mxu0 %v9067
  %9112 = vmatpush1.msra.mxu0 %v9065
  %9113 = vmatprep.subr.mxu0 %v9073
  %9114 = vmatpush1.msra.mxu0 %v9071
  %9115 = vmatprep.subr.mxu0 %v9077
  %9116 = vmatpush1.msra.mxu0 %v9075
  %9117 = vmatprep.subr.mxu0 %v9083
  %9118 = vmatpush1.msra.mxu0 %v9081
  %9119 = vmatprep.subr.mxu0 %v9087
  %9120 = vmatpush1.msra.mxu0 %v9085
  %9121 = vmatprep.subr.mxu0 0.0
  %9122 = vmatpush1.msra.mxu0 0.0
  %9123 = vmatprep.subr.mxu0 0.0
  %9124 = vmatpush1.msra.mxu0 0.0
  %9125 = vmatprep.subr.mxu0 0.0
  %9126 = vmatpush1.msra.mxu0 0.0
  %9127 = vmatprep.subr.mxu0 0.0
  %9128 = vmatpush1.msra.mxu0 0.0
  %9129 = vmatprep.subr.mxu0 0.0
  %9130 = vmatpush1.msra.mxu0 0.0
  %9131 = vmatprep.subr.mxu0 0.0
  %9132 = vmatpush1.msra.mxu0 0.0
  %9133 = vmatprep.subr.mxu0 0.0
  %9134 = vmatpush1.msra.mxu0 0.0
  %9135 = vmatprep.subr.mxu0 0.0
  %9136 = vmatpush1.msra.mxu0 0.0
  %9137 = vmatprep.subr.mxu0 0.0
  %9138 = vmatpush1.msra.mxu0 0.0
  %9139 = vmatprep.subr.mxu0 0.0
  %9140 = vmatpush1.msra.mxu0 0.0
  %9141 = vmatprep.subr.mxu0 0.0
  %9142 = vmatpush1.msra.mxu0 0.0
  %9143 = vmatprep.subr.mxu0 0.0
  %9144 = vmatpush1.msra.mxu0 0.0
  %9145 = vmatprep.subr.mxu0 0.0
  %9146 = vmatpush1.msra.mxu0 0.0
  %9147 = vmatprep.subr.mxu0 0.0
  %9148 = vmatpush1.msra.mxu0 0.0
  %9149 = vmatprep.subr.mxu0 0.0
  %9150 = vmatpush1.msra.mxu0 0.0
  %9151 = vmatprep.subr.mxu0 0.0
  %9152 = vmatpush1.msra.mxu0 0.0
  %9153 = vmatprep.mubr.f32.mxu0 0.0
  %9154 = vmatmul.mubr.f32.gmra.mrb[0].mxu0 %v3647
  %v9155 = vpop.f32.mrb[0].mxu0
  %v9156 = vadd.f32 0.0, %v9155
  %v9157 = vpop.f32.mrb[0].mxu0
  %v9158 = vadd.f32 0.0, %v9157
  %9159 = vmatprep.mubr.f32.mxu0 0.0
  %9160 = vmatmul.mubr.f32.gmra.mrb[0].mxu0 %v3648
  %v9161 = vpop.f32.mrb[0].mxu0
  %v9162 = vadd.f32 0.0, %v9161
  %v9163 = vpop.f32.mrb[0].mxu0
  %v9164 = vadd.f32 0.0, %v9163
  %9165 = vmatprep.mubr.f32.mxu0 0.0
  %9166 = vmatmul.mubr.f32.gmra.mrb[0].mxu0 %v3649
  %v9167 = vpop.f32.mrb[0].mxu0
  %v9168 = vadd.f32 0.0, %v9167
  %v9169 = vpop.f32.mrb[0].mxu0
  %v9170 = vadd.f32 0.0, %v9169
  %9171 = vmatprep.mubr.f32.mxu0 0.0
  %9172 = vmatmul.mubr.f32.gmra.mrb[0].mxu0 %v3650
  %v9173 = vpop.f32.mrb[0].mxu0
  %v9174 = vadd.f32 0.0, %v9173
  %v9175 = vpop.f32.mrb[0].mxu0
  %v9176 = vadd.f32 0.0, %v9175
  %9177 = vmatprep.mubr.f32.mxu0 0.0
  %9178 = vmatmul.mubr.f32.gmra.mrb[0].mxu0 %v3651
  %v9179 = vpop.f32.mrb[0].mxu0
  %v9180 = vadd.f32 0.0, %v9179
  %v9181 = vpop.f32.mrb[0].mxu0
  %v9182 = vadd.f32 0.0, %v9181
  %9183 = vmatprep.mubr.f32.mxu0 0.0
  %9184 = vmatmul.mubr.f32.gmra.mrb[0].mxu0 %v3652
  %v9185 = vpop.f32.mrb[0].mxu0
  %v9186 = vadd.f32 0.0, %v9185
  %v9187 = vpop.f32.mrb[0].mxu0
  %v9188 = vadd.f32 0.0, %v9187
  %9189 = vmatprep.mubr.f32.mxu0 0.0
  %9190 = vmatmul.mubr.f32.gmra.mrb[0].mxu0 %v3653
  %v9191 = vpop.f32.mrb[0].mxu0
  %v9192 = vadd.f32 0.0, %v9191
  %v9193 = vpop.f32.mrb[0].mxu0
  %v9194 = vadd.f32 0.0, %v9193
  %9195 = vmatprep.mubr.f32.mxu0 0.0
  %9196 = vmatmul.mubr.f32.gmra.mrb[0].mxu0 %v3654
  %v9197 = vpop.f32.mrb[0].mxu0
  %v9198 = vadd.f32 0.0, %v9197
  %v9199 = vpop.f32.mrb[0].mxu0
  %v9200 = vadd.f32 0.0, %v9199
  %9201 = vmatprep.mubr.f32.mxu0 0.0
  %9202 = vmatmul.mubr.f32.gmra.mrb[0].mxu0 %v3655
  %v9203 = vpop.f32.mrb[0].mxu0
  %v9204 = vadd.f32 0.0, %v9203
  %v9205 = vpop.f32.mrb[0].mxu0
  %v9206 = vadd.f32 0.0, %v9205
  %9207 = vmatprep.mubr.f32.mxu0 0.0
  %9208 = vmatmul.mubr.f32.gmra.mrb[0].mxu0 %v3656
  %v9209 = vpop.f32.mrb[0].mxu0
  %v9210 = vadd.f32 0.0, %v9209
  %v9211 = vpop.f32.mrb[0].mxu0
  %v9212 = vadd.f32 0.0, %v9211
  %9213 = vmatprep.mubr.f32.mxu0 0.0
  %9214 = vmatmul.mubr.f32.gmra.mrb[0].mxu0 %v3657
  %v9215 = vpop.f32.mrb[0].mxu0
  %v9216 = vadd.f32 0.0, %v9215
  %v9217 = vpop.f32.mrb[0].mxu0
  %v9218 = vadd.f32 0.0, %v9217
  %9219 = vmatprep.mubr.f32.mxu0 0.0
  %9220 = vmatmul.mubr.f32.gmra.mrb[0].mxu0 %v3658
  %v9221 = vpop.f32.mrb[0].mxu0
  %v9222 = vadd.f32 0.0, %v9221
  %v9223 = vpop.f32.mrb[0].mxu0
  %v9224 = vadd.f32 0.0, %v9223
  %9225 = vmatprep.mubr.f32.mxu0 0.0
  %9226 = vmatmul.mubr.f32.gmra.mrb[0].mxu0 %v3659
  %v9227 = vpop.f32.mrb[0].mxu0
  %v9228 = vadd.f32 0.0, %v9227
  %v9229 = vpop.f32.mrb[0].mxu0
  %v9230 = vadd.f32 0.0, %v9229
  %9231 = vmatprep.mubr.f32.mxu0 0.0
  %9232 = vmatmul.mubr.f32.gmra.mrb[0].mxu0 %v3660
  %v9233 = vpop.f32.mrb[0].mxu0
  %v9234 = vadd.f32 0.0, %v9233
  %v9235 = vpop.f32.mrb[0].mxu0
  %v9236 = vadd.f32 0.0, %v9235
  %9237 = vmatprep.mubr.f32.mxu0 0.0
  %9238 = vmatmul.mubr.f32.gmra.mrb[0].mxu0 %v3661
  %v9239 = vpop.f32.mrb[0].mxu0
  %v9240 = vadd.f32 0.0, %v9239
  %v9241 = vpop.f32.mrb[0].mxu0
  %v9242 = vadd.f32 0.0, %v9241
  %9243 = vmatprep.mubr.f32.mxu0 0.0
  %9244 = vmatmul.mubr.f32.gmra.mrb[0].mxu0 %v3662
  %v9245 = vpop.f32.mrb[0].mxu0
  %v9246 = vadd.f32 0.0, %v9245
  %v9247 = vpop.f32.mrb[0].mxu0
  %v9248 = vadd.f32 0.0, %v9247
  %9249 = vdwg.mxu0
  %s9250 = scalar_lea.vmem %s53, 17
  %v9251 = vld [vmem:[%s9250] ss:$8 sm:$0x3]
  %v9253 = vlaneseq
  %v9254 = vshrl.u32 %v9253, 7
  %v9255 = vsub.s32 0, %v9254
  %v9256 = vrot.slane %v9251, %v9255
  %v9257 = vlaneseq
  %v9258 = vshrl.u32 %v9257, 7
  %v9259 = vsub.s32 1, %v9258
  %v9260 = vrot.slane %v9251, %v9259
  %v9263 = vmul.f32 %v9156, %v9256
  %v9264 = vmul.f32 %v9158, %v9260
  %v9265 = vmul.f32 %v9162, %v9256
  %v9266 = vmul.f32 %v9164, %v9260
  %v9267 = vmul.f32 %v9168, %v9256
  %v9268 = vmul.f32 %v9170, %v9260
  %v9269 = vmul.f32 %v9174, %v9256
  %v9270 = vmul.f32 %v9176, %v9260
  %v9271 = vmul.f32 %v9180, %v9256
  %v9272 = vmul.f32 %v9182, %v9260
  %v9273 = vmul.f32 %v9186, %v9256
  %v9274 = vmul.f32 %v9188, %v9260
  %v9275 = vmul.f32 %v9192, %v9256
  %v9276 = vmul.f32 %v9194, %v9260
  %v9277 = vmul.f32 %v9198, %v9256
  %v9278 = vmul.f32 %v9200, %v9260
  %v9279 = vmul.f32 %v9204, %v9256
  %v9280 = vmul.f32 %v9206, %v9260
  %v9281 = vmul.f32 %v9210, %v9256
  %v9282 = vmul.f32 %v9212, %v9260
  %v9283 = vmul.f32 %v9216, %v9256
  %v9284 = vmul.f32 %v9218, %v9260
  %v9285 = vmul.f32 %v9222, %v9256
  %v9286 = vmul.f32 %v9224, %v9260
  %v9287 = vmul.f32 %v9228, %v9256
  %v9288 = vmul.f32 %v9230, %v9260
  %v9289 = vmul.f32 %v9234, %v9256
  %v9290 = vmul.f32 %v9236, %v9260
  %v9291 = vmul.f32 %v9240, %v9256
  %v9292 = vmul.f32 %v9242, %v9260
  %v9293 = vmul.f32 %v9246, %v9256
  %v9294 = vmul.f32 %v9248, %v9260
  %v9295 = vadd.f32 %v9263, 0.0
  %v9296 = vadd.f32 %v9264, 0.0
  %v9297 = vadd.f32 %v9265, 0.0
  %v9298 = vadd.f32 %v9266, 0.0
  %v9299 = vadd.f32 %v9267, 0.0
  %v9300 = vadd.f32 %v9268, 0.0
  %v9301 = vadd.f32 %v9269, 0.0
  %v9302 = vadd.f32 %v9270, 0.0
  %v9303 = vadd.f32 %v9271, 0.0
  %v9304 = vadd.f32 %v9272, 0.0
  %v9305 = vadd.f32 %v9273, 0.0
  %v9306 = vadd.f32 %v9274, 0.0
  %v9307 = vadd.f32 %v9275, 0.0
  %v9308 = vadd.f32 %v9276, 0.0
  %v9309 = vadd.f32 %v9277, 0.0
  %v9310 = vadd.f32 %v9278, 0.0
  %v9311 = vadd.f32 %v9279, 0.0
  %v9312 = vadd.f32 %v9280, 0.0
  %v9313 = vadd.f32 %v9281, 0.0
  %v9314 = vadd.f32 %v9282, 0.0
  %v9315 = vadd.f32 %v9283, 0.0
  %v9316 = vadd.f32 %v9284, 0.0
  %v9317 = vadd.f32 %v9285, 0.0
  %v9318 = vadd.f32 %v9286, 0.0
  %v9319 = vadd.f32 %v9287, 0.0
  %v9320 = vadd.f32 %v9288, 0.0
  %v9321 = vadd.f32 %v9289, 0.0
  %v9322 = vadd.f32 %v9290, 0.0
  %v9323 = vadd.f32 %v9291, 0.0
  %v9324 = vadd.f32 %v9292, 0.0
  %v9325 = vadd.f32 %v9293, 0.0
  %v9326 = vadd.f32 %v9294, 0.0
  %9327 = vmatprep.subr.mxu0 %v9013
  %9328 = vmatpush1.msra.mxu0 %v9011
  %9329 = vmatprep.subr.mxu0 %v9017
  %9330 = vmatpush1.msra.mxu0 %v9015
  %9331 = vmatprep.subr.mxu0 %v9023
  %9332 = vmatpush1.msra.mxu0 %v9021
  %9333 = vmatprep.subr.mxu0 %v9027
  %9334 = vmatpush1.msra.mxu0 %v9025
  %9335 = vmatprep.subr.mxu0 %v9033
  %9336 = vmatpush1.msra.mxu0 %v9031
  %9337 = vmatprep.subr.mxu0 %v9037
  %9338 = vmatpush1.msra.mxu0 %v9035
  %9339 = vmatprep.subr.mxu0 %v9043
  %9340 = vmatpush1.msra.mxu0 %v9041
  %9341 = vmatprep.subr.mxu0 %v9047
  %9342 = vmatpush1.msra.mxu0 %v9045
  %9343 = vmatprep.subr.mxu0 %v9053
  %9344 = vmatpush1.msra.mxu0 %v9051
  %9345 = vmatprep.subr.mxu0 %v9057
  %9346 = vmatpush1.msra.mxu0 %v9055
  %9347 = vmatprep.subr.mxu0 %v9063
  %9348 = vmatpush1.msra.mxu0 %v9061
  %9349 = vmatprep.subr.mxu0 %v9067
  %9350 = vmatpush1.msra.mxu0 %v9065
  %9351 = vmatprep.subr.mxu0 %v9073
  %9352 = vmatpush1.msra.mxu0 %v9071
  %9353 = vmatprep.subr.mxu0 %v9077
  %9354 = vmatpush1.msra.mxu0 %v9075
  %9355 = vmatprep.subr.mxu0 %v9083
  %9356 = vmatpush1.msra.mxu0 %v9081
  %9357 = vmatprep.subr.mxu0 %v9087
  %9358 = vmatpush1.msra.mxu0 %v9085
  %9359 = vmatprep.subr.mxu0 0.0
  %9360 = vmatpush1.msra.mxu0 0.0
  %9361 = vmatprep.subr.mxu0 0.0
  %9362 = vmatpush1.msra.mxu0 0.0
  %9363 = vmatprep.subr.mxu0 0.0
  %9364 = vmatpush1.msra.mxu0 0.0
  %9365 = vmatprep.subr.mxu0 0.0
  %9366 = vmatpush1.msra.mxu0 0.0
  %9367 = vmatprep.subr.mxu0 0.0
  %9368 = vmatpush1.msra.mxu0 0.0
  %9369 = vmatprep.subr.mxu0 0.0
  %9370 = vmatpush1.msra.mxu0 0.0
  %9371 = vmatprep.subr.mxu0 0.0
  %9372 = vmatpush1.msra.mxu0 0.0
  %9373 = vmatprep.subr.mxu0 0.0
  %9374 = vmatpush1.msra.mxu0 0.0
  %9375 = vmatprep.subr.mxu0 0.0
  %9376 = vmatpush1.msra.mxu0 0.0
  %9377 = vmatprep.subr.mxu0 0.0
  %9378 = vmatpush1.msra.mxu0 0.0
  %9379 = vmatprep.subr.mxu0 0.0
  %9380 = vmatpush1.msra.mxu0 0.0
  %9381 = vmatprep.subr.mxu0 0.0
  %9382 = vmatpush1.msra.mxu0 0.0
  %9383 = vmatprep.subr.mxu0 0.0
  %9384 = vmatpush1.msra.mxu0 0.0
  %9385 = vmatprep.subr.mxu0 0.0
  %9386 = vmatpush1.msra.mxu0 0.0
  %9387 = vmatprep.subr.mxu0 0.0
  %9388 = vmatpush1.msra.mxu0 0.0
  %9389 = vmatprep.subr.mxu0 0.0
  %9390 = vmatpush1.msra.mxu0 0.0
  %9391 = vmatprep.mubr.f32.mxu0 0.0
  %9392 = vmatmul.mubr.f32.gmra.mrb[0].mxu0 %v3900
  %v9393 = vpop.f32.mrb[0].mxu0
  %v9394 = vadd.f32 0.0, %v9393
  %v9395 = vpop.f32.mrb[0].mxu0
  %v9396 = vadd.f32 0.0, %v9395
  %9397 = vmatprep.mubr.f32.mxu0 0.0
  %9398 = vmatmul.mubr.f32.gmra.mrb[0].mxu0 %v3901
  %v9399 = vpop.f32.mrb[0].mxu0
  %v9400 = vadd.f32 0.0, %v9399
  %v9401 = vpop.f32.mrb[0].mxu0
  %v9402 = vadd.f32 0.0, %v9401
  %9403 = vmatprep.mubr.f32.mxu0 0.0
  %9404 = vmatmul.mubr.f32.gmra.mrb[0].mxu0 %v3902
  %v9405 = vpop.f32.mrb[0].mxu0
  %v9406 = vadd.f32 0.0, %v9405
  %v9407 = vpop.f32.mrb[0].mxu0
  %v9408 = vadd.f32 0.0, %v9407
  %9409 = vmatprep.mubr.f32.mxu0 0.0
  %9410 = vmatmul.mubr.f32.gmra.mrb[0].mxu0 %v3903
  %v9411 = vpop.f32.mrb[0].mxu0
  %v9412 = vadd.f32 0.0, %v9411
  %v9413 = vpop.f32.mrb[0].mxu0
  %v9414 = vadd.f32 0.0, %v9413
  %9415 = vmatprep.mubr.f32.mxu0 0.0
  %9416 = vmatmul.mubr.f32.gmra.mrb[0].mxu0 %v3904
  %v9417 = vpop.f32.mrb[0].mxu0
  %v9418 = vadd.f32 0.0, %v9417
  %v9419 = vpop.f32.mrb[0].mxu0
  %v9420 = vadd.f32 0.0, %v9419
  %9421 = vmatprep.mubr.f32.mxu0 0.0
  %9422 = vmatmul.mubr.f32.gmra.mrb[0].mxu0 %v3905
  %v9423 = vpop.f32.mrb[0].mxu0
  %v9424 = vadd.f32 0.0, %v9423
  %v9425 = vpop.f32.mrb[0].mxu0
  %v9426 = vadd.f32 0.0, %v9425
  %9427 = vmatprep.mubr.f32.mxu0 0.0
  %9428 = vmatmul.mubr.f32.gmra.mrb[0].mxu0 %v3906
  %v9429 = vpop.f32.mrb[0].mxu0
  %v9430 = vadd.f32 0.0, %v9429
  %v9431 = vpop.f32.mrb[0].mxu0
  %v9432 = vadd.f32 0.0, %v9431
  %9433 = vmatprep.mubr.f32.mxu0 0.0
  %9434 = vmatmul.mubr.f32.gmra.mrb[0].mxu0 %v3907
  %v9435 = vpop.f32.mrb[0].mxu0
  %v9436 = vadd.f32 0.0, %v9435
  %v9437 = vpop.f32.mrb[0].mxu0
  %v9438 = vadd.f32 0.0, %v9437
  %9439 = vmatprep.mubr.f32.mxu0 0.0
  %9440 = vmatmul.mubr.f32.gmra.mrb[0].mxu0 %v3908
  %v9441 = vpop.f32.mrb[0].mxu0
  %v9442 = vadd.f32 0.0, %v9441
  %v9443 = vpop.f32.mrb[0].mxu0
  %v9444 = vadd.f32 0.0, %v9443
  %9445 = vmatprep.mubr.f32.mxu0 0.0
  %9446 = vmatmul.mubr.f32.gmra.mrb[0].mxu0 %v3909
  %v9447 = vpop.f32.mrb[0].mxu0
  %v9448 = vadd.f32 0.0, %v9447
  %v9449 = vpop.f32.mrb[0].mxu0
  %v9450 = vadd.f32 0.0, %v9449
  %9451 = vmatprep.mubr.f32.mxu0 0.0
  %9452 = vmatmul.mubr.f32.gmra.mrb[0].mxu0 %v3910
  %v9453 = vpop.f32.mrb[0].mxu0
  %v9454 = vadd.f32 0.0, %v9453
  %v9455 = vpop.f32.mrb[0].mxu0
  %v9456 = vadd.f32 0.0, %v9455
  %9457 = vmatprep.mubr.f32.mxu0 0.0
  %9458 = vmatmul.mubr.f32.gmra.mrb[0].mxu0 %v3911
  %v9459 = vpop.f32.mrb[0].mxu0
  %v9460 = vadd.f32 0.0, %v9459
  %v9461 = vpop.f32.mrb[0].mxu0
  %v9462 = vadd.f32 0.0, %v9461
  %9463 = vmatprep.mubr.f32.mxu0 0.0
  %9464 = vmatmul.mubr.f32.gmra.mrb[0].mxu0 %v3912
  %v9465 = vpop.f32.mrb[0].mxu0
  %v9466 = vadd.f32 0.0, %v9465
  %v9467 = vpop.f32.mrb[0].mxu0
  %v9468 = vadd.f32 0.0, %v9467
  %9469 = vmatprep.mubr.f32.mxu0 0.0
  %9470 = vmatmul.mubr.f32.gmra.mrb[0].mxu0 %v3913
  %v9471 = vpop.f32.mrb[0].mxu0
  %v9472 = vadd.f32 0.0, %v9471
  %v9473 = vpop.f32.mrb[0].mxu0
  %v9474 = vadd.f32 0.0, %v9473
  %9475 = vmatprep.mubr.f32.mxu0 0.0
  %9476 = vmatmul.mubr.f32.gmra.mrb[0].mxu0 %v3914
  %v9477 = vpop.f32.mrb[0].mxu0
  %v9478 = vadd.f32 0.0, %v9477
  %v9479 = vpop.f32.mrb[0].mxu0
  %v9480 = vadd.f32 0.0, %v9479
  %9481 = vmatprep.mubr.f32.mxu0 0.0
  %9482 = vmatmul.mubr.f32.gmra.mrb[0].mxu0 %v3915
  %v9483 = vpop.f32.mrb[0].mxu0
  %v9484 = vadd.f32 0.0, %v9483
  %v9485 = vpop.f32.mrb[0].mxu0
  %v9486 = vadd.f32 0.0, %v9485
  %9487 = vdwg.mxu0
  %s9488 = scalar_lea.vmem %s53, 18
  %v9489 = vld [vmem:[%s9488] ss:$8 sm:$0x3]
  %v9491 = vlaneseq
  %v9492 = vshrl.u32 %v9491, 7
  %v9493 = vsub.s32 0, %v9492
  %v9494 = vrot.slane %v9489, %v9493
  %v9495 = vlaneseq
  %v9496 = vshrl.u32 %v9495, 7
  %v9497 = vsub.s32 1, %v9496
  %v9498 = vrot.slane %v9489, %v9497
  %v9501 = vmul.f32 %v9394, %v9494
  %v9502 = vmul.f32 %v9396, %v9498
  %v9503 = vmul.f32 %v9400, %v9494
  %v9504 = vmul.f32 %v9402, %v9498
  %v9505 = vmul.f32 %v9406, %v9494
  %v9506 = vmul.f32 %v9408, %v9498
  %v9507 = vmul.f32 %v9412, %v9494
  %v9508 = vmul.f32 %v9414, %v9498
  %v9509 = vmul.f32 %v9418, %v9494
  %v9510 = vmul.f32 %v9420, %v9498
  %v9511 = vmul.f32 %v9424, %v9494
  %v9512 = vmul.f32 %v9426, %v9498
  %v9513 = vmul.f32 %v9430, %v9494
  %v9514 = vmul.f32 %v9432, %v9498
  %v9515 = vmul.f32 %v9436, %v9494
  %v9516 = vmul.f32 %v9438, %v9498
  %v9517 = vmul.f32 %v9442, %v9494
  %v9518 = vmul.f32 %v9444, %v9498
  %v9519 = vmul.f32 %v9448, %v9494
  %v9520 = vmul.f32 %v9450, %v9498
  %v9521 = vmul.f32 %v9454, %v9494
  %v9522 = vmul.f32 %v9456, %v9498
  %v9523 = vmul.f32 %v9460, %v9494
  %v9524 = vmul.f32 %v9462, %v9498
  %v9525 = vmul.f32 %v9466, %v9494
  %v9526 = vmul.f32 %v9468, %v9498
  %v9527 = vmul.f32 %v9472, %v9494
  %v9528 = vmul.f32 %v9474, %v9498
  %v9529 = vmul.f32 %v9478, %v9494
  %v9530 = vmul.f32 %v9480, %v9498
  %v9531 = vmul.f32 %v9484, %v9494
  %v9532 = vmul.f32 %v9486, %v9498
  %v9533 = vadd.f32 %v9295, %v9501
  %v9534 = vadd.f32 %v9296, %v9502
  %v9535 = vadd.f32 %v9297, %v9503
  %v9536 = vadd.f32 %v9298, %v9504
  %v9537 = vadd.f32 %v9299, %v9505
  %v9538 = vadd.f32 %v9300, %v9506
  %v9539 = vadd.f32 %v9301, %v9507
  %v9540 = vadd.f32 %v9302, %v9508
  %v9541 = vadd.f32 %v9303, %v9509
  %v9542 = vadd.f32 %v9304, %v9510
  %v9543 = vadd.f32 %v9305, %v9511
  %v9544 = vadd.f32 %v9306, %v9512
  %v9545 = vadd.f32 %v9307, %v9513
  %v9546 = vadd.f32 %v9308, %v9514
  %v9547 = vadd.f32 %v9309, %v9515
  %v9548 = vadd.f32 %v9310, %v9516
  %v9549 = vadd.f32 %v9311, %v9517
  %v9550 = vadd.f32 %v9312, %v9518
  %v9551 = vadd.f32 %v9313, %v9519
  %v9552 = vadd.f32 %v9314, %v9520
  %v9553 = vadd.f32 %v9315, %v9521
  %v9554 = vadd.f32 %v9316, %v9522
  %v9555 = vadd.f32 %v9317, %v9523
  %v9556 = vadd.f32 %v9318, %v9524
  %v9557 = vadd.f32 %v9319, %v9525
  %v9558 = vadd.f32 %v9320, %v9526
  %v9559 = vadd.f32 %v9321, %v9527
  %v9560 = vadd.f32 %v9322, %v9528
  %v9561 = vadd.f32 %v9323, %v9529
  %v9562 = vadd.f32 %v9324, %v9530
  %v9563 = vadd.f32 %v9325, %v9531
  %v9564 = vadd.f32 %v9326, %v9532
  %9565 = vmatprep.subr.mxu0 %v9013
  %9566 = vmatpush1.msra.mxu0 %v9011
  %9567 = vmatprep.subr.mxu0 %v9017
  %9568 = vmatpush1.msra.mxu0 %v9015
  %9569 = vmatprep.subr.mxu0 %v9023
  %9570 = vmatpush1.msra.mxu0 %v9021
  %9571 = vmatprep.subr.mxu0 %v9027
  %9572 = vmatpush1.msra.mxu0 %v9025
  %9573 = vmatprep.subr.mxu0 %v9033
  %9574 = vmatpush1.msra.mxu0 %v9031
  %9575 = vmatprep.subr.mxu0 %v9037
  %9576 = vmatpush1.msra.mxu0 %v9035
  %9577 = vmatprep.subr.mxu0 %v9043
  %9578 = vmatpush1.msra.mxu0 %v9041
  %9579 = vmatprep.subr.mxu0 %v9047
  %9580 = vmatpush1.msra.mxu0 %v9045
  %9581 = vmatprep.subr.mxu0 %v9053
  %9582 = vmatpush1.msra.mxu0 %v9051
  %9583 = vmatprep.subr.mxu0 %v9057
  %9584 = vmatpush1.msra.mxu0 %v9055
  %9585 = vmatprep.subr.mxu0 %v9063
  %9586 = vmatpush1.msra.mxu0 %v9061
  %9587 = vmatprep.subr.mxu0 %v9067
  %9588 = vmatpush1.msra.mxu0 %v9065
  %9589 = vmatprep.subr.mxu0 %v9073
  %9590 = vmatpush1.msra.mxu0 %v9071
  %9591 = vmatprep.subr.mxu0 %v9077
  %9592 = vmatpush1.msra.mxu0 %v9075
  %9593 = vmatprep.subr.mxu0 %v9083
  %9594 = vmatpush1.msra.mxu0 %v9081
  %9595 = vmatprep.subr.mxu0 %v9087
  %9596 = vmatpush1.msra.mxu0 %v9085
  %9597 = vmatprep.subr.mxu0 0.0
  %9598 = vmatpush1.msra.mxu0 0.0
  %9599 = vmatprep.subr.mxu0 0.0
  %9600 = vmatpush1.msra.mxu0 0.0
  %9601 = vmatprep.subr.mxu0 0.0
  %9602 = vmatpush1.msra.mxu0 0.0
  %9603 = vmatprep.subr.mxu0 0.0
  %9604 = vmatpush1.msra.mxu0 0.0
  %9605 = vmatprep.subr.mxu0 0.0
  %9606 = vmatpush1.msra.mxu0 0.0
  %9607 = vmatprep.subr.mxu0 0.0
  %9608 = vmatpush1.msra.mxu0 0.0
  %9609 = vmatprep.subr.mxu0 0.0
  %9610 = vmatpush1.msra.mxu0 0.0
  %9611 = vmatprep.subr.mxu0 0.0
  %9612 = vmatpush1.msra.mxu0 0.0
  %9613 = vmatprep.subr.mxu0 0.0
  %9614 = vmatpush1.msra.mxu0 0.0
  %9615 = vmatprep.subr.mxu0 0.0
  %9616 = vmatpush1.msra.mxu0 0.0
  %9617 = vmatprep.subr.mxu0 0.0
  %9618 = vmatpush1.msra.mxu0 0.0
  %9619 = vmatprep.subr.mxu0 0.0
  %9620 = vmatpush1.msra.mxu0 0.0
  %9621 = vmatprep.subr.mxu0 0.0
  %9622 = vmatpush1.msra.mxu0 0.0
  %9623 = vmatprep.subr.mxu0 0.0
  %9624 = vmatpush1.msra.mxu0 0.0
  %9625 = vmatprep.subr.mxu0 0.0
  %9626 = vmatpush1.msra.mxu0 0.0
  %9627 = vmatprep.subr.mxu0 0.0
  %9628 = vmatpush1.msra.mxu0 0.0
  %9629 = vmatprep.mubr.f32.mxu0 0.0
  %9630 = vmatmul.mubr.f32.gmra.mrb[0].mxu0 %v4154
  %v9631 = vpop.f32.mrb[0].mxu0
  %v9632 = vadd.f32 0.0, %v9631
  %v9633 = vpop.f32.mrb[0].mxu0
  %v9634 = vadd.f32 0.0, %v9633
  %9635 = vmatprep.mubr.f32.mxu0 0.0
  %9636 = vmatmul.mubr.f32.gmra.mrb[0].mxu0 %v4155
  %v9637 = vpop.f32.mrb[0].mxu0
  %v9638 = vadd.f32 0.0, %v9637
  %v9639 = vpop.f32.mrb[0].mxu0
  %v9640 = vadd.f32 0.0, %v9639
  %9641 = vmatprep.mubr.f32.mxu0 0.0
  %9642 = vmatmul.mubr.f32.gmra.mrb[0].mxu0 %v4156
  %v9643 = vpop.f32.mrb[0].mxu0
  %v9644 = vadd.f32 0.0, %v9643
  %v9645 = vpop.f32.mrb[0].mxu0
  %v9646 = vadd.f32 0.0, %v9645
  %9647 = vmatprep.mubr.f32.mxu0 0.0
  %9648 = vmatmul.mubr.f32.gmra.mrb[0].mxu0 %v4157
  %v9649 = vpop.f32.mrb[0].mxu0
  %v9650 = vadd.f32 0.0, %v9649
  %v9651 = vpop.f32.mrb[0].mxu0
  %v9652 = vadd.f32 0.0, %v9651
  %9653 = vmatprep.mubr.f32.mxu0 0.0
  %9654 = vmatmul.mubr.f32.gmra.mrb[0].mxu0 %v4158
  %v9655 = vpop.f32.mrb[0].mxu0
  %v9656 = vadd.f32 0.0, %v9655
  %v9657 = vpop.f32.mrb[0].mxu0
  %v9658 = vadd.f32 0.0, %v9657
  %9659 = vmatprep.mubr.f32.mxu0 0.0
  %9660 = vmatmul.mubr.f32.gmra.mrb[0].mxu0 %v4159
  %v9661 = vpop.f32.mrb[0].mxu0
  %v9662 = vadd.f32 0.0, %v9661
  %v9663 = vpop.f32.mrb[0].mxu0
  %v9664 = vadd.f32 0.0, %v9663
  %9665 = vmatprep.mubr.f32.mxu0 0.0
  %9666 = vmatmul.mubr.f32.gmra.mrb[0].mxu0 %v4160
  %v9667 = vpop.f32.mrb[0].mxu0
  %v9668 = vadd.f32 0.0, %v9667
  %v9669 = vpop.f32.mrb[0].mxu0
  %v9670 = vadd.f32 0.0, %v9669
  %9671 = vmatprep.mubr.f32.mxu0 0.0
  %9672 = vmatmul.mubr.f32.gmra.mrb[0].mxu0 %v4161
  %v9673 = vpop.f32.mrb[0].mxu0
  %v9674 = vadd.f32 0.0, %v9673
  %v9675 = vpop.f32.mrb[0].mxu0
  %v9676 = vadd.f32 0.0, %v9675
  %9677 = vmatprep.mubr.f32.mxu0 0.0
  %9678 = vmatmul.mubr.f32.gmra.mrb[0].mxu0 %v4162
  %v9679 = vpop.f32.mrb[0].mxu0
  %v9680 = vadd.f32 0.0, %v9679
  %v9681 = vpop.f32.mrb[0].mxu0
  %v9682 = vadd.f32 0.0, %v9681
  %9683 = vmatprep.mubr.f32.mxu0 0.0
  %9684 = vmatmul.mubr.f32.gmra.mrb[0].mxu0 %v4163
  %v9685 = vpop.f32.mrb[0].mxu0
  %v9686 = vadd.f32 0.0, %v9685
  %v9687 = vpop.f32.mrb[0].mxu0
  %v9688 = vadd.f32 0.0, %v9687
  %9689 = vmatprep.mubr.f32.mxu0 0.0
  %9690 = vmatmul.mubr.f32.gmra.mrb[0].mxu0 %v4164
  %v9691 = vpop.f32.mrb[0].mxu0
  %v9692 = vadd.f32 0.0, %v9691
  %v9693 = vpop.f32.mrb[0].mxu0
  %v9694 = vadd.f32 0.0, %v9693
  %9695 = vmatprep.mubr.f32.mxu0 0.0
  %9696 = vmatmul.mubr.f32.gmra.mrb[0].mxu0 %v4165
  %v9697 = vpop.f32.mrb[0].mxu0
  %v9698 = vadd.f32 0.0, %v9697
  %v9699 = vpop.f32.mrb[0].mxu0
  %v9700 = vadd.f32 0.0, %v9699
  %9701 = vmatprep.mubr.f32.mxu0 0.0
  %9702 = vmatmul.mubr.f32.gmra.mrb[0].mxu0 %v4166
  %v9703 = vpop.f32.mrb[0].mxu0
  %v9704 = vadd.f32 0.0, %v9703
  %v9705 = vpop.f32.mrb[0].mxu0
  %v9706 = vadd.f32 0.0, %v9705
  %9707 = vmatprep.mubr.f32.mxu0 0.0
  %9708 = vmatmul.mubr.f32.gmra.mrb[0].mxu0 %v4167
  %v9709 = vpop.f32.mrb[0].mxu0
  %v9710 = vadd.f32 0.0, %v9709
  %v9711 = vpop.f32.mrb[0].mxu0
  %v9712 = vadd.f32 0.0, %v9711
  %9713 = vmatprep.mubr.f32.mxu0 0.0
  %9714 = vmatmul.mubr.f32.gmra.mrb[0].mxu0 %v4168
  %v9715 = vpop.f32.mrb[0].mxu0
  %v9716 = vadd.f32 0.0, %v9715
  %v9717 = vpop.f32.mrb[0].mxu0
  %v9718 = vadd.f32 0.0, %v9717
  %9719 = vmatprep.mubr.f32.mxu0 0.0
  %9720 = vmatmul.mubr.f32.gmra.mrb[0].mxu0 %v4169
  %v9721 = vpop.f32.mrb[0].mxu0
  %v9722 = vadd.f32 0.0, %v9721
  %v9723 = vpop.f32.mrb[0].mxu0
  %v9724 = vadd.f32 0.0, %v9723
  %9725 = vdwg.mxu0
  %s9726 = scalar_lea.vmem %s53, 19
  %v9727 = vld [vmem:[%s9726] ss:$8 sm:$0x3]
  %v9729 = vlaneseq
  %v9730 = vshrl.u32 %v9729, 7
  %v9731 = vsub.s32 0, %v9730
  %v9732 = vrot.slane %v9727, %v9731
  %v9733 = vlaneseq
  %v9734 = vshrl.u32 %v9733, 7
  %v9735 = vsub.s32 1, %v9734
  %v9736 = vrot.slane %v9727, %v9735
  %v9739 = vmul.f32 %v9632, %v9732
  %v9740 = vmul.f32 %v9634, %v9736
  %v9741 = vmul.f32 %v9638, %v9732
  %v9742 = vmul.f32 %v9640, %v9736
  %v9743 = vmul.f32 %v9644, %v9732
  %v9744 = vmul.f32 %v9646, %v9736
  %v9745 = vmul.f32 %v9650, %v9732
  %v9746 = vmul.f32 %v9652, %v9736
  %v9747 = vmul.f32 %v9656, %v9732
  %v9748 = vmul.f32 %v9658, %v9736
  %v9749 = vmul.f32 %v9662, %v9732
  %v9750 = vmul.f32 %v9664, %v9736
  %v9751 = vmul.f32 %v9668, %v9732
  %v9752 = vmul.f32 %v9670, %v9736
  %v9753 = vmul.f32 %v9674, %v9732
  %v9754 = vmul.f32 %v9676, %v9736
  %v9755 = vmul.f32 %v9680, %v9732
  %v9756 = vmul.f32 %v9682, %v9736
  %v9757 = vmul.f32 %v9686, %v9732
  %v9758 = vmul.f32 %v9688, %v9736
  %v9759 = vmul.f32 %v9692, %v9732
  %v9760 = vmul.f32 %v9694, %v9736
  %v9761 = vmul.f32 %v9698, %v9732
  %v9762 = vmul.f32 %v9700, %v9736
  %v9763 = vmul.f32 %v9704, %v9732
  %v9764 = vmul.f32 %v9706, %v9736
  %v9765 = vmul.f32 %v9710, %v9732
  %v9766 = vmul.f32 %v9712, %v9736
  %v9767 = vmul.f32 %v9716, %v9732
  %v9768 = vmul.f32 %v9718, %v9736
  %v9769 = vmul.f32 %v9722, %v9732
  %v9770 = vmul.f32 %v9724, %v9736
  %v9771 = vadd.f32 %v9533, %v9739
  %v9772 = vadd.f32 %v9534, %v9740
  %v9773 = vadd.f32 %v9535, %v9741
  %v9774 = vadd.f32 %v9536, %v9742
  %v9775 = vadd.f32 %v9537, %v9743
  %v9776 = vadd.f32 %v9538, %v9744
  %v9777 = vadd.f32 %v9539, %v9745
  %v9778 = vadd.f32 %v9540, %v9746
  %v9779 = vadd.f32 %v9541, %v9747
  %v9780 = vadd.f32 %v9542, %v9748
  %v9781 = vadd.f32 %v9543, %v9749
  %v9782 = vadd.f32 %v9544, %v9750
  %v9783 = vadd.f32 %v9545, %v9751
  %v9784 = vadd.f32 %v9546, %v9752
  %v9785 = vadd.f32 %v9547, %v9753
  %v9786 = vadd.f32 %v9548, %v9754
  %v9787 = vadd.f32 %v9549, %v9755
  %v9788 = vadd.f32 %v9550, %v9756
  %v9789 = vadd.f32 %v9551, %v9757
  %v9790 = vadd.f32 %v9552, %v9758
  %v9791 = vadd.f32 %v9553, %v9759
  %v9792 = vadd.f32 %v9554, %v9760
  %v9793 = vadd.f32 %v9555, %v9761
  %v9794 = vadd.f32 %v9556, %v9762
  %v9795 = vadd.f32 %v9557, %v9763
  %v9796 = vadd.f32 %v9558, %v9764
  %v9797 = vadd.f32 %v9559, %v9765
  %v9798 = vadd.f32 %v9560, %v9766
  %v9799 = vadd.f32 %v9561, %v9767
  %v9800 = vadd.f32 %v9562, %v9768
  %v9801 = vadd.f32 %v9563, %v9769
  %v9802 = vadd.f32 %v9564, %v9770
  %9803 = vmatprep.subr.mxu0 %v9013
  %9804 = vmatpush1.msra.mxu0 %v9011
  %9805 = vmatprep.subr.mxu0 %v9017
  %9806 = vmatpush1.msra.mxu0 %v9015
  %9807 = vmatprep.subr.mxu0 %v9023
  %9808 = vmatpush1.msra.mxu0 %v9021
  %9809 = vmatprep.subr.mxu0 %v9027
  %9810 = vmatpush1.msra.mxu0 %v9025
  %9811 = vmatprep.subr.mxu0 %v9033
  %9812 = vmatpush1.msra.mxu0 %v9031
  %9813 = vmatprep.subr.mxu0 %v9037
  %9814 = vmatpush1.msra.mxu0 %v9035
  %9815 = vmatprep.subr.mxu0 %v9043
  %9816 = vmatpush1.msra.mxu0 %v9041
  %9817 = vmatprep.subr.mxu0 %v9047
  %9818 = vmatpush1.msra.mxu0 %v9045
  %9819 = vmatprep.subr.mxu0 %v9053
  %9820 = vmatpush1.msra.mxu0 %v9051
  %9821 = vmatprep.subr.mxu0 %v9057
  %9822 = vmatpush1.msra.mxu0 %v9055
  %9823 = vmatprep.subr.mxu0 %v9063
  %9824 = vmatpush1.msra.mxu0 %v9061
  %9825 = vmatprep.subr.mxu0 %v9067
  %9826 = vmatpush1.msra.mxu0 %v9065
  %9827 = vmatprep.subr.mxu0 %v9073
  %9828 = vmatpush1.msra.mxu0 %v9071
  %9829 = vmatprep.subr.mxu0 %v9077
  %9830 = vmatpush1.msra.mxu0 %v9075
  %9831 = vmatprep.subr.mxu0 %v9083
  %9832 = vmatpush1.msra.mxu0 %v9081
  %9833 = vmatprep.subr.mxu0 %v9087
  %9834 = vmatpush1.msra.mxu0 %v9085
  %9835 = vmatprep.subr.mxu0 0.0
  %9836 = vmatpush1.msra.mxu0 0.0
  %9837 = vmatprep.subr.mxu0 0.0
  %9838 = vmatpush1.msra.mxu0 0.0
  %9839 = vmatprep.subr.mxu0 0.0
  %9840 = vmatpush1.msra.mxu0 0.0
  %9841 = vmatprep.subr.mxu0 0.0
  %9842 = vmatpush1.msra.mxu0 0.0
  %9843 = vmatprep.subr.mxu0 0.0
  %9844 = vmatpush1.msra.mxu0 0.0
  %9845 = vmatprep.subr.mxu0 0.0
  %9846 = vmatpush1.msra.mxu0 0.0
  %9847 = vmatprep.subr.mxu0 0.0
  %9848 = vmatpush1.msra.mxu0 0.0
  %9849 = vmatprep.subr.mxu0 0.0
  %9850 = vmatpush1.msra.mxu0 0.0
  %9851 = vmatprep.subr.mxu0 0.0
  %9852 = vmatpush1.msra.mxu0 0.0
  %9853 = vmatprep.subr.mxu0 0.0
  %9854 = vmatpush1.msra.mxu0 0.0
  %9855 = vmatprep.subr.mxu0 0.0
  %9856 = vmatpush1.msra.mxu0 0.0
  %9857 = vmatprep.subr.mxu0 0.0
  %9858 = vmatpush1.msra.mxu0 0.0
  %9859 = vmatprep.subr.mxu0 0.0
  %9860 = vmatpush1.msra.mxu0 0.0
  %9861 = vmatprep.subr.mxu0 0.0
  %9862 = vmatpush1.msra.mxu0 0.0
  %9863 = vmatprep.subr.mxu0 0.0
  %9864 = vmatpush1.msra.mxu0 0.0
  %9865 = vmatprep.subr.mxu0 0.0
  %9866 = vmatpush1.msra.mxu0 0.0
  %9867 = vmatprep.mubr.f32.mxu0 0.0
  %9868 = vmatmul.mubr.f32.gmra.mrb[0].mxu0 %v4408
  %v9869 = vpop.f32.mrb[0].mxu0
  %v9870 = vadd.f32 0.0, %v9869
  %v9871 = vpop.f32.mrb[0].mxu0
  %v9872 = vadd.f32 0.0, %v9871
  %9873 = vmatprep.mubr.f32.mxu0 0.0
  %9874 = vmatmul.mubr.f32.gmra.mrb[0].mxu0 %v4409
  %v9875 = vpop.f32.mrb[0].mxu0
  %v9876 = vadd.f32 0.0, %v9875
  %v9877 = vpop.f32.mrb[0].mxu0
  %v9878 = vadd.f32 0.0, %v9877
  %9879 = vmatprep.mubr.f32.mxu0 0.0
  %9880 = vmatmul.mubr.f32.gmra.mrb[0].mxu0 %v4410
  %v9881 = vpop.f32.mrb[0].mxu0
  %v9882 = vadd.f32 0.0, %v9881
  %v9883 = vpop.f32.mrb[0].mxu0
  %v9884 = vadd.f32 0.0, %v9883
  %9885 = vmatprep.mubr.f32.mxu0 0.0
  %9886 = vmatmul.mubr.f32.gmra.mrb[0].mxu0 %v4411
  %v9887 = vpop.f32.mrb[0].mxu0
  %v9888 = vadd.f32 0.0, %v9887
  %v9889 = vpop.f32.mrb[0].mxu0
  %v9890 = vadd.f32 0.0, %v9889
  %9891 = vmatprep.mubr.f32.mxu0 0.0
  %9892 = vmatmul.mubr.f32.gmra.mrb[0].mxu0 %v4412
  %v9893 = vpop.f32.mrb[0].mxu0
  %v9894 = vadd.f32 0.0, %v9893
  %v9895 = vpop.f32.mrb[0].mxu0
  %v9896 = vadd.f32 0.0, %v9895
  %9897 = vmatprep.mubr.f32.mxu0 0.0
  %9898 = vmatmul.mubr.f32.gmra.mrb[0].mxu0 %v4413
  %v9899 = vpop.f32.mrb[0].mxu0
  %v9900 = vadd.f32 0.0, %v9899
  %v9901 = vpop.f32.mrb[0].mxu0
  %v9902 = vadd.f32 0.0, %v9901
  %9903 = vmatprep.mubr.f32.mxu0 0.0
  %9904 = vmatmul.mubr.f32.gmra.mrb[0].mxu0 %v4414
  %v9905 = vpop.f32.mrb[0].mxu0
  %v9906 = vadd.f32 0.0, %v9905
  %v9907 = vpop.f32.mrb[0].mxu0
  %v9908 = vadd.f32 0.0, %v9907
  %9909 = vmatprep.mubr.f32.mxu0 0.0
  %9910 = vmatmul.mubr.f32.gmra.mrb[0].mxu0 %v4415
  %v9911 = vpop.f32.mrb[0].mxu0
  %v9912 = vadd.f32 0.0, %v9911
  %v9913 = vpop.f32.mrb[0].mxu0
  %v9914 = vadd.f32 0.0, %v9913
  %9915 = vmatprep.mubr.f32.mxu0 0.0
  %9916 = vmatmul.mubr.f32.gmra.mrb[0].mxu0 %v4416
  %v9917 = vpop.f32.mrb[0].mxu0
  %v9918 = vadd.f32 0.0, %v9917
  %v9919 = vpop.f32.mrb[0].mxu0
  %v9920 = vadd.f32 0.0, %v9919
  %9921 = vmatprep.mubr.f32.mxu0 0.0
  %9922 = vmatmul.mubr.f32.gmra.mrb[0].mxu0 %v4417
  %v9923 = vpop.f32.mrb[0].mxu0
  %v9924 = vadd.f32 0.0, %v9923
  %v9925 = vpop.f32.mrb[0].mxu0
  %v9926 = vadd.f32 0.0, %v9925
  %9927 = vmatprep.mubr.f32.mxu0 0.0
  %9928 = vmatmul.mubr.f32.gmra.mrb[0].mxu0 %v4418
  %v9929 = vpop.f32.mrb[0].mxu0
  %v9930 = vadd.f32 0.0, %v9929
  %v9931 = vpop.f32.mrb[0].mxu0
  %v9932 = vadd.f32 0.0, %v9931
  %9933 = vmatprep.mubr.f32.mxu0 0.0
  %9934 = vmatmul.mubr.f32.gmra.mrb[0].mxu0 %v4419
  %v9935 = vpop.f32.mrb[0].mxu0
  %v9936 = vadd.f32 0.0, %v9935
  %v9937 = vpop.f32.mrb[0].mxu0
  %v9938 = vadd.f32 0.0, %v9937
  %9939 = vmatprep.mubr.f32.mxu0 0.0
  %9940 = vmatmul.mubr.f32.gmra.mrb[0].mxu0 %v4420
  %v9941 = vpop.f32.mrb[0].mxu0
  %v9942 = vadd.f32 0.0, %v9941
  %v9943 = vpop.f32.mrb[0].mxu0
  %v9944 = vadd.f32 0.0, %v9943
  %9945 = vmatprep.mubr.f32.mxu0 0.0
  %9946 = vmatmul.mubr.f32.gmra.mrb[0].mxu0 %v4421
  %v9947 = vpop.f32.mrb[0].mxu0
  %v9948 = vadd.f32 0.0, %v9947
  %v9949 = vpop.f32.mrb[0].mxu0
  %v9950 = vadd.f32 0.0, %v9949
  %9951 = vmatprep.mubr.f32.mxu0 0.0
  %9952 = vmatmul.mubr.f32.gmra.mrb[0].mxu0 %v4422
  %v9953 = vpop.f32.mrb[0].mxu0
  %v9954 = vadd.f32 0.0, %v9953
  %v9955 = vpop.f32.mrb[0].mxu0
  %v9956 = vadd.f32 0.0, %v9955
  %9957 = vmatprep.mubr.f32.mxu0 0.0
  %9958 = vmatmul.mubr.f32.gmra.mrb[0].mxu0 %v4423
  %v9959 = vpop.f32.mrb[0].mxu0
  %v9960 = vadd.f32 0.0, %v9959
  %v9961 = vpop.f32.mrb[0].mxu0
  %v9962 = vadd.f32 0.0, %v9961
  %9963 = vdwg.mxu0
  %s9964 = scalar_lea.vmem %s53, 20
  %v9965 = vld [vmem:[%s9964] ss:$8 sm:$0x3]
  %v9967 = vlaneseq
  %v9968 = vshrl.u32 %v9967, 7
  %v9969 = vsub.s32 0, %v9968
  %v9970 = vrot.slane %v9965, %v9969
  %v9971 = vlaneseq
  %v9972 = vshrl.u32 %v9971, 7
  %v9973 = vsub.s32 1, %v9972
  %v9974 = vrot.slane %v9965, %v9973
  %v9977 = vmul.f32 %v9870, %v9970
  %v9978 = vmul.f32 %v9872, %v9974
  %v9979 = vmul.f32 %v9876, %v9970
  %v9980 = vmul.f32 %v9878, %v9974
  %v9981 = vmul.f32 %v9882, %v9970
  %v9982 = vmul.f32 %v9884, %v9974
  %v9983 = vmul.f32 %v9888, %v9970
  %v9984 = vmul.f32 %v9890, %v9974
  %v9985 = vmul.f32 %v9894, %v9970
  %v9986 = vmul.f32 %v9896, %v9974
  %v9987 = vmul.f32 %v9900, %v9970
  %v9988 = vmul.f32 %v9902, %v9974
  %v9989 = vmul.f32 %v9906, %v9970
  %v9990 = vmul.f32 %v9908, %v9974
  %v9991 = vmul.f32 %v9912, %v9970
  %v9992 = vmul.f32 %v9914, %v9974
  %v9993 = vmul.f32 %v9918, %v9970
  %v9994 = vmul.f32 %v9920, %v9974
  %v9995 = vmul.f32 %v9924, %v9970
  %v9996 = vmul.f32 %v9926, %v9974
  %v9997 = vmul.f32 %v9930, %v9970
  %v9998 = vmul.f32 %v9932, %v9974
  %v9999 = vmul.f32 %v9936, %v9970
  %v10000 = vmul.f32 %v9938, %v9974
  %v10001 = vmul.f32 %v9942, %v9970
  %v10002 = vmul.f32 %v9944, %v9974
  %v10003 = vmul.f32 %v9948, %v9970
  %v10004 = vmul.f32 %v9950, %v9974
  %v10005 = vmul.f32 %v9954, %v9970
  %v10006 = vmul.f32 %v9956, %v9974
  %v10007 = vmul.f32 %v9960, %v9970
  %v10008 = vmul.f32 %v9962, %v9974
  %v10009 = vadd.f32 %v9771, %v9977
  %v10010 = vadd.f32 %v9772, %v9978
  %v10011 = vadd.f32 %v9773, %v9979
  %v10012 = vadd.f32 %v9774, %v9980
  %v10013 = vadd.f32 %v9775, %v9981
  %v10014 = vadd.f32 %v9776, %v9982
  %v10015 = vadd.f32 %v9777, %v9983
  %v10016 = vadd.f32 %v9778, %v9984
  %v10017 = vadd.f32 %v9779, %v9985
  %v10018 = vadd.f32 %v9780, %v9986
  %v10019 = vadd.f32 %v9781, %v9987
  %v10020 = vadd.f32 %v9782, %v9988
  %v10021 = vadd.f32 %v9783, %v9989
  %v10022 = vadd.f32 %v9784, %v9990
  %v10023 = vadd.f32 %v9785, %v9991
  %v10024 = vadd.f32 %v9786, %v9992
  %v10025 = vadd.f32 %v9787, %v9993
  %v10026 = vadd.f32 %v9788, %v9994
  %v10027 = vadd.f32 %v9789, %v9995
  %v10028 = vadd.f32 %v9790, %v9996
  %v10029 = vadd.f32 %v9791, %v9997
  %v10030 = vadd.f32 %v9792, %v9998
  %v10031 = vadd.f32 %v9793, %v9999
  %v10032 = vadd.f32 %v9794, %v10000
  %v10033 = vadd.f32 %v9795, %v10001
  %v10034 = vadd.f32 %v9796, %v10002
  %v10035 = vadd.f32 %v9797, %v10003
  %v10036 = vadd.f32 %v9798, %v10004
  %v10037 = vadd.f32 %v9799, %v10005
  %v10038 = vadd.f32 %v9800, %v10006
  %v10039 = vadd.f32 %v9801, %v10007
  %v10040 = vadd.f32 %v9802, %v10008
  %10041 = vmatprep.subr.mxu0 %v9013
  %10042 = vmatpush1.msra.mxu0 %v9011
  %10043 = vmatprep.subr.mxu0 %v9017
  %10044 = vmatpush1.msra.mxu0 %v9015
  %10045 = vmatprep.subr.mxu0 %v9023
  %10046 = vmatpush1.msra.mxu0 %v9021
  %10047 = vmatprep.subr.mxu0 %v9027
  %10048 = vmatpush1.msra.mxu0 %v9025
  %10049 = vmatprep.subr.mxu0 %v9033
  %10050 = vmatpush1.msra.mxu0 %v9031
  %10051 = vmatprep.subr.mxu0 %v9037
  %10052 = vmatpush1.msra.mxu0 %v9035
  %10053 = vmatprep.subr.mxu0 %v9043
  %10054 = vmatpush1.msra.mxu0 %v9041
  %10055 = vmatprep.subr.mxu0 %v9047
  %10056 = vmatpush1.msra.mxu0 %v9045
  %10057 = vmatprep.subr.mxu0 %v9053
  %10058 = vmatpush1.msra.mxu0 %v9051
  %10059 = vmatprep.subr.mxu0 %v9057
  %10060 = vmatpush1.msra.mxu0 %v9055
  %10061 = vmatprep.subr.mxu0 %v9063
  %10062 = vmatpush1.msra.mxu0 %v9061
  %10063 = vmatprep.subr.mxu0 %v9067
  %10064 = vmatpush1.msra.mxu0 %v9065
  %10065 = vmatprep.subr.mxu0 %v9073
  %10066 = vmatpush1.msra.mxu0 %v9071
  %10067 = vmatprep.subr.mxu0 %v9077
  %10068 = vmatpush1.msra.mxu0 %v9075
  %10069 = vmatprep.subr.mxu0 %v9083
  %10070 = vmatpush1.msra.mxu0 %v9081
  %10071 = vmatprep.subr.mxu0 %v9087
  %10072 = vmatpush1.msra.mxu0 %v9085
  %10073 = vmatprep.subr.mxu0 0.0
  %10074 = vmatpush1.msra.mxu0 0.0
  %10075 = vmatprep.subr.mxu0 0.0
  %10076 = vmatpush1.msra.mxu0 0.0
  %10077 = vmatprep.subr.mxu0 0.0
  %10078 = vmatpush1.msra.mxu0 0.0
  %10079 = vmatprep.subr.mxu0 0.0
  %10080 = vmatpush1.msra.mxu0 0.0
  %10081 = vmatprep.subr.mxu0 0.0
  %10082 = vmatpush1.msra.mxu0 0.0
  %10083 = vmatprep.subr.mxu0 0.0
  %10084 = vmatpush1.msra.mxu0 0.0
  %10085 = vmatprep.subr.mxu0 0.0
  %10086 = vmatpush1.msra.mxu0 0.0
  %10087 = vmatprep.subr.mxu0 0.0
  %10088 = vmatpush1.msra.mxu0 0.0
  %10089 = vmatprep.subr.mxu0 0.0
  %10090 = vmatpush1.msra.mxu0 0.0
  %10091 = vmatprep.subr.mxu0 0.0
  %10092 = vmatpush1.msra.mxu0 0.0
  %10093 = vmatprep.subr.mxu0 0.0
  %10094 = vmatpush1.msra.mxu0 0.0
  %10095 = vmatprep.subr.mxu0 0.0
  %10096 = vmatpush1.msra.mxu0 0.0
  %10097 = vmatprep.subr.mxu0 0.0
  %10098 = vmatpush1.msra.mxu0 0.0
  %10099 = vmatprep.subr.mxu0 0.0
  %10100 = vmatpush1.msra.mxu0 0.0
  %10101 = vmatprep.subr.mxu0 0.0
  %10102 = vmatpush1.msra.mxu0 0.0
  %10103 = vmatprep.subr.mxu0 0.0
  %10104 = vmatpush1.msra.mxu0 0.0
  %10105 = vmatprep.mubr.f32.mxu0 0.0
  %10106 = vmatmul.mubr.f32.gmra.mrb[0].mxu0 %v4662
  %v10107 = vpop.f32.mrb[0].mxu0
  %v10108 = vadd.f32 0.0, %v10107
  %v10109 = vpop.f32.mrb[0].mxu0
  %v10110 = vadd.f32 0.0, %v10109
  %10111 = vmatprep.mubr.f32.mxu0 0.0
  %10112 = vmatmul.mubr.f32.gmra.mrb[0].mxu0 %v4663
  %v10113 = vpop.f32.mrb[0].mxu0
  %v10114 = vadd.f32 0.0, %v10113
  %v10115 = vpop.f32.mrb[0].mxu0
  %v10116 = vadd.f32 0.0, %v10115
  %10117 = vmatprep.mubr.f32.mxu0 0.0
  %10118 = vmatmul.mubr.f32.gmra.mrb[0].mxu0 %v4664
  %v10119 = vpop.f32.mrb[0].mxu0
  %v10120 = vadd.f32 0.0, %v10119
  %v10121 = vpop.f32.mrb[0].mxu0
  %v10122 = vadd.f32 0.0, %v10121
  %10123 = vmatprep.mubr.f32.mxu0 0.0
  %10124 = vmatmul.mubr.f32.gmra.mrb[0].mxu0 %v4665
  %v10125 = vpop.f32.mrb[0].mxu0
  %v10126 = vadd.f32 0.0, %v10125
  %v10127 = vpop.f32.mrb[0].mxu0
  %v10128 = vadd.f32 0.0, %v10127
  %10129 = vmatprep.mubr.f32.mxu0 0.0
  %10130 = vmatmul.mubr.f32.gmra.mrb[0].mxu0 %v4666
  %v10131 = vpop.f32.mrb[0].mxu0
  %v10132 = vadd.f32 0.0, %v10131
  %v10133 = vpop.f32.mrb[0].mxu0
  %v10134 = vadd.f32 0.0, %v10133
  %10135 = vmatprep.mubr.f32.mxu0 0.0
  %10136 = vmatmul.mubr.f32.gmra.mrb[0].mxu0 %v4667
  %v10137 = vpop.f32.mrb[0].mxu0
  %v10138 = vadd.f32 0.0, %v10137
  %v10139 = vpop.f32.mrb[0].mxu0
  %v10140 = vadd.f32 0.0, %v10139
  %10141 = vmatprep.mubr.f32.mxu0 0.0
  %10142 = vmatmul.mubr.f32.gmra.mrb[0].mxu0 %v4668
  %v10143 = vpop.f32.mrb[0].mxu0
  %v10144 = vadd.f32 0.0, %v10143
  %v10145 = vpop.f32.mrb[0].mxu0
  %v10146 = vadd.f32 0.0, %v10145
  %10147 = vmatprep.mubr.f32.mxu0 0.0
  %10148 = vmatmul.mubr.f32.gmra.mrb[0].mxu0 %v4669
  %v10149 = vpop.f32.mrb[0].mxu0
  %v10150 = vadd.f32 0.0, %v10149
  %v10151 = vpop.f32.mrb[0].mxu0
  %v10152 = vadd.f32 0.0, %v10151
  %10153 = vmatprep.mubr.f32.mxu0 0.0
  %10154 = vmatmul.mubr.f32.gmra.mrb[0].mxu0 %v4670
  %v10155 = vpop.f32.mrb[0].mxu0
  %v10156 = vadd.f32 0.0, %v10155
  %v10157 = vpop.f32.mrb[0].mxu0
  %v10158 = vadd.f32 0.0, %v10157
  %10159 = vmatprep.mubr.f32.mxu0 0.0
  %10160 = vmatmul.mubr.f32.gmra.mrb[0].mxu0 %v4671
  %v10161 = vpop.f32.mrb[0].mxu0
  %v10162 = vadd.f32 0.0, %v10161
  %v10163 = vpop.f32.mrb[0].mxu0
  %v10164 = vadd.f32 0.0, %v10163
  %10165 = vmatprep.mubr.f32.mxu0 0.0
  %10166 = vmatmul.mubr.f32.gmra.mrb[0].mxu0 %v4672
  %v10167 = vpop.f32.mrb[0].mxu0
  %v10168 = vadd.f32 0.0, %v10167
  %v10169 = vpop.f32.mrb[0].mxu0
  %v10170 = vadd.f32 0.0, %v10169
  %10171 = vmatprep.mubr.f32.mxu0 0.0
  %10172 = vmatmul.mubr.f32.gmra.mrb[0].mxu0 %v4673
  %v10173 = vpop.f32.mrb[0].mxu0
  %v10174 = vadd.f32 0.0, %v10173
  %v10175 = vpop.f32.mrb[0].mxu0
  %v10176 = vadd.f32 0.0, %v10175
  %10177 = vmatprep.mubr.f32.mxu0 0.0
  %10178 = vmatmul.mubr.f32.gmra.mrb[0].mxu0 %v4674
  %v10179 = vpop.f32.mrb[0].mxu0
  %v10180 = vadd.f32 0.0, %v10179
  %v10181 = vpop.f32.mrb[0].mxu0
  %v10182 = vadd.f32 0.0, %v10181
  %10183 = vmatprep.mubr.f32.mxu0 0.0
  %10184 = vmatmul.mubr.f32.gmra.mrb[0].mxu0 %v4675
  %v10185 = vpop.f32.mrb[0].mxu0
  %v10186 = vadd.f32 0.0, %v10185
  %v10187 = vpop.f32.mrb[0].mxu0
  %v10188 = vadd.f32 0.0, %v10187
  %10189 = vmatprep.mubr.f32.mxu0 0.0
  %10190 = vmatmul.mubr.f32.gmra.mrb[0].mxu0 %v4676
  %v10191 = vpop.f32.mrb[0].mxu0
  %v10192 = vadd.f32 0.0, %v10191
  %v10193 = vpop.f32.mrb[0].mxu0
  %v10194 = vadd.f32 0.0, %v10193
  %10195 = vmatprep.mubr.f32.mxu0 0.0
  %10196 = vmatmul.mubr.f32.gmra.mrb[0].mxu0 %v4677
  %v10197 = vpop.f32.mrb[0].mxu0
  %v10198 = vadd.f32 0.0, %v10197
  %v10199 = vpop.f32.mrb[0].mxu0
  %v10200 = vadd.f32 0.0, %v10199
  %10201 = vdwg.mxu0
  %s10202 = scalar_lea.vmem %s53, 21
  %v10203 = vld [vmem:[%s10202] ss:$8 sm:$0x3]
  %v10205 = vlaneseq
  %v10206 = vshrl.u32 %v10205, 7
  %v10207 = vsub.s32 0, %v10206
  %v10208 = vrot.slane %v10203, %v10207
  %v10209 = vlaneseq
  %v10210 = vshrl.u32 %v10209, 7
  %v10211 = vsub.s32 1, %v10210
  %v10212 = vrot.slane %v10203, %v10211
  %v10215 = vmul.f32 %v10108, %v10208
  %v10216 = vmul.f32 %v10110, %v10212
  %v10217 = vmul.f32 %v10114, %v10208
  %v10218 = vmul.f32 %v10116, %v10212
  %v10219 = vmul.f32 %v10120, %v10208
  %v10220 = vmul.f32 %v10122, %v10212
  %v10221 = vmul.f32 %v10126, %v10208
  %v10222 = vmul.f32 %v10128, %v10212
  %v10223 = vmul.f32 %v10132, %v10208
  %v10224 = vmul.f32 %v10134, %v10212
  %v10225 = vmul.f32 %v10138, %v10208
  %v10226 = vmul.f32 %v10140, %v10212
  %v10227 = vmul.f32 %v10144, %v10208
  %v10228 = vmul.f32 %v10146, %v10212
  %v10229 = vmul.f32 %v10150, %v10208
  %v10230 = vmul.f32 %v10152, %v10212
  %v10231 = vmul.f32 %v10156, %v10208
  %v10232 = vmul.f32 %v10158, %v10212
  %v10233 = vmul.f32 %v10162, %v10208
  %v10234 = vmul.f32 %v10164, %v10212
  %v10235 = vmul.f32 %v10168, %v10208
  %v10236 = vmul.f32 %v10170, %v10212
  %v10237 = vmul.f32 %v10174, %v10208
  %v10238 = vmul.f32 %v10176, %v10212
  %v10239 = vmul.f32 %v10180, %v10208
  %v10240 = vmul.f32 %v10182, %v10212
  %v10241 = vmul.f32 %v10186, %v10208
  %v10242 = vmul.f32 %v10188, %v10212
  %v10243 = vmul.f32 %v10192, %v10208
  %v10244 = vmul.f32 %v10194, %v10212
  %v10245 = vmul.f32 %v10198, %v10208
  %v10246 = vmul.f32 %v10200, %v10212
  %v10247 = vadd.f32 %v10009, %v10215
  %v10248 = vadd.f32 %v10010, %v10216
  %v10249 = vadd.f32 %v10011, %v10217
  %v10250 = vadd.f32 %v10012, %v10218
  %v10251 = vadd.f32 %v10013, %v10219
  %v10252 = vadd.f32 %v10014, %v10220
  %v10253 = vadd.f32 %v10015, %v10221
  %v10254 = vadd.f32 %v10016, %v10222
  %v10255 = vadd.f32 %v10017, %v10223
  %v10256 = vadd.f32 %v10018, %v10224
  %v10257 = vadd.f32 %v10019, %v10225
  %v10258 = vadd.f32 %v10020, %v10226
  %v10259 = vadd.f32 %v10021, %v10227
  %v10260 = vadd.f32 %v10022, %v10228
  %v10261 = vadd.f32 %v10023, %v10229
  %v10262 = vadd.f32 %v10024, %v10230
  %v10263 = vadd.f32 %v10025, %v10231
  %v10264 = vadd.f32 %v10026, %v10232
  %v10265 = vadd.f32 %v10027, %v10233
  %v10266 = vadd.f32 %v10028, %v10234
  %v10267 = vadd.f32 %v10029, %v10235
  %v10268 = vadd.f32 %v10030, %v10236
  %v10269 = vadd.f32 %v10031, %v10237
  %v10270 = vadd.f32 %v10032, %v10238
  %v10271 = vadd.f32 %v10033, %v10239
  %v10272 = vadd.f32 %v10034, %v10240
  %v10273 = vadd.f32 %v10035, %v10241
  %v10274 = vadd.f32 %v10036, %v10242
  %v10275 = vadd.f32 %v10037, %v10243
  %v10276 = vadd.f32 %v10038, %v10244
  %v10277 = vadd.f32 %v10039, %v10245
  %v10278 = vadd.f32 %v10040, %v10246
  %10279 = vmatprep.subr.mxu0 %v9013
  %10280 = vmatpush1.msra.mxu0 %v9011
  %10281 = vmatprep.subr.mxu0 %v9017
  %10282 = vmatpush1.msra.mxu0 %v9015
  %10283 = vmatprep.subr.mxu0 %v9023
  %10284 = vmatpush1.msra.mxu0 %v9021
  %10285 = vmatprep.subr.mxu0 %v9027
  %10286 = vmatpush1.msra.mxu0 %v9025
  %10287 = vmatprep.subr.mxu0 %v9033
  %10288 = vmatpush1.msra.mxu0 %v9031
  %10289 = vmatprep.subr.mxu0 %v9037
  %10290 = vmatpush1.msra.mxu0 %v9035
  %10291 = vmatprep.subr.mxu0 %v9043
  %10292 = vmatpush1.msra.mxu0 %v9041
  %10293 = vmatprep.subr.mxu0 %v9047
  %10294 = vmatpush1.msra.mxu0 %v9045
  %10295 = vmatprep.subr.mxu0 %v9053
  %10296 = vmatpush1.msra.mxu0 %v9051
  %10297 = vmatprep.subr.mxu0 %v9057
  %10298 = vmatpush1.msra.mxu0 %v9055
  %10299 = vmatprep.subr.mxu0 %v9063
  %10300 = vmatpush1.msra.mxu0 %v9061
  %10301 = vmatprep.subr.mxu0 %v9067
  %10302 = vmatpush1.msra.mxu0 %v9065
  %10303 = vmatprep.subr.mxu0 %v9073
  %10304 = vmatpush1.msra.mxu0 %v9071
  %10305 = vmatprep.subr.mxu0 %v9077
  %10306 = vmatpush1.msra.mxu0 %v9075
  %10307 = vmatprep.subr.mxu0 %v9083
  %10308 = vmatpush1.msra.mxu0 %v9081
  %10309 = vmatprep.subr.mxu0 %v9087
  %10310 = vmatpush1.msra.mxu0 %v9085
  %10311 = vmatprep.subr.mxu0 0.0
  %10312 = vmatpush1.msra.mxu0 0.0
  %10313 = vmatprep.subr.mxu0 0.0
  %10314 = vmatpush1.msra.mxu0 0.0
  %10315 = vmatprep.subr.mxu0 0.0
  %10316 = vmatpush1.msra.mxu0 0.0
  %10317 = vmatprep.subr.mxu0 0.0
  %10318 = vmatpush1.msra.mxu0 0.0
  %10319 = vmatprep.subr.mxu0 0.0
  %10320 = vmatpush1.msra.mxu0 0.0
  %10321 = vmatprep.subr.mxu0 0.0
  %10322 = vmatpush1.msra.mxu0 0.0
  %10323 = vmatprep.subr.mxu0 0.0
  %10324 = vmatpush1.msra.mxu0 0.0
  %10325 = vmatprep.subr.mxu0 0.0
  %10326 = vmatpush1.msra.mxu0 0.0
  %10327 = vmatprep.subr.mxu0 0.0
  %10328 = vmatpush1.msra.mxu0 0.0
  %10329 = vmatprep.subr.mxu0 0.0
  %10330 = vmatpush1.msra.mxu0 0.0
  %10331 = vmatprep.subr.mxu0 0.0
  %10332 = vmatpush1.msra.mxu0 0.0
  %10333 = vmatprep.subr.mxu0 0.0
  %10334 = vmatpush1.msra.mxu0 0.0
  %10335 = vmatprep.subr.mxu0 0.0
  %10336 = vmatpush1.msra.mxu0 0.0
  %10337 = vmatprep.subr.mxu0 0.0
  %10338 = vmatpush1.msra.mxu0 0.0
  %10339 = vmatprep.subr.mxu0 0.0
  %10340 = vmatpush1.msra.mxu0 0.0
  %10341 = vmatprep.subr.mxu0 0.0
  %10342 = vmatpush1.msra.mxu0 0.0
  %10343 = vmatprep.mubr.f32.mxu0 0.0
  %10344 = vmatmul.mubr.f32.gmra.mrb[0].mxu0 %v4916
  %v10345 = vpop.f32.mrb[0].mxu0
  %v10346 = vadd.f32 0.0, %v10345
  %v10347 = vpop.f32.mrb[0].mxu0
  %v10348 = vadd.f32 0.0, %v10347
  %10349 = vmatprep.mubr.f32.mxu0 0.0
  %10350 = vmatmul.mubr.f32.gmra.mrb[0].mxu0 %v4917
  %v10351 = vpop.f32.mrb[0].mxu0
  %v10352 = vadd.f32 0.0, %v10351
  %v10353 = vpop.f32.mrb[0].mxu0
  %v10354 = vadd.f32 0.0, %v10353
  %10355 = vmatprep.mubr.f32.mxu0 0.0
  %10356 = vmatmul.mubr.f32.gmra.mrb[0].mxu0 %v4918
  %v10357 = vpop.f32.mrb[0].mxu0
  %v10358 = vadd.f32 0.0, %v10357
  %v10359 = vpop.f32.mrb[0].mxu0
  %v10360 = vadd.f32 0.0, %v10359
  %10361 = vmatprep.mubr.f32.mxu0 0.0
  %10362 = vmatmul.mubr.f32.gmra.mrb[0].mxu0 %v4919
  %v10363 = vpop.f32.mrb[0].mxu0
  %v10364 = vadd.f32 0.0, %v10363
  %v10365 = vpop.f32.mrb[0].mxu0
  %v10366 = vadd.f32 0.0, %v10365
  %10367 = vmatprep.mubr.f32.mxu0 0.0
  %10368 = vmatmul.mubr.f32.gmra.mrb[0].mxu0 %v4920
  %v10369 = vpop.f32.mrb[0].mxu0
  %v10370 = vadd.f32 0.0, %v10369
  %v10371 = vpop.f32.mrb[0].mxu0
  %v10372 = vadd.f32 0.0, %v10371
  %10373 = vmatprep.mubr.f32.mxu0 0.0
  %10374 = vmatmul.mubr.f32.gmra.mrb[0].mxu0 %v4921
  %v10375 = vpop.f32.mrb[0].mxu0
  %v10376 = vadd.f32 0.0, %v10375
  %v10377 = vpop.f32.mrb[0].mxu0
  %v10378 = vadd.f32 0.0, %v10377
  %10379 = vmatprep.mubr.f32.mxu0 0.0
  %10380 = vmatmul.mubr.f32.gmra.mrb[0].mxu0 %v4922
  %v10381 = vpop.f32.mrb[0].mxu0
  %v10382 = vadd.f32 0.0, %v10381
  %v10383 = vpop.f32.mrb[0].mxu0
  %v10384 = vadd.f32 0.0, %v10383
  %10385 = vmatprep.mubr.f32.mxu0 0.0
  %10386 = vmatmul.mubr.f32.gmra.mrb[0].mxu0 %v4923
  %v10387 = vpop.f32.mrb[0].mxu0
  %v10388 = vadd.f32 0.0, %v10387
  %v10389 = vpop.f32.mrb[0].mxu0
  %v10390 = vadd.f32 0.0, %v10389
  %10391 = vmatprep.mubr.f32.mxu0 0.0
  %10392 = vmatmul.mubr.f32.gmra.mrb[0].mxu0 %v4924
  %v10393 = vpop.f32.mrb[0].mxu0
  %v10394 = vadd.f32 0.0, %v10393
  %v10395 = vpop.f32.mrb[0].mxu0
  %v10396 = vadd.f32 0.0, %v10395
  %10397 = vmatprep.mubr.f32.mxu0 0.0
  %10398 = vmatmul.mubr.f32.gmra.mrb[0].mxu0 %v4925
  %v10399 = vpop.f32.mrb[0].mxu0
  %v10400 = vadd.f32 0.0, %v10399
  %v10401 = vpop.f32.mrb[0].mxu0
  %v10402 = vadd.f32 0.0, %v10401
  %10403 = vmatprep.mubr.f32.mxu0 0.0
  %10404 = vmatmul.mubr.f32.gmra.mrb[0].mxu0 %v4926
  %v10405 = vpop.f32.mrb[0].mxu0
  %v10406 = vadd.f32 0.0, %v10405
  %v10407 = vpop.f32.mrb[0].mxu0
  %v10408 = vadd.f32 0.0, %v10407
  %10409 = vmatprep.mubr.f32.mxu0 0.0
  %10410 = vmatmul.mubr.f32.gmra.mrb[0].mxu0 %v4927
  %v10411 = vpop.f32.mrb[0].mxu0
  %v10412 = vadd.f32 0.0, %v10411
  %v10413 = vpop.f32.mrb[0].mxu0
  %v10414 = vadd.f32 0.0, %v10413
  %10415 = vmatprep.mubr.f32.mxu0 0.0
  %10416 = vmatmul.mubr.f32.gmra.mrb[0].mxu0 %v4928
  %v10417 = vpop.f32.mrb[0].mxu0
  %v10418 = vadd.f32 0.0, %v10417
  %v10419 = vpop.f32.mrb[0].mxu0
  %v10420 = vadd.f32 0.0, %v10419
  %10421 = vmatprep.mubr.f32.mxu0 0.0
  %10422 = vmatmul.mubr.f32.gmra.mrb[0].mxu0 %v4929
  %v10423 = vpop.f32.mrb[0].mxu0
  %v10424 = vadd.f32 0.0, %v10423
  %v10425 = vpop.f32.mrb[0].mxu0
  %v10426 = vadd.f32 0.0, %v10425
  %10427 = vmatprep.mubr.f32.mxu0 0.0
  %10428 = vmatmul.mubr.f32.gmra.mrb[0].mxu0 %v4930
  %v10429 = vpop.f32.mrb[0].mxu0
  %v10430 = vadd.f32 0.0, %v10429
  %v10431 = vpop.f32.mrb[0].mxu0
  %v10432 = vadd.f32 0.0, %v10431
  %10433 = vmatprep.mubr.f32.mxu0 0.0
  %10434 = vmatmul.mubr.f32.gmra.mrb[0].mxu0 %v4931
  %v10435 = vpop.f32.mrb[0].mxu0
  %v10436 = vadd.f32 0.0, %v10435
  %v10437 = vpop.f32.mrb[0].mxu0
  %v10438 = vadd.f32 0.0, %v10437
  %10439 = vdwg.mxu0
  %s10440 = scalar_lea.vmem %s53, 22
  %v10441 = vld [vmem:[%s10440] ss:$8 sm:$0x3]
  %v10443 = vlaneseq
  %v10444 = vshrl.u32 %v10443, 7
  %v10445 = vsub.s32 0, %v10444
  %v10446 = vrot.slane %v10441, %v10445
  %v10447 = vlaneseq
  %v10448 = vshrl.u32 %v10447, 7
  %v10449 = vsub.s32 1, %v10448
  %v10450 = vrot.slane %v10441, %v10449
  %v10453 = vmul.f32 %v10346, %v10446
  %v10454 = vmul.f32 %v10348, %v10450
  %v10455 = vmul.f32 %v10352, %v10446
  %v10456 = vmul.f32 %v10354, %v10450
  %v10457 = vmul.f32 %v10358, %v10446
  %v10458 = vmul.f32 %v10360, %v10450
  %v10459 = vmul.f32 %v10364, %v10446
  %v10460 = vmul.f32 %v10366, %v10450
  %v10461 = vmul.f32 %v10370, %v10446
  %v10462 = vmul.f32 %v10372, %v10450
  %v10463 = vmul.f32 %v10376, %v10446
  %v10464 = vmul.f32 %v10378, %v10450
  %v10465 = vmul.f32 %v10382, %v10446
  %v10466 = vmul.f32 %v10384, %v10450
  %v10467 = vmul.f32 %v10388, %v10446
  %v10468 = vmul.f32 %v10390, %v10450
  %v10469 = vmul.f32 %v10394, %v10446
  %v10470 = vmul.f32 %v10396, %v10450
  %v10471 = vmul.f32 %v10400, %v10446
  %v10472 = vmul.f32 %v10402, %v10450
  %v10473 = vmul.f32 %v10406, %v10446
  %v10474 = vmul.f32 %v10408, %v10450
  %v10475 = vmul.f32 %v10412, %v10446
  %v10476 = vmul.f32 %v10414, %v10450
  %v10477 = vmul.f32 %v10418, %v10446
  %v10478 = vmul.f32 %v10420, %v10450
  %v10479 = vmul.f32 %v10424, %v10446
  %v10480 = vmul.f32 %v10426, %v10450
  %v10481 = vmul.f32 %v10430, %v10446
  %v10482 = vmul.f32 %v10432, %v10450
  %v10483 = vmul.f32 %v10436, %v10446
  %v10484 = vmul.f32 %v10438, %v10450
  %v10485 = vadd.f32 %v10247, %v10453
  %v10486 = vadd.f32 %v10248, %v10454
  %v10487 = vadd.f32 %v10249, %v10455
  %v10488 = vadd.f32 %v10250, %v10456
  %v10489 = vadd.f32 %v10251, %v10457
  %v10490 = vadd.f32 %v10252, %v10458
  %v10491 = vadd.f32 %v10253, %v10459
  %v10492 = vadd.f32 %v10254, %v10460
  %v10493 = vadd.f32 %v10255, %v10461
  %v10494 = vadd.f32 %v10256, %v10462
  %v10495 = vadd.f32 %v10257, %v10463
  %v10496 = vadd.f32 %v10258, %v10464
  %v10497 = vadd.f32 %v10259, %v10465
  %v10498 = vadd.f32 %v10260, %v10466
  %v10499 = vadd.f32 %v10261, %v10467
  %v10500 = vadd.f32 %v10262, %v10468
  %v10501 = vadd.f32 %v10263, %v10469
  %v10502 = vadd.f32 %v10264, %v10470
  %v10503 = vadd.f32 %v10265, %v10471
  %v10504 = vadd.f32 %v10266, %v10472
  %v10505 = vadd.f32 %v10267, %v10473
  %v10506 = vadd.f32 %v10268, %v10474
  %v10507 = vadd.f32 %v10269, %v10475
  %v10508 = vadd.f32 %v10270, %v10476
  %v10509 = vadd.f32 %v10271, %v10477
  %v10510 = vadd.f32 %v10272, %v10478
  %v10511 = vadd.f32 %v10273, %v10479
  %v10512 = vadd.f32 %v10274, %v10480
  %v10513 = vadd.f32 %v10275, %v10481
  %v10514 = vadd.f32 %v10276, %v10482
  %v10515 = vadd.f32 %v10277, %v10483
  %v10516 = vadd.f32 %v10278, %v10484
  %10517 = vmatprep.subr.mxu0 %v9013
  %10518 = vmatpush1.msra.mxu0 %v9011
  %10519 = vmatprep.subr.mxu0 %v9017
  %10520 = vmatpush1.msra.mxu0 %v9015
  %10521 = vmatprep.subr.mxu0 %v9023
  %10522 = vmatpush1.msra.mxu0 %v9021
  %10523 = vmatprep.subr.mxu0 %v9027
  %10524 = vmatpush1.msra.mxu0 %v9025
  %10525 = vmatprep.subr.mxu0 %v9033
  %10526 = vmatpush1.msra.mxu0 %v9031
  %10527 = vmatprep.subr.mxu0 %v9037
  %10528 = vmatpush1.msra.mxu0 %v9035
  %10529 = vmatprep.subr.mxu0 %v9043
  %10530 = vmatpush1.msra.mxu0 %v9041
  %10531 = vmatprep.subr.mxu0 %v9047
  %10532 = vmatpush1.msra.mxu0 %v9045
  %10533 = vmatprep.subr.mxu0 %v9053
  %10534 = vmatpush1.msra.mxu0 %v9051
  %10535 = vmatprep.subr.mxu0 %v9057
  %10536 = vmatpush1.msra.mxu0 %v9055
  %10537 = vmatprep.subr.mxu0 %v9063
  %10538 = vmatpush1.msra.mxu0 %v9061
  %10539 = vmatprep.subr.mxu0 %v9067
  %10540 = vmatpush1.msra.mxu0 %v9065
  %10541 = vmatprep.subr.mxu0 %v9073
  %10542 = vmatpush1.msra.mxu0 %v9071
  %10543 = vmatprep.subr.mxu0 %v9077
  %10544 = vmatpush1.msra.mxu0 %v9075
  %10545 = vmatprep.subr.mxu0 %v9083
  %10546 = vmatpush1.msra.mxu0 %v9081
  %10547 = vmatprep.subr.mxu0 %v9087
  %10548 = vmatpush1.msra.mxu0 %v9085
  %10549 = vmatprep.subr.mxu0 0.0
  %10550 = vmatpush1.msra.mxu0 0.0
  %10551 = vmatprep.subr.mxu0 0.0
  %10552 = vmatpush1.msra.mxu0 0.0
  %10553 = vmatprep.subr.mxu0 0.0
  %10554 = vmatpush1.msra.mxu0 0.0
  %10555 = vmatprep.subr.mxu0 0.0
  %10556 = vmatpush1.msra.mxu0 0.0
  %10557 = vmatprep.subr.mxu0 0.0
  %10558 = vmatpush1.msra.mxu0 0.0
  %10559 = vmatprep.subr.mxu0 0.0
  %10560 = vmatpush1.msra.mxu0 0.0
  %10561 = vmatprep.subr.mxu0 0.0
  %10562 = vmatpush1.msra.mxu0 0.0
  %10563 = vmatprep.subr.mxu0 0.0
  %10564 = vmatpush1.msra.mxu0 0.0
  %10565 = vmatprep.subr.mxu0 0.0
  %10566 = vmatpush1.msra.mxu0 0.0
  %10567 = vmatprep.subr.mxu0 0.0
  %10568 = vmatpush1.msra.mxu0 0.0
  %10569 = vmatprep.subr.mxu0 0.0
  %10570 = vmatpush1.msra.mxu0 0.0
  %10571 = vmatprep.subr.mxu0 0.0
  %10572 = vmatpush1.msra.mxu0 0.0
  %10573 = vmatprep.subr.mxu0 0.0
  %10574 = vmatpush1.msra.mxu0 0.0
  %10575 = vmatprep.subr.mxu0 0.0
  %10576 = vmatpush1.msra.mxu0 0.0
  %10577 = vmatprep.subr.mxu0 0.0
  %10578 = vmatpush1.msra.mxu0 0.0
  %10579 = vmatprep.subr.mxu0 0.0
  %10580 = vmatpush1.msra.mxu0 0.0
  %10581 = vmatprep.mubr.f32.mxu0 0.0
  %10582 = vmatmul.mubr.f32.gmra.mrb[0].mxu0 %v5170
  %v10583 = vpop.f32.mrb[0].mxu0
  %v10584 = vadd.f32 0.0, %v10583
  %v10585 = vpop.f32.mrb[0].mxu0
  %v10586 = vadd.f32 0.0, %v10585
  %10587 = vmatprep.mubr.f32.mxu0 0.0
  %10588 = vmatmul.mubr.f32.gmra.mrb[0].mxu0 %v5171
  %v10589 = vpop.f32.mrb[0].mxu0
  %v10590 = vadd.f32 0.0, %v10589
  %v10591 = vpop.f32.mrb[0].mxu0
  %v10592 = vadd.f32 0.0, %v10591
  %10593 = vmatprep.mubr.f32.mxu0 0.0
  %10594 = vmatmul.mubr.f32.gmra.mrb[0].mxu0 %v5172
  %v10595 = vpop.f32.mrb[0].mxu0
  %v10596 = vadd.f32 0.0, %v10595
  %v10597 = vpop.f32.mrb[0].mxu0
  %v10598 = vadd.f32 0.0, %v10597
  %10599 = vmatprep.mubr.f32.mxu0 0.0
  %10600 = vmatmul.mubr.f32.gmra.mrb[0].mxu0 %v5173
  %v10601 = vpop.f32.mrb[0].mxu0
  %v10602 = vadd.f32 0.0, %v10601
  %v10603 = vpop.f32.mrb[0].mxu0
  %v10604 = vadd.f32 0.0, %v10603
  %10605 = vmatprep.mubr.f32.mxu0 0.0
  %10606 = vmatmul.mubr.f32.gmra.mrb[0].mxu0 %v5174
  %v10607 = vpop.f32.mrb[0].mxu0
  %v10608 = vadd.f32 0.0, %v10607
  %v10609 = vpop.f32.mrb[0].mxu0
  %v10610 = vadd.f32 0.0, %v10609
  %10611 = vmatprep.mubr.f32.mxu0 0.0
  %10612 = vmatmul.mubr.f32.gmra.mrb[0].mxu0 %v5175
  %v10613 = vpop.f32.mrb[0].mxu0
  %v10614 = vadd.f32 0.0, %v10613
  %v10615 = vpop.f32.mrb[0].mxu0
  %v10616 = vadd.f32 0.0, %v10615
  %10617 = vmatprep.mubr.f32.mxu0 0.0
  %10618 = vmatmul.mubr.f32.gmra.mrb[0].mxu0 %v5176
  %v10619 = vpop.f32.mrb[0].mxu0
  %v10620 = vadd.f32 0.0, %v10619
  %v10621 = vpop.f32.mrb[0].mxu0
  %v10622 = vadd.f32 0.0, %v10621
  %10623 = vmatprep.mubr.f32.mxu0 0.0
  %10624 = vmatmul.mubr.f32.gmra.mrb[0].mxu0 %v5177
  %v10625 = vpop.f32.mrb[0].mxu0
  %v10626 = vadd.f32 0.0, %v10625
  %v10627 = vpop.f32.mrb[0].mxu0
  %v10628 = vadd.f32 0.0, %v10627
  %10629 = vmatprep.mubr.f32.mxu0 0.0
  %10630 = vmatmul.mubr.f32.gmra.mrb[0].mxu0 %v5178
  %v10631 = vpop.f32.mrb[0].mxu0
  %v10632 = vadd.f32 0.0, %v10631
  %v10633 = vpop.f32.mrb[0].mxu0
  %v10634 = vadd.f32 0.0, %v10633
  %10635 = vmatprep.mubr.f32.mxu0 0.0
  %10636 = vmatmul.mubr.f32.gmra.mrb[0].mxu0 %v5179
  %v10637 = vpop.f32.mrb[0].mxu0
  %v10638 = vadd.f32 0.0, %v10637
  %v10639 = vpop.f32.mrb[0].mxu0
  %v10640 = vadd.f32 0.0, %v10639
  %10641 = vmatprep.mubr.f32.mxu0 0.0
  %10642 = vmatmul.mubr.f32.gmra.mrb[0].mxu0 %v5180
  %v10643 = vpop.f32.mrb[0].mxu0
  %v10644 = vadd.f32 0.0, %v10643
  %v10645 = vpop.f32.mrb[0].mxu0
  %v10646 = vadd.f32 0.0, %v10645
  %10647 = vmatprep.mubr.f32.mxu0 0.0
  %10648 = vmatmul.mubr.f32.gmra.mrb[0].mxu0 %v5181
  %v10649 = vpop.f32.mrb[0].mxu0
  %v10650 = vadd.f32 0.0, %v10649
  %v10651 = vpop.f32.mrb[0].mxu0
  %v10652 = vadd.f32 0.0, %v10651
  %10653 = vmatprep.mubr.f32.mxu0 0.0
  %10654 = vmatmul.mubr.f32.gmra.mrb[0].mxu0 %v5182
  %v10655 = vpop.f32.mrb[0].mxu0
  %v10656 = vadd.f32 0.0, %v10655
  %v10657 = vpop.f32.mrb[0].mxu0
  %v10658 = vadd.f32 0.0, %v10657
  %10659 = vmatprep.mubr.f32.mxu0 0.0
  %10660 = vmatmul.mubr.f32.gmra.mrb[0].mxu0 %v5183
  %v10661 = vpop.f32.mrb[0].mxu0
  %v10662 = vadd.f32 0.0, %v10661
  %v10663 = vpop.f32.mrb[0].mxu0
  %v10664 = vadd.f32 0.0, %v10663
  %10665 = vmatprep.mubr.f32.mxu0 0.0
  %10666 = vmatmul.mubr.f32.gmra.mrb[0].mxu0 %v5184
  %v10667 = vpop.f32.mrb[0].mxu0
  %v10668 = vadd.f32 0.0, %v10667
  %v10669 = vpop.f32.mrb[0].mxu0
  %v10670 = vadd.f32 0.0, %v10669
  %10671 = vmatprep.mubr.f32.mxu0 0.0
  %10672 = vmatmul.mubr.f32.gmra.mrb[0].mxu0 %v5185
  %v10673 = vpop.f32.mrb[0].mxu0
  %v10674 = vadd.f32 0.0, %v10673
  %v10675 = vpop.f32.mrb[0].mxu0
  %v10676 = vadd.f32 0.0, %v10675
  %10677 = vdwg.mxu0
  %s10678 = scalar_lea.vmem %s53, 23
  %v10679 = vld [vmem:[%s10678] ss:$8 sm:$0x3]
  %v10681 = vlaneseq
  %v10682 = vshrl.u32 %v10681, 7
  %v10683 = vsub.s32 0, %v10682
  %v10684 = vrot.slane %v10679, %v10683
  %v10685 = vlaneseq
  %v10686 = vshrl.u32 %v10685, 7
  %v10687 = vsub.s32 1, %v10686
  %v10688 = vrot.slane %v10679, %v10687
  %v10691 = vmul.f32 %v10584, %v10684
  %v10692 = vmul.f32 %v10586, %v10688
  %v10693 = vmul.f32 %v10590, %v10684
  %v10694 = vmul.f32 %v10592, %v10688
  %v10695 = vmul.f32 %v10596, %v10684
  %v10696 = vmul.f32 %v10598, %v10688
  %v10697 = vmul.f32 %v10602, %v10684
  %v10698 = vmul.f32 %v10604, %v10688
  %v10699 = vmul.f32 %v10608, %v10684
  %v10700 = vmul.f32 %v10610, %v10688
  %v10701 = vmul.f32 %v10614, %v10684
  %v10702 = vmul.f32 %v10616, %v10688
  %v10703 = vmul.f32 %v10620, %v10684
  %v10704 = vmul.f32 %v10622, %v10688
  %v10705 = vmul.f32 %v10626, %v10684
  %v10706 = vmul.f32 %v10628, %v10688
  %v10707 = vmul.f32 %v10632, %v10684
  %v10708 = vmul.f32 %v10634, %v10688
  %v10709 = vmul.f32 %v10638, %v10684
  %v10710 = vmul.f32 %v10640, %v10688
  %v10711 = vmul.f32 %v10644, %v10684
  %v10712 = vmul.f32 %v10646, %v10688
  %v10713 = vmul.f32 %v10650, %v10684
  %v10714 = vmul.f32 %v10652, %v10688
  %v10715 = vmul.f32 %v10656, %v10684
  %v10716 = vmul.f32 %v10658, %v10688
  %v10717 = vmul.f32 %v10662, %v10684
  %v10718 = vmul.f32 %v10664, %v10688
  %v10719 = vmul.f32 %v10668, %v10684
  %v10720 = vmul.f32 %v10670, %v10688
  %v10721 = vmul.f32 %v10674, %v10684
  %v10722 = vmul.f32 %v10676, %v10688
  %v10723 = vadd.f32 %v10485, %v10691
  %v10724 = vadd.f32 %v10486, %v10692
  %v10725 = vadd.f32 %v10487, %v10693
  %v10726 = vadd.f32 %v10488, %v10694
  %v10727 = vadd.f32 %v10489, %v10695
  %v10728 = vadd.f32 %v10490, %v10696
  %v10729 = vadd.f32 %v10491, %v10697
  %v10730 = vadd.f32 %v10492, %v10698
  %v10731 = vadd.f32 %v10493, %v10699
  %v10732 = vadd.f32 %v10494, %v10700
  %v10733 = vadd.f32 %v10495, %v10701
  %v10734 = vadd.f32 %v10496, %v10702
  %v10735 = vadd.f32 %v10497, %v10703
  %v10736 = vadd.f32 %v10498, %v10704
  %v10737 = vadd.f32 %v10499, %v10705
  %v10738 = vadd.f32 %v10500, %v10706
  %v10739 = vadd.f32 %v10501, %v10707
  %v10740 = vadd.f32 %v10502, %v10708
  %v10741 = vadd.f32 %v10503, %v10709
  %v10742 = vadd.f32 %v10504, %v10710
  %v10743 = vadd.f32 %v10505, %v10711
  %v10744 = vadd.f32 %v10506, %v10712
  %v10745 = vadd.f32 %v10507, %v10713
  %v10746 = vadd.f32 %v10508, %v10714
  %v10747 = vadd.f32 %v10509, %v10715
  %v10748 = vadd.f32 %v10510, %v10716
  %v10749 = vadd.f32 %v10511, %v10717
  %v10750 = vadd.f32 %v10512, %v10718
  %v10751 = vadd.f32 %v10513, %v10719
  %v10752 = vadd.f32 %v10514, %v10720
  %v10753 = vadd.f32 %v10515, %v10721
  %v10754 = vadd.f32 %v10516, %v10722
  %10755 = vmatprep.subr.mxu0 %v9013
  %10756 = vmatpush1.msra.mxu0 %v9011
  %10757 = vmatprep.subr.mxu0 %v9017
  %10758 = vmatpush1.msra.mxu0 %v9015
  %10759 = vmatprep.subr.mxu0 %v9023
  %10760 = vmatpush1.msra.mxu0 %v9021
  %10761 = vmatprep.subr.mxu0 %v9027
  %10762 = vmatpush1.msra.mxu0 %v9025
  %10763 = vmatprep.subr.mxu0 %v9033
  %10764 = vmatpush1.msra.mxu0 %v9031
  %10765 = vmatprep.subr.mxu0 %v9037
  %10766 = vmatpush1.msra.mxu0 %v9035
  %10767 = vmatprep.subr.mxu0 %v9043
  %10768 = vmatpush1.msra.mxu0 %v9041
  %10769 = vmatprep.subr.mxu0 %v9047
  %10770 = vmatpush1.msra.mxu0 %v9045
  %10771 = vmatprep.subr.mxu0 %v9053
  %10772 = vmatpush1.msra.mxu0 %v9051
  %10773 = vmatprep.subr.mxu0 %v9057
  %10774 = vmatpush1.msra.mxu0 %v9055
  %10775 = vmatprep.subr.mxu0 %v9063
  %10776 = vmatpush1.msra.mxu0 %v9061
  %10777 = vmatprep.subr.mxu0 %v9067
  %10778 = vmatpush1.msra.mxu0 %v9065
  %10779 = vmatprep.subr.mxu0 %v9073
  %10780 = vmatpush1.msra.mxu0 %v9071
  %10781 = vmatprep.subr.mxu0 %v9077
  %10782 = vmatpush1.msra.mxu0 %v9075
  %10783 = vmatprep.subr.mxu0 %v9083
  %10784 = vmatpush1.msra.mxu0 %v9081
  %10785 = vmatprep.subr.mxu0 %v9087
  %10786 = vmatpush1.msra.mxu0 %v9085
  %10787 = vmatprep.subr.mxu0 0.0
  %10788 = vmatpush1.msra.mxu0 0.0
  %10789 = vmatprep.subr.mxu0 0.0
  %10790 = vmatpush1.msra.mxu0 0.0
  %10791 = vmatprep.subr.mxu0 0.0
  %10792 = vmatpush1.msra.mxu0 0.0
  %10793 = vmatprep.subr.mxu0 0.0
  %10794 = vmatpush1.msra.mxu0 0.0
  %10795 = vmatprep.subr.mxu0 0.0
  %10796 = vmatpush1.msra.mxu0 0.0
  %10797 = vmatprep.subr.mxu0 0.0
  %10798 = vmatpush1.msra.mxu0 0.0
  %10799 = vmatprep.subr.mxu0 0.0
  %10800 = vmatpush1.msra.mxu0 0.0
  %10801 = vmatprep.subr.mxu0 0.0
  %10802 = vmatpush1.msra.mxu0 0.0
  %10803 = vmatprep.subr.mxu0 0.0
  %10804 = vmatpush1.msra.mxu0 0.0
  %10805 = vmatprep.subr.mxu0 0.0
  %10806 = vmatpush1.msra.mxu0 0.0
  %10807 = vmatprep.subr.mxu0 0.0
  %10808 = vmatpush1.msra.mxu0 0.0
  %10809 = vmatprep.subr.mxu0 0.0
  %10810 = vmatpush1.msra.mxu0 0.0
  %10811 = vmatprep.subr.mxu0 0.0
  %10812 = vmatpush1.msra.mxu0 0.0
  %10813 = vmatprep.subr.mxu0 0.0
  %10814 = vmatpush1.msra.mxu0 0.0
  %10815 = vmatprep.subr.mxu0 0.0
  %10816 = vmatpush1.msra.mxu0 0.0
  %10817 = vmatprep.subr.mxu0 0.0
  %10818 = vmatpush1.msra.mxu0 0.0
  %10819 = vmatprep.mubr.f32.mxu0 0.0
  %10820 = vmatmul.mubr.f32.gmra.mrb[0].mxu0 %v5424
  %v10821 = vpop.f32.mrb[0].mxu0
  %v10822 = vadd.f32 0.0, %v10821
  %v10823 = vpop.f32.mrb[0].mxu0
  %v10824 = vadd.f32 0.0, %v10823
  %10825 = vmatprep.mubr.f32.mxu0 0.0
  %10826 = vmatmul.mubr.f32.gmra.mrb[0].mxu0 %v5425
  %v10827 = vpop.f32.mrb[0].mxu0
  %v10828 = vadd.f32 0.0, %v10827
  %v10829 = vpop.f32.mrb[0].mxu0
  %v10830 = vadd.f32 0.0, %v10829
  %10831 = vmatprep.mubr.f32.mxu0 0.0
  %10832 = vmatmul.mubr.f32.gmra.mrb[0].mxu0 %v5426
  %v10833 = vpop.f32.mrb[0].mxu0
  %v10834 = vadd.f32 0.0, %v10833
  %v10835 = vpop.f32.mrb[0].mxu0
  %v10836 = vadd.f32 0.0, %v10835
  %10837 = vmatprep.mubr.f32.mxu0 0.0
  %10838 = vmatmul.mubr.f32.gmra.mrb[0].mxu0 %v5427
  %v10839 = vpop.f32.mrb[0].mxu0
  %v10840 = vadd.f32 0.0, %v10839
  %v10841 = vpop.f32.mrb[0].mxu0
  %v10842 = vadd.f32 0.0, %v10841
  %10843 = vmatprep.mubr.f32.mxu0 0.0
  %10844 = vmatmul.mubr.f32.gmra.mrb[0].mxu0 %v5428
  %v10845 = vpop.f32.mrb[0].mxu0
  %v10846 = vadd.f32 0.0, %v10845
  %v10847 = vpop.f32.mrb[0].mxu0
  %v10848 = vadd.f32 0.0, %v10847
  %10849 = vmatprep.mubr.f32.mxu0 0.0
  %10850 = vmatmul.mubr.f32.gmra.mrb[0].mxu0 %v5429
  %v10851 = vpop.f32.mrb[0].mxu0
  %v10852 = vadd.f32 0.0, %v10851
  %v10853 = vpop.f32.mrb[0].mxu0
  %v10854 = vadd.f32 0.0, %v10853
  %10855 = vmatprep.mubr.f32.mxu0 0.0
  %10856 = vmatmul.mubr.f32.gmra.mrb[0].mxu0 %v5430
  %v10857 = vpop.f32.mrb[0].mxu0
  %v10858 = vadd.f32 0.0, %v10857
  %v10859 = vpop.f32.mrb[0].mxu0
  %v10860 = vadd.f32 0.0, %v10859
  %10861 = vmatprep.mubr.f32.mxu0 0.0
  %10862 = vmatmul.mubr.f32.gmra.mrb[0].mxu0 %v5431
  %v10863 = vpop.f32.mrb[0].mxu0
  %v10864 = vadd.f32 0.0, %v10863
  %v10865 = vpop.f32.mrb[0].mxu0
  %v10866 = vadd.f32 0.0, %v10865
  %10867 = vmatprep.mubr.f32.mxu0 0.0
  %10868 = vmatmul.mubr.f32.gmra.mrb[0].mxu0 %v5432
  %v10869 = vpop.f32.mrb[0].mxu0
  %v10870 = vadd.f32 0.0, %v10869
  %v10871 = vpop.f32.mrb[0].mxu0
  %v10872 = vadd.f32 0.0, %v10871
  %10873 = vmatprep.mubr.f32.mxu0 0.0
  %10874 = vmatmul.mubr.f32.gmra.mrb[0].mxu0 %v5433
  %v10875 = vpop.f32.mrb[0].mxu0
  %v10876 = vadd.f32 0.0, %v10875
  %v10877 = vpop.f32.mrb[0].mxu0
  %v10878 = vadd.f32 0.0, %v10877
  %10879 = vmatprep.mubr.f32.mxu0 0.0
  %10880 = vmatmul.mubr.f32.gmra.mrb[0].mxu0 %v5434
  %v10881 = vpop.f32.mrb[0].mxu0
  %v10882 = vadd.f32 0.0, %v10881
  %v10883 = vpop.f32.mrb[0].mxu0
  %v10884 = vadd.f32 0.0, %v10883
  %10885 = vmatprep.mubr.f32.mxu0 0.0
  %10886 = vmatmul.mubr.f32.gmra.mrb[0].mxu0 %v5435
  %v10887 = vpop.f32.mrb[0].mxu0
  %v10888 = vadd.f32 0.0, %v10887
  %v10889 = vpop.f32.mrb[0].mxu0
  %v10890 = vadd.f32 0.0, %v10889
  %10891 = vmatprep.mubr.f32.mxu0 0.0
  %10892 = vmatmul.mubr.f32.gmra.mrb[0].mxu0 %v5436
  %v10893 = vpop.f32.mrb[0].mxu0
  %v10894 = vadd.f32 0.0, %v10893
  %v10895 = vpop.f32.mrb[0].mxu0
  %v10896 = vadd.f32 0.0, %v10895
  %10897 = vmatprep.mubr.f32.mxu0 0.0
  %10898 = vmatmul.mubr.f32.gmra.mrb[0].mxu0 %v5437
  %v10899 = vpop.f32.mrb[0].mxu0
  %v10900 = vadd.f32 0.0, %v10899
  %v10901 = vpop.f32.mrb[0].mxu0
  %v10902 = vadd.f32 0.0, %v10901
  %10903 = vmatprep.mubr.f32.mxu0 0.0
  %10904 = vmatmul.mubr.f32.gmra.mrb[0].mxu0 %v5438
  %v10905 = vpop.f32.mrb[0].mxu0
  %v10906 = vadd.f32 0.0, %v10905
  %v10907 = vpop.f32.mrb[0].mxu0
  %v10908 = vadd.f32 0.0, %v10907
  %10909 = vmatprep.mubr.f32.mxu0 0.0
  %10910 = vmatmul.mubr.f32.gmra.mrb[0].mxu0 %v5439
  %v10911 = vpop.f32.mrb[0].mxu0
  %v10912 = vadd.f32 0.0, %v10911
  %v10913 = vpop.f32.mrb[0].mxu0
  %v10914 = vadd.f32 0.0, %v10913
  %10915 = vdwg.mxu0
  %s10916 = scalar_lea.vmem %s53, 32
  %v10917 = vld [vmem:[%s10916] ss:$8 sm:$0x3]
  %v10919 = vlaneseq
  %v10920 = vshrl.u32 %v10919, 7
  %v10921 = vsub.s32 0, %v10920
  %v10922 = vrot.slane %v10917, %v10921
  %v10923 = vlaneseq
  %v10924 = vshrl.u32 %v10923, 7
  %v10925 = vsub.s32 1, %v10924
  %v10926 = vrot.slane %v10917, %v10925
  %v10929 = vmul.f32 %v10822, %v10922
  %v10930 = vmul.f32 %v10824, %v10926
  %v10931 = vmul.f32 %v10828, %v10922
  %v10932 = vmul.f32 %v10830, %v10926
  %v10933 = vmul.f32 %v10834, %v10922
  %v10934 = vmul.f32 %v10836, %v10926
  %v10935 = vmul.f32 %v10840, %v10922
  %v10936 = vmul.f32 %v10842, %v10926
  %v10937 = vmul.f32 %v10846, %v10922
  %v10938 = vmul.f32 %v10848, %v10926
  %v10939 = vmul.f32 %v10852, %v10922
  %v10940 = vmul.f32 %v10854, %v10926
  %v10941 = vmul.f32 %v10858, %v10922
  %v10942 = vmul.f32 %v10860, %v10926
  %v10943 = vmul.f32 %v10864, %v10922
  %v10944 = vmul.f32 %v10866, %v10926
  %v10945 = vmul.f32 %v10870, %v10922
  %v10946 = vmul.f32 %v10872, %v10926
  %v10947 = vmul.f32 %v10876, %v10922
  %v10948 = vmul.f32 %v10878, %v10926
  %v10949 = vmul.f32 %v10882, %v10922
  %v10950 = vmul.f32 %v10884, %v10926
  %v10951 = vmul.f32 %v10888, %v10922
  %v10952 = vmul.f32 %v10890, %v10926
  %v10953 = vmul.f32 %v10894, %v10922
  %v10954 = vmul.f32 %v10896, %v10926
  %v10955 = vmul.f32 %v10900, %v10922
  %v10956 = vmul.f32 %v10902, %v10926
  %v10957 = vmul.f32 %v10906, %v10922
  %v10958 = vmul.f32 %v10908, %v10926
  %v10959 = vmul.f32 %v10912, %v10922
  %v10960 = vmul.f32 %v10914, %v10926
  %v10961 = vadd.f32 %v10723, %v10929
  %v10962 = vadd.f32 %v10724, %v10930
  %v10963 = vadd.f32 %v10725, %v10931
  %v10964 = vadd.f32 %v10726, %v10932
  %v10965 = vadd.f32 %v10727, %v10933
  %v10966 = vadd.f32 %v10728, %v10934
  %v10967 = vadd.f32 %v10729, %v10935
  %v10968 = vadd.f32 %v10730, %v10936
  %v10969 = vadd.f32 %v10731, %v10937
  %v10970 = vadd.f32 %v10732, %v10938
  %v10971 = vadd.f32 %v10733, %v10939
  %v10972 = vadd.f32 %v10734, %v10940
  %v10973 = vadd.f32 %v10735, %v10941
  %v10974 = vadd.f32 %v10736, %v10942
  %v10975 = vadd.f32 %v10737, %v10943
  %v10976 = vadd.f32 %v10738, %v10944
  %v10977 = vadd.f32 %v10739, %v10945
  %v10978 = vadd.f32 %v10740, %v10946
  %v10979 = vadd.f32 %v10741, %v10947
  %v10980 = vadd.f32 %v10742, %v10948
  %v10981 = vadd.f32 %v10743, %v10949
  %v10982 = vadd.f32 %v10744, %v10950
  %v10983 = vadd.f32 %v10745, %v10951
  %v10984 = vadd.f32 %v10746, %v10952
  %v10985 = vadd.f32 %v10747, %v10953
  %v10986 = vadd.f32 %v10748, %v10954
  %v10987 = vadd.f32 %v10749, %v10955
  %v10988 = vadd.f32 %v10750, %v10956
  %v10989 = vadd.f32 %v10751, %v10957
  %v10990 = vadd.f32 %v10752, %v10958
  %v10991 = vadd.f32 %v10753, %v10959
  %v10992 = vadd.f32 %v10754, %v10960
  %10993 = vmatprep.subr.mxu0 %v9013
  %10994 = vmatpush1.msra.mxu0 %v9011
  %10995 = vmatprep.subr.mxu0 %v9017
  %10996 = vmatpush1.msra.mxu0 %v9015
  %10997 = vmatprep.subr.mxu0 %v9023
  %10998 = vmatpush1.msra.mxu0 %v9021
  %10999 = vmatprep.subr.mxu0 %v9027
  %11000 = vmatpush1.msra.mxu0 %v9025
  %11001 = vmatprep.subr.mxu0 %v9033
  %11002 = vmatpush1.msra.mxu0 %v9031
  %11003 = vmatprep.subr.mxu0 %v9037
  %11004 = vmatpush1.msra.mxu0 %v9035
  %11005 = vmatprep.subr.mxu0 %v9043
  %11006 = vmatpush1.msra.mxu0 %v9041
  %11007 = vmatprep.subr.mxu0 %v9047
  %11008 = vmatpush1.msra.mxu0 %v9045
  %11009 = vmatprep.subr.mxu0 %v9053
  %11010 = vmatpush1.msra.mxu0 %v9051
  %11011 = vmatprep.subr.mxu0 %v9057
  %11012 = vmatpush1.msra.mxu0 %v9055
  %11013 = vmatprep.subr.mxu0 %v9063
  %11014 = vmatpush1.msra.mxu0 %v9061
  %11015 = vmatprep.subr.mxu0 %v9067
  %11016 = vmatpush1.msra.mxu0 %v9065
  %11017 = vmatprep.subr.mxu0 %v9073
  %11018 = vmatpush1.msra.mxu0 %v9071
  %11019 = vmatprep.subr.mxu0 %v9077
  %11020 = vmatpush1.msra.mxu0 %v9075
  %11021 = vmatprep.subr.mxu0 %v9083
  %11022 = vmatpush1.msra.mxu0 %v9081
  %11023 = vmatprep.subr.mxu0 %v9087
  %11024 = vmatpush1.msra.mxu0 %v9085
  %11025 = vmatprep.subr.mxu0 0.0
  %11026 = vmatpush1.msra.mxu0 0.0
  %11027 = vmatprep.subr.mxu0 0.0
  %11028 = vmatpush1.msra.mxu0 0.0
  %11029 = vmatprep.subr.mxu0 0.0
  %11030 = vmatpush1.msra.mxu0 0.0
  %11031 = vmatprep.subr.mxu0 0.0
  %11032 = vmatpush1.msra.mxu0 0.0
  %11033 = vmatprep.subr.mxu0 0.0
  %11034 = vmatpush1.msra.mxu0 0.0
  %11035 = vmatprep.subr.mxu0 0.0
  %11036 = vmatpush1.msra.mxu0 0.0
  %11037 = vmatprep.subr.mxu0 0.0
  %11038 = vmatpush1.msra.mxu0 0.0
  %11039 = vmatprep.subr.mxu0 0.0
  %11040 = vmatpush1.msra.mxu0 0.0
  %11041 = vmatprep.subr.mxu0 0.0
  %11042 = vmatpush1.msra.mxu0 0.0
  %11043 = vmatprep.subr.mxu0 0.0
  %11044 = vmatpush1.msra.mxu0 0.0
  %11045 = vmatprep.subr.mxu0 0.0
  %11046 = vmatpush1.msra.mxu0 0.0
  %11047 = vmatprep.subr.mxu0 0.0
  %11048 = vmatpush1.msra.mxu0 0.0
  %11049 = vmatprep.subr.mxu0 0.0
  %11050 = vmatpush1.msra.mxu0 0.0
  %11051 = vmatprep.subr.mxu0 0.0
  %11052 = vmatpush1.msra.mxu0 0.0
  %11053 = vmatprep.subr.mxu0 0.0
  %11054 = vmatpush1.msra.mxu0 0.0
  %11055 = vmatprep.subr.mxu0 0.0
  %11056 = vmatpush1.msra.mxu0 0.0
  %11057 = vmatprep.mubr.f32.mxu0 0.0
  %11058 = vmatmul.mubr.f32.gmra.mrb[0].mxu0 %v5678
  %v11059 = vpop.f32.mrb[0].mxu0
  %v11060 = vadd.f32 0.0, %v11059
  %v11061 = vpop.f32.mrb[0].mxu0
  %v11062 = vadd.f32 0.0, %v11061
  %11063 = vmatprep.mubr.f32.mxu0 0.0
  %11064 = vmatmul.mubr.f32.gmra.mrb[0].mxu0 %v5679
  %v11065 = vpop.f32.mrb[0].mxu0
  %v11066 = vadd.f32 0.0, %v11065
  %v11067 = vpop.f32.mrb[0].mxu0
  %v11068 = vadd.f32 0.0, %v11067
  %11069 = vmatprep.mubr.f32.mxu0 0.0
  %11070 = vmatmul.mubr.f32.gmra.mrb[0].mxu0 %v5680
  %v11071 = vpop.f32.mrb[0].mxu0
  %v11072 = vadd.f32 0.0, %v11071
  %v11073 = vpop.f32.mrb[0].mxu0
  %v11074 = vadd.f32 0.0, %v11073
  %11075 = vmatprep.mubr.f32.mxu0 0.0
  %11076 = vmatmul.mubr.f32.gmra.mrb[0].mxu0 %v5681
  %v11077 = vpop.f32.mrb[0].mxu0
  %v11078 = vadd.f32 0.0, %v11077
  %v11079 = vpop.f32.mrb[0].mxu0
  %v11080 = vadd.f32 0.0, %v11079
  %11081 = vmatprep.mubr.f32.mxu0 0.0
  %11082 = vmatmul.mubr.f32.gmra.mrb[0].mxu0 %v5682
  %v11083 = vpop.f32.mrb[0].mxu0
  %v11084 = vadd.f32 0.0, %v11083
  %v11085 = vpop.f32.mrb[0].mxu0
  %v11086 = vadd.f32 0.0, %v11085
  %11087 = vmatprep.mubr.f32.mxu0 0.0
  %11088 = vmatmul.mubr.f32.gmra.mrb[0].mxu0 %v5683
  %v11089 = vpop.f32.mrb[0].mxu0
  %v11090 = vadd.f32 0.0, %v11089
  %v11091 = vpop.f32.mrb[0].mxu0
  %v11092 = vadd.f32 0.0, %v11091
  %11093 = vmatprep.mubr.f32.mxu0 0.0
  %11094 = vmatmul.mubr.f32.gmra.mrb[0].mxu0 %v5684
  %v11095 = vpop.f32.mrb[0].mxu0
  %v11096 = vadd.f32 0.0, %v11095
  %v11097 = vpop.f32.mrb[0].mxu0
  %v11098 = vadd.f32 0.0, %v11097
  %11099 = vmatprep.mubr.f32.mxu0 0.0
  %11100 = vmatmul.mubr.f32.gmra.mrb[0].mxu0 %v5685
  %v11101 = vpop.f32.mrb[0].mxu0
  %v11102 = vadd.f32 0.0, %v11101
  %v11103 = vpop.f32.mrb[0].mxu0
  %v11104 = vadd.f32 0.0, %v11103
  %11105 = vmatprep.mubr.f32.mxu0 0.0
  %11106 = vmatmul.mubr.f32.gmra.mrb[0].mxu0 %v5686
  %v11107 = vpop.f32.mrb[0].mxu0
  %v11108 = vadd.f32 0.0, %v11107
  %v11109 = vpop.f32.mrb[0].mxu0
  %v11110 = vadd.f32 0.0, %v11109
  %11111 = vmatprep.mubr.f32.mxu0 0.0
  %11112 = vmatmul.mubr.f32.gmra.mrb[0].mxu0 %v5687
  %v11113 = vpop.f32.mrb[0].mxu0
  %v11114 = vadd.f32 0.0, %v11113
  %v11115 = vpop.f32.mrb[0].mxu0
  %v11116 = vadd.f32 0.0, %v11115
  %11117 = vmatprep.mubr.f32.mxu0 0.0
  %11118 = vmatmul.mubr.f32.gmra.mrb[0].mxu0 %v5688
  %v11119 = vpop.f32.mrb[0].mxu0
  %v11120 = vadd.f32 0.0, %v11119
  %v11121 = vpop.f32.mrb[0].mxu0
  %v11122 = vadd.f32 0.0, %v11121
  %11123 = vmatprep.mubr.f32.mxu0 0.0
  %11124 = vmatmul.mubr.f32.gmra.mrb[0].mxu0 %v5689
  %v11125 = vpop.f32.mrb[0].mxu0
  %v11126 = vadd.f32 0.0, %v11125
  %v11127 = vpop.f32.mrb[0].mxu0
  %v11128 = vadd.f32 0.0, %v11127
  %11129 = vmatprep.mubr.f32.mxu0 0.0
  %11130 = vmatmul.mubr.f32.gmra.mrb[0].mxu0 %v5690
  %v11131 = vpop.f32.mrb[0].mxu0
  %v11132 = vadd.f32 0.0, %v11131
  %v11133 = vpop.f32.mrb[0].mxu0
  %v11134 = vadd.f32 0.0, %v11133
  %11135 = vmatprep.mubr.f32.mxu0 0.0
  %11136 = vmatmul.mubr.f32.gmra.mrb[0].mxu0 %v5691
  %v11137 = vpop.f32.mrb[0].mxu0
  %v11138 = vadd.f32 0.0, %v11137
  %v11139 = vpop.f32.mrb[0].mxu0
  %v11140 = vadd.f32 0.0, %v11139
  %11141 = vmatprep.mubr.f32.mxu0 0.0
  %11142 = vmatmul.mubr.f32.gmra.mrb[0].mxu0 %v5692
  %v11143 = vpop.f32.mrb[0].mxu0
  %v11144 = vadd.f32 0.0, %v11143
  %v11145 = vpop.f32.mrb[0].mxu0
  %v11146 = vadd.f32 0.0, %v11145
  %11147 = vmatprep.mubr.f32.mxu0 0.0
  %11148 = vmatmul.mubr.f32.gmra.mrb[0].mxu0 %v5693
  %v11149 = vpop.f32.mrb[0].mxu0
  %v11150 = vadd.f32 0.0, %v11149
  %v11151 = vpop.f32.mrb[0].mxu0
  %v11152 = vadd.f32 0.0, %v11151
  %11153 = vdwg.mxu0
  %s11154 = scalar_lea.vmem %s53, 33
  %v11155 = vld [vmem:[%s11154] ss:$8 sm:$0x3]
  %v11157 = vlaneseq
  %v11158 = vshrl.u32 %v11157, 7
  %v11159 = vsub.s32 0, %v11158
  %v11160 = vrot.slane %v11155, %v11159
  %v11161 = vlaneseq
  %v11162 = vshrl.u32 %v11161, 7
  %v11163 = vsub.s32 1, %v11162
  %v11164 = vrot.slane %v11155, %v11163
  %v11167 = vmul.f32 %v11060, %v11160
  %v11168 = vmul.f32 %v11062, %v11164
  %v11169 = vmul.f32 %v11066, %v11160
  %v11170 = vmul.f32 %v11068, %v11164
  %v11171 = vmul.f32 %v11072, %v11160
  %v11172 = vmul.f32 %v11074, %v11164
  %v11173 = vmul.f32 %v11078, %v11160
  %v11174 = vmul.f32 %v11080, %v11164
  %v11175 = vmul.f32 %v11084, %v11160
  %v11176 = vmul.f32 %v11086, %v11164
  %v11177 = vmul.f32 %v11090, %v11160
  %v11178 = vmul.f32 %v11092, %v11164
  %v11179 = vmul.f32 %v11096, %v11160
  %v11180 = vmul.f32 %v11098, %v11164
  %v11181 = vmul.f32 %v11102, %v11160
  %v11182 = vmul.f32 %v11104, %v11164
  %v11183 = vmul.f32 %v11108, %v11160
  %v11184 = vmul.f32 %v11110, %v11164
  %v11185 = vmul.f32 %v11114, %v11160
  %v11186 = vmul.f32 %v11116, %v11164
  %v11187 = vmul.f32 %v11120, %v11160
  %v11188 = vmul.f32 %v11122, %v11164
  %v11189 = vmul.f32 %v11126, %v11160
  %v11190 = vmul.f32 %v11128, %v11164
  %v11191 = vmul.f32 %v11132, %v11160
  %v11192 = vmul.f32 %v11134, %v11164
  %v11193 = vmul.f32 %v11138, %v11160
  %v11194 = vmul.f32 %v11140, %v11164
  %v11195 = vmul.f32 %v11144, %v11160
  %v11196 = vmul.f32 %v11146, %v11164
  %v11197 = vmul.f32 %v11150, %v11160
  %v11198 = vmul.f32 %v11152, %v11164
  %v11199 = vadd.f32 %v10961, %v11167
  %v11200 = vadd.f32 %v10962, %v11168
  %v11201 = vadd.f32 %v10963, %v11169
  %v11202 = vadd.f32 %v10964, %v11170
  %v11203 = vadd.f32 %v10965, %v11171
  %v11204 = vadd.f32 %v10966, %v11172
  %v11205 = vadd.f32 %v10967, %v11173
  %v11206 = vadd.f32 %v10968, %v11174
  %v11207 = vadd.f32 %v10969, %v11175
  %v11208 = vadd.f32 %v10970, %v11176
  %v11209 = vadd.f32 %v10971, %v11177
  %v11210 = vadd.f32 %v10972, %v11178
  %v11211 = vadd.f32 %v10973, %v11179
  %v11212 = vadd.f32 %v10974, %v11180
  %v11213 = vadd.f32 %v10975, %v11181
  %v11214 = vadd.f32 %v10976, %v11182
  %v11215 = vadd.f32 %v10977, %v11183
  %v11216 = vadd.f32 %v10978, %v11184
  %v11217 = vadd.f32 %v10979, %v11185
  %v11218 = vadd.f32 %v10980, %v11186
  %v11219 = vadd.f32 %v10981, %v11187
  %v11220 = vadd.f32 %v10982, %v11188
  %v11221 = vadd.f32 %v10983, %v11189
  %v11222 = vadd.f32 %v10984, %v11190
  %v11223 = vadd.f32 %v10985, %v11191
  %v11224 = vadd.f32 %v10986, %v11192
  %v11225 = vadd.f32 %v10987, %v11193
  %v11226 = vadd.f32 %v10988, %v11194
  %v11227 = vadd.f32 %v10989, %v11195
  %v11228 = vadd.f32 %v10990, %v11196
  %v11229 = vadd.f32 %v10991, %v11197
  %v11230 = vadd.f32 %v10992, %v11198
  %s11231 = scalar_lea.vmem %s55, 1
  %v11232 = vld [vmem:[%s11231] ss:$2 sm:$0x3]
  %v11234 = vlaneseq
  %v11235 = vshrl.u32 %v11234, 7
  %v11236 = vsub.s32 0, %v11235
  %v11237 = vrot.slane %v11232, %v11236
  %v11238 = vlaneseq
  %v11239 = vshrl.u32 %v11238, 7
  %v11240 = vsub.s32 1, %v11239
  %v11241 = vrot.slane %v11232, %v11240
  %v11244 = vadd.f32 %v11199, %v11237
  %v11245 = vadd.f32 %v11200, %v11241
  %v11246 = vadd.f32 %v11201, %v11237
  %v11247 = vadd.f32 %v11202, %v11241
  %v11248 = vadd.f32 %v11203, %v11237
  %v11249 = vadd.f32 %v11204, %v11241
  %v11250 = vadd.f32 %v11205, %v11237
  %v11251 = vadd.f32 %v11206, %v11241
  %v11252 = vadd.f32 %v11207, %v11237
  %v11253 = vadd.f32 %v11208, %v11241
  %v11254 = vadd.f32 %v11209, %v11237
  %v11255 = vadd.f32 %v11210, %v11241
  %v11256 = vadd.f32 %v11211, %v11237
  %v11257 = vadd.f32 %v11212, %v11241
  %v11258 = vadd.f32 %v11213, %v11237
  %v11259 = vadd.f32 %v11214, %v11241
  %v11260 = vadd.f32 %v11215, %v11237
  %v11261 = vadd.f32 %v11216, %v11241
  %v11262 = vadd.f32 %v11217, %v11237
  %v11263 = vadd.f32 %v11218, %v11241
  %v11264 = vadd.f32 %v11219, %v11237
  %v11265 = vadd.f32 %v11220, %v11241
  %v11266 = vadd.f32 %v11221, %v11237
  %v11267 = vadd.f32 %v11222, %v11241
  %v11268 = vadd.f32 %v11223, %v11237
  %v11269 = vadd.f32 %v11224, %v11241
  %v11270 = vadd.f32 %v11225, %v11237
  %v11271 = vadd.f32 %v11226, %v11241
  %v11272 = vadd.f32 %v11227, %v11237
  %v11273 = vadd.f32 %v11228, %v11241
  %v11274 = vadd.f32 %v11229, %v11237
  %v11275 = vadd.f32 %v11230, %v11241
  %v11276 = vmul.f32 %v11244, 0.5
  %v11277 = vmul.f32 %v11245, 0.5
  %v11278 = vmul.f32 %v11246, 0.5
  %v11279 = vmul.f32 %v11247, 0.5
  %v11280 = vmul.f32 %v11248, 0.5
  %v11281 = vmul.f32 %v11249, 0.5
  %v11282 = vmul.f32 %v11250, 0.5
  %v11283 = vmul.f32 %v11251, 0.5
  %v11284 = vmul.f32 %v11252, 0.5
  %v11285 = vmul.f32 %v11253, 0.5
  %v11286 = vmul.f32 %v11254, 0.5
  %v11287 = vmul.f32 %v11255, 0.5
  %v11288 = vmul.f32 %v11256, 0.5
  %v11289 = vmul.f32 %v11257, 0.5
  %v11290 = vmul.f32 %v11258, 0.5
  %v11291 = vmul.f32 %v11259, 0.5
  %v11292 = vmul.f32 %v11260, 0.5
  %v11293 = vmul.f32 %v11261, 0.5
  %v11294 = vmul.f32 %v11262, 0.5
  %v11295 = vmul.f32 %v11263, 0.5
  %v11296 = vmul.f32 %v11264, 0.5
  %v11297 = vmul.f32 %v11265, 0.5
  %v11298 = vmul.f32 %v11266, 0.5
  %v11299 = vmul.f32 %v11267, 0.5
  %v11300 = vmul.f32 %v11268, 0.5
  %v11301 = vmul.f32 %v11269, 0.5
  %v11302 = vmul.f32 %v11270, 0.5
  %v11303 = vmul.f32 %v11271, 0.5
  %v11304 = vmul.f32 %v11272, 0.5
  %v11305 = vmul.f32 %v11273, 0.5
  %v11306 = vmul.f32 %v11274, 0.5
  %v11307 = vmul.f32 %v11275, 0.5
  %v11308 = vmul.f32 %v11244, 0.70710677
  %v11309 = vmul.f32 %v11245, 0.70710677
  %v11310 = vmul.f32 %v11246, 0.70710677
  %v11311 = vmul.f32 %v11247, 0.70710677
  %v11312 = vmul.f32 %v11248, 0.70710677
  %v11313 = vmul.f32 %v11249, 0.70710677
  %v11314 = vmul.f32 %v11250, 0.70710677
  %v11315 = vmul.f32 %v11251, 0.70710677
  %v11316 = vmul.f32 %v11252, 0.70710677
  %v11317 = vmul.f32 %v11253, 0.70710677
  %v11318 = vmul.f32 %v11254, 0.70710677
  %v11319 = vmul.f32 %v11255, 0.70710677
  %v11320 = vmul.f32 %v11256, 0.70710677
  %v11321 = vmul.f32 %v11257, 0.70710677
  %v11322 = vmul.f32 %v11258, 0.70710677
  %v11323 = vmul.f32 %v11259, 0.70710677
  %v11324 = vmul.f32 %v11260, 0.70710677
  %v11325 = vmul.f32 %v11261, 0.70710677
  %v11326 = vmul.f32 %v11262, 0.70710677
  %v11327 = vmul.f32 %v11263, 0.70710677
  %v11328 = vmul.f32 %v11264, 0.70710677
  %v11329 = vmul.f32 %v11265, 0.70710677
  %v11330 = vmul.f32 %v11266, 0.70710677
  %v11331 = vmul.f32 %v11267, 0.70710677
  %v11332 = vmul.f32 %v11268, 0.70710677
  %v11333 = vmul.f32 %v11269, 0.70710677
  %v11334 = vmul.f32 %v11270, 0.70710677
  %v11335 = vmul.f32 %v11271, 0.70710677
  %v11336 = vmul.f32 %v11272, 0.70710677
  %v11337 = vmul.f32 %v11273, 0.70710677
  %v11338 = vmul.f32 %v11274, 0.70710677
  %v11339 = vmul.f32 %v11275, 0.70710677
  %v11340 = verf.f32.pop %v11308
  %v11341 = verf.f32.pop %v11309
  %v11342 = verf.f32.pop %v11310
  %v11343 = verf.f32.pop %v11311
  %v11344 = verf.f32.pop %v11312
  %v11345 = verf.f32.pop %v11313
  %v11346 = verf.f32.pop %v11314
  %v11347 = verf.f32.pop %v11315
  %v11348 = verf.f32.pop %v11316
  %v11349 = verf.f32.pop %v11317
  %v11350 = verf.f32.pop %v11318
  %v11351 = verf.f32.pop %v11319
  %v11352 = verf.f32.pop %v11320
  %v11353 = verf.f32.pop %v11321
  %v11354 = verf.f32.pop %v11322
  %v11355 = verf.f32.pop %v11323
  %v11356 = verf.f32.pop %v11324
  %v11357 = verf.f32.pop %v11325
  %v11358 = verf.f32.pop %v11326
  %v11359 = verf.f32.pop %v11327
  %v11360 = verf.f32.pop %v11328
  %v11361 = verf.f32.pop %v11329
  %v11362 = verf.f32.pop %v11330
  %v11363 = verf.f32.pop %v11331
  %v11364 = verf.f32.pop %v11332
  %v11365 = verf.f32.pop %v11333
  %v11366 = verf.f32.pop %v11334
  %v11367 = verf.f32.pop %v11335
  %v11368 = verf.f32.pop %v11336
  %v11369 = verf.f32.pop %v11337
  %v11370 = verf.f32.pop %v11338
  %v11371 = verf.f32.pop %v11339
  %v11372 = vadd.f32 %v11340, 1.0
  %v11373 = vadd.f32 %v11341, 1.0
  %v11374 = vadd.f32 %v11342, 1.0
  %v11375 = vadd.f32 %v11343, 1.0
  %v11376 = vadd.f32 %v11344, 1.0
  %v11377 = vadd.f32 %v11345, 1.0
  %v11378 = vadd.f32 %v11346, 1.0
  %v11379 = vadd.f32 %v11347, 1.0
  %v11380 = vadd.f32 %v11348, 1.0
  %v11381 = vadd.f32 %v11349, 1.0
  %v11382 = vadd.f32 %v11350, 1.0
  %v11383 = vadd.f32 %v11351, 1.0
  %v11384 = vadd.f32 %v11352, 1.0
  %v11385 = vadd.f32 %v11353, 1.0
  %v11386 = vadd.f32 %v11354, 1.0
  %v11387 = vadd.f32 %v11355, 1.0
  %v11388 = vadd.f32 %v11356, 1.0
  %v11389 = vadd.f32 %v11357, 1.0
  %v11390 = vadd.f32 %v11358, 1.0
  %v11391 = vadd.f32 %v11359, 1.0
  %v11392 = vadd.f32 %v11360, 1.0
  %v11393 = vadd.f32 %v11361, 1.0
  %v11394 = vadd.f32 %v11362, 1.0
  %v11395 = vadd.f32 %v11363, 1.0
  %v11396 = vadd.f32 %v11364, 1.0
  %v11397 = vadd.f32 %v11365, 1.0
  %v11398 = vadd.f32 %v11366, 1.0
  %v11399 = vadd.f32 %v11367, 1.0
  %v11400 = vadd.f32 %v11368, 1.0
  %v11401 = vadd.f32 %v11369, 1.0
  %v11402 = vadd.f32 %v11370, 1.0
  %v11403 = vadd.f32 %v11371, 1.0
  %v11404 = vmul.f32 %v11276, %v11372
  %v11405 = vmul.f32 %v11277, %v11373
  %v11406 = vmul.f32 %v11278, %v11374
  %v11407 = vmul.f32 %v11279, %v11375
  %v11408 = vmul.f32 %v11280, %v11376
  %v11409 = vmul.f32 %v11281, %v11377
  %v11410 = vmul.f32 %v11282, %v11378
  %v11411 = vmul.f32 %v11283, %v11379
  %v11412 = vmul.f32 %v11284, %v11380
  %v11413 = vmul.f32 %v11285, %v11381
  %v11414 = vmul.f32 %v11286, %v11382
  %v11415 = vmul.f32 %v11287, %v11383
  %v11416 = vmul.f32 %v11288, %v11384
  %v11417 = vmul.f32 %v11289, %v11385
  %v11418 = vmul.f32 %v11290, %v11386
  %v11419 = vmul.f32 %v11291, %v11387
  %v11420 = vmul.f32 %v11292, %v11388
  %v11421 = vmul.f32 %v11293, %v11389
  %v11422 = vmul.f32 %v11294, %v11390
  %v11423 = vmul.f32 %v11295, %v11391
  %v11424 = vmul.f32 %v11296, %v11392
  %v11425 = vmul.f32 %v11297, %v11393
  %v11426 = vmul.f32 %v11298, %v11394
  %v11427 = vmul.f32 %v11299, %v11395
  %v11428 = vmul.f32 %v11300, %v11396
  %v11429 = vmul.f32 %v11301, %v11397
  %v11430 = vmul.f32 %v11302, %v11398
  %v11431 = vmul.f32 %v11303, %v11399
  %v11432 = vmul.f32 %v11304, %v11400
  %v11433 = vmul.f32 %v11305, %v11401
  %v11434 = vmul.f32 %v11306, %v11402
  %v11435 = vmul.f32 %v11307, %v11403
  %s11436 = scalar_lea.vmem %s57, 128
  %v11437 = vld [vmem:[%s11436] sm:$0xf]
  %v11438 = vld [vmem:[%s11436 + $0x4] sm:$0xf]
  %v11439 = vld [vmem:[%s11436 + $0x8] sm:$0xf]
  %v11440 = vld [vmem:[%s11436 + $0xc] sm:$0xf]
  %v11441 = vld [vmem:[%s11436 + $0x10] sm:$0xf]
  %v11442 = vld [vmem:[%s11436 + $0x14] sm:$0xf]
  %v11443 = vld [vmem:[%s11436 + $0x18] sm:$0xf]
  %v11444 = vld [vmem:[%s11436 + $0x1c] sm:$0xf]
  %v11445 = vld [vmem:[%s11436 + $0x20] sm:$0xf]
  %v11446 = vld [vmem:[%s11436 + $0x24] sm:$0xf]
  %v11447 = vld [vmem:[%s11436 + $0x28] sm:$0xf]
  %v11448 = vld [vmem:[%s11436 + $0x2c] sm:$0xf]
  %v11449 = vld [vmem:[%s11436 + $0x30] sm:$0xf]
  %v11450 = vld [vmem:[%s11436 + $0x34] sm:$0xf]
  %v11451 = vld [vmem:[%s11436 + $0x38] sm:$0xf]
  %v11452 = vld [vmem:[%s11436 + $0x3c] sm:$0xf]
  %v11453 = vld [vmem:[%s11436 + $0x40] sm:$0xf]
  %v11454 = vld [vmem:[%s11436 + $0x44] sm:$0xf]
  %v11455 = vld [vmem:[%s11436 + $0x48] sm:$0xf]
  %v11456 = vld [vmem:[%s11436 + $0x4c] sm:$0xf]
  %v11457 = vld [vmem:[%s11436 + $0x50] sm:$0xf]
  %v11458 = vld [vmem:[%s11436 + $0x54] sm:$0xf]
  %v11459 = vld [vmem:[%s11436 + $0x58] sm:$0xf]
  %v11460 = vld [vmem:[%s11436 + $0x5c] sm:$0xf]
  %v11461 = vld [vmem:[%s11436 + $0x60] sm:$0xf]
  %v11462 = vld [vmem:[%s11436 + $0x64] sm:$0xf]
  %v11463 = vld [vmem:[%s11436 + $0x68] sm:$0xf]
  %v11464 = vld [vmem:[%s11436 + $0x6c] sm:$0xf]
  %v11465 = vld [vmem:[%s11436 + $0x70] sm:$0xf]
  %v11466 = vld [vmem:[%s11436 + $0x74] sm:$0xf]
  %v11467 = vld [vmem:[%s11436 + $0x78] sm:$0xf]
  %v11468 = vld [vmem:[%s11436 + $0x7c] sm:$0xf]
  %v11469 = vpack.c.bf16 %v11406, %v11404
  %v11470 = vpack.c.bf16 %v11407, %v11405
  %v11471 = vpack.c.bf16 %v11410, %v11408
  %v11472 = vpack.c.bf16 %v11411, %v11409
  %v11473 = vpack.c.bf16 %v11414, %v11412
  %v11474 = vpack.c.bf16 %v11415, %v11413
  %v11475 = vpack.c.bf16 %v11418, %v11416
  %v11476 = vpack.c.bf16 %v11419, %v11417
  %v11477 = vpack.c.bf16 %v11422, %v11420
  %v11478 = vpack.c.bf16 %v11423, %v11421
  %v11479 = vpack.c.bf16 %v11426, %v11424
  %v11480 = vpack.c.bf16 %v11427, %v11425
  %v11481 = vpack.c.bf16 %v11430, %v11428
  %v11482 = vpack.c.bf16 %v11431, %v11429
  %v11483 = vpack.c.bf16 %v11434, %v11432
  %v11484 = vpack.c.bf16 %v11435, %v11433
  %v11517 = vunpack.c.l.b16 %v11437
  %v11518 = vunpack.c.l.b16 %v11438
  %v11519 = vunpack.c.l.b16 %v11439
  %v11520 = vunpack.c.l.b16 %v11440
  %v11521 = vunpack.c.l.b16 %v11441
  %v11522 = vunpack.c.l.b16 %v11442
  %v11523 = vunpack.c.l.b16 %v11443
  %v11524 = vunpack.c.l.b16 %v11444
  %v11525 = vunpack.c.l.b16 %v11445
  %v11526 = vunpack.c.l.b16 %v11446
  %v11527 = vunpack.c.l.b16 %v11447
  %v11528 = vunpack.c.l.b16 %v11448
  %v11529 = vunpack.c.l.b16 %v11449
  %v11530 = vunpack.c.l.b16 %v11450
  %v11531 = vunpack.c.l.b16 %v11451
  %v11532 = vunpack.c.l.b16 %v11452
  %v11533 = vunpack.c.l.b16 %v11453
  %v11534 = vunpack.c.l.b16 %v11454
  %v11535 = vunpack.c.l.b16 %v11455
  %v11536 = vunpack.c.l.b16 %v11456
  %v11537 = vunpack.c.l.b16 %v11457
  %v11538 = vunpack.c.l.b16 %v11458
  %v11539 = vunpack.c.l.b16 %v11459
  %v11540 = vunpack.c.l.b16 %v11460
  %v11541 = vunpack.c.l.b16 %v11461
  %v11542 = vunpack.c.l.b16 %v11462
  %v11543 = vunpack.c.l.b16 %v11463
  %v11544 = vunpack.c.l.b16 %v11464
  %v11545 = vunpack.c.l.b16 %v11465
  %v11546 = vunpack.c.l.b16 %v11466
  %v11547 = vunpack.c.l.b16 %v11467
  %v11548 = vunpack.c.l.b16 %v11468
  %v11549 = vpack.c.b16 %v11518, %v11517
  %v11550 = vpack.c.b16 %v11520, %v11519
  %v11551 = vpack.c.b16 %v11522, %v11521
  %v11552 = vpack.c.b16 %v11524, %v11523
  %v11553 = vpack.c.b16 %v11526, %v11525
  %v11554 = vpack.c.b16 %v11528, %v11527
  %v11555 = vpack.c.b16 %v11530, %v11529
  %v11556 = vpack.c.b16 %v11532, %v11531
  %v11557 = vpack.c.b16 %v11534, %v11533
  %v11558 = vpack.c.b16 %v11536, %v11535
  %v11559 = vpack.c.b16 %v11538, %v11537
  %v11560 = vpack.c.b16 %v11540, %v11539
  %v11561 = vpack.c.b16 %v11542, %v11541
  %v11562 = vpack.c.b16 %v11544, %v11543
  %v11563 = vpack.c.b16 %v11546, %v11545
  %v11564 = vpack.c.b16 %v11548, %v11547
  %11581 = vmatprep.subr.bf16.mxu0 0
  %11582 = vmatpush1.bf16.msra.mxu0 %v11549
  %11583 = vmatprep.subr.bf16.mxu0 0
  %11584 = vmatpush1.bf16.msra.mxu0 %v11550
  %11585 = vmatprep.subr.bf16.mxu0 0
  %11586 = vmatpush1.bf16.msra.mxu0 %v11551
  %11587 = vmatprep.subr.bf16.mxu0 0
  %11588 = vmatpush1.bf16.msra.mxu0 %v11552
  %11589 = vmatprep.subr.bf16.mxu0 0
  %11590 = vmatpush1.bf16.msra.mxu0 %v11553
  %11591 = vmatprep.subr.bf16.mxu0 0
  %11592 = vmatpush1.bf16.msra.mxu0 %v11554
  %11593 = vmatprep.subr.bf16.mxu0 0
  %11594 = vmatpush1.bf16.msra.mxu0 %v11555
  %11595 = vmatprep.subr.bf16.mxu0 0
  %11596 = vmatpush1.bf16.msra.mxu0 %v11556
  %11597 = vmatprep.subr.bf16.mxu0 0
  %11598 = vmatpush1.bf16.msra.mxu0 %v11557
  %11599 = vmatprep.subr.bf16.mxu0 0
  %11600 = vmatpush1.bf16.msra.mxu0 %v11558
  %11601 = vmatprep.subr.bf16.mxu0 0
  %11602 = vmatpush1.bf16.msra.mxu0 %v11559
  %11603 = vmatprep.subr.bf16.mxu0 0
  %11604 = vmatpush1.bf16.msra.mxu0 %v11560
  %11605 = vmatprep.subr.bf16.mxu0 0
  %11606 = vmatpush1.bf16.msra.mxu0 %v11561
  %11607 = vmatprep.subr.bf16.mxu0 0
  %11608 = vmatpush1.bf16.msra.mxu0 %v11562
  %11609 = vmatprep.subr.bf16.mxu0 0
  %11610 = vmatpush1.bf16.msra.mxu0 %v11563
  %11611 = vmatprep.subr.bf16.mxu0 0
  %11612 = vmatpush1.bf16.msra.mxu0 %v11564
  %11613 = vmatprep.mubr.bf16.mxu0 %v11470
  %11614 = vmatmul.mubr.bf16.gmra.mrb[0].mxu0 %v11469
  %v11615 = vpop.f32.mrb[0].mxu0
  %v11616 = vadd.f32 0.0, %v11615
  %v11617 = vpop.f32.mrb[0].mxu0
  %v11618 = vpop.f32.mrb[0].mxu0
  %v11619 = vadd.f32 0.0, %v11618
  %v11620 = vpop.f32.mrb[0].mxu0
  %11621 = vmatprep.mubr.bf16.mxu0 %v11472
  %11622 = vmatmul.mubr.bf16.gmra.mrb[0].mxu0 %v11471
  %v11623 = vpop.f32.mrb[0].mxu0
  %v11624 = vadd.f32 0.0, %v11623
  %v11625 = vpop.f32.mrb[0].mxu0
  %v11626 = vpop.f32.mrb[0].mxu0
  %v11627 = vadd.f32 0.0, %v11626
  %v11628 = vpop.f32.mrb[0].mxu0
  %11629 = vmatprep.mubr.bf16.mxu0 %v11474
  %11630 = vmatmul.mubr.bf16.gmra.mrb[0].mxu0 %v11473
  %v11631 = vpop.f32.mrb[0].mxu0
  %v11632 = vadd.f32 0.0, %v11631
  %v11633 = vpop.f32.mrb[0].mxu0
  %v11634 = vpop.f32.mrb[0].mxu0
  %v11635 = vadd.f32 0.0, %v11634
  %v11636 = vpop.f32.mrb[0].mxu0
  %11637 = vmatprep.mubr.bf16.mxu0 %v11476
  %11638 = vmatmul.mubr.bf16.gmra.mrb[0].mxu0 %v11475
  %v11639 = vpop.f32.mrb[0].mxu0
  %v11640 = vadd.f32 0.0, %v11639
  %v11641 = vpop.f32.mrb[0].mxu0
  %v11642 = vpop.f32.mrb[0].mxu0
  %v11643 = vadd.f32 0.0, %v11642
  %v11644 = vpop.f32.mrb[0].mxu0
  %11645 = vmatprep.mubr.bf16.mxu0 %v11478
  %11646 = vmatmul.mubr.bf16.gmra.mrb[0].mxu0 %v11477
  %v11647 = vpop.f32.mrb[0].mxu0
  %v11648 = vadd.f32 0.0, %v11647
  %v11649 = vpop.f32.mrb[0].mxu0
  %v11650 = vpop.f32.mrb[0].mxu0
  %v11651 = vadd.f32 0.0, %v11650
  %v11652 = vpop.f32.mrb[0].mxu0
  %11653 = vmatprep.mubr.bf16.mxu0 %v11480
  %11654 = vmatmul.mubr.bf16.gmra.mrb[0].mxu0 %v11479
  %v11655 = vpop.f32.mrb[0].mxu0
  %v11656 = vadd.f32 0.0, %v11655
  %v11657 = vpop.f32.mrb[0].mxu0
  %v11658 = vpop.f32.mrb[0].mxu0
  %v11659 = vadd.f32 0.0, %v11658
  %v11660 = vpop.f32.mrb[0].mxu0
  %11661 = vmatprep.mubr.bf16.mxu0 %v11482
  %11662 = vmatmul.mubr.bf16.gmra.mrb[0].mxu0 %v11481
  %v11663 = vpop.f32.mrb[0].mxu0
  %v11664 = vadd.f32 0.0, %v11663
  %v11665 = vpop.f32.mrb[0].mxu0
  %v11666 = vpop.f32.mrb[0].mxu0
  %v11667 = vadd.f32 0.0, %v11666
  %v11668 = vpop.f32.mrb[0].mxu0
  %11669 = vmatprep.mubr.bf16.mxu0 %v11484
  %11670 = vmatmul.mubr.bf16.gmra.mrb[0].mxu0 %v11483
  %v11671 = vpop.f32.mrb[0].mxu0
  %v11672 = vadd.f32 0.0, %v11671
  %v11673 = vpop.f32.mrb[0].mxu0
  %v11674 = vpop.f32.mrb[0].mxu0
  %v11675 = vadd.f32 0.0, %v11674
  %v11676 = vpop.f32.mrb[0].mxu0
  %11677 = vdwg.mxu0
  %v11678 = vadd.f32 %v8616, %v11616
  %v11679 = vadd.f32 %v8617, %v11619
  %v11680 = vadd.f32 %v8618, %v11624
  %v11681 = vadd.f32 %v8619, %v11627
  %v11682 = vadd.f32 %v8620, %v11632
  %v11683 = vadd.f32 %v8621, %v11635
  %v11684 = vadd.f32 %v8622, %v11640
  %v11685 = vadd.f32 %v8623, %v11643
  %v11686 = vadd.f32 %v8624, %v11648
  %v11687 = vadd.f32 %v8625, %v11651
  %v11688 = vadd.f32 %v8626, %v11656
  %v11689 = vadd.f32 %v8627, %v11659
  %v11690 = vadd.f32 %v8628, %v11664
  %v11691 = vadd.f32 %v8629, %v11667
  %v11692 = vadd.f32 %v8630, %v11672
  %v11693 = vadd.f32 %v8631, %v11675
  %v11694 = vld [vmem:[%s59 + $0x1] sm:$0x1]
  %v11695 = vlaneseq
  %v11696 = vshrl.u32 %v11695, 7
  %v11697 = vsub.s32 0, %v11696
  %v11698 = vrot.slane %v11694, %v11697
  %v11699 = vadd.f32 %v11678, %v11698
  %v11700 = vadd.f32 %v11679, %v11698
  %v11701 = vadd.f32 %v11680, %v11698
  %v11702 = vadd.f32 %v11681, %v11698
  %v11703 = vadd.f32 %v11682, %v11698
  %v11704 = vadd.f32 %v11683, %v11698
  %v11705 = vadd.f32 %v11684, %v11698
  %v11706 = vadd.f32 %v11685, %v11698
  %v11707 = vadd.f32 %v11686, %v11698
  %v11708 = vadd.f32 %v11687, %v11698
  %v11709 = vadd.f32 %v11688, %v11698
  %v11710 = vadd.f32 %v11689, %v11698
  %v11711 = vadd.f32 %v11690, %v11698
  %v11712 = vadd.f32 %v11691, %v11698
  %v11713 = vadd.f32 %v11692, %v11698
  %v11714 = vadd.f32 %v11693, %v11698
  %11715 = vst.msk [vmem:[%s61] sm:$0xff] %vm689, %v11699
  %11716 = vst.msk [vmem:[%s61 + $0x8] sm:$0xff] %vm689, %v11700
  %11717 = vst.msk [vmem:[%s61 + $0x10] sm:$0xff] %vm689, %v11701
  %11718 = vst.msk [vmem:[%s61 + $0x18] sm:$0xff] %vm689, %v11702
  %11719 = vst.msk [vmem:[%s61 + $0x20] sm:$0xff] %vm689, %v11703
  %11720 = vst.msk [vmem:[%s61 + $0x28] sm:$0xff] %vm689, %v11704
  %11721 = vst.msk [vmem:[%s61 + $0x30] sm:$0xff] %vm689, %v11705
  %11722 = vst.msk [vmem:[%s61 + $0x38] sm:$0xff] %vm689, %v11706
  %11723 = vst.msk [vmem:[%s61 + $0x40] sm:$0xff] %vm689, %v11707
  %11724 = vst.msk [vmem:[%s61 + $0x48] sm:$0xff] %vm689, %v11708
  %11725 = vst.msk [vmem:[%s61 + $0x50] sm:$0xff] %vm689, %v11709
  %11726 = vst.msk [vmem:[%s61 + $0x58] sm:$0xff] %vm689, %v11710
  %11727 = vst.msk [vmem:[%s61 + $0x60] sm:$0xff] %vm689, %v11711
  %11728 = vst.msk [vmem:[%s61 + $0x68] sm:$0xff] %vm689, %v11712
  %11729 = vst.msk [vmem:[%s61 + $0x70] sm:$0xff] %vm689, %v11713
  %11730 = vst.msk [vmem:[%s61 + $0x78] sm:$0xff] %vm689, %v11714
  // Predicated region
  $region122: #{denoiser_forward.1} parent=0 // pred_check
    _
  $region123: #{denoiser_forward.1} parent=0 // pred_check_branch
    %11732 = sbr.rel (0) target = $region125
  $region124: #{denoiser_forward.1} parent=0 // pred_region
    _
  $region125: #{denoiser_forward.1} parent=0 // pred_fallthru
    _
  // Predicated region
  $region126: #{denoiser_forward.1} parent=0 // pred_check
    _
  $region127: #{denoiser_forward.1} parent=0 // pred_check_branch
    %11734 = sbr.rel (0) target = $region129
  $region128: #{denoiser_forward.1} parent=0 // pred_region
    _
  $region129: #{denoiser_forward.1} parent=0 // pred_fallthru
    _

</llo_original>
